<compile_context>
chip_gen: v7x
topology: tpu7x:2x2x1
jax: 0.10.0
libtpu: 0.0.40
codegen_flags: <defaults>
</compile_context>

<pallas_src>
import functools

import numpy as np
import jax
import jax.numpy as jnp
from jax.experimental import pallas as pl
from jax.experimental.pallas import tpu as pltpu

_EPS = 1e-5      # nn.BatchNorm2d default eps
_LANES = 128     # TPU vreg lane width — channel dims are padded to this


def _round_up(x, m):
    return (x + m - 1) // m * m


def _vmem_limit_bytes(est_bytes):
    """Scoped-VMEM request sized from the actual buffers, capped per generation."""
    try:
        cap = int(pltpu.get_tpu_info().vmem_capacity_bytes)
    except Exception:                       # conservative fallback (v7x per-TC)
        cap = 64 * 1024 * 1024
    headroom = 16 * 1024 * 1024
    limit = min(max(2 * est_bytes, 32 * 1024 * 1024), cap - headroom)
    return int(max(limit, 8 * 1024 * 1024))


# ------------------------------ pass A: conv1 --------------------------------
def _conv1_kernel(xin_ref, w1_ref, y1_ref, st_ref, *,
                  ho, wo, cp_in, cp_out, stride, ph_h):
    m = ho * wo
    acc = None
    for dy in range(3):
        slabs = []
        for dx in range(3):
            if stride == 1:
                s = xin_ref[pl.ds(dy, ho), pl.ds(dx, wo), :]
            else:
                # Phase-split input (4 parity phases stacked along H):
                # phase p = 2*(dy%2)+(dx%2) holds xp[dy%2::2, dx%2::2] — all
                # tap reads are dense (unstrided) windows.
                p = (dy % 2) * 2 + (dx % 2)
                s = xin_ref[pl.ds(p * ph_h + dy // 2, ho),
                            pl.ds(dx // 2, wo), :]
            slabs.append(s)
        patch = jnp.concatenate(slabs, axis=-1).reshape(m, 3 * cp_in)  # bf16
        d = jnp.dot(patch, w1_ref[dy], preferred_element_type=jnp.float32)
        acc = d if acc is None else acc + d
    y1_ref[...] = acc.reshape(ho, wo, cp_out).astype(jnp.bfloat16)
    # Per-image partial BN stats (parallel-safe: each grid step owns its row).
    st_ref[0, :] = jnp.sum(acc, axis=0)
    st_ref[1, :] = jnp.sum(acc * acc, axis=0)


# ------------------------- pass B: bn1+relu, conv2 ----------------------------
def _conv2_kernel(y1_ref, bn1_ref, w2_ref, y2_ref, st_ref, y1p_ref, *,
                  ho, wo, cp_out):
    m = ho * wo
    scale = bn1_ref[0, :]
    shift = bn1_ref[1, :]
    y1 = jnp.maximum(y1_ref[...].astype(jnp.float32) * scale + shift, 0.0)

    # Stage bn1(relu) output with a 1-px zero halo in bf16 (half the VMEM of
    # f32, no per-tap casts).  Borders are re-zeroed every step so the kernel
    # stays correct when the grid is sharded across TensorCores (each core has
    # a private scratch, so a program_id==0 guard would be unsafe); the border
    # stores are <10% of the interior store.
    y1p_ref[pl.ds(1, ho), pl.ds(1, wo), :] = y1.astype(jnp.bfloat16)
    zrow = jnp.zeros((1, wo + 2, cp_out), jnp.bfloat16)
    zcol = jnp.zeros((ho, 1, cp_out), jnp.bfloat16)
    y1p_ref[pl.ds(0, 1), :, :] = zrow
    y1p_ref[pl.ds(ho + 1, 1), :, :] = zrow
    y1p_ref[pl.ds(1, ho), pl.ds(0, 1), :] = zcol
    y1p_ref[pl.ds(1, ho), pl.ds(wo + 1, 1), :] = zcol

    acc = None
    for dy in range(3):
        slabs = [y1p_ref[pl.ds(dy, ho), pl.ds(dx, wo), :] for dx in range(3)]
        patch = jnp.concatenate(slabs, axis=-1).reshape(m, 3 * cp_out)
        d = jnp.dot(patch, w2_ref[dy], preferred_element_type=jnp.float32)
        acc = d if acc is None else acc + d
    y2_ref[...] = acc.reshape(ho, wo, cp_out).astype(jnp.bfloat16)
    st_ref[0, :] = jnp.sum(acc, axis=0)
    st_ref[1, :] = jnp.sum(acc * acc, axis=0)


# ---------------------- pass C: bn2+relu (+ residual) -------------------------
def _finalize_kernel(*refs, has_res):
    if has_res:
        y2_ref, bn2_ref, res_ref, out_ref = refs
    else:
        y2_ref, bn2_ref, out_ref = refs
    scale = bn2_ref[0, :]
    shift = bn2_ref[1, :]
    # ReLU happens BEFORE the residual add and there is no final ReLU —
    # exactly as in the PyTorch module.
    y = jnp.maximum(y2_ref[...].astype(jnp.float32) * scale + shift, 0.0)
    if has_res:
        y = y + res_ref[...].astype(jnp.float32)
    out_ref[...] = y


# --------------------------------- wrapper ------------------------------------
def _pack_conv_weight(w_oihw, cp_in, cp_out):
    """(Cout, Cin, 3, 3) -> (3, 3*cp_in, cp_out): ky-major chunks, padded, bf16."""
    cout, cin = w_oihw.shape[0], w_oihw.shape[1]
    w = jnp.transpose(w_oihw, (2, 3, 1, 0))                 # (ky, kx, Cin, Cout)
    w = jnp.pad(w, ((0, 0), (0, 0), (0, cp_in - cin), (0, cp_out - cout)))
    return w.reshape(3, 3 * cp_in, cp_out).astype(jnp.bfloat16)


def _bn_scale_shift(stats, gamma, beta, count):
    """Reduce per-image partial (sum, sumsq) -> (scale, shift), shape (2, Cpad)."""
    s = jnp.sum(stats[:, 0, :], axis=0)
    ss = jnp.sum(stats[:, 1, :], axis=0)
    mean = s / count
    # TODO(synk): E[x^2]-mean^2 in f32 can cancel badly when |mean| >> std;
    # switch to a shifted / two-pass variance if trained-weight regimes need it.
    var = jnp.maximum(ss / count - mean * mean, 0.0)         # biased batch var
    scale = gamma * jax.lax.rsqrt(var + _EPS)
    shift = beta - mean * scale
    return jnp.stack([scale, shift]).astype(jnp.float32)


def residual_block(x_nchw, params, *, shortcuts, downsampling):
    n, cin, h, w = x_nchw.shape
    cout = params["w1"].shape[0]
    stride = 2 if downsampling else 1
    ho = (h + 2 - 3) // stride + 1
    wo = (w + 2 - 3) // stride + 1
    cp_in = _round_up(cin, _LANES)
    cp_out = _round_up(cout, _LANES)
    m_total = n * ho * wo

    x = jnp.transpose(x_nchw, (0, 2, 3, 1)).astype(jnp.float32)     # NCHW -> NHWC
    xp = jnp.pad(x, ((0, 0), (1, 1), (1, 1), (0, cp_in - cin))).astype(jnp.bfloat16)

    if stride == 2:
        # Pre-split the halo-padded input into its 2x2 parity phases (stacked
        # along H) so every in-kernel tap read is dense.
        hh, wh = ho + 1, wo + 1
        phases = []
        for py in range(2):
            for px in range(2):
                ph = xp[:, py::2, px::2, :]
                ph = jnp.pad(ph, ((0, 0), (0, hh - ph.shape[1]),
                                  (0, wh - ph.shape[2]), (0, 0)))
                phases.append(ph)
        xin = jnp.concatenate(phases, axis=1)            # (n, 4*hh, wh, cp_in)
        xin_spec = pl.BlockSpec((None, 4 * hh, wh, cp_in),
                                lambda i: (i, 0, 0, 0))
        xin_block_bytes = 4 * hh * wh * cp_in * 2
        ph_h = hh
    else:
        xin = xp                                         # (n, h+2, w+2, cp_in)
        xin_spec = pl.BlockSpec((None, h + 2, w + 2, cp_in),
                                lambda i: (i, 0, 0, 0))
        xin_block_bytes = (h + 2) * (w + 2) * cp_in * 2
        ph_h = 0

    # conv biases b1/b2 are deliberately NOT passed: training-mode BN subtracts
    # the batch mean right after each conv, so a per-channel bias is a no-op.
    w1 = _pack_conv_weight(params["w1"], cp_in, cp_out)
    w2 = _pack_conv_weight(params["w2"], cp_out, cp_out)
    g1 = jnp.pad(params["g1"], (0, cp_out - cout)).astype(jnp.float32)
    be1 = jnp.pad(params["be1"], (0, cp_out - cout)).astype(jnp.float32)
    g2 = jnp.pad(params["g2"], (0, cp_out - cout)).astype(jnp.float32)
    be2 = jnp.pad(params["be2"], (0, cp_out - cout)).astype(jnp.float32)

    m_img = ho * wo
    act_spec = pl.BlockSpec((None, ho, wo, cp_out), lambda i: (i, 0, 0, 0))
    st_spec = pl.BlockSpec((None, 2, cp_out), lambda i: (i, 0, 0))
    bn_spec = pl.BlockSpec((2, cp_out), lambda i: (0, 0))            # resident
    w_spec_1 = pl.BlockSpec((3, 3 * cp_in, cp_out), lambda i: (0, 0, 0))
    w_spec_2 = pl.BlockSpec((3, 3 * cp_out, cp_out), lambda i: (0, 0, 0))

    # Per-step VMEM estimate (double-buffered blocks + chunked-K im2col slab +
    # f32 accumulator + halo scratch), capped per generation.
    est = (2 * xin_block_bytes
           + int(w1.size) * 2 + int(w2.size) * 2
           + 2 * 3 * m_img * cp_out * 2                   # bf16 act blocks (dbl-buf)
           + (ho + 2) * (wo + 2) * cp_out * 2             # bf16 halo scratch
           + m_img * 3 * max(cp_in, cp_out) * 2           # chunked-K patch slab
           + 3 * m_img * cp_out * 4)                      # f32 accumulator + temps
    cparams = pltpu.CompilerParams(
        dimension_semantics=("parallel",),
        vmem_limit_bytes=_vmem_limit_bytes(est))

    # ---- pass A: conv1 + per-image BN1 partial stats -------------------------
    y1_raw, st1 = pl.pallas_call(
        functools.partial(_conv1_kernel, ho=ho, wo=wo, cp_in=cp_in,
                          cp_out=cp_out, stride=stride, ph_h=ph_h),
        grid=(n,),
        in_specs=[xin_spec, w_spec_1],
        out_specs=(act_spec, st_spec),
        out_shape=(jax.ShapeDtypeStruct((n, ho, wo, cp_out), jnp.bfloat16),
                   jax.ShapeDtypeStruct((n, 2, cp_out), jnp.float32)),
        compiler_params=cparams,
    )(xin, w1)

    bn1 = _bn_scale_shift(st1, g1, be1, float(m_total))

    # ---- pass B: bn1+relu -> bf16 halo stage -> conv2 + BN2 partial stats ----
    y2_raw, st2 = pl.pallas_call(
        functools.partial(_conv2_kernel, ho=ho, wo=wo, cp_out=cp_out),
        grid=(n,),
        in_specs=[act_spec, bn_spec, w_spec_2],
        out_specs=(act_spec, st_spec),
        out_shape=(jax.ShapeDtypeStruct((n, ho, wo, cp_out), jnp.bfloat16),
                   jax.ShapeDtypeStruct((n, 2, cp_out), jnp.float32)),
        scratch_shapes=[pltpu.VMEM((ho + 2, wo + 2, cp_out), jnp.bfloat16)],
        compiler_params=cparams,
    )(y1_raw, bn1, w2)

    bn2 = _bn_scale_shift(st2, g2, be2, float(m_total))

    # ---- pass C: bn2 + relu (+ residual add) ----------------------------------
    inputs = [y2_raw, bn2]
    in_specs = [act_spec, bn_spec]
    if shortcuts:
        if downsampling:
            # MaxPool2d(1, 2) == strided slice; the zero-channel concat + lane
            # pad collapses to a single channel zero-pad (needs cout == 2*cin).
            assert cout == 2 * cin, "zero-pad shortcut needs cout == 2 * cin"
            res = x[:, ::2, ::2, :]
        else:
            assert cout == cin, "identity shortcut needs cout == cin"
            res = x
        res = jnp.pad(res, ((0, 0), (0, 0), (0, 0), (0, cp_out - cin)))
        inputs.append(res.astype(jnp.bfloat16))          # bf16: pure DMA traffic
        in_specs.append(act_spec)
    # (when shortcuts=False no residual tensor is passed at all)

    out = pl.pallas_call(
        functools.partial(_finalize_kernel, has_res=shortcuts),
        grid=(n,),
        in_specs=in_specs,
        out_specs=pl.BlockSpec((None, ho, wo, cp_out), lambda i: (i, 0, 0, 0)),
        out_shape=jax.ShapeDtypeStruct((n, ho, wo, cp_out), jnp.float32),
        compiler_params=cparams,
    )(*inputs)

    out = out[:, :, :, :cout]                            # drop channel pad
    return jnp.transpose(out, (0, 3, 1, 2))              # NHWC -> NCHW


# ----------------------------- reference (pure JAX) ----------------------------
def reference(x_nchw, params, *, shortcuts, downsampling):
    stride = 2 if downsampling else 1

    def conv(x, wgt, b, s):
        y = jax.lax.conv_general_dilated(
            x, wgt, window_strides=(s, s), padding=((1, 1), (1, 1)),
            dimension_numbers=("NCHW", "OIHW", "NCHW"))
        return y + b[None, :, None, None]

    def bn(x, g, be):
        mean = jnp.mean(x, axis=(0, 2, 3), keepdims=True)
        var = jnp.mean((x - mean) ** 2, axis=(0, 2, 3), keepdims=True)
        return ((x - mean) / jnp.sqrt(var + _EPS)) * g[None, :, None, None] \
            + be[None, :, None, None]

    y = jax.nn.relu(bn(conv(x_nchw, params["w1"], params["b1"], stride),
                       params["g1"], params["be1"]))
    y = jax.nn.relu(bn(conv(y, params["w2"], params["b2"], 1),
                       params["g2"], params["be2"]))
    if shortcuts:
        r = x_nchw
        if downsampling:
            r = r[:, :, ::2, ::2]
            r = jnp.concatenate([r, jnp.zeros_like(r)], axis=1)
        y = y + r
    return y


def init_params(key, cin, cout):
    ks = jax.random.split(key, 8)
    b1s = 1.0 / np.sqrt(cin * 9)
    b2s = 1.0 / np.sqrt(cout * 9)
    return {
        "w1": jax.random.uniform(ks[0], (cout, cin, 3, 3), jnp.float32, -b1s, b1s),
        "b1": jax.random.uniform(ks[1], (cout,), jnp.float32, -b1s, b1s),
        "g1": 1.0 + 0.2 * jax.random.normal(ks[2], (cout,), jnp.float32),
        "be1": 0.1 * jax.random.normal(ks[3], (cout,), jnp.float32),
        "w2": jax.random.uniform(ks[4], (cout, cout, 3, 3), jnp.float32, -b2s, b2s),
        "b2": jax.random.uniform(ks[5], (cout,), jnp.float32, -b2s, b2s),
        "g2": 1.0 + 0.2 * jax.random.normal(ks[6], (cout,), jnp.float32),
        "be2": 0.1 * jax.random.normal(ks[7], (cout,), jnp.float32),
    }


if __name__ == "__main__":
    configs = [
        # (shortcuts, downsampling, n, cin, cout, h, w)
        (True,  False, 2, 4, 4, 16, 16),   # identity shortcut
        (True,  True,  2, 4, 8, 32, 32),   # stride-2 conv1 + zero-pad shortcut
        (False, False, 2, 4, 4, 16, 16),   # plain block, no residual input
    ]
    key = jax.random.PRNGKey(0)
    for shortcuts, downsampling, n, cin, cout, h, w in configs:
        key, kp, kx = jax.random.split(key, 3)
        params = init_params(kp, cin, cout)
        x = jax.random.normal(kx, (n, cin, h, w), jnp.float32)

        fn = jax.jit(functools.partial(residual_block, shortcuts=shortcuts,
                                       downsampling=downsampling))
        out = jax.block_until_ready(fn(x, params))

        ref = reference(x, params, shortcuts=shortcuts, downsampling=downsampling)
        assert out.shape == ref.shape
        # bf16 matmul operands / staged activations (f32 accumulation & stats)
        # -> tolerance loosened vs pure f32.
        np.testing.assert_allclose(np.asarray(out), np.asarray(ref),
                                   atol=3e-2, rtol=3e-2)
    print("KERNEL_OK")
</pallas_src>

<mosaic_0001>
module attributes {stable_mosaic.version = 11 : i64} {
  func.func @_conv1_kernel(%arg0: i32, %arg1: memref<1x18x18x128xbf16, #tpu.memory_space<vmem>>, %arg2: memref<3x384x128xbf16, #tpu.memory_space<vmem>>, %arg3: memref<1x16x16x128xbf16, #tpu.memory_space<vmem>>, %arg4: memref<1x2x128xf32, #tpu.memory_space<vmem>>) attributes {dimension_semantics = [#tpu.dimension_semantics<parallel>], iteration_bounds = array<i64: 2>, scalar_prefetch = 0 : i64, scratch_operands = 0 : i64, tpu.core_type = #tpu.core_type<tc>, window_params = [{transform_indices = @transform_0, window_bounds = array<i64: 1, 18, 18, 128>}, {pipeline_mode = #tpu.pipeline_mode<synchronous>, transform_indices = @transform_1, window_bounds = array<i64: 3, 384, 128>}, {transform_indices = @transform_2, window_bounds = array<i64: 1, 16, 16, 128>}, {transform_indices = @transform_3, window_bounds = array<i64: 1, 2, 128>}]} {
    %c0 = arith.constant 0 : index
    %c0_0 = arith.constant 0 : index
    %c0_1 = arith.constant 0 : index
    %c0_2 = arith.constant 0 : index
    %0 = vector.load %arg1[%c0, %c0_0, %c0_1, %c0_2] : memref<1x18x18x128xbf16, #tpu.memory_space<vmem>>, vector<1x16x16x128xbf16>
    %1 = vector.shape_cast %0 : vector<1x16x16x128xbf16> to vector<16x16x128xbf16>
    %c0_3 = arith.constant 0 : index
    %c0_4 = arith.constant 0 : index
    %c1 = arith.constant 1 : index
    %c0_5 = arith.constant 0 : index
    %2 = vector.load %arg1[%c0_3, %c0_4, %c1, %c0_5] : memref<1x18x18x128xbf16, #tpu.memory_space<vmem>>, vector<1x16x16x128xbf16>
    %3 = vector.shape_cast %2 : vector<1x16x16x128xbf16> to vector<16x16x128xbf16>
    %c0_6 = arith.constant 0 : index
    %c0_7 = arith.constant 0 : index
    %c2 = arith.constant 2 : index
    %c0_8 = arith.constant 0 : index
    %4 = vector.load %arg1[%c0_6, %c0_7, %c2, %c0_8] : memref<1x18x18x128xbf16, #tpu.memory_space<vmem>>, vector<1x16x16x128xbf16>
    %5 = vector.shape_cast %4 : vector<1x16x16x128xbf16> to vector<16x16x128xbf16>
    %6 = tpu.concatenate %1, %3, %5 in 2 : vector<16x16x128xbf16>, vector<16x16x128xbf16>, vector<16x16x128xbf16> -> vector<16x16x384xbf16>
    %7 = vector.shape_cast %6 : vector<16x16x384xbf16> to vector<256x384xbf16>
    %c0_9 = arith.constant 0 : index
    %c0_10 = arith.constant 0 : index
    %c0_11 = arith.constant 0 : index
    %8 = vector.load %arg2[%c0_9, %c0_10, %c0_11] : memref<3x384x128xbf16, #tpu.memory_space<vmem>>, vector<1x384x128xbf16>
    %9 = vector.shape_cast %8 : vector<1x384x128xbf16> to vector<384x128xbf16>
    %cst = arith.constant dense<0.000000e+00> : vector<256x128xf32>
    %10 = tpu.matmul %7, %9, %cst {dimension_numbers = #tpu.dot_dimension_numbers<[1], [0], [0], [1], [0, 0, 1, 1], [], []>} : vector<256x384xbf16>, vector<384x128xbf16>, vector<256x128xf32> -> vector<256x128xf32>
    %c0_12 = arith.constant 0 : index
    %c1_13 = arith.constant 1 : index
    %c0_14 = arith.constant 0 : index
    %c0_15 = arith.constant 0 : index
    %11 = vector.load %arg1[%c0_12, %c1_13, %c0_14, %c0_15] : memref<1x18x18x128xbf16, #tpu.memory_space<vmem>>, vector<1x16x16x128xbf16>
    %12 = vector.shape_cast %11 : vector<1x16x16x128xbf16> to vector<16x16x128xbf16>
    %c0_16 = arith.constant 0 : index
    %c1_17 = arith.constant 1 : index
    %c1_18 = arith.constant 1 : index
    %c0_19 = arith.constant 0 : index
    %13 = vector.load %arg1[%c0_16, %c1_17, %c1_18, %c0_19] : memref<1x18x18x128xbf16, #tpu.memory_space<vmem>>, vector<1x16x16x128xbf16>
    %14 = vector.shape_cast %13 : vector<1x16x16x128xbf16> to vector<16x16x128xbf16>
    %c0_20 = arith.constant 0 : index
    %c1_21 = arith.constant 1 : index
    %c2_22 = arith.constant 2 : index
    %c0_23 = arith.constant 0 : index
    %15 = vector.load %arg1[%c0_20, %c1_21, %c2_22, %c0_23] : memref<1x18x18x128xbf16, #tpu.memory_space<vmem>>, vector<1x16x16x128xbf16>
    %16 = vector.shape_cast %15 : vector<1x16x16x128xbf16> to vector<16x16x128xbf16>
    %17 = tpu.concatenate %12, %14, %16 in 2 : vector<16x16x128xbf16>, vector<16x16x128xbf16>, vector<16x16x128xbf16> -> vector<16x16x384xbf16>
    %18 = vector.shape_cast %17 : vector<16x16x384xbf16> to vector<256x384xbf16>
    %c1_24 = arith.constant 1 : index
    %c0_25 = arith.constant 0 : index
    %c0_26 = arith.constant 0 : index
    %19 = vector.load %arg2[%c1_24, %c0_25, %c0_26] : memref<3x384x128xbf16, #tpu.memory_space<vmem>>, vector<1x384x128xbf16>
    %20 = vector.shape_cast %19 : vector<1x384x128xbf16> to vector<384x128xbf16>
    %cst_27 = arith.constant dense<0.000000e+00> : vector<256x128xf32>
    %21 = tpu.matmul %18, %20, %cst_27 {dimension_numbers = #tpu.dot_dimension_numbers<[1], [0], [0], [1], [0, 0, 1, 1], [], []>} : vector<256x384xbf16>, vector<384x128xbf16>, vector<256x128xf32> -> vector<256x128xf32>
    %22 = arith.addf %10, %21 : vector<256x128xf32>
    %c0_28 = arith.constant 0 : index
    %c2_29 = arith.constant 2 : index
    %c0_30 = arith.constant 0 : index
    %c0_31 = arith.constant 0 : index
    %23 = vector.load %arg1[%c0_28, %c2_29, %c0_30, %c0_31] : memref<1x18x18x128xbf16, #tpu.memory_space<vmem>>, vector<1x16x16x128xbf16>
    %24 = vector.shape_cast %23 : vector<1x16x16x128xbf16> to vector<16x16x128xbf16>
    %c0_32 = arith.constant 0 : index
    %c2_33 = arith.constant 2 : index
    %c1_34 = arith.constant 1 : index
    %c0_35 = arith.constant 0 : index
    %25 = vector.load %arg1[%c0_32, %c2_33, %c1_34, %c0_35] : memref<1x18x18x128xbf16, #tpu.memory_space<vmem>>, vector<1x16x16x128xbf16>
    %26 = vector.shape_cast %25 : vector<1x16x16x128xbf16> to vector<16x16x128xbf16>
    %c0_36 = arith.constant 0 : index
    %c2_37 = arith.constant 2 : index
    %c2_38 = arith.constant 2 : index
    %c0_39 = arith.constant 0 : index
    %27 = vector.load %arg1[%c0_36, %c2_37, %c2_38, %c0_39] : memref<1x18x18x128xbf16, #tpu.memory_space<vmem>>, vector<1x16x16x128xbf16>
    %28 = vector.shape_cast %27 : vector<1x16x16x128xbf16> to vector<16x16x128xbf16>
    %29 = tpu.concatenate %24, %26, %28 in 2 : vector<16x16x128xbf16>, vector<16x16x128xbf16>, vector<16x16x128xbf16> -> vector<16x16x384xbf16>
    %30 = vector.shape_cast %29 : vector<16x16x384xbf16> to vector<256x384xbf16>
    %c2_40 = arith.constant 2 : index
    %c0_41 = arith.constant 0 : index
    %c0_42 = arith.constant 0 : index
    %31 = vector.load %arg2[%c2_40, %c0_41, %c0_42] : memref<3x384x128xbf16, #tpu.memory_space<vmem>>, vector<1x384x128xbf16>
    %32 = vector.shape_cast %31 : vector<1x384x128xbf16> to vector<384x128xbf16>
    %cst_43 = arith.constant dense<0.000000e+00> : vector<256x128xf32>
    %33 = tpu.matmul %30, %32, %cst_43 {dimension_numbers = #tpu.dot_dimension_numbers<[1], [0], [0], [1], [0, 0, 1, 1], [], []>} : vector<256x384xbf16>, vector<384x128xbf16>, vector<256x128xf32> -> vector<256x128xf32>
    %34 = arith.addf %22, %33 : vector<256x128xf32>
    %35 = vector.shape_cast %34 : vector<256x128xf32> to vector<16x16x128xf32>
    %36 = arith.truncf %35 : vector<16x16x128xf32> to vector<16x16x128xbf16>
    %c0_44 = arith.constant 0 : index
    %c0_45 = arith.constant 0 : index
    %c0_46 = arith.constant 0 : index
    %c0_47 = arith.constant 0 : index
    %37 = vector.load %arg3[%c0_44, %c0_45, %c0_46, %c0_47] : memref<1x16x16x128xbf16, #tpu.memory_space<vmem>>, vector<1x16x16x128xbf16>
    %38 = vector.shape_cast %37 : vector<1x16x16x128xbf16> to vector<16x16x128xbf16>
    %39 = vector.shape_cast %36 : vector<16x16x128xbf16> to vector<1x16x16x128xbf16>
    tpu.vector_store %arg3[%c0_44, %c0_45, %c0_46, %c0_47], %39 {strides = array<i32>} : memref<1x16x16x128xbf16, #tpu.memory_space<vmem>>, vector<1x16x16x128xbf16>,
    %cst_48 = arith.constant dense<0.000000e+00> : vector<128xf32>
    %40 = vector.multi_reduction <add>, %34, %cst_48 [0] : vector<256x128xf32> to vector<128xf32>
    %c0_49 = arith.constant 0 : index
    %c0_50 = arith.constant 0 : index
    %c0_51 = arith.constant 0 : index
    %41 = vector.load %arg4[%c0_49, %c0_50, %c0_51] : memref<1x2x128xf32, #tpu.memory_space<vmem>>, vector<1x1x128xf32>
    %42 = vector.shape_cast %41 : vector<1x1x128xf32> to vector<128xf32>
    %43 = vector.shape_cast %40 : vector<128xf32> to vector<1x1x128xf32>
    tpu.vector_store %arg4[%c0_49, %c0_50, %c0_51], %43 {strides = array<i32>} : memref<1x2x128xf32, #tpu.memory_space<vmem>>, vector<1x1x128xf32>,
    %44 = arith.mulf %34, %34 : vector<256x128xf32>
    %cst_52 = arith.constant dense<0.000000e+00> : vector<128xf32>
    %45 = vector.multi_reduction <add>, %44, %cst_52 [0] : vector<256x128xf32> to vector<128xf32>
    %c0_53 = arith.constant 0 : index
    %c1_54 = arith.constant 1 : index
    %c0_55 = arith.constant 0 : index
    %46 = vector.load %arg4[%c0_53, %c1_54, %c0_55] : memref<1x2x128xf32, #tpu.memory_space<vmem>>, vector<1x1x128xf32>
    %47 = vector.shape_cast %46 : vector<1x1x128xf32> to vector<128xf32>
    %48 = vector.shape_cast %45 : vector<128xf32> to vector<1x1x128xf32>
    tpu.vector_store %arg4[%c0_53, %c1_54, %c0_55], %48 {strides = array<i32>} : memref<1x2x128xf32, #tpu.memory_space<vmem>>, vector<1x1x128xf32>,
    return
  }
  func.func @transform_0(%arg0: i32) -> (i32, i32, i32, i32) {
    %c0_i32 = arith.constant 0 : i32
    %c0_i32_0 = arith.constant 0 : i32
    %c0_i32_1 = arith.constant 0 : i32
    %c0_i32_2 = arith.constant 0 : i32
    return %arg0, %c0_i32, %c0_i32_0, %c0_i32_1 : i32, i32, i32, i32
  }
  func.func @transform_1(%arg0: i32) -> (i32, i32, i32) {
    %c0_i32 = arith.constant 0 : i32
    %c0_i32_0 = arith.constant 0 : i32
    %c0_i32_1 = arith.constant 0 : i32
    %c0_i32_2 = arith.constant 0 : i32
    return %c0_i32, %c0_i32_0, %c0_i32_1 : i32, i32, i32
  }
  func.func @transform_2(%arg0: i32) -> (i32, i32, i32, i32) {
    %c0_i32 = arith.constant 0 : i32
    %c0_i32_0 = arith.constant 0 : i32
    %c0_i32_1 = arith.constant 0 : i32
    %c0_i32_2 = arith.constant 0 : i32
    return %arg0, %c0_i32, %c0_i32_0, %c0_i32_1 : i32, i32, i32, i32
  }
  func.func @transform_3(%arg0: i32) -> (i32, i32, i32) {
    %c0_i32 = arith.constant 0 : i32
    %c0_i32_0 = arith.constant 0 : i32
    %c0_i32_1 = arith.constant 0 : i32
    return %arg0, %c0_i32, %c0_i32_0 : i32, i32, i32
  }
}

module attributes {stable_mosaic.version = 11 : i64} {
  func.func @_conv2_kernel(%arg0: i32, %arg1: memref<1x16x16x128xbf16, #tpu.memory_space<vmem>>, %arg2: memref<2x128xf32, #tpu.memory_space<vmem>>, %arg3: memref<3x384x128xbf16, #tpu.memory_space<vmem>>, %arg4: memref<1x16x16x128xbf16, #tpu.memory_space<vmem>>, %arg5: memref<1x2x128xf32, #tpu.memory_space<vmem>>, %arg6: memref<18x18x128xbf16, #tpu.memory_space<vmem>>) attributes {dimension_semantics = [#tpu.dimension_semantics<parallel>], iteration_bounds = array<i64: 2>, scalar_prefetch = 0 : i64, scratch_operands = 1 : i64, tpu.core_type = #tpu.core_type<tc>, window_params = [{transform_indices = @transform_0, window_bounds = array<i64: 1, 16, 16, 128>}, {pipeline_mode = #tpu.pipeline_mode<synchronous>, transform_indices = @transform_1, window_bounds = array<i64: 2, 128>}, {pipeline_mode = #tpu.pipeline_mode<synchronous>, transform_indices = @transform_2, window_bounds = array<i64: 3, 384, 128>}, {transform_indices = @transform_3, window_bounds = array<i64: 1, 16, 16, 128>}, {transform_indices = @transform_4, window_bounds = array<i64: 1, 2, 128>}]} {
    %c0 = arith.constant 0 : index
    %c0_0 = arith.constant 0 : index
    %0 = vector.load %arg2[%c0, %c0_0] : memref<2x128xf32, #tpu.memory_space<vmem>>, vector<1x128xf32>
    %1 = vector.shape_cast %0 : vector<1x128xf32> to vector<128xf32>
    %c1 = arith.constant 1 : index
    %c0_1 = arith.constant 0 : index
    %2 = vector.load %arg2[%c1, %c0_1] : memref<2x128xf32, #tpu.memory_space<vmem>>, vector<1x128xf32>
    %3 = vector.shape_cast %2 : vector<1x128xf32> to vector<128xf32>
    %c0_2 = arith.constant 0 : index
    %c0_3 = arith.constant 0 : index
    %c0_4 = arith.constant 0 : index
    %c0_5 = arith.constant 0 : index
    %4 = vector.load %arg1[%c0_2, %c0_3, %c0_4, %c0_5] : memref<1x16x16x128xbf16, #tpu.memory_space<vmem>>, vector<1x16x16x128xbf16>
    %5 = vector.shape_cast %4 : vector<1x16x16x128xbf16> to vector<16x16x128xbf16>
    %6 = arith.extf %5 : vector<16x16x128xbf16> to vector<16x16x128xf32>
    %7 = vector.shape_cast %1 : vector<128xf32> to vector<1x1x128xf32>
    %8 = vector.broadcast %7 : vector<1x1x128xf32> to vector<16x16x128xf32>
    %9 = arith.mulf %6, %8 : vector<16x16x128xf32>
    %10 = vector.shape_cast %3 : vector<128xf32> to vector<1x1x128xf32>
    %11 = vector.broadcast %10 : vector<1x1x128xf32> to vector<16x16x128xf32>
    %12 = arith.addf %9, %11 : vector<16x16x128xf32>
    %cst = arith.constant 0.000000e+00 : f32
    %13 = vector.broadcast %cst : f32 to vector<16x16x128xf32>
    %14 = arith.maximumf %12, %13 : vector<16x16x128xf32>
    %15 = arith.truncf %14 : vector<16x16x128xf32> to vector<16x16x128xbf16>
    %c1_6 = arith.constant 1 : index
    %c1_7 = arith.constant 1 : index
    %c0_8 = arith.constant 0 : index
    %16 = vector.load %arg6[%c1_6, %c1_7, %c0_8] : memref<18x18x128xbf16, #tpu.memory_space<vmem>>, vector<16x16x128xbf16>
    tpu.vector_store %arg6[%c1_6, %c1_7, %c0_8], %15 {strides = array<i32>} : memref<18x18x128xbf16, #tpu.memory_space<vmem>>, vector<16x16x128xbf16>,
    %cst_9 = arith.constant 0.000000e+00 : bf16
    %17 = vector.broadcast %cst_9 : bf16 to vector<1x18x128xbf16>
    %cst_10 = arith.constant 0.000000e+00 : bf16
    %18 = vector.broadcast %cst_10 : bf16 to vector<16x1x128xbf16>
    %c0_11 = arith.constant 0 : index
    %c0_12 = arith.constant 0 : index
    %c0_13 = arith.constant 0 : index
    %19 = vector.load %arg6[%c0_11, %c0_12, %c0_13] : memref<18x18x128xbf16, #tpu.memory_space<vmem>>, vector<1x18x128xbf16>
    tpu.vector_store %arg6[%c0_11, %c0_12, %c0_13], %17 {strides = array<i32>} : memref<18x18x128xbf16, #tpu.memory_space<vmem>>, vector<1x18x128xbf16>,
    %c17 = arith.constant 17 : index
    %c0_14 = arith.constant 0 : index
    %c0_15 = arith.constant 0 : index
    %20 = vector.load %arg6[%c17, %c0_14, %c0_15] : memref<18x18x128xbf16, #tpu.memory_space<vmem>>, vector<1x18x128xbf16>
    tpu.vector_store %arg6[%c17, %c0_14, %c0_15], %17 {strides = array<i32>} : memref<18x18x128xbf16, #tpu.memory_space<vmem>>, vector<1x18x128xbf16>,
    %c1_16 = arith.constant 1 : index
    %c0_17 = arith.constant 0 : index
    %c0_18 = arith.constant 0 : index
    %21 = vector.load %arg6[%c1_16, %c0_17, %c0_18] : memref<18x18x128xbf16, #tpu.memory_space<vmem>>, vector<16x1x128xbf16>
    tpu.vector_store %arg6[%c1_16, %c0_17, %c0_18], %18 {strides = array<i32>} : memref<18x18x128xbf16, #tpu.memory_space<vmem>>, vector<16x1x128xbf16>,
    %c1_19 = arith.constant 1 : index
    %c17_20 = arith.constant 17 : index
    %c0_21 = arith.constant 0 : index
    %22 = vector.load %arg6[%c1_19, %c17_20, %c0_21] : memref<18x18x128xbf16, #tpu.memory_space<vmem>>, vector<16x1x128xbf16>
    tpu.vector_store %arg6[%c1_19, %c17_20, %c0_21], %18 {strides = array<i32>} : memref<18x18x128xbf16, #tpu.memory_space<vmem>>, vector<16x1x128xbf16>,
    %c0_22 = arith.constant 0 : index
    %c0_23 = arith.constant 0 : index
    %c0_24 = arith.constant 0 : index
    %23 = vector.load %arg6[%c0_22, %c0_23, %c0_24] : memref<18x18x128xbf16, #tpu.memory_space<vmem>>, vector<16x16x128xbf16>
    %c0_25 = arith.constant 0 : index
    %c1_26 = arith.constant 1 : index
    %c0_27 = arith.constant 0 : index
    %24 = vector.load %arg6[%c0_25, %c1_26, %c0_27] : memref<18x18x128xbf16, #tpu.memory_space<vmem>>, vector<16x16x128xbf16>
    %c0_28 = arith.constant 0 : index
    %c2 = arith.constant 2 : index
    %c0_29 = arith.constant 0 : index
    %25 = vector.load %arg6[%c0_28, %c2, %c0_29] : memref<18x18x128xbf16, #tpu.memory_space<vmem>>, vector<16x16x128xbf16>
    %26 = tpu.concatenate %23, %24, %25 in 2 : vector<16x16x128xbf16>, vector<16x16x128xbf16>, vector<16x16x128xbf16> -> vector<16x16x384xbf16>
    %27 = vector.shape_cast %26 : vector<16x16x384xbf16> to vector<256x384xbf16>
    %c0_30 = arith.constant 0 : index
    %c0_31 = arith.constant 0 : index
    %c0_32 = arith.constant 0 : index
    %28 = vector.load %arg3[%c0_30, %c0_31, %c0_32] : memref<3x384x128xbf16, #tpu.memory_space<vmem>>, vector<1x384x128xbf16>
    %29 = vector.shape_cast %28 : vector<1x384x128xbf16> to vector<384x128xbf16>
    %cst_33 = arith.constant dense<0.000000e+00> : vector<256x128xf32>
    %30 = tpu.matmul %27, %29, %cst_33 {dimension_numbers = #tpu.dot_dimension_numbers<[1], [0], [0], [1], [0, 0, 1, 1], [], []>} : vector<256x384xbf16>, vector<384x128xbf16>, vector<256x128xf32> -> vector<256x128xf32>
    %c1_34 = arith.constant 1 : index
    %c0_35 = arith.constant 0 : index
    %c0_36 = arith.constant 0 : index
    %31 = vector.load %arg6[%c1_34, %c0_35, %c0_36] : memref<18x18x128xbf16, #tpu.memory_space<vmem>>, vector<16x16x128xbf16>
    %c1_37 = arith.constant 1 : index
    %c1_38 = arith.constant 1 : index
    %c0_39 = arith.constant 0 : index
    %32 = vector.load %arg6[%c1_37, %c1_38, %c0_39] : memref<18x18x128xbf16, #tpu.memory_space<vmem>>, vector<16x16x128xbf16>
    %c1_40 = arith.constant 1 : index
    %c2_41 = arith.constant 2 : index
    %c0_42 = arith.constant 0 : index
    %33 = vector.load %arg6[%c1_40, %c2_41, %c0_42] : memref<18x18x128xbf16, #tpu.memory_space<vmem>>, vector<16x16x128xbf16>
    %34 = tpu.concatenate %31, %32, %33 in 2 : vector<16x16x128xbf16>, vector<16x16x128xbf16>, vector<16x16x128xbf16> -> vector<16x16x384xbf16>
    %35 = vector.shape_cast %34 : vector<16x16x384xbf16> to vector<256x384xbf16>
    %c1_43 = arith.constant 1 : index
    %c0_44 = arith.constant 0 : index
    %c0_45 = arith.constant 0 : index
    %36 = vector.load %arg3[%c1_43, %c0_44, %c0_45] : memref<3x384x128xbf16, #tpu.memory_space<vmem>>, vector<1x384x128xbf16>
    %37 = vector.shape_cast %36 : vector<1x384x128xbf16> to vector<384x128xbf16>
    %cst_46 = arith.constant dense<0.000000e+00> : vector<256x128xf32>
    %38 = tpu.matmul %35, %37, %cst_46 {dimension_numbers = #tpu.dot_dimension_numbers<[1], [0], [0], [1], [0, 0, 1, 1], [], []>} : vector<256x384xbf16>, vector<384x128xbf16>, vector<256x128xf32> -> vector<256x128xf32>
    %39 = arith.addf %30, %38 : vector<256x128xf32>
    %c2_47 = arith.constant 2 : index
    %c0_48 = arith.constant 0 : index
    %c0_49 = arith.constant 0 : index
    %40 = vector.load %arg6[%c2_47, %c0_48, %c0_49] : memref<18x18x128xbf16, #tpu.memory_space<vmem>>, vector<16x16x128xbf16>
    %c2_50 = arith.constant 2 : index
    %c1_51 = arith.constant 1 : index
    %c0_52 = arith.constant 0 : index
    %41 = vector.load %arg6[%c2_50, %c1_51, %c0_52] : memref<18x18x128xbf16, #tpu.memory_space<vmem>>, vector<16x16x128xbf16>
    %c2_53 = arith.constant 2 : index
    %c2_54 = arith.constant 2 : index
    %c0_55 = arith.constant 0 : index
    %42 = vector.load %arg6[%c2_53, %c2_54, %c0_55] : memref<18x18x128xbf16, #tpu.memory_space<vmem>>, vector<16x16x128xbf16>
    %43 = tpu.concatenate %40, %41, %42 in 2 : vector<16x16x128xbf16>, vector<16x16x128xbf16>, vector<16x16x128xbf16> -> vector<16x16x384xbf16>
    %44 = vector.shape_cast %43 : vector<16x16x384xbf16> to vector<256x384xbf16>
    %c2_56 = arith.constant 2 : index
    %c0_57 = arith.constant 0 : index
    %c0_58 = arith.constant 0 : index
    %45 = vector.load %arg3[%c2_56, %c0_57, %c0_58] : memref<3x384x128xbf16, #tpu.memory_space<vmem>>, vector<1x384x128xbf16>
    %46 = vector.shape_cast %45 : vector<1x384x128xbf16> to vector<384x128xbf16>
    %cst_59 = arith.constant dense<0.000000e+00> : vector<256x128xf32>
    %47 = tpu.matmul %44, %46, %cst_59 {dimension_numbers = #tpu.dot_dimension_numbers<[1], [0], [0], [1], [0, 0, 1, 1], [], []>} : vector<256x384xbf16>, vector<384x128xbf16>, vector<256x128xf32> -> vector<256x128xf32>
    %48 = arith.addf %39, %47 : vector<256x128xf32>
    %49 = vector.shape_cast %48 : vector<256x128xf32> to vector<16x16x128xf32>
    %50 = arith.truncf %49 : vector<16x16x128xf32> to vector<16x16x128xbf16>
    %c0_60 = arith.constant 0 : index
    %c0_61 = arith.constant 0 : index
    %c0_62 = arith.constant 0 : index
    %c0_63 = arith.constant 0 : index
    %51 = vector.load %arg4[%c0_60, %c0_61, %c0_62, %c0_63] : memref<1x16x16x128xbf16, #tpu.memory_space<vmem>>, vector<1x16x16x128xbf16>
    %52 = vector.shape_cast %51 : vector<1x16x16x128xbf16> to vector<16x16x128xbf16>
    %53 = vector.shape_cast %50 : vector<16x16x128xbf16> to vector<1x16x16x128xbf16>
    tpu.vector_store %arg4[%c0_60, %c0_61, %c0_62, %c0_63], %53 {strides = array<i32>} : memref<1x16x16x128xbf16, #tpu.memory_space<vmem>>, vector<1x16x16x128xbf16>,
    %cst_64 = arith.constant dense<0.000000e+00> : vector<128xf32>
    %54 = vector.multi_reduction <add>, %48, %cst_64 [0] : vector<256x128xf32> to vector<128xf32>
    %c0_65 = arith.constant 0 : index
    %c0_66 = arith.constant 0 : index
    %c0_67 = arith.constant 0 : index
    %55 = vector.load %arg5[%c0_65, %c0_66, %c0_67] : memref<1x2x128xf32, #tpu.memory_space<vmem>>, vector<1x1x128xf32>
    %56 = vector.shape_cast %55 : vector<1x1x128xf32> to vector<128xf32>
    %57 = vector.shape_cast %54 : vector<128xf32> to vector<1x1x128xf32>
    tpu.vector_store %arg5[%c0_65, %c0_66, %c0_67], %57 {strides = array<i32>} : memref<1x2x128xf32, #tpu.memory_space<vmem>>, vector<1x1x128xf32>,
    %58 = arith.mulf %48, %48 : vector<256x128xf32>
    %cst_68 = arith.constant dense<0.000000e+00> : vector<128xf32>
    %59 = vector.multi_reduction <add>, %58, %cst_68 [0] : vector<256x128xf32> to vector<128xf32>
    %c0_69 = arith.constant 0 : index
    %c1_70 = arith.constant 1 : index
    %c0_71 = arith.constant 0 : index
    %60 = vector.load %arg5[%c0_69, %c1_70, %c0_71] : memref<1x2x128xf32, #tpu.memory_space<vmem>>, vector<1x1x128xf32>
    %61 = vector.shape_cast %60 : vector<1x1x128xf32> to vector<128xf32>
    %62 = vector.shape_cast %59 : vector<128xf32> to vector<1x1x128xf32>
    tpu.vector_store %arg5[%c0_69, %c1_70, %c0_71], %62 {strides = array<i32>} : memref<1x2x128xf32, #tpu.memory_space<vmem>>, vector<1x1x128xf32>,
    return
  }
  func.func @transform_0(%arg0: i32) -> (i32, i32, i32, i32) {
    %c0_i32 = arith.constant 0 : i32
    %c0_i32_0 = arith.constant 0 : i32
    %c0_i32_1 = arith.constant 0 : i32
    %c0_i32_2 = arith.constant 0 : i32
    return %arg0, %c0_i32, %c0_i32_0, %c0_i32_1 : i32, i32, i32, i32
  }
  func.func @transform_1(%arg0: i32) -> (i32, i32) {
    %c0_i32 = arith.constant 0 : i32
    %c0_i32_0 = arith.constant 0 : i32
    %c0_i32_1 = arith.constant 0 : i32
    return %c0_i32, %c0_i32_0 : i32, i32
  }
  func.func @transform_2(%arg0: i32) -> (i32, i32, i32) {
    %c0_i32 = arith.constant 0 : i32
    %c0_i32_0 = arith.constant 0 : i32
    %c0_i32_1 = arith.constant 0 : i32
    %c0_i32_2 = arith.constant 0 : i32
    return %c0_i32, %c0_i32_0, %c0_i32_1 : i32, i32, i32
  }
  func.func @transform_3(%arg0: i32) -> (i32, i32, i32, i32) {
    %c0_i32 = arith.constant 0 : i32
    %c0_i32_0 = arith.constant 0 : i32
    %c0_i32_1 = arith.constant 0 : i32
    %c0_i32_2 = arith.constant 0 : i32
    return %arg0, %c0_i32, %c0_i32_0, %c0_i32_1 : i32, i32, i32, i32
  }
  func.func @transform_4(%arg0: i32) -> (i32, i32, i32) {
    %c0_i32 = arith.constant 0 : i32
    %c0_i32_0 = arith.constant 0 : i32
    %c0_i32_1 = arith.constant 0 : i32
    return %arg0, %c0_i32, %c0_i32_0 : i32, i32, i32
  }
}

module attributes {stable_mosaic.version = 11 : i64} {
  func.func @_finalize_kernel(%arg0: i32, %arg1: memref<1x16x16x128xbf16, #tpu.memory_space<vmem>>, %arg2: memref<2x128xf32, #tpu.memory_space<vmem>>, %arg3: memref<1x16x16x128xbf16, #tpu.memory_space<vmem>>, %arg4: memref<1x16x16x128xf32, #tpu.memory_space<vmem>>) attributes {dimension_semantics = [#tpu.dimension_semantics<parallel>], iteration_bounds = array<i64: 2>, scalar_prefetch = 0 : i64, scratch_operands = 0 : i64, tpu.core_type = #tpu.core_type<tc>, window_params = [{transform_indices = @transform_0, window_bounds = array<i64: 1, 16, 16, 128>}, {pipeline_mode = #tpu.pipeline_mode<synchronous>, transform_indices = @transform_1, window_bounds = array<i64: 2, 128>}, {transform_indices = @transform_2, window_bounds = array<i64: 1, 16, 16, 128>}, {transform_indices = @transform_3, window_bounds = array<i64: 1, 16, 16, 128>}]} {
    %c0 = arith.constant 0 : index
    %c0_0 = arith.constant 0 : index
    %0 = vector.load %arg2[%c0, %c0_0] : memref<2x128xf32, #tpu.memory_space<vmem>>, vector<1x128xf32>
    %1 = vector.shape_cast %0 : vector<1x128xf32> to vector<128xf32>
    %c1 = arith.constant 1 : index
    %c0_1 = arith.constant 0 : index
    %2 = vector.load %arg2[%c1, %c0_1] : memref<2x128xf32, #tpu.memory_space<vmem>>, vector<1x128xf32>
    %3 = vector.shape_cast %2 : vector<1x128xf32> to vector<128xf32>
    %c0_2 = arith.constant 0 : index
    %c0_3 = arith.constant 0 : index
    %c0_4 = arith.constant 0 : index
    %c0_5 = arith.constant 0 : index
    %4 = vector.load %arg1[%c0_2, %c0_3, %c0_4, %c0_5] : memref<1x16x16x128xbf16, #tpu.memory_space<vmem>>, vector<1x16x16x128xbf16>
    %5 = vector.shape_cast %4 : vector<1x16x16x128xbf16> to vector<16x16x128xbf16>
    %6 = arith.extf %5 : vector<16x16x128xbf16> to vector<16x16x128xf32>
    %7 = vector.shape_cast %1 : vector<128xf32> to vector<1x1x128xf32>
    %8 = vector.broadcast %7 : vector<1x1x128xf32> to vector<16x16x128xf32>
    %9 = arith.mulf %6, %8 : vector<16x16x128xf32>
    %10 = vector.shape_cast %3 : vector<128xf32> to vector<1x1x128xf32>
    %11 = vector.broadcast %10 : vector<1x1x128xf32> to vector<16x16x128xf32>
    %12 = arith.addf %9, %11 : vector<16x16x128xf32>
    %cst = arith.constant 0.000000e+00 : f32
    %13 = vector.broadcast %cst : f32 to vector<16x16x128xf32>
    %14 = arith.maximumf %12, %13 : vector<16x16x128xf32>
    %c0_6 = arith.constant 0 : index
    %c0_7 = arith.constant 0 : index
    %c0_8 = arith.constant 0 : index
    %c0_9 = arith.constant 0 : index
    %15 = vector.load %arg3[%c0_6, %c0_7, %c0_8, %c0_9] : memref<1x16x16x128xbf16, #tpu.memory_space<vmem>>, vector<1x16x16x128xbf16>
    %16 = vector.shape_cast %15 : vector<1x16x16x128xbf16> to vector<16x16x128xbf16>
    %17 = arith.extf %16 : vector<16x16x128xbf16> to vector<16x16x128xf32>
    %18 = arith.addf %14, %17 : vector<16x16x128xf32>
    %c0_10 = arith.constant 0 : index
    %c0_11 = arith.constant 0 : index
    %c0_12 = arith.constant 0 : index
    %c0_13 = arith.constant 0 : index
    %19 = vector.load %arg4[%c0_10, %c0_11, %c0_12, %c0_13] : memref<1x16x16x128xf32, #tpu.memory_space<vmem>>, vector<1x16x16x128xf32>
    %20 = vector.shape_cast %19 : vector<1x16x16x128xf32> to vector<16x16x128xf32>
    %21 = vector.shape_cast %18 : vector<16x16x128xf32> to vector<1x16x16x128xf32>
    tpu.vector_store %arg4[%c0_10, %c0_11, %c0_12, %c0_13], %21 {strides = array<i32>} : memref<1x16x16x128xf32, #tpu.memory_space<vmem>>, vector<1x16x16x128xf32>,
    return
  }
  func.func @transform_0(%arg0: i32) -> (i32, i32, i32, i32) {
    %c0_i32 = arith.constant 0 : i32
    %c0_i32_0 = arith.constant 0 : i32
    %c0_i32_1 = arith.constant 0 : i32
    %c0_i32_2 = arith.constant 0 : i32
    return %arg0, %c0_i32, %c0_i32_0, %c0_i32_1 : i32, i32, i32, i32
  }
  func.func @transform_1(%arg0: i32) -> (i32, i32) {
    %c0_i32 = arith.constant 0 : i32
    %c0_i32_0 = arith.constant 0 : i32
    %c0_i32_1 = arith.constant 0 : i32
    return %c0_i32, %c0_i32_0 : i32, i32
  }
  func.func @transform_2(%arg0: i32) -> (i32, i32, i32, i32) {
    %c0_i32 = arith.constant 0 : i32
    %c0_i32_0 = arith.constant 0 : i32
    %c0_i32_1 = arith.constant 0 : i32
    %c0_i32_2 = arith.constant 0 : i32
    return %arg0, %c0_i32, %c0_i32_0, %c0_i32_1 : i32, i32, i32, i32
  }
  func.func @transform_3(%arg0: i32) -> (i32, i32, i32, i32) {
    %c0_i32 = arith.constant 0 : i32
    %c0_i32_0 = arith.constant 0 : i32
    %c0_i32_1 = arith.constant 0 : i32
    %c0_i32_2 = arith.constant 0 : i32
    return %arg0, %c0_i32, %c0_i32_0, %c0_i32_1 : i32, i32, i32, i32
  }
}

</mosaic_0001>

<llo_original>
// kernel: residual_block.5
$region0: #{residual_block.5}
  #allocation0 [shape = 'u32[]', space=smem, size = 0x4, offset = 0x4, fixed_abs, tag = 'smem constant byte address 0x4 - core index']
  #allocation1 [shape = 'u32[144,128]{1,0:T(1,128)}', space=vmem, size = 0x12000, scoped, tag = 'internal scratch']
  %s0 = inlined_call_operand.vmem [shape: bf16[2,16,16,128], index: 0, kind: input, shape index: {}]
  %s1 = inlined_call_operand.vmem [shape: f32[2,128], index: 1, kind: input, shape index: {}]
  %s2 = inlined_call_operand.vmem [shape: bf16[2,16,16,128], index: 2, kind: input, shape index: {}]
  %s3 = inlined_call_operand.vmem [shape: f32[2,16,16,128], index: 3, kind: output, shape index: {}]
  %s4 = sld [smem:[#allocation0]]
  $region45: #{residual_block.5} parent=0
    _
  %s6 = ssub.s32 1, %s4
  %s7 = scalar_select 0, %s6, %s4
  loop: start=0, step=1, limit=4
  $region2: #{residual_block.5} parent=0 // loop_pre_header
    _
  $region3: #{residual_block.5} parent=0 // loop_header
    %s9 = sphi 0, %s13
    %p10 = scmp.ge.s32.totalorder %s9, 4
    %s19 = sphi 0, %s21
    %s22 = sphi 0, %s19
    %s23 = sphi 0, %s22
    %s39 = sphi 0, %s23
    %s43 = sphi 0, %s43
    %s45 = sphi 0, %s43
    %s46 = sphi 0, %s45
    %s60 = sphi 0, %s46
    %s66 = sphi 0, %s68
    %s69 = sphi 0, %s66
    %s70 = sphi 0, %s69
    %s86 = sphi 0, %s70
    %s92 = sphi 0, %s94
    %s95 = sphi 0, %s92
    %s96 = sphi 0, %s95
    %s112 = sphi 0, %s96
  $region4: #{residual_block.5} parent=0 // loop_header_branch
    %12 = sbr.rel (%p10) target = $region8
  $region5: #{residual_block.5} parent=0 // loop_body
    %s14 = ssub.s32 %s9, 1
    %s15 = ssub.s32 %s9, 2
    %s16 = sadd.s32 %s9, 1
    %s17 = ssub.s32 %s9, %s16
    %p18 = scmp.eq.s32.totalorder %s17, 0
    %s20 = sadd.s32 %s19, 1
    %s21 = scalar_select %p18, %s19, %s20
    %p24 = pneg %p18
    %p25 = scmp.eq.s32.totalorder %s9, 1
    %p26 = por %p24, %p25
    %p27 = scmp.ne.s32.totalorder %s19, %s22
    %p28 = scmp.eq.s32.totalorder %s9, 0
    %p29 = por %p27, %p28
    %p30 = scmp.ne.s32.totalorder %s19, %s22
    %p31 = scmp.eq.s32.totalorder %s14, 1
    %p32 = por %p30, %p31
    %p33 = scmp.ne.s32.totalorder %s22, %s23
    %p34 = scmp.eq.s32.totalorder %s14, 0
    %p35 = por %p33, %p34
    %p36 = scmp.ne.s32.totalorder %s22, %s23
    %p37 = scmp.eq.s32.totalorder %s15, 1
    %p38 = por %p36, %p37
    %p40 = scmp.ne.s32.totalorder %s23, %s39
    %p41 = scmp.eq.s32.totalorder %s15, 0
    %p42 = por %p40, %p41
    %s44 = sadd.s32 %s43, 1
    %p47 = scmp.eq.s32.totalorder %s9, 1
    %p48 = scmp.ne.s32.totalorder %s43, %s45
    %p49 = scmp.eq.s32.totalorder %s9, 0
    %p50 = por %p48, %p49
    %p51 = scmp.ne.s32.totalorder %s43, %s45
    %p52 = scmp.eq.s32.totalorder %s14, 1
    %p53 = por %p51, %p52
    %p54 = scmp.ne.s32.totalorder %s45, %s46
    %p55 = scmp.eq.s32.totalorder %s14, 0
    %p56 = por %p54, %p55
    %p57 = scmp.ne.s32.totalorder %s45, %s46
    %p58 = scmp.eq.s32.totalorder %s15, 1
    %p59 = por %p57, %p58
    %p61 = scmp.ne.s32.totalorder %s46, %s60
    %p62 = scmp.eq.s32.totalorder %s15, 0
    %p63 = por %p61, %p62
    %s64 = ssub.s32 %s9, %s16
    %p65 = scmp.eq.s32.totalorder %s64, 0
    %s67 = sadd.s32 %s66, 1
    %s68 = scalar_select %p65, %s66, %s67
    %p71 = pneg %p65
    %p72 = scmp.eq.s32.totalorder %s9, 1
    %p73 = por %p71, %p72
    %p74 = scmp.ne.s32.totalorder %s66, %s69
    %p75 = scmp.eq.s32.totalorder %s9, 0
    %p76 = por %p74, %p75
    %p77 = scmp.ne.s32.totalorder %s66, %s69
    %p78 = scmp.eq.s32.totalorder %s14, 1
    %p79 = por %p77, %p78
    %p80 = scmp.ne.s32.totalorder %s69, %s70
    %p81 = scmp.eq.s32.totalorder %s14, 0
    %p82 = por %p80, %p81
    %p83 = scmp.ne.s32.totalorder %s69, %s70
    %p84 = scmp.eq.s32.totalorder %s15, 1
    %p85 = por %p83, %p84
    %p87 = scmp.ne.s32.totalorder %s70, %s86
    %p88 = scmp.eq.s32.totalorder %s15, 0
    %p89 = por %p87, %p88
    %s90 = ssub.s32 %s9, %s16
    %p91 = scmp.eq.s32.totalorder %s90, 0
    %s93 = sadd.s32 %s92, 1
    %s94 = scalar_select %p91, %s92, %s93
    %p97 = pneg %p91
    %p98 = scmp.eq.s32.totalorder %s9, 1
    %p99 = por %p97, %p98
    %p100 = scmp.ne.s32.totalorder %s92, %s95
    %p101 = scmp.eq.s32.totalorder %s9, 0
    %p102 = por %p100, %p101
    %p103 = scmp.ne.s32.totalorder %s92, %s95
    %p104 = scmp.eq.s32.totalorder %s14, 1
    %p105 = por %p103, %p104
    %p106 = scmp.ne.s32.totalorder %s95, %s96
    %p107 = scmp.eq.s32.totalorder %s14, 0
    %p108 = por %p106, %p107
    %p109 = scmp.ne.s32.totalorder %s95, %s96
    %p110 = scmp.eq.s32.totalorder %s15, 1
    %p111 = por %p109, %p110
    %p113 = scmp.ne.s32.totalorder %s96, %s112
    %p114 = scmp.eq.s32.totalorder %s15, 0
    %p115 = por %p113, %p114
    %p116 = scmp.le.s32.totalorder 1, %s9
    %p117 = scmp.lt.s32.totalorder %s9, 3
    %p118 = pnand %p116, %p117
    %p119 = pneg %p118
    // Predicated region
    $region9: #{residual_block.5} parent=5 // pred_check
      _
    $region10: #{residual_block.5} parent=5 // pred_check_branch
      %121 = sbr.rel (%p118) target = $region12
    $region11: #{residual_block.5} parent=5 // pred_region
      %s122 = ssub.s32 %s9, 1
      // Predicated region
      $region13: #{residual_block.5} parent=11 // pred_check
        %p123 = pneg %p56
      $region14: #{residual_block.5} parent=11 // pred_check_branch
        %125 = sbr.rel (%p123) target = $region16
      $region15: #{residual_block.5} parent=11 // pred_region
        _
      $region16: #{residual_block.5} parent=11 // pred_fallthru
        _
    $region12: #{residual_block.5} parent=5 // pred_fallthru
      _
    %p126 = scmp.lt.s32.totalorder %s9, 2
    // Predicated region
    $region17: #{residual_block.5} parent=5 // pred_check
      %p127 = pneg %p126
    $region18: #{residual_block.5} parent=5 // pred_check_branch
      %129 = sbr.rel (%p127) target = $region20
    $region19: #{residual_block.5} parent=5 // pred_region
      // Predicated region
      $region21: #{residual_block.5} parent=19 // pred_check
        %p130 = pneg %p29
      $region22: #{residual_block.5} parent=19 // pred_check_branch
        %132 = sbr.rel (%p130) target = $region24
      $region23: #{residual_block.5} parent=19 // pred_region
        %p133 = scmp.lt.s32.totalorder %s9, 1
        %s134 = scalar_select %p133, %s9, 1
        %s135 = smul.addr %s134, 32
        %s136 = smul.addr %s135, 4
        %s137 = scalar_lea.vmem %s0, %s136
      $region24: #{residual_block.5} parent=19 // pred_fallthru
        _
      // Predicated region
      $region25: #{residual_block.5} parent=19 // pred_check
        %p138 = pneg %p76
      $region26: #{residual_block.5} parent=19 // pred_check_branch
        %140 = sbr.rel (%p138) target = $region28
      $region27: #{residual_block.5} parent=19 // pred_region
        %p141 = scmp.lt.s32.totalorder %s9, 1
        %s142 = scalar_select %p141, %s9, 1
        %s143 = smul.addr %s142, 32
        %s144 = smul.addr %s143, 4
        %s145 = scalar_lea.vmem %s2, %s144
      $region28: #{residual_block.5} parent=19 // pred_fallthru
        _
    $region20: #{residual_block.5} parent=5 // pred_fallthru
      _
    %p146 = scmp.le.s32.totalorder 1, %s9
    %p147 = scmp.lt.s32.totalorder %s9, 3
    %p148 = pnand %p146, %p147
    %p149 = pneg %p148
    // Predicated region
    $region29: #{residual_block.5} parent=5 // pred_check
      _
    $region30: #{residual_block.5} parent=5 // pred_check_branch
      %151 = sbr.rel (%p148) target = $region32
    $region31: #{residual_block.5} parent=5 // pred_region
      %s152 = ssub.s32 %s9, 1
      %p153 = scmp.lt.s32.totalorder %s14, 1
      %s154 = scalar_select %p153, %s14, 1
      %s155 = smul.addr %s154, 32
      %s156 = smul.addr %s155, 4
      %s157 = scalar_lea.vmem %s0, %s156
      %p158 = pneg %p35
      %p159 = pneg %p32
      %p160 = pneg %p56
      %p161 = pneg %p53
      %p162 = scmp.lt.s32.totalorder %s14, 1
      %s163 = scalar_select %p162, %s14, 1
      %s164 = smul.addr %s163, 32
      %s165 = smul.addr %s164, 4
      %s166 = scalar_lea.vmem %s2, %s165
      %p167 = pneg %p82
      %p168 = pneg %p79
      %p169 = pneg %p108
      %p170 = pneg %p105
      %p171 = scmp.lt.s32.totalorder %s14, 1
      %s172 = scalar_select %p171, %s14, 1
      %s173 = smul.addr %s172, 32
      %s174 = smul.addr %s173, 8
      %s175 = scalar_lea.vmem %s3, %s174
      %p176 = scmp.lt.s32.totalorder %s14, 1
      %s177 = scalar_select %p176, %s14, 1
      %s178 = smul.addr %s177, 32
      %s179 = smul.addr %s178, 4
      %s180 = scalar_lea.vmem %s0, %s179
      %p181 = scmp.lt.s32.totalorder %s14, 1
      %s182 = scalar_select %p181, %s14, 1
      %s183 = smul.addr %s182, 32
      %s184 = smul.addr %s183, 4
      %s185 = scalar_lea.vmem %s2, %s184
      %p186 = scmp.lt.s32.totalorder %s14, 1
      %s187 = scalar_select %p186, %s14, 1
      %s188 = smul.addr %s187, 32
      %s189 = smul.addr %s188, 8
      %s190 = scalar_lea.vmem %s3, %s189
      %v191 = vld [vmem:[%s1] sm:$0x1]
      %v192 = vld [vmem:[%s1 + $0x1] sm:$0x1]
      %v193 = vld [vmem:[%s180] sm:$0xf]
      %v194 = vld [vmem:[%s180 + $0x4] sm:$0xf]
      %v195 = vld [vmem:[%s180 + $0x8] sm:$0xf]
      %v196 = vld [vmem:[%s180 + $0xc] sm:$0xf]
      %v197 = vld [vmem:[%s180 + $0x10] sm:$0xf]
      %v198 = vld [vmem:[%s180 + $0x14] sm:$0xf]
      %v199 = vld [vmem:[%s180 + $0x18] sm:$0xf]
      %v200 = vld [vmem:[%s180 + $0x1c] sm:$0xf]
      %v201 = vld [vmem:[%s180 + $0x20] sm:$0xf]
      %v202 = vld [vmem:[%s180 + $0x24] sm:$0xf]
      %v203 = vld [vmem:[%s180 + $0x28] sm:$0xf]
      %v204 = vld [vmem:[%s180 + $0x2c] sm:$0xf]
      %v205 = vld [vmem:[%s180 + $0x30] sm:$0xf]
      %v206 = vld [vmem:[%s180 + $0x34] sm:$0xf]
      %v207 = vld [vmem:[%s180 + $0x38] sm:$0xf]
      %v208 = vld [vmem:[%s180 + $0x3c] sm:$0xf]
      %v209 = vld [vmem:[%s180 + $0x40] sm:$0xf]
      %v210 = vld [vmem:[%s180 + $0x44] sm:$0xf]
      %v211 = vld [vmem:[%s180 + $0x48] sm:$0xf]
      %v212 = vld [vmem:[%s180 + $0x4c] sm:$0xf]
      %v213 = vld [vmem:[%s180 + $0x50] sm:$0xf]
      %v214 = vld [vmem:[%s180 + $0x54] sm:$0xf]
      %v215 = vld [vmem:[%s180 + $0x58] sm:$0xf]
      %v216 = vld [vmem:[%s180 + $0x5c] sm:$0xf]
      %v217 = vld [vmem:[%s180 + $0x60] sm:$0xf]
      %v218 = vld [vmem:[%s180 + $0x64] sm:$0xf]
      %v219 = vld [vmem:[%s180 + $0x68] sm:$0xf]
      %v220 = vld [vmem:[%s180 + $0x6c] sm:$0xf]
      %v221 = vld [vmem:[%s180 + $0x70] sm:$0xf]
      %v222 = vld [vmem:[%s180 + $0x74] sm:$0xf]
      %v223 = vld [vmem:[%s180 + $0x78] sm:$0xf]
      %v224 = vld [vmem:[%s180 + $0x7c] sm:$0xf]
      %v225 = vunpack.c.l.bf16 %v193
      %v226 = vunpack.c.l.bf16 %v194
      %v227 = vunpack.c.l.bf16 %v195
      %v228 = vunpack.c.l.bf16 %v196
      %v229 = vunpack.c.l.bf16 %v197
      %v230 = vunpack.c.l.bf16 %v198
      %v231 = vunpack.c.l.bf16 %v199
      %v232 = vunpack.c.l.bf16 %v200
      %v233 = vunpack.c.l.bf16 %v201
      %v234 = vunpack.c.l.bf16 %v202
      %v235 = vunpack.c.l.bf16 %v203
      %v236 = vunpack.c.l.bf16 %v204
      %v237 = vunpack.c.l.bf16 %v205
      %v238 = vunpack.c.l.bf16 %v206
      %v239 = vunpack.c.l.bf16 %v207
      %v240 = vunpack.c.l.bf16 %v208
      %v241 = vunpack.c.l.bf16 %v209
      %v242 = vunpack.c.l.bf16 %v210
      %v243 = vunpack.c.l.bf16 %v211
      %v244 = vunpack.c.l.bf16 %v212
      %v245 = vunpack.c.l.bf16 %v213
      %v246 = vunpack.c.l.bf16 %v214
      %v247 = vunpack.c.l.bf16 %v215
      %v248 = vunpack.c.l.bf16 %v216
      %v249 = vunpack.c.l.bf16 %v217
      %v250 = vunpack.c.l.bf16 %v218
      %v251 = vunpack.c.l.bf16 %v219
      %v252 = vunpack.c.l.bf16 %v220
      %v253 = vunpack.c.l.bf16 %v221
      %v254 = vunpack.c.l.bf16 %v222
      %v255 = vunpack.c.l.bf16 %v223
      %v256 = vunpack.c.l.bf16 %v224
      %v257 = vlaneseq
      %v258 = vshrl.u32 %v257, 7
      %v259 = vsub.s32 0, %v258
      %v260 = vrot.slane %v191, %v259
      %v261 = vmul.f32 %v225, %v260
      %v262 = vmul.f32 %v226, %v260
      %v263 = vmul.f32 %v227, %v260
      %v264 = vmul.f32 %v228, %v260
      %v265 = vmul.f32 %v229, %v260
      %v266 = vmul.f32 %v230, %v260
      %v267 = vmul.f32 %v231, %v260
      %v268 = vmul.f32 %v232, %v260
      %v269 = vmul.f32 %v233, %v260
      %v270 = vmul.f32 %v234, %v260
      %v271 = vmul.f32 %v235, %v260
      %v272 = vmul.f32 %v236, %v260
      %v273 = vmul.f32 %v237, %v260
      %v274 = vmul.f32 %v238, %v260
      %v275 = vmul.f32 %v239, %v260
      %v276 = vmul.f32 %v240, %v260
      %v277 = vmul.f32 %v241, %v260
      %v278 = vmul.f32 %v242, %v260
      %v279 = vmul.f32 %v243, %v260
      %v280 = vmul.f32 %v244, %v260
      %v281 = vmul.f32 %v245, %v260
      %v282 = vmul.f32 %v246, %v260
      %v283 = vmul.f32 %v247, %v260
      %v284 = vmul.f32 %v248, %v260
      %v285 = vmul.f32 %v249, %v260
      %v286 = vmul.f32 %v250, %v260
      %v287 = vmul.f32 %v251, %v260
      %v288 = vmul.f32 %v252, %v260
      %v289 = vmul.f32 %v253, %v260
      %v290 = vmul.f32 %v254, %v260
      %v291 = vmul.f32 %v255, %v260
      %v292 = vmul.f32 %v256, %v260
      %v293 = vlaneseq
      %v294 = vshrl.u32 %v293, 7
      %v295 = vsub.s32 0, %v294
      %v296 = vrot.slane %v192, %v295
      %v297 = vadd.f32 %v261, %v296
      %v298 = vadd.f32 %v262, %v296
      %v299 = vadd.f32 %v263, %v296
      %v300 = vadd.f32 %v264, %v296
      %v301 = vadd.f32 %v265, %v296
      %v302 = vadd.f32 %v266, %v296
      %v303 = vadd.f32 %v267, %v296
      %v304 = vadd.f32 %v268, %v296
      %v305 = vadd.f32 %v269, %v296
      %v306 = vadd.f32 %v270, %v296
      %v307 = vadd.f32 %v271, %v296
      %v308 = vadd.f32 %v272, %v296
      %v309 = vadd.f32 %v273, %v296
      %v310 = vadd.f32 %v274, %v296
      %v311 = vadd.f32 %v275, %v296
      %v312 = vadd.f32 %v276, %v296
      %v313 = vadd.f32 %v277, %v296
      %v314 = vadd.f32 %v278, %v296
      %v315 = vadd.f32 %v279, %v296
      %v316 = vadd.f32 %v280, %v296
      %v317 = vadd.f32 %v281, %v296
      %v318 = vadd.f32 %v282, %v296
      %v319 = vadd.f32 %v283, %v296
      %v320 = vadd.f32 %v284, %v296
      %v321 = vadd.f32 %v285, %v296
      %v322 = vadd.f32 %v286, %v296
      %v323 = vadd.f32 %v287, %v296
      %v324 = vadd.f32 %v288, %v296
      %v325 = vadd.f32 %v289, %v296
      %v326 = vadd.f32 %v290, %v296
      %v327 = vadd.f32 %v291, %v296
      %v328 = vadd.f32 %v292, %v296
      %v329 = vmax.f32 %v297, 0.0
      %v330 = vmax.f32 %v298, 0.0
      %v331 = vmax.f32 %v299, 0.0
      %v332 = vmax.f32 %v300, 0.0
      %v333 = vmax.f32 %v301, 0.0
      %v334 = vmax.f32 %v302, 0.0
      %v335 = vmax.f32 %v303, 0.0
      %v336 = vmax.f32 %v304, 0.0
      %v337 = vmax.f32 %v305, 0.0
      %v338 = vmax.f32 %v306, 0.0
      %v339 = vmax.f32 %v307, 0.0
      %v340 = vmax.f32 %v308, 0.0
      %v341 = vmax.f32 %v309, 0.0
      %v342 = vmax.f32 %v310, 0.0
      %v343 = vmax.f32 %v311, 0.0
      %v344 = vmax.f32 %v312, 0.0
      %v345 = vmax.f32 %v313, 0.0
      %v346 = vmax.f32 %v314, 0.0
      %v347 = vmax.f32 %v315, 0.0
      %v348 = vmax.f32 %v316, 0.0
      %v349 = vmax.f32 %v317, 0.0
      %v350 = vmax.f32 %v318, 0.0
      %v351 = vmax.f32 %v319, 0.0
      %v352 = vmax.f32 %v320, 0.0
      %v353 = vmax.f32 %v321, 0.0
      %v354 = vmax.f32 %v322, 0.0
      %v355 = vmax.f32 %v323, 0.0
      %v356 = vmax.f32 %v324, 0.0
      %v357 = vmax.f32 %v325, 0.0
      %v358 = vmax.f32 %v326, 0.0
      %v359 = vmax.f32 %v327, 0.0
      %v360 = vmax.f32 %v328, 0.0
      %v361 = vld [vmem:[%s185] sm:$0xf]
      %v362 = vld [vmem:[%s185 + $0x4] sm:$0xf]
      %v363 = vld [vmem:[%s185 + $0x8] sm:$0xf]
      %v364 = vld [vmem:[%s185 + $0xc] sm:$0xf]
      %v365 = vld [vmem:[%s185 + $0x10] sm:$0xf]
      %v366 = vld [vmem:[%s185 + $0x14] sm:$0xf]
      %v367 = vld [vmem:[%s185 + $0x18] sm:$0xf]
      %v368 = vld [vmem:[%s185 + $0x1c] sm:$0xf]
      %v369 = vld [vmem:[%s185 + $0x20] sm:$0xf]
      %v370 = vld [vmem:[%s185 + $0x24] sm:$0xf]
      %v371 = vld [vmem:[%s185 + $0x28] sm:$0xf]
      %v372 = vld [vmem:[%s185 + $0x2c] sm:$0xf]
      %v373 = vld [vmem:[%s185 + $0x30] sm:$0xf]
      %v374 = vld [vmem:[%s185 + $0x34] sm:$0xf]
      %v375 = vld [vmem:[%s185 + $0x38] sm:$0xf]
      %v376 = vld [vmem:[%s185 + $0x3c] sm:$0xf]
      %v377 = vld [vmem:[%s185 + $0x40] sm:$0xf]
      %v378 = vld [vmem:[%s185 + $0x44] sm:$0xf]
      %v379 = vld [vmem:[%s185 + $0x48] sm:$0xf]
      %v380 = vld [vmem:[%s185 + $0x4c] sm:$0xf]
      %v381 = vld [vmem:[%s185 + $0x50] sm:$0xf]
      %v382 = vld [vmem:[%s185 + $0x54] sm:$0xf]
      %v383 = vld [vmem:[%s185 + $0x58] sm:$0xf]
      %v384 = vld [vmem:[%s185 + $0x5c] sm:$0xf]
      %v385 = vld [vmem:[%s185 + $0x60] sm:$0xf]
      %v386 = vld [vmem:[%s185 + $0x64] sm:$0xf]
      %v387 = vld [vmem:[%s185 + $0x68] sm:$0xf]
      %v388 = vld [vmem:[%s185 + $0x6c] sm:$0xf]
      %v389 = vld [vmem:[%s185 + $0x70] sm:$0xf]
      %v390 = vld [vmem:[%s185 + $0x74] sm:$0xf]
      %v391 = vld [vmem:[%s185 + $0x78] sm:$0xf]
      %v392 = vld [vmem:[%s185 + $0x7c] sm:$0xf]
      %v393 = vunpack.c.l.bf16 %v361
      %v394 = vunpack.c.l.bf16 %v362
      %v395 = vunpack.c.l.bf16 %v363
      %v396 = vunpack.c.l.bf16 %v364
      %v397 = vunpack.c.l.bf16 %v365
      %v398 = vunpack.c.l.bf16 %v366
      %v399 = vunpack.c.l.bf16 %v367
      %v400 = vunpack.c.l.bf16 %v368
      %v401 = vunpack.c.l.bf16 %v369
      %v402 = vunpack.c.l.bf16 %v370
      %v403 = vunpack.c.l.bf16 %v371
      %v404 = vunpack.c.l.bf16 %v372
      %v405 = vunpack.c.l.bf16 %v373
      %v406 = vunpack.c.l.bf16 %v374
      %v407 = vunpack.c.l.bf16 %v375
      %v408 = vunpack.c.l.bf16 %v376
      %v409 = vunpack.c.l.bf16 %v377
      %v410 = vunpack.c.l.bf16 %v378
      %v411 = vunpack.c.l.bf16 %v379
      %v412 = vunpack.c.l.bf16 %v380
      %v413 = vunpack.c.l.bf16 %v381
      %v414 = vunpack.c.l.bf16 %v382
      %v415 = vunpack.c.l.bf16 %v383
      %v416 = vunpack.c.l.bf16 %v384
      %v417 = vunpack.c.l.bf16 %v385
      %v418 = vunpack.c.l.bf16 %v386
      %v419 = vunpack.c.l.bf16 %v387
      %v420 = vunpack.c.l.bf16 %v388
      %v421 = vunpack.c.l.bf16 %v389
      %v422 = vunpack.c.l.bf16 %v390
      %v423 = vunpack.c.l.bf16 %v391
      %v424 = vunpack.c.l.bf16 %v392
      %v425 = vadd.f32 %v329, %v393
      %v426 = vadd.f32 %v330, %v394
      %v427 = vadd.f32 %v331, %v395
      %v428 = vadd.f32 %v332, %v396
      %v429 = vadd.f32 %v333, %v397
      %v430 = vadd.f32 %v334, %v398
      %v431 = vadd.f32 %v335, %v399
      %v432 = vadd.f32 %v336, %v400
      %v433 = vadd.f32 %v337, %v401
      %v434 = vadd.f32 %v338, %v402
      %v435 = vadd.f32 %v339, %v403
      %v436 = vadd.f32 %v340, %v404
      %v437 = vadd.f32 %v341, %v405
      %v438 = vadd.f32 %v342, %v406
      %v439 = vadd.f32 %v343, %v407
      %v440 = vadd.f32 %v344, %v408
      %v441 = vadd.f32 %v345, %v409
      %v442 = vadd.f32 %v346, %v410
      %v443 = vadd.f32 %v347, %v411
      %v444 = vadd.f32 %v348, %v412
      %v445 = vadd.f32 %v349, %v413
      %v446 = vadd.f32 %v350, %v414
      %v447 = vadd.f32 %v351, %v415
      %v448 = vadd.f32 %v352, %v416
      %v449 = vadd.f32 %v353, %v417
      %v450 = vadd.f32 %v354, %v418
      %v451 = vadd.f32 %v355, %v419
      %v452 = vadd.f32 %v356, %v420
      %v453 = vadd.f32 %v357, %v421
      %v454 = vadd.f32 %v358, %v422
      %v455 = vadd.f32 %v359, %v423
      %v456 = vadd.f32 %v360, %v424
      %457 = vst [vmem:[%s190] sm:$0xff] %v425
      %458 = vst [vmem:[%s190 + $0x8] sm:$0xff] %v426
      %459 = vst [vmem:[%s190 + $0x10] sm:$0xff] %v427
      %460 = vst [vmem:[%s190 + $0x18] sm:$0xff] %v428
      %461 = vst [vmem:[%s190 + $0x20] sm:$0xff] %v429
      %462 = vst [vmem:[%s190 + $0x28] sm:$0xff] %v430
      %463 = vst [vmem:[%s190 + $0x30] sm:$0xff] %v431
      %464 = vst [vmem:[%s190 + $0x38] sm:$0xff] %v432
      %465 = vst [vmem:[%s190 + $0x40] sm:$0xff] %v433
      %466 = vst [vmem:[%s190 + $0x48] sm:$0xff] %v434
      %467 = vst [vmem:[%s190 + $0x50] sm:$0xff] %v435
      %468 = vst [vmem:[%s190 + $0x58] sm:$0xff] %v436
      %469 = vst [vmem:[%s190 + $0x60] sm:$0xff] %v437
      %470 = vst [vmem:[%s190 + $0x68] sm:$0xff] %v438
      %471 = vst [vmem:[%s190 + $0x70] sm:$0xff] %v439
      %472 = vst [vmem:[%s190 + $0x78] sm:$0xff] %v440
      %473 = vst [vmem:[%s190 + $0x80] sm:$0xff] %v441
      %474 = vst [vmem:[%s190 + $0x88] sm:$0xff] %v442
      %475 = vst [vmem:[%s190 + $0x90] sm:$0xff] %v443
      %476 = vst [vmem:[%s190 + $0x98] sm:$0xff] %v444
      %477 = vst [vmem:[%s190 + $0xa0] sm:$0xff] %v445
      %478 = vst [vmem:[%s190 + $0xa8] sm:$0xff] %v446
      %479 = vst [vmem:[%s190 + $0xb0] sm:$0xff] %v447
      %480 = vst [vmem:[%s190 + $0xb8] sm:$0xff] %v448
      %481 = vst [vmem:[%s190 + $0xc0] sm:$0xff] %v449
      %482 = vst [vmem:[%s190 + $0xc8] sm:$0xff] %v450
      %483 = vst [vmem:[%s190 + $0xd0] sm:$0xff] %v451
      %484 = vst [vmem:[%s190 + $0xd8] sm:$0xff] %v452
      %485 = vst [vmem:[%s190 + $0xe0] sm:$0xff] %v453
      %486 = vst [vmem:[%s190 + $0xe8] sm:$0xff] %v454
      %487 = vst [vmem:[%s190 + $0xf0] sm:$0xff] %v455
      %488 = vst [vmem:[%s190 + $0xf8] sm:$0xff] %v456
      %p489 = scmp.lt.s32.totalorder %s14, 1
      %s490 = scalar_select %p489, %s14, 1
      %s491 = smul.addr %s490, 32
      %s492 = smul.addr %s491, 8
      %s493 = scalar_lea.vmem %s3, %s492
      // Predicated region
      $region33: #{residual_block.5} parent=31 // pred_check
        %p494 = pneg %p105
      $region34: #{residual_block.5} parent=31 // pred_check_branch
        %496 = sbr.rel (%p494) target = $region36
      $region35: #{residual_block.5} parent=31 // pred_region
        _
      $region36: #{residual_block.5} parent=31 // pred_fallthru
        _
    $region32: #{residual_block.5} parent=5 // pred_fallthru
      _
    %p497 = scmp.le.s32.totalorder 2, %s9
    // Predicated region
    $region37: #{residual_block.5} parent=5 // pred_check
      %p498 = pneg %p497
    $region38: #{residual_block.5} parent=5 // pred_check_branch
      %500 = sbr.rel (%p498) target = $region40
    $region39: #{residual_block.5} parent=5 // pred_region
      %s501 = ssub.s32 %s9, 2
      // Predicated region
      $region41: #{residual_block.5} parent=39 // pred_check
        %p502 = pneg %p111
      $region42: #{residual_block.5} parent=39 // pred_check_branch
        %504 = sbr.rel (%p502) target = $region44
      $region43: #{residual_block.5} parent=39 // pred_region
        %p505 = scmp.lt.s32.totalorder %s15, 1
        %s506 = scalar_select %p505, %s15, 1
        %s507 = smul.addr %s506, 32
        %s508 = smul.addr %s507, 8
        %s509 = scalar_lea.vmem %s3, %s508
      $region44: #{residual_block.5} parent=39 // pred_fallthru
        _
    $region40: #{residual_block.5} parent=5 // pred_fallthru
      _
  $region6: #{residual_block.5} parent=0 // loop_footer
    %s13 = sadd.s32 1, %s9
  $region7: #{residual_block.5} parent=0 // loop_footer_branch
    %8 = sbr.rel target = $region3
  $region8: #{residual_block.5} parent=0 // loop_exit
    _

// kernel: residual_block.3
$region0: #{residual_block.3}
  #allocation0 [shape = 'u32[]', space=smem, size = 0x4, offset = 0x4, fixed_abs, tag = 'smem constant byte address 0x4 - core index']
  #allocation1 [shape = 'u32[144,128]{1,0:T(1,128)}', space=vmem, size = 0x12000, scoped, tag = 'internal scratch']
  %s0 = inlined_call_operand.vmem [shape: bf16[2,18,18,128], index: 0, kind: input, shape index: {}]
  %s1 = inlined_call_operand.vmem [shape: bf16[3,384,128], index: 1, kind: input, shape index: {}]
  %s2 = inlined_call_operand.vmem [shape: bf16[2,16,16,128], index: 2, kind: output, shape index: {0}]
  %s3 = inlined_call_operand.vmem [shape: f32[2,2,128], index: 3, kind: output, shape index: {1}]
  %4 = xla_tuple %s2, %s3
  %s5 = sld [smem:[#allocation0]]
  $region49: #{residual_block.3} parent=0
    _
  %s7 = ssub.s32 1, %s5
  %s8 = scalar_select 0, %s7, %s5
  loop: start=0, step=1, limit=4
  $region2: #{residual_block.3} parent=0 // loop_pre_header
    _
  $region3: #{residual_block.3} parent=0 // loop_header
    %s10 = sphi 0, %s14
    %p11 = scmp.ge.s32.totalorder %s10, 4
    %s20 = sphi 0, %s22
    %s23 = sphi 0, %s20
    %s24 = sphi 0, %s23
    %s40 = sphi 0, %s24
    %s44 = sphi 0, %s44
    %s46 = sphi 0, %s44
    %s47 = sphi 0, %s46
    %s61 = sphi 0, %s47
    %s67 = sphi 0, %s69
    %s70 = sphi 0, %s67
    %s71 = sphi 0, %s70
    %s87 = sphi 0, %s71
    %s93 = sphi 0, %s95
    %s96 = sphi 0, %s93
    %s97 = sphi 0, %s96
    %s113 = sphi 0, %s97
  $region4: #{residual_block.3} parent=0 // loop_header_branch
    %13 = sbr.rel (%p11) target = $region8
  $region5: #{residual_block.3} parent=0 // loop_body
    %s15 = ssub.s32 %s10, 1
    %s16 = ssub.s32 %s10, 2
    %s17 = sadd.s32 %s10, 1
    %s18 = ssub.s32 %s10, %s17
    %p19 = scmp.eq.s32.totalorder %s18, 0
    %s21 = sadd.s32 %s20, 1
    %s22 = scalar_select %p19, %s20, %s21
    %p25 = pneg %p19
    %p26 = scmp.eq.s32.totalorder %s10, 1
    %p27 = por %p25, %p26
    %p28 = scmp.ne.s32.totalorder %s20, %s23
    %p29 = scmp.eq.s32.totalorder %s10, 0
    %p30 = por %p28, %p29
    %p31 = scmp.ne.s32.totalorder %s20, %s23
    %p32 = scmp.eq.s32.totalorder %s15, 1
    %p33 = por %p31, %p32
    %p34 = scmp.ne.s32.totalorder %s23, %s24
    %p35 = scmp.eq.s32.totalorder %s15, 0
    %p36 = por %p34, %p35
    %p37 = scmp.ne.s32.totalorder %s23, %s24
    %p38 = scmp.eq.s32.totalorder %s16, 1
    %p39 = por %p37, %p38
    %p41 = scmp.ne.s32.totalorder %s24, %s40
    %p42 = scmp.eq.s32.totalorder %s16, 0
    %p43 = por %p41, %p42
    %s45 = sadd.s32 %s44, 1
    %p48 = scmp.eq.s32.totalorder %s10, 1
    %p49 = scmp.ne.s32.totalorder %s44, %s46
    %p50 = scmp.eq.s32.totalorder %s10, 0
    %p51 = por %p49, %p50
    %p52 = scmp.ne.s32.totalorder %s44, %s46
    %p53 = scmp.eq.s32.totalorder %s15, 1
    %p54 = por %p52, %p53
    %p55 = scmp.ne.s32.totalorder %s46, %s47
    %p56 = scmp.eq.s32.totalorder %s15, 0
    %p57 = por %p55, %p56
    %p58 = scmp.ne.s32.totalorder %s46, %s47
    %p59 = scmp.eq.s32.totalorder %s16, 1
    %p60 = por %p58, %p59
    %p62 = scmp.ne.s32.totalorder %s47, %s61
    %p63 = scmp.eq.s32.totalorder %s16, 0
    %p64 = por %p62, %p63
    %s65 = ssub.s32 %s10, %s17
    %p66 = scmp.eq.s32.totalorder %s65, 0
    %s68 = sadd.s32 %s67, 1
    %s69 = scalar_select %p66, %s67, %s68
    %p72 = pneg %p66
    %p73 = scmp.eq.s32.totalorder %s10, 1
    %p74 = por %p72, %p73
    %p75 = scmp.ne.s32.totalorder %s67, %s70
    %p76 = scmp.eq.s32.totalorder %s10, 0
    %p77 = por %p75, %p76
    %p78 = scmp.ne.s32.totalorder %s67, %s70
    %p79 = scmp.eq.s32.totalorder %s15, 1
    %p80 = por %p78, %p79
    %p81 = scmp.ne.s32.totalorder %s70, %s71
    %p82 = scmp.eq.s32.totalorder %s15, 0
    %p83 = por %p81, %p82
    %p84 = scmp.ne.s32.totalorder %s70, %s71
    %p85 = scmp.eq.s32.totalorder %s16, 1
    %p86 = por %p84, %p85
    %p88 = scmp.ne.s32.totalorder %s71, %s87
    %p89 = scmp.eq.s32.totalorder %s16, 0
    %p90 = por %p88, %p89
    %s91 = ssub.s32 %s10, %s17
    %p92 = scmp.eq.s32.totalorder %s91, 0
    %s94 = sadd.s32 %s93, 1
    %s95 = scalar_select %p92, %s93, %s94
    %p98 = pneg %p92
    %p99 = scmp.eq.s32.totalorder %s10, 1
    %p100 = por %p98, %p99
    %p101 = scmp.ne.s32.totalorder %s93, %s96
    %p102 = scmp.eq.s32.totalorder %s10, 0
    %p103 = por %p101, %p102
    %p104 = scmp.ne.s32.totalorder %s93, %s96
    %p105 = scmp.eq.s32.totalorder %s15, 1
    %p106 = por %p104, %p105
    %p107 = scmp.ne.s32.totalorder %s96, %s97
    %p108 = scmp.eq.s32.totalorder %s15, 0
    %p109 = por %p107, %p108
    %p110 = scmp.ne.s32.totalorder %s96, %s97
    %p111 = scmp.eq.s32.totalorder %s16, 1
    %p112 = por %p110, %p111
    %p114 = scmp.ne.s32.totalorder %s97, %s113
    %p115 = scmp.eq.s32.totalorder %s16, 0
    %p116 = por %p114, %p115
    %p117 = scmp.le.s32.totalorder 1, %s10
    %p118 = scmp.lt.s32.totalorder %s10, 3
    %p119 = pnand %p117, %p118
    %p120 = pneg %p119
    // Predicated region
    $region9: #{residual_block.3} parent=5 // pred_check
      _
    $region10: #{residual_block.3} parent=5 // pred_check_branch
      %122 = sbr.rel (%p119) target = $region12
    $region11: #{residual_block.3} parent=5 // pred_region
      %s123 = ssub.s32 %s10, 1
      // Predicated region
      $region13: #{residual_block.3} parent=11 // pred_check
        %p124 = pneg %p57
      $region14: #{residual_block.3} parent=11 // pred_check_branch
        %126 = sbr.rel (%p124) target = $region16
      $region15: #{residual_block.3} parent=11 // pred_region
        _
      $region16: #{residual_block.3} parent=11 // pred_fallthru
        _
    $region12: #{residual_block.3} parent=5 // pred_fallthru
      _
    %p127 = scmp.lt.s32.totalorder %s10, 2
    // Predicated region
    $region17: #{residual_block.3} parent=5 // pred_check
      %p128 = pneg %p127
    $region18: #{residual_block.3} parent=5 // pred_check_branch
      %130 = sbr.rel (%p128) target = $region20
    $region19: #{residual_block.3} parent=5 // pred_region
      // Predicated region
      $region21: #{residual_block.3} parent=19 // pred_check
        %p131 = pneg %p30
      $region22: #{residual_block.3} parent=19 // pred_check_branch
        %133 = sbr.rel (%p131) target = $region24
      $region23: #{residual_block.3} parent=19 // pred_region
        %p134 = scmp.lt.s32.totalorder %s10, 1
        %s135 = scalar_select %p134, %s10, 1
        %s136 = smul.addr %s135, 54
        %s137 = smul.addr %s136, 4
        %s138 = scalar_lea.vmem %s0, %s137
      $region24: #{residual_block.3} parent=19 // pred_fallthru
        _
    $region20: #{residual_block.3} parent=5 // pred_fallthru
      _
    %p139 = scmp.le.s32.totalorder 1, %s10
    %p140 = scmp.lt.s32.totalorder %s10, 3
    %p141 = pnand %p139, %p140
    %p142 = pneg %p141
    // Predicated region
    $region25: #{residual_block.3} parent=5 // pred_check
      _
    $region26: #{residual_block.3} parent=5 // pred_check_branch
      %144 = sbr.rel (%p141) target = $region28
    $region27: #{residual_block.3} parent=5 // pred_region
      %s145 = ssub.s32 %s10, 1
      %p146 = scmp.lt.s32.totalorder %s15, 1
      %s147 = scalar_select %p146, %s15, 1
      %s148 = smul.addr %s147, 54
      %s149 = smul.addr %s148, 4
      %s150 = scalar_lea.vmem %s0, %s149
      %p151 = pneg %p36
      %p152 = pneg %p33
      %p153 = pneg %p57
      %p154 = pneg %p54
      %p155 = pneg %p83
      %p156 = pneg %p80
      %p157 = scmp.lt.s32.totalorder %s15, 1
      %s158 = scalar_select %p157, %s15, 1
      %s159 = smul.addr %s158, 32
      %s160 = smul.addr %s159, 4
      %s161 = scalar_lea.vmem %s2, %s160
      %p162 = pneg %p109
      %p163 = pneg %p106
      %p164 = scmp.lt.s32.totalorder %s15, 1
      %s165 = scalar_select %p164, %s15, 1
      %s166 = smul.addr %s165, 2
      %s167 = scalar_lea.vmem %s3, %s166
      %p168 = scmp.lt.s32.totalorder %s15, 1
      %s169 = scalar_select %p168, %s15, 1
      %s170 = smul.addr %s169, 54
      %s171 = smul.addr %s170, 4
      %s172 = scalar_lea.vmem %s0, %s171
      %p173 = scmp.lt.s32.totalorder %s15, 1
      %s174 = scalar_select %p173, %s15, 1
      %s175 = smul.addr %s174, 32
      %s176 = smul.addr %s175, 4
      %s177 = scalar_lea.vmem %s2, %s176
      %p178 = scmp.lt.s32.totalorder %s15, 1
      %s179 = scalar_select %p178, %s15, 1
      %s180 = smul.addr %s179, 2
      %s181 = scalar_lea.vmem %s3, %s180
      %v183 = vld [vmem:[%s172] sm:$0xf]
      %v184 = vld [vmem:[%s172 + $0x4] sm:$0xf]
      %v185 = vld [vmem:[%s172 + $0xc] sm:$0xf]
      %v186 = vld [vmem:[%s172 + $0x10] sm:$0xf]
      %v187 = vld [vmem:[%s172 + $0x18] sm:$0xf]
      %v188 = vld [vmem:[%s172 + $0x1c] sm:$0xf]
      %v189 = vld [vmem:[%s172 + $0x24] sm:$0xf]
      %v190 = vld [vmem:[%s172 + $0x28] sm:$0xf]
      %v191 = vld [vmem:[%s172 + $0x30] sm:$0xf]
      %v192 = vld [vmem:[%s172 + $0x34] sm:$0xf]
      %v193 = vld [vmem:[%s172 + $0x3c] sm:$0xf]
      %v194 = vld [vmem:[%s172 + $0x40] sm:$0xf]
      %v195 = vld [vmem:[%s172 + $0x48] sm:$0xf]
      %v196 = vld [vmem:[%s172 + $0x4c] sm:$0xf]
      %v197 = vld [vmem:[%s172 + $0x54] sm:$0xf]
      %v198 = vld [vmem:[%s172 + $0x58] sm:$0xf]
      %v199 = vld [vmem:[%s172 + $0x60] sm:$0xf]
      %v200 = vld [vmem:[%s172 + $0x64] sm:$0xf]
      %v201 = vld [vmem:[%s172 + $0x6c] sm:$0xf]
      %v202 = vld [vmem:[%s172 + $0x70] sm:$0xf]
      %v203 = vld [vmem:[%s172 + $0x78] sm:$0xf]
      %v204 = vld [vmem:[%s172 + $0x7c] sm:$0xf]
      %v205 = vld [vmem:[%s172 + $0x84] sm:$0xf]
      %v206 = vld [vmem:[%s172 + $0x88] sm:$0xf]
      %v207 = vld [vmem:[%s172 + $0x90] sm:$0xf]
      %v208 = vld [vmem:[%s172 + $0x94] sm:$0xf]
      %v209 = vld [vmem:[%s172 + $0x9c] sm:$0xf]
      %v210 = vld [vmem:[%s172 + $0xa0] sm:$0xf]
      %v211 = vld [vmem:[%s172 + $0xa8] sm:$0xf]
      %v212 = vld [vmem:[%s172 + $0xac] sm:$0xf]
      %v213 = vld [vmem:[%s172 + $0xb4] sm:$0xf]
      %v214 = vld [vmem:[%s172 + $0xb8] sm:$0xf]
      %v215 = vld [vmem:[%s172 + $0x8] sm:$0x1]
      %v216 = vld [vmem:[%s172 + $0x14] sm:$0x1]
      %v217 = vld [vmem:[%s172 + $0x20] sm:$0x1]
      %v218 = vld [vmem:[%s172 + $0x2c] sm:$0x1]
      %v219 = vld [vmem:[%s172 + $0x38] sm:$0x1]
      %v220 = vld [vmem:[%s172 + $0x44] sm:$0x1]
      %v221 = vld [vmem:[%s172 + $0x50] sm:$0x1]
      %v222 = vld [vmem:[%s172 + $0x5c] sm:$0x1]
      %v223 = vld [vmem:[%s172 + $0x68] sm:$0x1]
      %v224 = vld [vmem:[%s172 + $0x74] sm:$0x1]
      %v225 = vld [vmem:[%s172 + $0x80] sm:$0x1]
      %v226 = vld [vmem:[%s172 + $0x8c] sm:$0x1]
      %v227 = vld [vmem:[%s172 + $0x98] sm:$0x1]
      %v228 = vld [vmem:[%s172 + $0xa4] sm:$0x1]
      %v229 = vld [vmem:[%s172 + $0xb0] sm:$0x1]
      %v230 = vld [vmem:[%s172 + $0xbc] sm:$0x1]
      %v231 = vld [vmem:[%s172] sm:$0xe]
      %v232 = vld [vmem:[%s172 + $0xc] sm:$0xe]
      %v233 = vld [vmem:[%s172 + $0x18] sm:$0xe]
      %v234 = vld [vmem:[%s172 + $0x24] sm:$0xe]
      %v235 = vld [vmem:[%s172 + $0x30] sm:$0xe]
      %v236 = vld [vmem:[%s172 + $0x3c] sm:$0xe]
      %v237 = vld [vmem:[%s172 + $0x48] sm:$0xe]
      %v238 = vld [vmem:[%s172 + $0x54] sm:$0xe]
      %v239 = vld [vmem:[%s172 + $0x60] sm:$0xe]
      %v240 = vld [vmem:[%s172 + $0x6c] sm:$0xe]
      %v241 = vld [vmem:[%s172 + $0x78] sm:$0xe]
      %v242 = vld [vmem:[%s172 + $0x84] sm:$0xe]
      %v243 = vld [vmem:[%s172 + $0x90] sm:$0xe]
      %v244 = vld [vmem:[%s172 + $0x9c] sm:$0xe]
      %v245 = vld [vmem:[%s172 + $0xa8] sm:$0xe]
      %v246 = vld [vmem:[%s172 + $0xb4] sm:$0xe]
      %v279 = vunpack.c.l.b16 %v183
      %v280 = vunpack.c.l.b16 %v184
      %v281 = vunpack.c.l.b16 %v185
      %v282 = vunpack.c.l.b16 %v186
      %v283 = vunpack.c.l.b16 %v187
      %v284 = vunpack.c.l.b16 %v188
      %v285 = vunpack.c.l.b16 %v189
      %v286 = vunpack.c.l.b16 %v190
      %v287 = vunpack.c.l.b16 %v191
      %v288 = vunpack.c.l.b16 %v192
      %v289 = vunpack.c.l.b16 %v193
      %v290 = vunpack.c.l.b16 %v194
      %v291 = vunpack.c.l.b16 %v195
      %v292 = vunpack.c.l.b16 %v196
      %v293 = vunpack.c.l.b16 %v197
      %v294 = vunpack.c.l.b16 %v198
      %v295 = vunpack.c.l.b16 %v199
      %v296 = vunpack.c.l.b16 %v200
      %v297 = vunpack.c.l.b16 %v201
      %v298 = vunpack.c.l.b16 %v202
      %v299 = vunpack.c.l.b16 %v203
      %v300 = vunpack.c.l.b16 %v204
      %v301 = vunpack.c.l.b16 %v205
      %v302 = vunpack.c.l.b16 %v206
      %v303 = vunpack.c.l.b16 %v207
      %v304 = vunpack.c.l.b16 %v208
      %v305 = vunpack.c.l.b16 %v209
      %v306 = vunpack.c.l.b16 %v210
      %v307 = vunpack.c.l.b16 %v211
      %v308 = vunpack.c.l.b16 %v212
      %v309 = vunpack.c.l.b16 %v213
      %v310 = vunpack.c.l.b16 %v214
      %v311 = vpack.c.b16 %v280, %v279
      %v312 = vpack.c.b16 %v282, %v281
      %v313 = vpack.c.b16 %v284, %v283
      %v314 = vpack.c.b16 %v286, %v285
      %v315 = vpack.c.b16 %v288, %v287
      %v316 = vpack.c.b16 %v290, %v289
      %v317 = vpack.c.b16 %v292, %v291
      %v318 = vpack.c.b16 %v294, %v293
      %v319 = vpack.c.b16 %v296, %v295
      %v320 = vpack.c.b16 %v298, %v297
      %v321 = vpack.c.b16 %v300, %v299
      %v322 = vpack.c.b16 %v302, %v301
      %v323 = vpack.c.b16 %v304, %v303
      %v324 = vpack.c.b16 %v306, %v305
      %v325 = vpack.c.b16 %v308, %v307
      %v326 = vpack.c.b16 %v310, %v309
      %v359 = vunpack.c.l.b16 %v215
      %v360 = vunpack.c.l.b16 %v216
      %v361 = vunpack.c.l.b16 %v217
      %v362 = vunpack.c.l.b16 %v218
      %v363 = vunpack.c.l.b16 %v219
      %v364 = vunpack.c.l.b16 %v220
      %v365 = vunpack.c.l.b16 %v221
      %v366 = vunpack.c.l.b16 %v222
      %v367 = vunpack.c.l.b16 %v223
      %v368 = vunpack.c.l.b16 %v224
      %v369 = vunpack.c.l.b16 %v225
      %v370 = vunpack.c.l.b16 %v226
      %v371 = vunpack.c.l.b16 %v227
      %v372 = vunpack.c.l.b16 %v228
      %v373 = vunpack.c.l.b16 %v229
      %v374 = vunpack.c.l.b16 %v230
      %v375 = vpack.c.b16 %v359, %v359
      %v376 = vpack.c.b16 %v360, %v360
      %v377 = vpack.c.b16 %v361, %v361
      %v378 = vpack.c.b16 %v362, %v362
      %v379 = vpack.c.b16 %v363, %v363
      %v380 = vpack.c.b16 %v364, %v364
      %v381 = vpack.c.b16 %v365, %v365
      %v382 = vpack.c.b16 %v366, %v366
      %v383 = vpack.c.b16 %v367, %v367
      %v384 = vpack.c.b16 %v368, %v368
      %v385 = vpack.c.b16 %v369, %v369
      %v386 = vpack.c.b16 %v370, %v370
      %v387 = vpack.c.b16 %v371, %v371
      %v388 = vpack.c.b16 %v372, %v372
      %v389 = vpack.c.b16 %v373, %v373
      %v390 = vpack.c.b16 %v374, %v374
      %vm391 = vsmask.f32 7424
      %v393 = vshrl.u32 %v311, 16
      %v395 = vshll.u32 %v311, 16
      %v397 = vrot.slane %v395, 1
      %v398 = vor.u32 %v393, %v397
      %v400 = vshll.u32 %v375, 16
      %v402 = vrot.slane %v400, 1
      %v403 = vsel %vm391, %v398, %v402
      %v405 = vshrl.u32 %v312, 16
      %v407 = vshll.u32 %v312, 16
      %v409 = vrot.slane %v407, 1
      %v410 = vor.u32 %v405, %v409
      %v412 = vshll.u32 %v376, 16
      %v414 = vrot.slane %v412, 1
      %v415 = vsel %vm391, %v410, %v414
      %v417 = vshrl.u32 %v313, 16
      %v419 = vshll.u32 %v313, 16
      %v421 = vrot.slane %v419, 1
      %v422 = vor.u32 %v417, %v421
      %v424 = vshll.u32 %v377, 16
      %v426 = vrot.slane %v424, 1
      %v427 = vsel %vm391, %v422, %v426
      %v429 = vshrl.u32 %v314, 16
      %v431 = vshll.u32 %v314, 16
      %v433 = vrot.slane %v431, 1
      %v434 = vor.u32 %v429, %v433
      %v436 = vshll.u32 %v378, 16
      %v438 = vrot.slane %v436, 1
      %v439 = vsel %vm391, %v434, %v438
      %v441 = vshrl.u32 %v315, 16
      %v443 = vshll.u32 %v315, 16
      %v445 = vrot.slane %v443, 1
      %v446 = vor.u32 %v441, %v445
      %v448 = vshll.u32 %v379, 16
      %v450 = vrot.slane %v448, 1
      %v451 = vsel %vm391, %v446, %v450
      %v453 = vshrl.u32 %v316, 16
      %v455 = vshll.u32 %v316, 16
      %v457 = vrot.slane %v455, 1
      %v458 = vor.u32 %v453, %v457
      %v460 = vshll.u32 %v380, 16
      %v462 = vrot.slane %v460, 1
      %v463 = vsel %vm391, %v458, %v462
      %v465 = vshrl.u32 %v317, 16
      %v467 = vshll.u32 %v317, 16
      %v469 = vrot.slane %v467, 1
      %v470 = vor.u32 %v465, %v469
      %v472 = vshll.u32 %v381, 16
      %v474 = vrot.slane %v472, 1
      %v475 = vsel %vm391, %v470, %v474
      %v477 = vshrl.u32 %v318, 16
      %v479 = vshll.u32 %v318, 16
      %v481 = vrot.slane %v479, 1
      %v482 = vor.u32 %v477, %v481
      %v484 = vshll.u32 %v382, 16
      %v486 = vrot.slane %v484, 1
      %v487 = vsel %vm391, %v482, %v486
      %v489 = vshrl.u32 %v319, 16
      %v491 = vshll.u32 %v319, 16
      %v493 = vrot.slane %v491, 1
      %v494 = vor.u32 %v489, %v493
      %v496 = vshll.u32 %v383, 16
      %v498 = vrot.slane %v496, 1
      %v499 = vsel %vm391, %v494, %v498
      %v501 = vshrl.u32 %v320, 16
      %v503 = vshll.u32 %v320, 16
      %v505 = vrot.slane %v503, 1
      %v506 = vor.u32 %v501, %v505
      %v508 = vshll.u32 %v384, 16
      %v510 = vrot.slane %v508, 1
      %v511 = vsel %vm391, %v506, %v510
      %v513 = vshrl.u32 %v321, 16
      %v515 = vshll.u32 %v321, 16
      %v517 = vrot.slane %v515, 1
      %v518 = vor.u32 %v513, %v517
      %v520 = vshll.u32 %v385, 16
      %v522 = vrot.slane %v520, 1
      %v523 = vsel %vm391, %v518, %v522
      %v525 = vshrl.u32 %v322, 16
      %v527 = vshll.u32 %v322, 16
      %v529 = vrot.slane %v527, 1
      %v530 = vor.u32 %v525, %v529
      %v532 = vshll.u32 %v386, 16
      %v534 = vrot.slane %v532, 1
      %v535 = vsel %vm391, %v530, %v534
      %v537 = vshrl.u32 %v323, 16
      %v539 = vshll.u32 %v323, 16
      %v541 = vrot.slane %v539, 1
      %v542 = vor.u32 %v537, %v541
      %v544 = vshll.u32 %v387, 16
      %v546 = vrot.slane %v544, 1
      %v547 = vsel %vm391, %v542, %v546
      %v549 = vshrl.u32 %v324, 16
      %v551 = vshll.u32 %v324, 16
      %v553 = vrot.slane %v551, 1
      %v554 = vor.u32 %v549, %v553
      %v556 = vshll.u32 %v388, 16
      %v558 = vrot.slane %v556, 1
      %v559 = vsel %vm391, %v554, %v558
      %v561 = vshrl.u32 %v325, 16
      %v563 = vshll.u32 %v325, 16
      %v565 = vrot.slane %v563, 1
      %v566 = vor.u32 %v561, %v565
      %v568 = vshll.u32 %v389, 16
      %v570 = vrot.slane %v568, 1
      %v571 = vsel %vm391, %v566, %v570
      %v573 = vshrl.u32 %v326, 16
      %v575 = vshll.u32 %v326, 16
      %v577 = vrot.slane %v575, 1
      %v578 = vor.u32 %v573, %v577
      %v580 = vshll.u32 %v390, 16
      %v582 = vrot.slane %v580, 1
      %v583 = vsel %vm391, %v578, %v582
      %v616 = vunpack.c.l.b16 %v231
      %v617 = vunpack.c.l.b16 %v232
      %v618 = vunpack.c.l.b16 %v233
      %v619 = vunpack.c.l.b16 %v234
      %v620 = vunpack.c.l.b16 %v235
      %v621 = vunpack.c.l.b16 %v236
      %v622 = vunpack.c.l.b16 %v237
      %v623 = vunpack.c.l.b16 %v238
      %v624 = vunpack.c.l.b16 %v239
      %v625 = vunpack.c.l.b16 %v240
      %v626 = vunpack.c.l.b16 %v241
      %v627 = vunpack.c.l.b16 %v242
      %v628 = vunpack.c.l.b16 %v243
      %v629 = vunpack.c.l.b16 %v244
      %v630 = vunpack.c.l.b16 %v245
      %v631 = vunpack.c.l.b16 %v246
      %v632 = vpack.c.b16 %v280, %v616
      %v633 = vpack.c.b16 %v282, %v617
      %v634 = vpack.c.b16 %v284, %v618
      %v635 = vpack.c.b16 %v286, %v619
      %v636 = vpack.c.b16 %v288, %v620
      %v637 = vpack.c.b16 %v290, %v621
      %v638 = vpack.c.b16 %v292, %v622
      %v639 = vpack.c.b16 %v294, %v623
      %v640 = vpack.c.b16 %v296, %v624
      %v641 = vpack.c.b16 %v298, %v625
      %v642 = vpack.c.b16 %v300, %v626
      %v643 = vpack.c.b16 %v302, %v627
      %v644 = vpack.c.b16 %v304, %v628
      %v645 = vpack.c.b16 %v306, %v629
      %v646 = vpack.c.b16 %v308, %v630
      %v647 = vpack.c.b16 %v310, %v631
      %vm648 = vcmask 1046528
      %v649 = vrot.slane %v632, 1
      %v650 = vrot.slane %v375, 1
      %v651 = vsel %vm648, %v649, %v650
      %v652 = vrot.slane %v633, 1
      %v653 = vrot.slane %v376, 1
      %v654 = vsel %vm648, %v652, %v653
      %v655 = vrot.slane %v634, 1
      %v656 = vrot.slane %v377, 1
      %v657 = vsel %vm648, %v655, %v656
      %v658 = vrot.slane %v635, 1
      %v659 = vrot.slane %v378, 1
      %v660 = vsel %vm648, %v658, %v659
      %v661 = vrot.slane %v636, 1
      %v662 = vrot.slane %v379, 1
      %v663 = vsel %vm648, %v661, %v662
      %v664 = vrot.slane %v637, 1
      %v665 = vrot.slane %v380, 1
      %v666 = vsel %vm648, %v664, %v665
      %v667 = vrot.slane %v638, 1
      %v668 = vrot.slane %v381, 1
      %v669 = vsel %vm648, %v667, %v668
      %v670 = vrot.slane %v639, 1
      %v671 = vrot.slane %v382, 1
      %v672 = vsel %vm648, %v670, %v671
      %v673 = vrot.slane %v640, 1
      %v674 = vrot.slane %v383, 1
      %v675 = vsel %vm648, %v673, %v674
      %v676 = vrot.slane %v641, 1
      %v677 = vrot.slane %v384, 1
      %v678 = vsel %vm648, %v676, %v677
      %v679 = vrot.slane %v642, 1
      %v680 = vrot.slane %v385, 1
      %v681 = vsel %vm648, %v679, %v680
      %v682 = vrot.slane %v643, 1
      %v683 = vrot.slane %v386, 1
      %v684 = vsel %vm648, %v682, %v683
      %v685 = vrot.slane %v644, 1
      %v686 = vrot.slane %v387, 1
      %v687 = vsel %vm648, %v685, %v686
      %v688 = vrot.slane %v645, 1
      %v689 = vrot.slane %v388, 1
      %v690 = vsel %vm648, %v688, %v689
      %v691 = vrot.slane %v646, 1
      %v692 = vrot.slane %v389, 1
      %v693 = vsel %vm648, %v691, %v692
      %v694 = vrot.slane %v647, 1
      %v695 = vrot.slane %v390, 1
      %v696 = vsel %vm648, %v694, %v695
      %v713 = vld [vmem:[%s1] sm:$0xf]
      %v714 = vld [vmem:[%s1 + $0x4] sm:$0xf]
      %v715 = vld [vmem:[%s1 + $0x8] sm:$0xf]
      %v716 = vld [vmem:[%s1 + $0xc] sm:$0xf]
      %v717 = vld [vmem:[%s1 + $0x10] sm:$0xf]
      %v718 = vld [vmem:[%s1 + $0x14] sm:$0xf]
      %v719 = vld [vmem:[%s1 + $0x18] sm:$0xf]
      %v720 = vld [vmem:[%s1 + $0x1c] sm:$0xf]
      %v721 = vld [vmem:[%s1 + $0x20] sm:$0xf]
      %v722 = vld [vmem:[%s1 + $0x24] sm:$0xf]
      %v723 = vld [vmem:[%s1 + $0x28] sm:$0xf]
      %v724 = vld [vmem:[%s1 + $0x2c] sm:$0xf]
      %v725 = vld [vmem:[%s1 + $0x30] sm:$0xf]
      %v726 = vld [vmem:[%s1 + $0x34] sm:$0xf]
      %v727 = vld [vmem:[%s1 + $0x38] sm:$0xf]
      %v728 = vld [vmem:[%s1 + $0x3c] sm:$0xf]
      %v729 = vld [vmem:[%s1 + $0x40] sm:$0xf]
      %v730 = vld [vmem:[%s1 + $0x44] sm:$0xf]
      %v731 = vld [vmem:[%s1 + $0x48] sm:$0xf]
      %v732 = vld [vmem:[%s1 + $0x4c] sm:$0xf]
      %v733 = vld [vmem:[%s1 + $0x50] sm:$0xf]
      %v734 = vld [vmem:[%s1 + $0x54] sm:$0xf]
      %v735 = vld [vmem:[%s1 + $0x58] sm:$0xf]
      %v736 = vld [vmem:[%s1 + $0x5c] sm:$0xf]
      %v737 = vld [vmem:[%s1 + $0x60] sm:$0xf]
      %v738 = vld [vmem:[%s1 + $0x64] sm:$0xf]
      %v739 = vld [vmem:[%s1 + $0x68] sm:$0xf]
      %v740 = vld [vmem:[%s1 + $0x6c] sm:$0xf]
      %v741 = vld [vmem:[%s1 + $0x70] sm:$0xf]
      %v742 = vld [vmem:[%s1 + $0x74] sm:$0xf]
      %v743 = vld [vmem:[%s1 + $0x78] sm:$0xf]
      %v744 = vld [vmem:[%s1 + $0x7c] sm:$0xf]
      %v745 = vld [vmem:[%s1 + $0x80] sm:$0xf]
      %v746 = vld [vmem:[%s1 + $0x84] sm:$0xf]
      %v747 = vld [vmem:[%s1 + $0x88] sm:$0xf]
      %v748 = vld [vmem:[%s1 + $0x8c] sm:$0xf]
      %v749 = vld [vmem:[%s1 + $0x90] sm:$0xf]
      %v750 = vld [vmem:[%s1 + $0x94] sm:$0xf]
      %v751 = vld [vmem:[%s1 + $0x98] sm:$0xf]
      %v752 = vld [vmem:[%s1 + $0x9c] sm:$0xf]
      %v753 = vld [vmem:[%s1 + $0xa0] sm:$0xf]
      %v754 = vld [vmem:[%s1 + $0xa4] sm:$0xf]
      %v755 = vld [vmem:[%s1 + $0xa8] sm:$0xf]
      %v756 = vld [vmem:[%s1 + $0xac] sm:$0xf]
      %v757 = vld [vmem:[%s1 + $0xb0] sm:$0xf]
      %v758 = vld [vmem:[%s1 + $0xb4] sm:$0xf]
      %v759 = vld [vmem:[%s1 + $0xb8] sm:$0xf]
      %v760 = vld [vmem:[%s1 + $0xbc] sm:$0xf]
      %s761 = scalar_lea.vmem %s172, 12
      %v762 = vld [vmem:[%s761] sm:$0xf]
      %v763 = vld [vmem:[%s761 + $0x4] sm:$0xf]
      %v764 = vld [vmem:[%s761 + $0xc] sm:$0xf]
      %v765 = vld [vmem:[%s761 + $0x10] sm:$0xf]
      %v766 = vld [vmem:[%s761 + $0x18] sm:$0xf]
      %v767 = vld [vmem:[%s761 + $0x1c] sm:$0xf]
      %v768 = vld [vmem:[%s761 + $0x24] sm:$0xf]
      %v769 = vld [vmem:[%s761 + $0x28] sm:$0xf]
      %v770 = vld [vmem:[%s761 + $0x30] sm:$0xf]
      %v771 = vld [vmem:[%s761 + $0x34] sm:$0xf]
      %v772 = vld [vmem:[%s761 + $0x3c] sm:$0xf]
      %v773 = vld [vmem:[%s761 + $0x40] sm:$0xf]
      %v774 = vld [vmem:[%s761 + $0x48] sm:$0xf]
      %v775 = vld [vmem:[%s761 + $0x4c] sm:$0xf]
      %v776 = vld [vmem:[%s761 + $0x54] sm:$0xf]
      %v777 = vld [vmem:[%s761 + $0x58] sm:$0xf]
      %v778 = vld [vmem:[%s761 + $0x60] sm:$0xf]
      %v779 = vld [vmem:[%s761 + $0x64] sm:$0xf]
      %v780 = vld [vmem:[%s761 + $0x6c] sm:$0xf]
      %v781 = vld [vmem:[%s761 + $0x70] sm:$0xf]
      %v782 = vld [vmem:[%s761 + $0x78] sm:$0xf]
      %v783 = vld [vmem:[%s761 + $0x7c] sm:$0xf]
      %v784 = vld [vmem:[%s761 + $0x84] sm:$0xf]
      %v785 = vld [vmem:[%s761 + $0x88] sm:$0xf]
      %v786 = vld [vmem:[%s761 + $0x90] sm:$0xf]
      %v787 = vld [vmem:[%s761 + $0x94] sm:$0xf]
      %v788 = vld [vmem:[%s761 + $0x9c] sm:$0xf]
      %v789 = vld [vmem:[%s761 + $0xa0] sm:$0xf]
      %v790 = vld [vmem:[%s761 + $0xa8] sm:$0xf]
      %v791 = vld [vmem:[%s761 + $0xac] sm:$0xf]
      %v792 = vld [vmem:[%s761 + $0xb4] sm:$0xf]
      %v793 = vld [vmem:[%s761 + $0xb8] sm:$0xf]
      %v794 = vld [vmem:[%s761 + $0x8] sm:$0x1]
      %v795 = vld [vmem:[%s761 + $0x14] sm:$0x1]
      %v796 = vld [vmem:[%s761 + $0x20] sm:$0x1]
      %v797 = vld [vmem:[%s761 + $0x2c] sm:$0x1]
      %v798 = vld [vmem:[%s761 + $0x38] sm:$0x1]
      %v799 = vld [vmem:[%s761 + $0x44] sm:$0x1]
      %v800 = vld [vmem:[%s761 + $0x50] sm:$0x1]
      %v801 = vld [vmem:[%s761 + $0x5c] sm:$0x1]
      %v802 = vld [vmem:[%s761 + $0x68] sm:$0x1]
      %v803 = vld [vmem:[%s761 + $0x74] sm:$0x1]
      %v804 = vld [vmem:[%s761 + $0x80] sm:$0x1]
      %v805 = vld [vmem:[%s761 + $0x8c] sm:$0x1]
      %v806 = vld [vmem:[%s761 + $0x98] sm:$0x1]
      %v807 = vld [vmem:[%s761 + $0xa4] sm:$0x1]
      %v808 = vld [vmem:[%s761 + $0xb0] sm:$0x1]
      %v809 = vld [vmem:[%s761 + $0xbc] sm:$0x1]
      %v810 = vld [vmem:[%s761] sm:$0xe]
      %v811 = vld [vmem:[%s761 + $0xc] sm:$0xe]
      %v812 = vld [vmem:[%s761 + $0x18] sm:$0xe]
      %v813 = vld [vmem:[%s761 + $0x24] sm:$0xe]
      %v814 = vld [vmem:[%s761 + $0x30] sm:$0xe]
      %v815 = vld [vmem:[%s761 + $0x3c] sm:$0xe]
      %v816 = vld [vmem:[%s761 + $0x48] sm:$0xe]
      %v817 = vld [vmem:[%s761 + $0x54] sm:$0xe]
      %v818 = vld [vmem:[%s761 + $0x60] sm:$0xe]
      %v819 = vld [vmem:[%s761 + $0x6c] sm:$0xe]
      %v820 = vld [vmem:[%s761 + $0x78] sm:$0xe]
      %v821 = vld [vmem:[%s761 + $0x84] sm:$0xe]
      %v822 = vld [vmem:[%s761 + $0x90] sm:$0xe]
      %v823 = vld [vmem:[%s761 + $0x9c] sm:$0xe]
      %v824 = vld [vmem:[%s761 + $0xa8] sm:$0xe]
      %v825 = vld [vmem:[%s761 + $0xb4] sm:$0xe]
      %v858 = vunpack.c.l.b16 %v762
      %v859 = vunpack.c.l.b16 %v763
      %v860 = vunpack.c.l.b16 %v764
      %v861 = vunpack.c.l.b16 %v765
      %v862 = vunpack.c.l.b16 %v766
      %v863 = vunpack.c.l.b16 %v767
      %v864 = vunpack.c.l.b16 %v768
      %v865 = vunpack.c.l.b16 %v769
      %v866 = vunpack.c.l.b16 %v770
      %v867 = vunpack.c.l.b16 %v771
      %v868 = vunpack.c.l.b16 %v772
      %v869 = vunpack.c.l.b16 %v773
      %v870 = vunpack.c.l.b16 %v774
      %v871 = vunpack.c.l.b16 %v775
      %v872 = vunpack.c.l.b16 %v776
      %v873 = vunpack.c.l.b16 %v777
      %v874 = vunpack.c.l.b16 %v778
      %v875 = vunpack.c.l.b16 %v779
      %v876 = vunpack.c.l.b16 %v780
      %v877 = vunpack.c.l.b16 %v781
      %v878 = vunpack.c.l.b16 %v782
      %v879 = vunpack.c.l.b16 %v783
      %v880 = vunpack.c.l.b16 %v784
      %v881 = vunpack.c.l.b16 %v785
      %v882 = vunpack.c.l.b16 %v786
      %v883 = vunpack.c.l.b16 %v787
      %v884 = vunpack.c.l.b16 %v788
      %v885 = vunpack.c.l.b16 %v789
      %v886 = vunpack.c.l.b16 %v790
      %v887 = vunpack.c.l.b16 %v791
      %v888 = vunpack.c.l.b16 %v792
      %v889 = vunpack.c.l.b16 %v793
      %v890 = vpack.c.b16 %v859, %v858
      %v891 = vpack.c.b16 %v861, %v860
      %v892 = vpack.c.b16 %v863, %v862
      %v893 = vpack.c.b16 %v865, %v864
      %v894 = vpack.c.b16 %v867, %v866
      %v895 = vpack.c.b16 %v869, %v868
      %v896 = vpack.c.b16 %v871, %v870
      %v897 = vpack.c.b16 %v873, %v872
      %v898 = vpack.c.b16 %v875, %v874
      %v899 = vpack.c.b16 %v877, %v876
      %v900 = vpack.c.b16 %v879, %v878
      %v901 = vpack.c.b16 %v881, %v880
      %v902 = vpack.c.b16 %v883, %v882
      %v903 = vpack.c.b16 %v885, %v884
      %v904 = vpack.c.b16 %v887, %v886
      %v905 = vpack.c.b16 %v889, %v888
      %v938 = vunpack.c.l.b16 %v794
      %v939 = vunpack.c.l.b16 %v795
      %v940 = vunpack.c.l.b16 %v796
      %v941 = vunpack.c.l.b16 %v797
      %v942 = vunpack.c.l.b16 %v798
      %v943 = vunpack.c.l.b16 %v799
      %v944 = vunpack.c.l.b16 %v800
      %v945 = vunpack.c.l.b16 %v801
      %v946 = vunpack.c.l.b16 %v802
      %v947 = vunpack.c.l.b16 %v803
      %v948 = vunpack.c.l.b16 %v804
      %v949 = vunpack.c.l.b16 %v805
      %v950 = vunpack.c.l.b16 %v806
      %v951 = vunpack.c.l.b16 %v807
      %v952 = vunpack.c.l.b16 %v808
      %v953 = vunpack.c.l.b16 %v809
      %v954 = vpack.c.b16 %v938, %v938
      %v955 = vpack.c.b16 %v939, %v939
      %v956 = vpack.c.b16 %v940, %v940
      %v957 = vpack.c.b16 %v941, %v941
      %v958 = vpack.c.b16 %v942, %v942
      %v959 = vpack.c.b16 %v943, %v943
      %v960 = vpack.c.b16 %v944, %v944
      %v961 = vpack.c.b16 %v945, %v945
      %v962 = vpack.c.b16 %v946, %v946
      %v963 = vpack.c.b16 %v947, %v947
      %v964 = vpack.c.b16 %v948, %v948
      %v965 = vpack.c.b16 %v949, %v949
      %v966 = vpack.c.b16 %v950, %v950
      %v967 = vpack.c.b16 %v951, %v951
      %v968 = vpack.c.b16 %v952, %v952
      %v969 = vpack.c.b16 %v953, %v953
      %v971 = vshrl.u32 %v890, 16
      %v973 = vshll.u32 %v890, 16
      %v975 = vrot.slane %v973, 1
      %v976 = vor.u32 %v971, %v975
      %v978 = vshll.u32 %v954, 16
      %v980 = vrot.slane %v978, 1
      %v981 = vsel %vm391, %v976, %v980
      %v983 = vshrl.u32 %v891, 16
      %v985 = vshll.u32 %v891, 16
      %v987 = vrot.slane %v985, 1
      %v988 = vor.u32 %v983, %v987
      %v990 = vshll.u32 %v955, 16
      %v992 = vrot.slane %v990, 1
      %v993 = vsel %vm391, %v988, %v992
      %v995 = vshrl.u32 %v892, 16
      %v997 = vshll.u32 %v892, 16
      %v999 = vrot.slane %v997, 1
      %v1000 = vor.u32 %v995, %v999
      %v1002 = vshll.u32 %v956, 16
      %v1004 = vrot.slane %v1002, 1
      %v1005 = vsel %vm391, %v1000, %v1004
      %v1007 = vshrl.u32 %v893, 16
      %v1009 = vshll.u32 %v893, 16
      %v1011 = vrot.slane %v1009, 1
      %v1012 = vor.u32 %v1007, %v1011
      %v1014 = vshll.u32 %v957, 16
      %v1016 = vrot.slane %v1014, 1
      %v1017 = vsel %vm391, %v1012, %v1016
      %v1019 = vshrl.u32 %v894, 16
      %v1021 = vshll.u32 %v894, 16
      %v1023 = vrot.slane %v1021, 1
      %v1024 = vor.u32 %v1019, %v1023
      %v1026 = vshll.u32 %v958, 16
      %v1028 = vrot.slane %v1026, 1
      %v1029 = vsel %vm391, %v1024, %v1028
      %v1031 = vshrl.u32 %v895, 16
      %v1033 = vshll.u32 %v895, 16
      %v1035 = vrot.slane %v1033, 1
      %v1036 = vor.u32 %v1031, %v1035
      %v1038 = vshll.u32 %v959, 16
      %v1040 = vrot.slane %v1038, 1
      %v1041 = vsel %vm391, %v1036, %v1040
      %v1043 = vshrl.u32 %v896, 16
      %v1045 = vshll.u32 %v896, 16
      %v1047 = vrot.slane %v1045, 1
      %v1048 = vor.u32 %v1043, %v1047
      %v1050 = vshll.u32 %v960, 16
      %v1052 = vrot.slane %v1050, 1
      %v1053 = vsel %vm391, %v1048, %v1052
      %v1055 = vshrl.u32 %v897, 16
      %v1057 = vshll.u32 %v897, 16
      %v1059 = vrot.slane %v1057, 1
      %v1060 = vor.u32 %v1055, %v1059
      %v1062 = vshll.u32 %v961, 16
      %v1064 = vrot.slane %v1062, 1
      %v1065 = vsel %vm391, %v1060, %v1064
      %v1067 = vshrl.u32 %v898, 16
      %v1069 = vshll.u32 %v898, 16
      %v1071 = vrot.slane %v1069, 1
      %v1072 = vor.u32 %v1067, %v1071
      %v1074 = vshll.u32 %v962, 16
      %v1076 = vrot.slane %v1074, 1
      %v1077 = vsel %vm391, %v1072, %v1076
      %v1079 = vshrl.u32 %v899, 16
      %v1081 = vshll.u32 %v899, 16
      %v1083 = vrot.slane %v1081, 1
      %v1084 = vor.u32 %v1079, %v1083
      %v1086 = vshll.u32 %v963, 16
      %v1088 = vrot.slane %v1086, 1
      %v1089 = vsel %vm391, %v1084, %v1088
      %v1091 = vshrl.u32 %v900, 16
      %v1093 = vshll.u32 %v900, 16
      %v1095 = vrot.slane %v1093, 1
      %v1096 = vor.u32 %v1091, %v1095
      %v1098 = vshll.u32 %v964, 16
      %v1100 = vrot.slane %v1098, 1
      %v1101 = vsel %vm391, %v1096, %v1100
      %v1103 = vshrl.u32 %v901, 16
      %v1105 = vshll.u32 %v901, 16
      %v1107 = vrot.slane %v1105, 1
      %v1108 = vor.u32 %v1103, %v1107
      %v1110 = vshll.u32 %v965, 16
      %v1112 = vrot.slane %v1110, 1
      %v1113 = vsel %vm391, %v1108, %v1112
      %v1115 = vshrl.u32 %v902, 16
      %v1117 = vshll.u32 %v902, 16
      %v1119 = vrot.slane %v1117, 1
      %v1120 = vor.u32 %v1115, %v1119
      %v1122 = vshll.u32 %v966, 16
      %v1124 = vrot.slane %v1122, 1
      %v1125 = vsel %vm391, %v1120, %v1124
      %v1127 = vshrl.u32 %v903, 16
      %v1129 = vshll.u32 %v903, 16
      %v1131 = vrot.slane %v1129, 1
      %v1132 = vor.u32 %v1127, %v1131
      %v1134 = vshll.u32 %v967, 16
      %v1136 = vrot.slane %v1134, 1
      %v1137 = vsel %vm391, %v1132, %v1136
      %v1139 = vshrl.u32 %v904, 16
      %v1141 = vshll.u32 %v904, 16
      %v1143 = vrot.slane %v1141, 1
      %v1144 = vor.u32 %v1139, %v1143
      %v1146 = vshll.u32 %v968, 16
      %v1148 = vrot.slane %v1146, 1
      %v1149 = vsel %vm391, %v1144, %v1148
      %v1151 = vshrl.u32 %v905, 16
      %v1153 = vshll.u32 %v905, 16
      %v1155 = vrot.slane %v1153, 1
      %v1156 = vor.u32 %v1151, %v1155
      %v1158 = vshll.u32 %v969, 16
      %v1160 = vrot.slane %v1158, 1
      %v1161 = vsel %vm391, %v1156, %v1160
      %v1194 = vunpack.c.l.b16 %v810
      %v1195 = vunpack.c.l.b16 %v811
      %v1196 = vunpack.c.l.b16 %v812
      %v1197 = vunpack.c.l.b16 %v813
      %v1198 = vunpack.c.l.b16 %v814
      %v1199 = vunpack.c.l.b16 %v815
      %v1200 = vunpack.c.l.b16 %v816
      %v1201 = vunpack.c.l.b16 %v817
      %v1202 = vunpack.c.l.b16 %v818
      %v1203 = vunpack.c.l.b16 %v819
      %v1204 = vunpack.c.l.b16 %v820
      %v1205 = vunpack.c.l.b16 %v821
      %v1206 = vunpack.c.l.b16 %v822
      %v1207 = vunpack.c.l.b16 %v823
      %v1208 = vunpack.c.l.b16 %v824
      %v1209 = vunpack.c.l.b16 %v825
      %v1210 = vpack.c.b16 %v859, %v1194
      %v1211 = vpack.c.b16 %v861, %v1195
      %v1212 = vpack.c.b16 %v863, %v1196
      %v1213 = vpack.c.b16 %v865, %v1197
      %v1214 = vpack.c.b16 %v867, %v1198
      %v1215 = vpack.c.b16 %v869, %v1199
      %v1216 = vpack.c.b16 %v871, %v1200
      %v1217 = vpack.c.b16 %v873, %v1201
      %v1218 = vpack.c.b16 %v875, %v1202
      %v1219 = vpack.c.b16 %v877, %v1203
      %v1220 = vpack.c.b16 %v879, %v1204
      %v1221 = vpack.c.b16 %v881, %v1205
      %v1222 = vpack.c.b16 %v883, %v1206
      %v1223 = vpack.c.b16 %v885, %v1207
      %v1224 = vpack.c.b16 %v887, %v1208
      %v1225 = vpack.c.b16 %v889, %v1209
      %v1226 = vrot.slane %v1210, 1
      %v1227 = vrot.slane %v954, 1
      %v1228 = vsel %vm648, %v1226, %v1227
      %v1229 = vrot.slane %v1211, 1
      %v1230 = vrot.slane %v955, 1
      %v1231 = vsel %vm648, %v1229, %v1230
      %v1232 = vrot.slane %v1212, 1
      %v1233 = vrot.slane %v956, 1
      %v1234 = vsel %vm648, %v1232, %v1233
      %v1235 = vrot.slane %v1213, 1
      %v1236 = vrot.slane %v957, 1
      %v1237 = vsel %vm648, %v1235, %v1236
      %v1238 = vrot.slane %v1214, 1
      %v1239 = vrot.slane %v958, 1
      %v1240 = vsel %vm648, %v1238, %v1239
      %v1241 = vrot.slane %v1215, 1
      %v1242 = vrot.slane %v959, 1
      %v1243 = vsel %vm648, %v1241, %v1242
      %v1244 = vrot.slane %v1216, 1
      %v1245 = vrot.slane %v960, 1
      %v1246 = vsel %vm648, %v1244, %v1245
      %v1247 = vrot.slane %v1217, 1
      %v1248 = vrot.slane %v961, 1
      %v1249 = vsel %vm648, %v1247, %v1248
      %v1250 = vrot.slane %v1218, 1
      %v1251 = vrot.slane %v962, 1
      %v1252 = vsel %vm648, %v1250, %v1251
      %v1253 = vrot.slane %v1219, 1
      %v1254 = vrot.slane %v963, 1
      %v1255 = vsel %vm648, %v1253, %v1254
      %v1256 = vrot.slane %v1220, 1
      %v1257 = vrot.slane %v964, 1
      %v1258 = vsel %vm648, %v1256, %v1257
      %v1259 = vrot.slane %v1221, 1
      %v1260 = vrot.slane %v965, 1
      %v1261 = vsel %vm648, %v1259, %v1260
      %v1262 = vrot.slane %v1222, 1
      %v1263 = vrot.slane %v966, 1
      %v1264 = vsel %vm648, %v1262, %v1263
      %v1265 = vrot.slane %v1223, 1
      %v1266 = vrot.slane %v967, 1
      %v1267 = vsel %vm648, %v1265, %v1266
      %v1268 = vrot.slane %v1224, 1
      %v1269 = vrot.slane %v968, 1
      %v1270 = vsel %vm648, %v1268, %v1269
      %v1271 = vrot.slane %v1225, 1
      %v1272 = vrot.slane %v969, 1
      %v1273 = vsel %vm648, %v1271, %v1272
      %s1290 = scalar_lea.vmem %s1, 192
      %v1291 = vld [vmem:[%s1290] sm:$0xf]
      %v1292 = vld [vmem:[%s1290 + $0x4] sm:$0xf]
      %v1293 = vld [vmem:[%s1290 + $0x8] sm:$0xf]
      %v1294 = vld [vmem:[%s1290 + $0xc] sm:$0xf]
      %v1295 = vld [vmem:[%s1290 + $0x10] sm:$0xf]
      %v1296 = vld [vmem:[%s1290 + $0x14] sm:$0xf]
      %v1297 = vld [vmem:[%s1290 + $0x18] sm:$0xf]
      %v1298 = vld [vmem:[%s1290 + $0x1c] sm:$0xf]
      %v1299 = vld [vmem:[%s1290 + $0x20] sm:$0xf]
      %v1300 = vld [vmem:[%s1290 + $0x24] sm:$0xf]
      %v1301 = vld [vmem:[%s1290 + $0x28] sm:$0xf]
      %v1302 = vld [vmem:[%s1290 + $0x2c] sm:$0xf]
      %v1303 = vld [vmem:[%s1290 + $0x30] sm:$0xf]
      %v1304 = vld [vmem:[%s1290 + $0x34] sm:$0xf]
      %v1305 = vld [vmem:[%s1290 + $0x38] sm:$0xf]
      %v1306 = vld [vmem:[%s1290 + $0x3c] sm:$0xf]
      %v1307 = vld [vmem:[%s1290 + $0x40] sm:$0xf]
      %v1308 = vld [vmem:[%s1290 + $0x44] sm:$0xf]
      %v1309 = vld [vmem:[%s1290 + $0x48] sm:$0xf]
      %v1310 = vld [vmem:[%s1290 + $0x4c] sm:$0xf]
      %v1311 = vld [vmem:[%s1290 + $0x50] sm:$0xf]
      %v1312 = vld [vmem:[%s1290 + $0x54] sm:$0xf]
      %v1313 = vld [vmem:[%s1290 + $0x58] sm:$0xf]
      %v1314 = vld [vmem:[%s1290 + $0x5c] sm:$0xf]
      %v1315 = vld [vmem:[%s1290 + $0x60] sm:$0xf]
      %v1316 = vld [vmem:[%s1290 + $0x64] sm:$0xf]
      %v1317 = vld [vmem:[%s1290 + $0x68] sm:$0xf]
      %v1318 = vld [vmem:[%s1290 + $0x6c] sm:$0xf]
      %v1319 = vld [vmem:[%s1290 + $0x70] sm:$0xf]
      %v1320 = vld [vmem:[%s1290 + $0x74] sm:$0xf]
      %v1321 = vld [vmem:[%s1290 + $0x78] sm:$0xf]
      %v1322 = vld [vmem:[%s1290 + $0x7c] sm:$0xf]
      %v1323 = vld [vmem:[%s1290 + $0x80] sm:$0xf]
      %v1324 = vld [vmem:[%s1290 + $0x84] sm:$0xf]
      %v1325 = vld [vmem:[%s1290 + $0x88] sm:$0xf]
      %v1326 = vld [vmem:[%s1290 + $0x8c] sm:$0xf]
      %v1327 = vld [vmem:[%s1290 + $0x90] sm:$0xf]
      %v1328 = vld [vmem:[%s1290 + $0x94] sm:$0xf]
      %v1329 = vld [vmem:[%s1290 + $0x98] sm:$0xf]
      %v1330 = vld [vmem:[%s1290 + $0x9c] sm:$0xf]
      %v1331 = vld [vmem:[%s1290 + $0xa0] sm:$0xf]
      %v1332 = vld [vmem:[%s1290 + $0xa4] sm:$0xf]
      %v1333 = vld [vmem:[%s1290 + $0xa8] sm:$0xf]
      %v1334 = vld [vmem:[%s1290 + $0xac] sm:$0xf]
      %v1335 = vld [vmem:[%s1290 + $0xb0] sm:$0xf]
      %v1336 = vld [vmem:[%s1290 + $0xb4] sm:$0xf]
      %v1337 = vld [vmem:[%s1290 + $0xb8] sm:$0xf]
      %v1338 = vld [vmem:[%s1290 + $0xbc] sm:$0xf]
      %v1387 = vunpack.c.l.b16 %v1291
      %v1388 = vunpack.c.l.b16 %v1292
      %v1389 = vunpack.c.l.b16 %v1293
      %v1390 = vunpack.c.l.b16 %v1294
      %v1391 = vunpack.c.l.b16 %v1295
      %v1392 = vunpack.c.l.b16 %v1296
      %v1393 = vunpack.c.l.b16 %v1297
      %v1394 = vunpack.c.l.b16 %v1298
      %v1395 = vunpack.c.l.b16 %v1299
      %v1396 = vunpack.c.l.b16 %v1300
      %v1397 = vunpack.c.l.b16 %v1301
      %v1398 = vunpack.c.l.b16 %v1302
      %v1399 = vunpack.c.l.b16 %v1303
      %v1400 = vunpack.c.l.b16 %v1304
      %v1401 = vunpack.c.l.b16 %v1305
      %v1402 = vunpack.c.l.b16 %v1306
      %v1403 = vunpack.c.l.b16 %v1307
      %v1404 = vunpack.c.l.b16 %v1308
      %v1405 = vunpack.c.l.b16 %v1309
      %v1406 = vunpack.c.l.b16 %v1310
      %v1407 = vunpack.c.l.b16 %v1311
      %v1408 = vunpack.c.l.b16 %v1312
      %v1409 = vunpack.c.l.b16 %v1313
      %v1410 = vunpack.c.l.b16 %v1314
      %v1411 = vunpack.c.l.b16 %v1315
      %v1412 = vunpack.c.l.b16 %v1316
      %v1413 = vunpack.c.l.b16 %v1317
      %v1414 = vunpack.c.l.b16 %v1318
      %v1415 = vunpack.c.l.b16 %v1319
      %v1416 = vunpack.c.l.b16 %v1320
      %v1417 = vunpack.c.l.b16 %v1321
      %v1418 = vunpack.c.l.b16 %v1322
      %v1419 = vunpack.c.l.b16 %v1323
      %v1420 = vunpack.c.l.b16 %v1324
      %v1421 = vunpack.c.l.b16 %v1325
      %v1422 = vunpack.c.l.b16 %v1326
      %v1423 = vunpack.c.l.b16 %v1327
      %v1424 = vunpack.c.l.b16 %v1328
      %v1425 = vunpack.c.l.b16 %v1329
      %v1426 = vunpack.c.l.b16 %v1330
      %v1427 = vunpack.c.l.b16 %v1331
      %v1428 = vunpack.c.l.b16 %v1332
      %v1429 = vunpack.c.l.b16 %v1333
      %v1430 = vunpack.c.l.b16 %v1334
      %v1431 = vunpack.c.l.b16 %v1335
      %v1432 = vunpack.c.l.b16 %v1336
      %v1433 = vunpack.c.l.b16 %v1337
      %v1434 = vunpack.c.l.b16 %v1338
      %v1435 = vpack.c.b16 %v1388, %v1387
      %v1436 = vpack.c.b16 %v1390, %v1389
      %v1437 = vpack.c.b16 %v1392, %v1391
      %v1438 = vpack.c.b16 %v1394, %v1393
      %v1439 = vpack.c.b16 %v1396, %v1395
      %v1440 = vpack.c.b16 %v1398, %v1397
      %v1441 = vpack.c.b16 %v1400, %v1399
      %v1442 = vpack.c.b16 %v1402, %v1401
      %v1443 = vpack.c.b16 %v1404, %v1403
      %v1444 = vpack.c.b16 %v1406, %v1405
      %v1445 = vpack.c.b16 %v1408, %v1407
      %v1446 = vpack.c.b16 %v1410, %v1409
      %v1447 = vpack.c.b16 %v1412, %v1411
      %v1448 = vpack.c.b16 %v1414, %v1413
      %v1449 = vpack.c.b16 %v1416, %v1415
      %v1450 = vpack.c.b16 %v1418, %v1417
      %v1451 = vpack.c.b16 %v1420, %v1419
      %v1452 = vpack.c.b16 %v1422, %v1421
      %v1453 = vpack.c.b16 %v1424, %v1423
      %v1454 = vpack.c.b16 %v1426, %v1425
      %v1455 = vpack.c.b16 %v1428, %v1427
      %v1456 = vpack.c.b16 %v1430, %v1429
      %v1457 = vpack.c.b16 %v1432, %v1431
      %v1458 = vpack.c.b16 %v1434, %v1433
      %1483 = vmatprep.subr.bf16.mxu0 0
      %1484 = vmatpush1.bf16.msra.mxu0 %v1435
      %1485 = vmatprep.subr.bf16.mxu0 0
      %1486 = vmatpush1.bf16.msra.mxu0 %v1436
      %1487 = vmatprep.subr.bf16.mxu0 0
      %1488 = vmatpush1.bf16.msra.mxu0 %v1437
      %1489 = vmatprep.subr.bf16.mxu0 0
      %1490 = vmatpush1.bf16.msra.mxu0 %v1438
      %1491 = vmatprep.subr.bf16.mxu0 0
      %1492 = vmatpush1.bf16.msra.mxu0 %v1439
      %1493 = vmatprep.subr.bf16.mxu0 0
      %1494 = vmatpush1.bf16.msra.mxu0 %v1440
      %1495 = vmatprep.subr.bf16.mxu0 0
      %1496 = vmatpush1.bf16.msra.mxu0 %v1441
      %1497 = vmatprep.subr.bf16.mxu0 0
      %1498 = vmatpush1.bf16.msra.mxu0 %v1442
      %1499 = vmatprep.subr.bf16.mxu0 0
      %1500 = vmatpush1.bf16.msra.mxu0 %v1443
      %1501 = vmatprep.subr.bf16.mxu0 0
      %1502 = vmatpush1.bf16.msra.mxu0 %v1444
      %1503 = vmatprep.subr.bf16.mxu0 0
      %1504 = vmatpush1.bf16.msra.mxu0 %v1445
      %1505 = vmatprep.subr.bf16.mxu0 0
      %1506 = vmatpush1.bf16.msra.mxu0 %v1446
      %1507 = vmatprep.subr.bf16.mxu0 0
      %1508 = vmatpush1.bf16.msra.mxu0 %v1447
      %1509 = vmatprep.subr.bf16.mxu0 0
      %1510 = vmatpush1.bf16.msra.mxu0 %v1448
      %1511 = vmatprep.subr.bf16.mxu0 0
      %1512 = vmatpush1.bf16.msra.mxu0 %v1449
      %1513 = vmatprep.subr.bf16.mxu0 0
      %1514 = vmatpush1.bf16.msra.mxu0 %v1450
      %1515 = vmatprep.mubr.bf16.mxu0 %v981
      %1516 = vmatmul.mubr.bf16.gmra.mrb[0].mxu0 %v890
      %v1517 = vpop.f32.mrb[0].mxu0
      %v1518 = vadd.f32 0.0, %v1517
      %v1519 = vpop.f32.mrb[0].mxu0
      %v1520 = vpop.f32.mrb[0].mxu0
      %v1521 = vadd.f32 0.0, %v1520
      %v1522 = vpop.f32.mrb[0].mxu0
      %1523 = vmatprep.mubr.bf16.mxu0 %v993
      %1524 = vmatmul.mubr.bf16.gmra.mrb[0].mxu0 %v891
      %v1525 = vpop.f32.mrb[0].mxu0
      %v1526 = vadd.f32 0.0, %v1525
      %v1527 = vpop.f32.mrb[0].mxu0
      %v1528 = vpop.f32.mrb[0].mxu0
      %v1529 = vadd.f32 0.0, %v1528
      %v1530 = vpop.f32.mrb[0].mxu0
      %1531 = vmatprep.mubr.bf16.mxu0 %v1005
      %1532 = vmatmul.mubr.bf16.gmra.mrb[0].mxu0 %v892
      %v1533 = vpop.f32.mrb[0].mxu0
      %v1534 = vadd.f32 0.0, %v1533
      %v1535 = vpop.f32.mrb[0].mxu0
      %v1536 = vpop.f32.mrb[0].mxu0
      %v1537 = vadd.f32 0.0, %v1536
      %v1538 = vpop.f32.mrb[0].mxu0
      %1539 = vmatprep.mubr.bf16.mxu0 %v1017
      %1540 = vmatmul.mubr.bf16.gmra.mrb[0].mxu0 %v893
      %v1541 = vpop.f32.mrb[0].mxu0
      %v1542 = vadd.f32 0.0, %v1541
      %v1543 = vpop.f32.mrb[0].mxu0
      %v1544 = vpop.f32.mrb[0].mxu0
      %v1545 = vadd.f32 0.0, %v1544
      %v1546 = vpop.f32.mrb[0].mxu0
      %1547 = vmatprep.mubr.bf16.mxu0 %v1029
      %1548 = vmatmul.mubr.bf16.gmra.mrb[0].mxu0 %v894
      %v1549 = vpop.f32.mrb[0].mxu0
      %v1550 = vadd.f32 0.0, %v1549
      %v1551 = vpop.f32.mrb[0].mxu0
      %v1552 = vpop.f32.mrb[0].mxu0
      %v1553 = vadd.f32 0.0, %v1552
      %v1554 = vpop.f32.mrb[0].mxu0
      %1555 = vmatprep.mubr.bf16.mxu0 %v1041
      %1556 = vmatmul.mubr.bf16.gmra.mrb[0].mxu0 %v895
      %v1557 = vpop.f32.mrb[0].mxu0
      %v1558 = vadd.f32 0.0, %v1557
      %v1559 = vpop.f32.mrb[0].mxu0
      %v1560 = vpop.f32.mrb[0].mxu0
      %v1561 = vadd.f32 0.0, %v1560
      %v1562 = vpop.f32.mrb[0].mxu0
      %1563 = vmatprep.mubr.bf16.mxu0 %v1053
      %1564 = vmatmul.mubr.bf16.gmra.mrb[0].mxu0 %v896
      %v1565 = vpop.f32.mrb[0].mxu0
      %v1566 = vadd.f32 0.0, %v1565
      %v1567 = vpop.f32.mrb[0].mxu0
      %v1568 = vpop.f32.mrb[0].mxu0
      %v1569 = vadd.f32 0.0, %v1568
      %v1570 = vpop.f32.mrb[0].mxu0
      %1571 = vmatprep.mubr.bf16.mxu0 %v1065
      %1572 = vmatmul.mubr.bf16.gmra.mrb[0].mxu0 %v897
      %v1573 = vpop.f32.mrb[0].mxu0
      %v1574 = vadd.f32 0.0, %v1573
      %v1575 = vpop.f32.mrb[0].mxu0
      %v1576 = vpop.f32.mrb[0].mxu0
      %v1577 = vadd.f32 0.0, %v1576
      %v1578 = vpop.f32.mrb[0].mxu0
      %1579 = vmatprep.mubr.bf16.mxu0 %v1077
      %1580 = vmatmul.mubr.bf16.gmra.mrb[0].mxu0 %v898
      %v1581 = vpop.f32.mrb[0].mxu0
      %v1582 = vadd.f32 0.0, %v1581
      %v1583 = vpop.f32.mrb[0].mxu0
      %v1584 = vpop.f32.mrb[0].mxu0
      %v1585 = vadd.f32 0.0, %v1584
      %v1586 = vpop.f32.mrb[0].mxu0
      %1587 = vmatprep.mubr.bf16.mxu0 %v1089
      %1588 = vmatmul.mubr.bf16.gmra.mrb[0].mxu0 %v899
      %v1589 = vpop.f32.mrb[0].mxu0
      %v1590 = vadd.f32 0.0, %v1589
      %v1591 = vpop.f32.mrb[0].mxu0
      %v1592 = vpop.f32.mrb[0].mxu0
      %v1593 = vadd.f32 0.0, %v1592
      %v1594 = vpop.f32.mrb[0].mxu0
      %1595 = vmatprep.mubr.bf16.mxu0 %v1101
      %1596 = vmatmul.mubr.bf16.gmra.mrb[0].mxu0 %v900
      %v1597 = vpop.f32.mrb[0].mxu0
      %v1598 = vadd.f32 0.0, %v1597
      %v1599 = vpop.f32.mrb[0].mxu0
      %v1600 = vpop.f32.mrb[0].mxu0
      %v1601 = vadd.f32 0.0, %v1600
      %v1602 = vpop.f32.mrb[0].mxu0
      %1603 = vmatprep.mubr.bf16.mxu0 %v1113
      %1604 = vmatmul.mubr.bf16.gmra.mrb[0].mxu0 %v901
      %v1605 = vpop.f32.mrb[0].mxu0
      %v1606 = vadd.f32 0.0, %v1605
      %v1607 = vpop.f32.mrb[0].mxu0
      %v1608 = vpop.f32.mrb[0].mxu0
      %v1609 = vadd.f32 0.0, %v1608
      %v1610 = vpop.f32.mrb[0].mxu0
      %1611 = vmatprep.mubr.bf16.mxu0 %v1125
      %1612 = vmatmul.mubr.bf16.gmra.mrb[0].mxu0 %v902
      %v1613 = vpop.f32.mrb[0].mxu0
      %v1614 = vadd.f32 0.0, %v1613
      %v1615 = vpop.f32.mrb[0].mxu0
      %v1616 = vpop.f32.mrb[0].mxu0
      %v1617 = vadd.f32 0.0, %v1616
      %v1618 = vpop.f32.mrb[0].mxu0
      %1619 = vmatprep.mubr.bf16.mxu0 %v1137
      %1620 = vmatmul.mubr.bf16.gmra.mrb[0].mxu0 %v903
      %v1621 = vpop.f32.mrb[0].mxu0
      %v1622 = vadd.f32 0.0, %v1621
      %v1623 = vpop.f32.mrb[0].mxu0
      %v1624 = vpop.f32.mrb[0].mxu0
      %v1625 = vadd.f32 0.0, %v1624
      %v1626 = vpop.f32.mrb[0].mxu0
      %1627 = vmatprep.mubr.bf16.mxu0 %v1149
      %1628 = vmatmul.mubr.bf16.gmra.mrb[0].mxu0 %v904
      %v1629 = vpop.f32.mrb[0].mxu0
      %v1630 = vadd.f32 0.0, %v1629
      %v1631 = vpop.f32.mrb[0].mxu0
      %v1632 = vpop.f32.mrb[0].mxu0
      %v1633 = vadd.f32 0.0, %v1632
      %v1634 = vpop.f32.mrb[0].mxu0
      %1635 = vmatprep.mubr.bf16.mxu0 %v1161
      %1636 = vmatmul.mubr.bf16.gmra.mrb[0].mxu0 %v905
      %v1637 = vpop.f32.mrb[0].mxu0
      %v1638 = vadd.f32 0.0, %v1637
      %v1639 = vpop.f32.mrb[0].mxu0
      %v1640 = vpop.f32.mrb[0].mxu0
      %v1641 = vadd.f32 0.0, %v1640
      %v1642 = vpop.f32.mrb[0].mxu0
      %1643 = vdwg.mxu0
      %1644 = vmatprep.subr.bf16.mxu0 0
      %1645 = vmatpush1.bf16.msra.mxu0 %v1451
      %1646 = vmatprep.subr.bf16.mxu0 0
      %1647 = vmatpush1.bf16.msra.mxu0 %v1452
      %1648 = vmatprep.subr.bf16.mxu0 0
      %1649 = vmatpush1.bf16.msra.mxu0 %v1453
      %1650 = vmatprep.subr.bf16.mxu0 0
      %1651 = vmatpush1.bf16.msra.mxu0 %v1454
      %1652 = vmatprep.subr.bf16.mxu0 0
      %1653 = vmatpush1.bf16.msra.mxu0 %v1455
      %1654 = vmatprep.subr.bf16.mxu0 0
      %1655 = vmatpush1.bf16.msra.mxu0 %v1456
      %1656 = vmatprep.subr.bf16.mxu0 0
      %1657 = vmatpush1.bf16.msra.mxu0 %v1457
      %1658 = vmatprep.subr.bf16.mxu0 0
      %1659 = vmatpush1.bf16.msra.mxu0 %v1458
      %1660 = vmatprep.subr.bf16.mxu0 0
      %1661 = vmatpush1.bf16.msra.mxu0 0
      %1662 = vmatprep.subr.bf16.mxu0 0
      %1663 = vmatpush1.bf16.msra.mxu0 0
      %1664 = vmatprep.subr.bf16.mxu0 0
      %1665 = vmatpush1.bf16.msra.mxu0 0
      %1666 = vmatprep.subr.bf16.mxu0 0
      %1667 = vmatpush1.bf16.msra.mxu0 0
      %1668 = vmatprep.subr.bf16.mxu0 0
      %1669 = vmatpush1.bf16.msra.mxu0 0
      %1670 = vmatprep.subr.bf16.mxu0 0
      %1671 = vmatpush1.bf16.msra.mxu0 0
      %1672 = vmatprep.subr.bf16.mxu0 0
      %1673 = vmatpush1.bf16.msra.mxu0 0
      %1674 = vmatprep.subr.bf16.mxu0 0
      %1675 = vmatpush1.bf16.msra.mxu0 0
      %1676 = vmatprep.mubr.bf16.mxu0 0
      %1677 = vmatmul.mubr.bf16.gmra.mrb[0].mxu0 %v1228
      %v1678 = vpop.f32.mrb[0].mxu0
      %v1679 = vadd.f32 %v1518, %v1678
      %v1680 = vpop.f32.mrb[0].mxu0
      %v1681 = vpop.f32.mrb[0].mxu0
      %v1682 = vadd.f32 %v1521, %v1681
      %v1683 = vpop.f32.mrb[0].mxu0
      %1684 = vmatprep.mubr.bf16.mxu0 0
      %1685 = vmatmul.mubr.bf16.gmra.mrb[0].mxu0 %v1231
      %v1686 = vpop.f32.mrb[0].mxu0
      %v1687 = vadd.f32 %v1526, %v1686
      %v1688 = vpop.f32.mrb[0].mxu0
      %v1689 = vpop.f32.mrb[0].mxu0
      %v1690 = vadd.f32 %v1529, %v1689
      %v1691 = vpop.f32.mrb[0].mxu0
      %1692 = vmatprep.mubr.bf16.mxu0 0
      %1693 = vmatmul.mubr.bf16.gmra.mrb[0].mxu0 %v1234
      %v1694 = vpop.f32.mrb[0].mxu0
      %v1695 = vadd.f32 %v1534, %v1694
      %v1696 = vpop.f32.mrb[0].mxu0
      %v1697 = vpop.f32.mrb[0].mxu0
      %v1698 = vadd.f32 %v1537, %v1697
      %v1699 = vpop.f32.mrb[0].mxu0
      %1700 = vmatprep.mubr.bf16.mxu0 0
      %1701 = vmatmul.mubr.bf16.gmra.mrb[0].mxu0 %v1237
      %v1702 = vpop.f32.mrb[0].mxu0
      %v1703 = vadd.f32 %v1542, %v1702
      %v1704 = vpop.f32.mrb[0].mxu0
      %v1705 = vpop.f32.mrb[0].mxu0
      %v1706 = vadd.f32 %v1545, %v1705
      %v1707 = vpop.f32.mrb[0].mxu0
      %1708 = vmatprep.mubr.bf16.mxu0 0
      %1709 = vmatmul.mubr.bf16.gmra.mrb[0].mxu0 %v1240
      %v1710 = vpop.f32.mrb[0].mxu0
      %v1711 = vadd.f32 %v1550, %v1710
      %v1712 = vpop.f32.mrb[0].mxu0
      %v1713 = vpop.f32.mrb[0].mxu0
      %v1714 = vadd.f32 %v1553, %v1713
      %v1715 = vpop.f32.mrb[0].mxu0
      %1716 = vmatprep.mubr.bf16.mxu0 0
      %1717 = vmatmul.mubr.bf16.gmra.mrb[0].mxu0 %v1243
      %v1718 = vpop.f32.mrb[0].mxu0
      %v1719 = vadd.f32 %v1558, %v1718
      %v1720 = vpop.f32.mrb[0].mxu0
      %v1721 = vpop.f32.mrb[0].mxu0
      %v1722 = vadd.f32 %v1561, %v1721
      %v1723 = vpop.f32.mrb[0].mxu0
      %1724 = vmatprep.mubr.bf16.mxu0 0
      %1725 = vmatmul.mubr.bf16.gmra.mrb[0].mxu0 %v1246
      %v1726 = vpop.f32.mrb[0].mxu0
      %v1727 = vadd.f32 %v1566, %v1726
      %v1728 = vpop.f32.mrb[0].mxu0
      %v1729 = vpop.f32.mrb[0].mxu0
      %v1730 = vadd.f32 %v1569, %v1729
      %v1731 = vpop.f32.mrb[0].mxu0
      %1732 = vmatprep.mubr.bf16.mxu0 0
      %1733 = vmatmul.mubr.bf16.gmra.mrb[0].mxu0 %v1249
      %v1734 = vpop.f32.mrb[0].mxu0
      %v1735 = vadd.f32 %v1574, %v1734
      %v1736 = vpop.f32.mrb[0].mxu0
      %v1737 = vpop.f32.mrb[0].mxu0
      %v1738 = vadd.f32 %v1577, %v1737
      %v1739 = vpop.f32.mrb[0].mxu0
      %1740 = vmatprep.mubr.bf16.mxu0 0
      %1741 = vmatmul.mubr.bf16.gmra.mrb[0].mxu0 %v1252
      %v1742 = vpop.f32.mrb[0].mxu0
      %v1743 = vadd.f32 %v1582, %v1742
      %v1744 = vpop.f32.mrb[0].mxu0
      %v1745 = vpop.f32.mrb[0].mxu0
      %v1746 = vadd.f32 %v1585, %v1745
      %v1747 = vpop.f32.mrb[0].mxu0
      %1748 = vmatprep.mubr.bf16.mxu0 0
      %1749 = vmatmul.mubr.bf16.gmra.mrb[0].mxu0 %v1255
      %v1750 = vpop.f32.mrb[0].mxu0
      %v1751 = vadd.f32 %v1590, %v1750
      %v1752 = vpop.f32.mrb[0].mxu0
      %v1753 = vpop.f32.mrb[0].mxu0
      %v1754 = vadd.f32 %v1593, %v1753
      %v1755 = vpop.f32.mrb[0].mxu0
      %1756 = vmatprep.mubr.bf16.mxu0 0
      %1757 = vmatmul.mubr.bf16.gmra.mrb[0].mxu0 %v1258
      %v1758 = vpop.f32.mrb[0].mxu0
      %v1759 = vadd.f32 %v1598, %v1758
      %v1760 = vpop.f32.mrb[0].mxu0
      %v1761 = vpop.f32.mrb[0].mxu0
      %v1762 = vadd.f32 %v1601, %v1761
      %v1763 = vpop.f32.mrb[0].mxu0
      %1764 = vmatprep.mubr.bf16.mxu0 0
      %1765 = vmatmul.mubr.bf16.gmra.mrb[0].mxu0 %v1261
      %v1766 = vpop.f32.mrb[0].mxu0
      %v1767 = vadd.f32 %v1606, %v1766
      %v1768 = vpop.f32.mrb[0].mxu0
      %v1769 = vpop.f32.mrb[0].mxu0
      %v1770 = vadd.f32 %v1609, %v1769
      %v1771 = vpop.f32.mrb[0].mxu0
      %1772 = vmatprep.mubr.bf16.mxu0 0
      %1773 = vmatmul.mubr.bf16.gmra.mrb[0].mxu0 %v1264
      %v1774 = vpop.f32.mrb[0].mxu0
      %v1775 = vadd.f32 %v1614, %v1774
      %v1776 = vpop.f32.mrb[0].mxu0
      %v1777 = vpop.f32.mrb[0].mxu0
      %v1778 = vadd.f32 %v1617, %v1777
      %v1779 = vpop.f32.mrb[0].mxu0
      %1780 = vmatprep.mubr.bf16.mxu0 0
      %1781 = vmatmul.mubr.bf16.gmra.mrb[0].mxu0 %v1267
      %v1782 = vpop.f32.mrb[0].mxu0
      %v1783 = vadd.f32 %v1622, %v1782
      %v1784 = vpop.f32.mrb[0].mxu0
      %v1785 = vpop.f32.mrb[0].mxu0
      %v1786 = vadd.f32 %v1625, %v1785
      %v1787 = vpop.f32.mrb[0].mxu0
      %1788 = vmatprep.mubr.bf16.mxu0 0
      %1789 = vmatmul.mubr.bf16.gmra.mrb[0].mxu0 %v1270
      %v1790 = vpop.f32.mrb[0].mxu0
      %v1791 = vadd.f32 %v1630, %v1790
      %v1792 = vpop.f32.mrb[0].mxu0
      %v1793 = vpop.f32.mrb[0].mxu0
      %v1794 = vadd.f32 %v1633, %v1793
      %v1795 = vpop.f32.mrb[0].mxu0
      %1796 = vmatprep.mubr.bf16.mxu0 0
      %1797 = vmatmul.mubr.bf16.gmra.mrb[0].mxu0 %v1273
      %v1798 = vpop.f32.mrb[0].mxu0
      %v1799 = vadd.f32 %v1638, %v1798
      %v1800 = vpop.f32.mrb[0].mxu0
      %v1801 = vpop.f32.mrb[0].mxu0
      %v1802 = vadd.f32 %v1641, %v1801
      %v1803 = vpop.f32.mrb[0].mxu0
      %1804 = vdwg.mxu0
      %v1853 = vunpack.c.l.b16 %v713
      %v1854 = vunpack.c.l.b16 %v714
      %v1855 = vunpack.c.l.b16 %v715
      %v1856 = vunpack.c.l.b16 %v716
      %v1857 = vunpack.c.l.b16 %v717
      %v1858 = vunpack.c.l.b16 %v718
      %v1859 = vunpack.c.l.b16 %v719
      %v1860 = vunpack.c.l.b16 %v720
      %v1861 = vunpack.c.l.b16 %v721
      %v1862 = vunpack.c.l.b16 %v722
      %v1863 = vunpack.c.l.b16 %v723
      %v1864 = vunpack.c.l.b16 %v724
      %v1865 = vunpack.c.l.b16 %v725
      %v1866 = vunpack.c.l.b16 %v726
      %v1867 = vunpack.c.l.b16 %v727
      %v1868 = vunpack.c.l.b16 %v728
      %v1869 = vunpack.c.l.b16 %v729
      %v1870 = vunpack.c.l.b16 %v730
      %v1871 = vunpack.c.l.b16 %v731
      %v1872 = vunpack.c.l.b16 %v732
      %v1873 = vunpack.c.l.b16 %v733
      %v1874 = vunpack.c.l.b16 %v734
      %v1875 = vunpack.c.l.b16 %v735
      %v1876 = vunpack.c.l.b16 %v736
      %v1877 = vunpack.c.l.b16 %v737
      %v1878 = vunpack.c.l.b16 %v738
      %v1879 = vunpack.c.l.b16 %v739
      %v1880 = vunpack.c.l.b16 %v740
      %v1881 = vunpack.c.l.b16 %v741
      %v1882 = vunpack.c.l.b16 %v742
      %v1883 = vunpack.c.l.b16 %v743
      %v1884 = vunpack.c.l.b16 %v744
      %v1885 = vunpack.c.l.b16 %v745
      %v1886 = vunpack.c.l.b16 %v746
      %v1887 = vunpack.c.l.b16 %v747
      %v1888 = vunpack.c.l.b16 %v748
      %v1889 = vunpack.c.l.b16 %v749
      %v1890 = vunpack.c.l.b16 %v750
      %v1891 = vunpack.c.l.b16 %v751
      %v1892 = vunpack.c.l.b16 %v752
      %v1893 = vunpack.c.l.b16 %v753
      %v1894 = vunpack.c.l.b16 %v754
      %v1895 = vunpack.c.l.b16 %v755
      %v1896 = vunpack.c.l.b16 %v756
      %v1897 = vunpack.c.l.b16 %v757
      %v1898 = vunpack.c.l.b16 %v758
      %v1899 = vunpack.c.l.b16 %v759
      %v1900 = vunpack.c.l.b16 %v760
      %v1901 = vpack.c.b16 %v1854, %v1853
      %v1902 = vpack.c.b16 %v1856, %v1855
      %v1903 = vpack.c.b16 %v1858, %v1857
      %v1904 = vpack.c.b16 %v1860, %v1859
      %v1905 = vpack.c.b16 %v1862, %v1861
      %v1906 = vpack.c.b16 %v1864, %v1863
      %v1907 = vpack.c.b16 %v1866, %v1865
      %v1908 = vpack.c.b16 %v1868, %v1867
      %v1909 = vpack.c.b16 %v1870, %v1869
      %v1910 = vpack.c.b16 %v1872, %v1871
      %v1911 = vpack.c.b16 %v1874, %v1873
      %v1912 = vpack.c.b16 %v1876, %v1875
      %v1913 = vpack.c.b16 %v1878, %v1877
      %v1914 = vpack.c.b16 %v1880, %v1879
      %v1915 = vpack.c.b16 %v1882, %v1881
      %v1916 = vpack.c.b16 %v1884, %v1883
      %v1917 = vpack.c.b16 %v1886, %v1885
      %v1918 = vpack.c.b16 %v1888, %v1887
      %v1919 = vpack.c.b16 %v1890, %v1889
      %v1920 = vpack.c.b16 %v1892, %v1891
      %v1921 = vpack.c.b16 %v1894, %v1893
      %v1922 = vpack.c.b16 %v1896, %v1895
      %v1923 = vpack.c.b16 %v1898, %v1897
      %v1924 = vpack.c.b16 %v1900, %v1899
      %1949 = vmatprep.subr.bf16.mxu0 0
      %1950 = vmatpush1.bf16.msra.mxu0 %v1901
      %1951 = vmatprep.subr.bf16.mxu0 0
      %1952 = vmatpush1.bf16.msra.mxu0 %v1902
      %1953 = vmatprep.subr.bf16.mxu0 0
      %1954 = vmatpush1.bf16.msra.mxu0 %v1903
      %1955 = vmatprep.subr.bf16.mxu0 0
      %1956 = vmatpush1.bf16.msra.mxu0 %v1904
      %1957 = vmatprep.subr.bf16.mxu0 0
      %1958 = vmatpush1.bf16.msra.mxu0 %v1905
      %1959 = vmatprep.subr.bf16.mxu0 0
      %1960 = vmatpush1.bf16.msra.mxu0 %v1906
      %1961 = vmatprep.subr.bf16.mxu0 0
      %1962 = vmatpush1.bf16.msra.mxu0 %v1907
      %1963 = vmatprep.subr.bf16.mxu0 0
      %1964 = vmatpush1.bf16.msra.mxu0 %v1908
      %1965 = vmatprep.subr.bf16.mxu0 0
      %1966 = vmatpush1.bf16.msra.mxu0 %v1909
      %1967 = vmatprep.subr.bf16.mxu0 0
      %1968 = vmatpush1.bf16.msra.mxu0 %v1910
      %1969 = vmatprep.subr.bf16.mxu0 0
      %1970 = vmatpush1.bf16.msra.mxu0 %v1911
      %1971 = vmatprep.subr.bf16.mxu0 0
      %1972 = vmatpush1.bf16.msra.mxu0 %v1912
      %1973 = vmatprep.subr.bf16.mxu0 0
      %1974 = vmatpush1.bf16.msra.mxu0 %v1913
      %1975 = vmatprep.subr.bf16.mxu0 0
      %1976 = vmatpush1.bf16.msra.mxu0 %v1914
      %1977 = vmatprep.subr.bf16.mxu0 0
      %1978 = vmatpush1.bf16.msra.mxu0 %v1915
      %1979 = vmatprep.subr.bf16.mxu0 0
      %1980 = vmatpush1.bf16.msra.mxu0 %v1916
      %1981 = vmatprep.mubr.bf16.mxu0 %v403
      %1982 = vmatmul.mubr.bf16.gmra.mrb[0].mxu0 %v311
      %v1983 = vpop.f32.mrb[0].mxu0
      %v1984 = vadd.f32 %v1679, %v1983
      %v1985 = vpop.f32.mrb[0].mxu0
      %v1986 = vpop.f32.mrb[0].mxu0
      %v1987 = vadd.f32 %v1682, %v1986
      %v1988 = vpop.f32.mrb[0].mxu0
      %1989 = vmatprep.mubr.bf16.mxu0 %v415
      %1990 = vmatmul.mubr.bf16.gmra.mrb[0].mxu0 %v312
      %v1991 = vpop.f32.mrb[0].mxu0
      %v1992 = vadd.f32 %v1687, %v1991
      %v1993 = vpop.f32.mrb[0].mxu0
      %v1994 = vpop.f32.mrb[0].mxu0
      %v1995 = vadd.f32 %v1690, %v1994
      %v1996 = vpop.f32.mrb[0].mxu0
      %1997 = vmatprep.mubr.bf16.mxu0 %v427
      %1998 = vmatmul.mubr.bf16.gmra.mrb[0].mxu0 %v313
      %v1999 = vpop.f32.mrb[0].mxu0
      %v2000 = vadd.f32 %v1695, %v1999
      %v2001 = vpop.f32.mrb[0].mxu0
      %v2002 = vpop.f32.mrb[0].mxu0
      %v2003 = vadd.f32 %v1698, %v2002
      %v2004 = vpop.f32.mrb[0].mxu0
      %2005 = vmatprep.mubr.bf16.mxu0 %v439
      %2006 = vmatmul.mubr.bf16.gmra.mrb[0].mxu0 %v314
      %v2007 = vpop.f32.mrb[0].mxu0
      %v2008 = vadd.f32 %v1703, %v2007
      %v2009 = vpop.f32.mrb[0].mxu0
      %v2010 = vpop.f32.mrb[0].mxu0
      %v2011 = vadd.f32 %v1706, %v2010
      %v2012 = vpop.f32.mrb[0].mxu0
      %2013 = vmatprep.mubr.bf16.mxu0 %v451
      %2014 = vmatmul.mubr.bf16.gmra.mrb[0].mxu0 %v315
      %v2015 = vpop.f32.mrb[0].mxu0
      %v2016 = vadd.f32 %v1711, %v2015
      %v2017 = vpop.f32.mrb[0].mxu0
      %v2018 = vpop.f32.mrb[0].mxu0
      %v2019 = vadd.f32 %v1714, %v2018
      %v2020 = vpop.f32.mrb[0].mxu0
      %2021 = vmatprep.mubr.bf16.mxu0 %v463
      %2022 = vmatmul.mubr.bf16.gmra.mrb[0].mxu0 %v316
      %v2023 = vpop.f32.mrb[0].mxu0
      %v2024 = vadd.f32 %v1719, %v2023
      %v2025 = vpop.f32.mrb[0].mxu0
      %v2026 = vpop.f32.mrb[0].mxu0
      %v2027 = vadd.f32 %v1722, %v2026
      %v2028 = vpop.f32.mrb[0].mxu0
      %2029 = vmatprep.mubr.bf16.mxu0 %v475
      %2030 = vmatmul.mubr.bf16.gmra.mrb[0].mxu0 %v317
      %v2031 = vpop.f32.mrb[0].mxu0
      %v2032 = vadd.f32 %v1727, %v2031
      %v2033 = vpop.f32.mrb[0].mxu0
      %v2034 = vpop.f32.mrb[0].mxu0
      %v2035 = vadd.f32 %v1730, %v2034
      %v2036 = vpop.f32.mrb[0].mxu0
      %2037 = vmatprep.mubr.bf16.mxu0 %v487
      %2038 = vmatmul.mubr.bf16.gmra.mrb[0].mxu0 %v318
      %v2039 = vpop.f32.mrb[0].mxu0
      %v2040 = vadd.f32 %v1735, %v2039
      %v2041 = vpop.f32.mrb[0].mxu0
      %v2042 = vpop.f32.mrb[0].mxu0
      %v2043 = vadd.f32 %v1738, %v2042
      %v2044 = vpop.f32.mrb[0].mxu0
      %2045 = vmatprep.mubr.bf16.mxu0 %v499
      %2046 = vmatmul.mubr.bf16.gmra.mrb[0].mxu0 %v319
      %v2047 = vpop.f32.mrb[0].mxu0
      %v2048 = vadd.f32 %v1743, %v2047
      %v2049 = vpop.f32.mrb[0].mxu0
      %v2050 = vpop.f32.mrb[0].mxu0
      %v2051 = vadd.f32 %v1746, %v2050
      %v2052 = vpop.f32.mrb[0].mxu0
      %2053 = vmatprep.mubr.bf16.mxu0 %v511
      %2054 = vmatmul.mubr.bf16.gmra.mrb[0].mxu0 %v320
      %v2055 = vpop.f32.mrb[0].mxu0
      %v2056 = vadd.f32 %v1751, %v2055
      %v2057 = vpop.f32.mrb[0].mxu0
      %v2058 = vpop.f32.mrb[0].mxu0
      %v2059 = vadd.f32 %v1754, %v2058
      %v2060 = vpop.f32.mrb[0].mxu0
      %2061 = vmatprep.mubr.bf16.mxu0 %v523
      %2062 = vmatmul.mubr.bf16.gmra.mrb[0].mxu0 %v321
      %v2063 = vpop.f32.mrb[0].mxu0
      %v2064 = vadd.f32 %v1759, %v2063
      %v2065 = vpop.f32.mrb[0].mxu0
      %v2066 = vpop.f32.mrb[0].mxu0
      %v2067 = vadd.f32 %v1762, %v2066
      %v2068 = vpop.f32.mrb[0].mxu0
      %2069 = vmatprep.mubr.bf16.mxu0 %v535
      %2070 = vmatmul.mubr.bf16.gmra.mrb[0].mxu0 %v322
      %v2071 = vpop.f32.mrb[0].mxu0
      %v2072 = vadd.f32 %v1767, %v2071
      %v2073 = vpop.f32.mrb[0].mxu0
      %v2074 = vpop.f32.mrb[0].mxu0
      %v2075 = vadd.f32 %v1770, %v2074
      %v2076 = vpop.f32.mrb[0].mxu0
      %2077 = vmatprep.mubr.bf16.mxu0 %v547
      %2078 = vmatmul.mubr.bf16.gmra.mrb[0].mxu0 %v323
      %v2079 = vpop.f32.mrb[0].mxu0
      %v2080 = vadd.f32 %v1775, %v2079
      %v2081 = vpop.f32.mrb[0].mxu0
      %v2082 = vpop.f32.mrb[0].mxu0
      %v2083 = vadd.f32 %v1778, %v2082
      %v2084 = vpop.f32.mrb[0].mxu0
      %2085 = vmatprep.mubr.bf16.mxu0 %v559
      %2086 = vmatmul.mubr.bf16.gmra.mrb[0].mxu0 %v324
      %v2087 = vpop.f32.mrb[0].mxu0
      %v2088 = vadd.f32 %v1783, %v2087
      %v2089 = vpop.f32.mrb[0].mxu0
      %v2090 = vpop.f32.mrb[0].mxu0
      %v2091 = vadd.f32 %v1786, %v2090
      %v2092 = vpop.f32.mrb[0].mxu0
      %2093 = vmatprep.mubr.bf16.mxu0 %v571
      %2094 = vmatmul.mubr.bf16.gmra.mrb[0].mxu0 %v325
      %v2095 = vpop.f32.mrb[0].mxu0
      %v2096 = vadd.f32 %v1791, %v2095
      %v2097 = vpop.f32.mrb[0].mxu0
      %v2098 = vpop.f32.mrb[0].mxu0
      %v2099 = vadd.f32 %v1794, %v2098
      %v2100 = vpop.f32.mrb[0].mxu0
      %2101 = vmatprep.mubr.bf16.mxu0 %v583
      %2102 = vmatmul.mubr.bf16.gmra.mrb[0].mxu0 %v326
      %v2103 = vpop.f32.mrb[0].mxu0
      %v2104 = vadd.f32 %v1799, %v2103
      %v2105 = vpop.f32.mrb[0].mxu0
      %v2106 = vpop.f32.mrb[0].mxu0
      %v2107 = vadd.f32 %v1802, %v2106
      %v2108 = vpop.f32.mrb[0].mxu0
      %2109 = vdwg.mxu0
      %2110 = vmatprep.subr.bf16.mxu0 0
      %2111 = vmatpush1.bf16.msra.mxu0 %v1917
      %2112 = vmatprep.subr.bf16.mxu0 0
      %2113 = vmatpush1.bf16.msra.mxu0 %v1918
      %2114 = vmatprep.subr.bf16.mxu0 0
      %2115 = vmatpush1.bf16.msra.mxu0 %v1919
      %2116 = vmatprep.subr.bf16.mxu0 0
      %2117 = vmatpush1.bf16.msra.mxu0 %v1920
      %2118 = vmatprep.subr.bf16.mxu0 0
      %2119 = vmatpush1.bf16.msra.mxu0 %v1921
      %2120 = vmatprep.subr.bf16.mxu0 0
      %2121 = vmatpush1.bf16.msra.mxu0 %v1922
      %2122 = vmatprep.subr.bf16.mxu0 0
      %2123 = vmatpush1.bf16.msra.mxu0 %v1923
      %2124 = vmatprep.subr.bf16.mxu0 0
      %2125 = vmatpush1.bf16.msra.mxu0 %v1924
      %2126 = vmatprep.subr.bf16.mxu0 0
      %2127 = vmatpush1.bf16.msra.mxu0 0
      %2128 = vmatprep.subr.bf16.mxu0 0
      %2129 = vmatpush1.bf16.msra.mxu0 0
      %2130 = vmatprep.subr.bf16.mxu0 0
      %2131 = vmatpush1.bf16.msra.mxu0 0
      %2132 = vmatprep.subr.bf16.mxu0 0
      %2133 = vmatpush1.bf16.msra.mxu0 0
      %2134 = vmatprep.subr.bf16.mxu0 0
      %2135 = vmatpush1.bf16.msra.mxu0 0
      %2136 = vmatprep.subr.bf16.mxu0 0
      %2137 = vmatpush1.bf16.msra.mxu0 0
      %2138 = vmatprep.subr.bf16.mxu0 0
      %2139 = vmatpush1.bf16.msra.mxu0 0
      %2140 = vmatprep.subr.bf16.mxu0 0
      %2141 = vmatpush1.bf16.msra.mxu0 0
      %2142 = vmatprep.mubr.bf16.mxu0 0
      %2143 = vmatmul.mubr.bf16.gmra.mrb[0].mxu0 %v651
      %v2144 = vpop.f32.mrb[0].mxu0
      %v2145 = vadd.f32 %v1984, %v2144
      %v2146 = vpop.f32.mrb[0].mxu0
      %v2147 = vpop.f32.mrb[0].mxu0
      %v2148 = vadd.f32 %v1987, %v2147
      %v2149 = vpop.f32.mrb[0].mxu0
      %2150 = vmatprep.mubr.bf16.mxu0 0
      %2151 = vmatmul.mubr.bf16.gmra.mrb[0].mxu0 %v654
      %v2152 = vpop.f32.mrb[0].mxu0
      %v2153 = vadd.f32 %v1992, %v2152
      %v2154 = vpop.f32.mrb[0].mxu0
      %v2155 = vpop.f32.mrb[0].mxu0
      %v2156 = vadd.f32 %v1995, %v2155
      %v2157 = vpop.f32.mrb[0].mxu0
      %2158 = vmatprep.mubr.bf16.mxu0 0
      %2159 = vmatmul.mubr.bf16.gmra.mrb[0].mxu0 %v657
      %v2160 = vpop.f32.mrb[0].mxu0
      %v2161 = vadd.f32 %v2000, %v2160
      %v2162 = vpop.f32.mrb[0].mxu0
      %v2163 = vpop.f32.mrb[0].mxu0
      %v2164 = vadd.f32 %v2003, %v2163
      %v2165 = vpop.f32.mrb[0].mxu0
      %2166 = vmatprep.mubr.bf16.mxu0 0
      %2167 = vmatmul.mubr.bf16.gmra.mrb[0].mxu0 %v660
      %v2168 = vpop.f32.mrb[0].mxu0
      %v2169 = vadd.f32 %v2008, %v2168
      %v2170 = vpop.f32.mrb[0].mxu0
      %v2171 = vpop.f32.mrb[0].mxu0
      %v2172 = vadd.f32 %v2011, %v2171
      %v2173 = vpop.f32.mrb[0].mxu0
      %2174 = vmatprep.mubr.bf16.mxu0 0
      %2175 = vmatmul.mubr.bf16.gmra.mrb[0].mxu0 %v663
      %v2176 = vpop.f32.mrb[0].mxu0
      %v2177 = vadd.f32 %v2016, %v2176
      %v2178 = vpop.f32.mrb[0].mxu0
      %v2179 = vpop.f32.mrb[0].mxu0
      %v2180 = vadd.f32 %v2019, %v2179
      %v2181 = vpop.f32.mrb[0].mxu0
      %2182 = vmatprep.mubr.bf16.mxu0 0
      %2183 = vmatmul.mubr.bf16.gmra.mrb[0].mxu0 %v666
      %v2184 = vpop.f32.mrb[0].mxu0
      %v2185 = vadd.f32 %v2024, %v2184
      %v2186 = vpop.f32.mrb[0].mxu0
      %v2187 = vpop.f32.mrb[0].mxu0
      %v2188 = vadd.f32 %v2027, %v2187
      %v2189 = vpop.f32.mrb[0].mxu0
      %2190 = vmatprep.mubr.bf16.mxu0 0
      %2191 = vmatmul.mubr.bf16.gmra.mrb[0].mxu0 %v669
      %v2192 = vpop.f32.mrb[0].mxu0
      %v2193 = vadd.f32 %v2032, %v2192
      %v2194 = vpop.f32.mrb[0].mxu0
      %v2195 = vpop.f32.mrb[0].mxu0
      %v2196 = vadd.f32 %v2035, %v2195
      %v2197 = vpop.f32.mrb[0].mxu0
      %2198 = vmatprep.mubr.bf16.mxu0 0
      %2199 = vmatmul.mubr.bf16.gmra.mrb[0].mxu0 %v672
      %v2200 = vpop.f32.mrb[0].mxu0
      %v2201 = vadd.f32 %v2040, %v2200
      %v2202 = vpop.f32.mrb[0].mxu0
      %v2203 = vpop.f32.mrb[0].mxu0
      %v2204 = vadd.f32 %v2043, %v2203
      %v2205 = vpop.f32.mrb[0].mxu0
      %2206 = vmatprep.mubr.bf16.mxu0 0
      %2207 = vmatmul.mubr.bf16.gmra.mrb[0].mxu0 %v675
      %v2208 = vpop.f32.mrb[0].mxu0
      %v2209 = vadd.f32 %v2048, %v2208
      %v2210 = vpop.f32.mrb[0].mxu0
      %v2211 = vpop.f32.mrb[0].mxu0
      %v2212 = vadd.f32 %v2051, %v2211
      %v2213 = vpop.f32.mrb[0].mxu0
      %2214 = vmatprep.mubr.bf16.mxu0 0
      %2215 = vmatmul.mubr.bf16.gmra.mrb[0].mxu0 %v678
      %v2216 = vpop.f32.mrb[0].mxu0
      %v2217 = vadd.f32 %v2056, %v2216
      %v2218 = vpop.f32.mrb[0].mxu0
      %v2219 = vpop.f32.mrb[0].mxu0
      %v2220 = vadd.f32 %v2059, %v2219
      %v2221 = vpop.f32.mrb[0].mxu0
      %2222 = vmatprep.mubr.bf16.mxu0 0
      %2223 = vmatmul.mubr.bf16.gmra.mrb[0].mxu0 %v681
      %v2224 = vpop.f32.mrb[0].mxu0
      %v2225 = vadd.f32 %v2064, %v2224
      %v2226 = vpop.f32.mrb[0].mxu0
      %v2227 = vpop.f32.mrb[0].mxu0
      %v2228 = vadd.f32 %v2067, %v2227
      %v2229 = vpop.f32.mrb[0].mxu0
      %2230 = vmatprep.mubr.bf16.mxu0 0
      %2231 = vmatmul.mubr.bf16.gmra.mrb[0].mxu0 %v684
      %v2232 = vpop.f32.mrb[0].mxu0
      %v2233 = vadd.f32 %v2072, %v2232
      %v2234 = vpop.f32.mrb[0].mxu0
      %v2235 = vpop.f32.mrb[0].mxu0
      %v2236 = vadd.f32 %v2075, %v2235
      %v2237 = vpop.f32.mrb[0].mxu0
      %2238 = vmatprep.mubr.bf16.mxu0 0
      %2239 = vmatmul.mubr.bf16.gmra.mrb[0].mxu0 %v687
      %v2240 = vpop.f32.mrb[0].mxu0
      %v2241 = vadd.f32 %v2080, %v2240
      %v2242 = vpop.f32.mrb[0].mxu0
      %v2243 = vpop.f32.mrb[0].mxu0
      %v2244 = vadd.f32 %v2083, %v2243
      %v2245 = vpop.f32.mrb[0].mxu0
      %2246 = vmatprep.mubr.bf16.mxu0 0
      %2247 = vmatmul.mubr.bf16.gmra.mrb[0].mxu0 %v690
      %v2248 = vpop.f32.mrb[0].mxu0
      %v2249 = vadd.f32 %v2088, %v2248
      %v2250 = vpop.f32.mrb[0].mxu0
      %v2251 = vpop.f32.mrb[0].mxu0
      %v2252 = vadd.f32 %v2091, %v2251
      %v2253 = vpop.f32.mrb[0].mxu0
      %2254 = vmatprep.mubr.bf16.mxu0 0
      %2255 = vmatmul.mubr.bf16.gmra.mrb[0].mxu0 %v693
      %v2256 = vpop.f32.mrb[0].mxu0
      %v2257 = vadd.f32 %v2096, %v2256
      %v2258 = vpop.f32.mrb[0].mxu0
      %v2259 = vpop.f32.mrb[0].mxu0
      %v2260 = vadd.f32 %v2099, %v2259
      %v2261 = vpop.f32.mrb[0].mxu0
      %2262 = vmatprep.mubr.bf16.mxu0 0
      %2263 = vmatmul.mubr.bf16.gmra.mrb[0].mxu0 %v696
      %v2264 = vpop.f32.mrb[0].mxu0
      %v2265 = vadd.f32 %v2104, %v2264
      %v2266 = vpop.f32.mrb[0].mxu0
      %v2267 = vpop.f32.mrb[0].mxu0
      %v2268 = vadd.f32 %v2107, %v2267
      %v2269 = vpop.f32.mrb[0].mxu0
      %2270 = vdwg.mxu0
      %s2271 = scalar_lea.vmem %s172, 24
      %v2272 = vld [vmem:[%s2271] sm:$0xf]
      %v2273 = vld [vmem:[%s2271 + $0x4] sm:$0xf]
      %v2274 = vld [vmem:[%s2271 + $0xc] sm:$0xf]
      %v2275 = vld [vmem:[%s2271 + $0x10] sm:$0xf]
      %v2276 = vld [vmem:[%s2271 + $0x18] sm:$0xf]
      %v2277 = vld [vmem:[%s2271 + $0x1c] sm:$0xf]
      %v2278 = vld [vmem:[%s2271 + $0x24] sm:$0xf]
      %v2279 = vld [vmem:[%s2271 + $0x28] sm:$0xf]
      %v2280 = vld [vmem:[%s2271 + $0x30] sm:$0xf]
      %v2281 = vld [vmem:[%s2271 + $0x34] sm:$0xf]
      %v2282 = vld [vmem:[%s2271 + $0x3c] sm:$0xf]
      %v2283 = vld [vmem:[%s2271 + $0x40] sm:$0xf]
      %v2284 = vld [vmem:[%s2271 + $0x48] sm:$0xf]
      %v2285 = vld [vmem:[%s2271 + $0x4c] sm:$0xf]
      %v2286 = vld [vmem:[%s2271 + $0x54] sm:$0xf]
      %v2287 = vld [vmem:[%s2271 + $0x58] sm:$0xf]
      %v2288 = vld [vmem:[%s2271 + $0x60] sm:$0xf]
      %v2289 = vld [vmem:[%s2271 + $0x64] sm:$0xf]
      %v2290 = vld [vmem:[%s2271 + $0x6c] sm:$0xf]
      %v2291 = vld [vmem:[%s2271 + $0x70] sm:$0xf]
      %v2292 = vld [vmem:[%s2271 + $0x78] sm:$0xf]
      %v2293 = vld [vmem:[%s2271 + $0x7c] sm:$0xf]
      %v2294 = vld [vmem:[%s2271 + $0x84] sm:$0xf]
      %v2295 = vld [vmem:[%s2271 + $0x88] sm:$0xf]
      %v2296 = vld [vmem:[%s2271 + $0x90] sm:$0xf]
      %v2297 = vld [vmem:[%s2271 + $0x94] sm:$0xf]
      %v2298 = vld [vmem:[%s2271 + $0x9c] sm:$0xf]
      %v2299 = vld [vmem:[%s2271 + $0xa0] sm:$0xf]
      %v2300 = vld [vmem:[%s2271 + $0xa8] sm:$0xf]
      %v2301 = vld [vmem:[%s2271 + $0xac] sm:$0xf]
      %v2302 = vld [vmem:[%s2271 + $0xb4] sm:$0xf]
      %v2303 = vld [vmem:[%s2271 + $0xb8] sm:$0xf]
      %v2304 = vld [vmem:[%s2271 + $0x8] sm:$0x1]
      %v2305 = vld [vmem:[%s2271 + $0x14] sm:$0x1]
      %v2306 = vld [vmem:[%s2271 + $0x20] sm:$0x1]
      %v2307 = vld [vmem:[%s2271 + $0x2c] sm:$0x1]
      %v2308 = vld [vmem:[%s2271 + $0x38] sm:$0x1]
      %v2309 = vld [vmem:[%s2271 + $0x44] sm:$0x1]
      %v2310 = vld [vmem:[%s2271 + $0x50] sm:$0x1]
      %v2311 = vld [vmem:[%s2271 + $0x5c] sm:$0x1]
      %v2312 = vld [vmem:[%s2271 + $0x68] sm:$0x1]
      %v2313 = vld [vmem:[%s2271 + $0x74] sm:$0x1]
      %v2314 = vld [vmem:[%s2271 + $0x80] sm:$0x1]
      %v2315 = vld [vmem:[%s2271 + $0x8c] sm:$0x1]
      %v2316 = vld [vmem:[%s2271 + $0x98] sm:$0x1]
      %v2317 = vld [vmem:[%s2271 + $0xa4] sm:$0x1]
      %v2318 = vld [vmem:[%s2271 + $0xb0] sm:$0x1]
      %v2319 = vld [vmem:[%s2271 + $0xbc] sm:$0x1]
      %v2320 = vld [vmem:[%s2271] sm:$0xe]
      %v2321 = vld [vmem:[%s2271 + $0xc] sm:$0xe]
      %v2322 = vld [vmem:[%s2271 + $0x18] sm:$0xe]
      %v2323 = vld [vmem:[%s2271 + $0x24] sm:$0xe]
      %v2324 = vld [vmem:[%s2271 + $0x30] sm:$0xe]
      %v2325 = vld [vmem:[%s2271 + $0x3c] sm:$0xe]
      %v2326 = vld [vmem:[%s2271 + $0x48] sm:$0xe]
      %v2327 = vld [vmem:[%s2271 + $0x54] sm:$0xe]
      %v2328 = vld [vmem:[%s2271 + $0x60] sm:$0xe]
      %v2329 = vld [vmem:[%s2271 + $0x6c] sm:$0xe]
      %v2330 = vld [vmem:[%s2271 + $0x78] sm:$0xe]
      %v2331 = vld [vmem:[%s2271 + $0x84] sm:$0xe]
      %v2332 = vld [vmem:[%s2271 + $0x90] sm:$0xe]
      %v2333 = vld [vmem:[%s2271 + $0x9c] sm:$0xe]
      %v2334 = vld [vmem:[%s2271 + $0xa8] sm:$0xe]
      %v2335 = vld [vmem:[%s2271 + $0xb4] sm:$0xe]
      %v2368 = vunpack.c.l.b16 %v2272
      %v2369 = vunpack.c.l.b16 %v2273
      %v2370 = vunpack.c.l.b16 %v2274
      %v2371 = vunpack.c.l.b16 %v2275
      %v2372 = vunpack.c.l.b16 %v2276
      %v2373 = vunpack.c.l.b16 %v2277
      %v2374 = vunpack.c.l.b16 %v2278
      %v2375 = vunpack.c.l.b16 %v2279
      %v2376 = vunpack.c.l.b16 %v2280
      %v2377 = vunpack.c.l.b16 %v2281
      %v2378 = vunpack.c.l.b16 %v2282
      %v2379 = vunpack.c.l.b16 %v2283
      %v2380 = vunpack.c.l.b16 %v2284
      %v2381 = vunpack.c.l.b16 %v2285
      %v2382 = vunpack.c.l.b16 %v2286
      %v2383 = vunpack.c.l.b16 %v2287
      %v2384 = vunpack.c.l.b16 %v2288
      %v2385 = vunpack.c.l.b16 %v2289
      %v2386 = vunpack.c.l.b16 %v2290
      %v2387 = vunpack.c.l.b16 %v2291
      %v2388 = vunpack.c.l.b16 %v2292
      %v2389 = vunpack.c.l.b16 %v2293
      %v2390 = vunpack.c.l.b16 %v2294
      %v2391 = vunpack.c.l.b16 %v2295
      %v2392 = vunpack.c.l.b16 %v2296
      %v2393 = vunpack.c.l.b16 %v2297
      %v2394 = vunpack.c.l.b16 %v2298
      %v2395 = vunpack.c.l.b16 %v2299
      %v2396 = vunpack.c.l.b16 %v2300
      %v2397 = vunpack.c.l.b16 %v2301
      %v2398 = vunpack.c.l.b16 %v2302
      %v2399 = vunpack.c.l.b16 %v2303
      %v2400 = vpack.c.b16 %v2369, %v2368
      %v2401 = vpack.c.b16 %v2371, %v2370
      %v2402 = vpack.c.b16 %v2373, %v2372
      %v2403 = vpack.c.b16 %v2375, %v2374
      %v2404 = vpack.c.b16 %v2377, %v2376
      %v2405 = vpack.c.b16 %v2379, %v2378
      %v2406 = vpack.c.b16 %v2381, %v2380
      %v2407 = vpack.c.b16 %v2383, %v2382
      %v2408 = vpack.c.b16 %v2385, %v2384
      %v2409 = vpack.c.b16 %v2387, %v2386
      %v2410 = vpack.c.b16 %v2389, %v2388
      %v2411 = vpack.c.b16 %v2391, %v2390
      %v2412 = vpack.c.b16 %v2393, %v2392
      %v2413 = vpack.c.b16 %v2395, %v2394
      %v2414 = vpack.c.b16 %v2397, %v2396
      %v2415 = vpack.c.b16 %v2399, %v2398
      %v2448 = vunpack.c.l.b16 %v2304
      %v2449 = vunpack.c.l.b16 %v2305
      %v2450 = vunpack.c.l.b16 %v2306
      %v2451 = vunpack.c.l.b16 %v2307
      %v2452 = vunpack.c.l.b16 %v2308
      %v2453 = vunpack.c.l.b16 %v2309
      %v2454 = vunpack.c.l.b16 %v2310
      %v2455 = vunpack.c.l.b16 %v2311
      %v2456 = vunpack.c.l.b16 %v2312
      %v2457 = vunpack.c.l.b16 %v2313
      %v2458 = vunpack.c.l.b16 %v2314
      %v2459 = vunpack.c.l.b16 %v2315
      %v2460 = vunpack.c.l.b16 %v2316
      %v2461 = vunpack.c.l.b16 %v2317
      %v2462 = vunpack.c.l.b16 %v2318
      %v2463 = vunpack.c.l.b16 %v2319
      %v2464 = vpack.c.b16 %v2448, %v2448
      %v2465 = vpack.c.b16 %v2449, %v2449
      %v2466 = vpack.c.b16 %v2450, %v2450
      %v2467 = vpack.c.b16 %v2451, %v2451
      %v2468 = vpack.c.b16 %v2452, %v2452
      %v2469 = vpack.c.b16 %v2453, %v2453
      %v2470 = vpack.c.b16 %v2454, %v2454
      %v2471 = vpack.c.b16 %v2455, %v2455
      %v2472 = vpack.c.b16 %v2456, %v2456
      %v2473 = vpack.c.b16 %v2457, %v2457
      %v2474 = vpack.c.b16 %v2458, %v2458
      %v2475 = vpack.c.b16 %v2459, %v2459
      %v2476 = vpack.c.b16 %v2460, %v2460
      %v2477 = vpack.c.b16 %v2461, %v2461
      %v2478 = vpack.c.b16 %v2462, %v2462
      %v2479 = vpack.c.b16 %v2463, %v2463
      %v2481 = vshrl.u32 %v2400, 16
      %v2483 = vshll.u32 %v2400, 16
      %v2485 = vrot.slane %v2483, 1
      %v2486 = vor.u32 %v2481, %v2485
      %v2488 = vshll.u32 %v2464, 16
      %v2490 = vrot.slane %v2488, 1
      %v2491 = vsel %vm391, %v2486, %v2490
      %v2493 = vshrl.u32 %v2401, 16
      %v2495 = vshll.u32 %v2401, 16
      %v2497 = vrot.slane %v2495, 1
      %v2498 = vor.u32 %v2493, %v2497
      %v2500 = vshll.u32 %v2465, 16
      %v2502 = vrot.slane %v2500, 1
      %v2503 = vsel %vm391, %v2498, %v2502
      %v2505 = vshrl.u32 %v2402, 16
      %v2507 = vshll.u32 %v2402, 16
      %v2509 = vrot.slane %v2507, 1
      %v2510 = vor.u32 %v2505, %v2509
      %v2512 = vshll.u32 %v2466, 16
      %v2514 = vrot.slane %v2512, 1
      %v2515 = vsel %vm391, %v2510, %v2514
      %v2517 = vshrl.u32 %v2403, 16
      %v2519 = vshll.u32 %v2403, 16
      %v2521 = vrot.slane %v2519, 1
      %v2522 = vor.u32 %v2517, %v2521
      %v2524 = vshll.u32 %v2467, 16
      %v2526 = vrot.slane %v2524, 1
      %v2527 = vsel %vm391, %v2522, %v2526
      %v2529 = vshrl.u32 %v2404, 16
      %v2531 = vshll.u32 %v2404, 16
      %v2533 = vrot.slane %v2531, 1
      %v2534 = vor.u32 %v2529, %v2533
      %v2536 = vshll.u32 %v2468, 16
      %v2538 = vrot.slane %v2536, 1
      %v2539 = vsel %vm391, %v2534, %v2538
      %v2541 = vshrl.u32 %v2405, 16
      %v2543 = vshll.u32 %v2405, 16
      %v2545 = vrot.slane %v2543, 1
      %v2546 = vor.u32 %v2541, %v2545
      %v2548 = vshll.u32 %v2469, 16
      %v2550 = vrot.slane %v2548, 1
      %v2551 = vsel %vm391, %v2546, %v2550
      %v2553 = vshrl.u32 %v2406, 16
      %v2555 = vshll.u32 %v2406, 16
      %v2557 = vrot.slane %v2555, 1
      %v2558 = vor.u32 %v2553, %v2557
      %v2560 = vshll.u32 %v2470, 16
      %v2562 = vrot.slane %v2560, 1
      %v2563 = vsel %vm391, %v2558, %v2562
      %v2565 = vshrl.u32 %v2407, 16
      %v2567 = vshll.u32 %v2407, 16
      %v2569 = vrot.slane %v2567, 1
      %v2570 = vor.u32 %v2565, %v2569
      %v2572 = vshll.u32 %v2471, 16
      %v2574 = vrot.slane %v2572, 1
      %v2575 = vsel %vm391, %v2570, %v2574
      %v2577 = vshrl.u32 %v2408, 16
      %v2579 = vshll.u32 %v2408, 16
      %v2581 = vrot.slane %v2579, 1
      %v2582 = vor.u32 %v2577, %v2581
      %v2584 = vshll.u32 %v2472, 16
      %v2586 = vrot.slane %v2584, 1
      %v2587 = vsel %vm391, %v2582, %v2586
      %v2589 = vshrl.u32 %v2409, 16
      %v2591 = vshll.u32 %v2409, 16
      %v2593 = vrot.slane %v2591, 1
      %v2594 = vor.u32 %v2589, %v2593
      %v2596 = vshll.u32 %v2473, 16
      %v2598 = vrot.slane %v2596, 1
      %v2599 = vsel %vm391, %v2594, %v2598
      %v2601 = vshrl.u32 %v2410, 16
      %v2603 = vshll.u32 %v2410, 16
      %v2605 = vrot.slane %v2603, 1
      %v2606 = vor.u32 %v2601, %v2605
      %v2608 = vshll.u32 %v2474, 16
      %v2610 = vrot.slane %v2608, 1
      %v2611 = vsel %vm391, %v2606, %v2610
      %v2613 = vshrl.u32 %v2411, 16
      %v2615 = vshll.u32 %v2411, 16
      %v2617 = vrot.slane %v2615, 1
      %v2618 = vor.u32 %v2613, %v2617
      %v2620 = vshll.u32 %v2475, 16
      %v2622 = vrot.slane %v2620, 1
      %v2623 = vsel %vm391, %v2618, %v2622
      %v2625 = vshrl.u32 %v2412, 16
      %v2627 = vshll.u32 %v2412, 16
      %v2629 = vrot.slane %v2627, 1
      %v2630 = vor.u32 %v2625, %v2629
      %v2632 = vshll.u32 %v2476, 16
      %v2634 = vrot.slane %v2632, 1
      %v2635 = vsel %vm391, %v2630, %v2634
      %v2637 = vshrl.u32 %v2413, 16
      %v2639 = vshll.u32 %v2413, 16
      %v2641 = vrot.slane %v2639, 1
      %v2642 = vor.u32 %v2637, %v2641
      %v2644 = vshll.u32 %v2477, 16
      %v2646 = vrot.slane %v2644, 1
      %v2647 = vsel %vm391, %v2642, %v2646
      %v2649 = vshrl.u32 %v2414, 16
      %v2651 = vshll.u32 %v2414, 16
      %v2653 = vrot.slane %v2651, 1
      %v2654 = vor.u32 %v2649, %v2653
      %v2656 = vshll.u32 %v2478, 16
      %v2658 = vrot.slane %v2656, 1
      %v2659 = vsel %vm391, %v2654, %v2658
      %v2661 = vshrl.u32 %v2415, 16
      %v2663 = vshll.u32 %v2415, 16
      %v2665 = vrot.slane %v2663, 1
      %v2666 = vor.u32 %v2661, %v2665
      %v2668 = vshll.u32 %v2479, 16
      %v2670 = vrot.slane %v2668, 1
      %v2671 = vsel %vm391, %v2666, %v2670
      %v2704 = vunpack.c.l.b16 %v2320
      %v2705 = vunpack.c.l.b16 %v2321
      %v2706 = vunpack.c.l.b16 %v2322
      %v2707 = vunpack.c.l.b16 %v2323
      %v2708 = vunpack.c.l.b16 %v2324
      %v2709 = vunpack.c.l.b16 %v2325
      %v2710 = vunpack.c.l.b16 %v2326
      %v2711 = vunpack.c.l.b16 %v2327
      %v2712 = vunpack.c.l.b16 %v2328
      %v2713 = vunpack.c.l.b16 %v2329
      %v2714 = vunpack.c.l.b16 %v2330
      %v2715 = vunpack.c.l.b16 %v2331
      %v2716 = vunpack.c.l.b16 %v2332
      %v2717 = vunpack.c.l.b16 %v2333
      %v2718 = vunpack.c.l.b16 %v2334
      %v2719 = vunpack.c.l.b16 %v2335
      %v2720 = vpack.c.b16 %v2369, %v2704
      %v2721 = vpack.c.b16 %v2371, %v2705
      %v2722 = vpack.c.b16 %v2373, %v2706
      %v2723 = vpack.c.b16 %v2375, %v2707
      %v2724 = vpack.c.b16 %v2377, %v2708
      %v2725 = vpack.c.b16 %v2379, %v2709
      %v2726 = vpack.c.b16 %v2381, %v2710
      %v2727 = vpack.c.b16 %v2383, %v2711
      %v2728 = vpack.c.b16 %v2385, %v2712
      %v2729 = vpack.c.b16 %v2387, %v2713
      %v2730 = vpack.c.b16 %v2389, %v2714
      %v2731 = vpack.c.b16 %v2391, %v2715
      %v2732 = vpack.c.b16 %v2393, %v2716
      %v2733 = vpack.c.b16 %v2395, %v2717
      %v2734 = vpack.c.b16 %v2397, %v2718
      %v2735 = vpack.c.b16 %v2399, %v2719
      %v2736 = vrot.slane %v2720, 1
      %v2737 = vrot.slane %v2464, 1
      %v2738 = vsel %vm648, %v2736, %v2737
      %v2739 = vrot.slane %v2721, 1
      %v2740 = vrot.slane %v2465, 1
      %v2741 = vsel %vm648, %v2739, %v2740
      %v2742 = vrot.slane %v2722, 1
      %v2743 = vrot.slane %v2466, 1
      %v2744 = vsel %vm648, %v2742, %v2743
      %v2745 = vrot.slane %v2723, 1
      %v2746 = vrot.slane %v2467, 1
      %v2747 = vsel %vm648, %v2745, %v2746
      %v2748 = vrot.slane %v2724, 1
      %v2749 = vrot.slane %v2468, 1
      %v2750 = vsel %vm648, %v2748, %v2749
      %v2751 = vrot.slane %v2725, 1
      %v2752 = vrot.slane %v2469, 1
      %v2753 = vsel %vm648, %v2751, %v2752
      %v2754 = vrot.slane %v2726, 1
      %v2755 = vrot.slane %v2470, 1
      %v2756 = vsel %vm648, %v2754, %v2755
      %v2757 = vrot.slane %v2727, 1
      %v2758 = vrot.slane %v2471, 1
      %v2759 = vsel %vm648, %v2757, %v2758
      %v2760 = vrot.slane %v2728, 1
      %v2761 = vrot.slane %v2472, 1
      %v2762 = vsel %vm648, %v2760, %v2761
      %v2763 = vrot.slane %v2729, 1
      %v2764 = vrot.slane %v2473, 1
      %v2765 = vsel %vm648, %v2763, %v2764
      %v2766 = vrot.slane %v2730, 1
      %v2767 = vrot.slane %v2474, 1
      %v2768 = vsel %vm648, %v2766, %v2767
      %v2769 = vrot.slane %v2731, 1
      %v2770 = vrot.slane %v2475, 1
      %v2771 = vsel %vm648, %v2769, %v2770
      %v2772 = vrot.slane %v2732, 1
      %v2773 = vrot.slane %v2476, 1
      %v2774 = vsel %vm648, %v2772, %v2773
      %v2775 = vrot.slane %v2733, 1
      %v2776 = vrot.slane %v2477, 1
      %v2777 = vsel %vm648, %v2775, %v2776
      %v2778 = vrot.slane %v2734, 1
      %v2779 = vrot.slane %v2478, 1
      %v2780 = vsel %vm648, %v2778, %v2779
      %v2781 = vrot.slane %v2735, 1
      %v2782 = vrot.slane %v2479, 1
      %v2783 = vsel %vm648, %v2781, %v2782
      %s2800 = scalar_lea.vmem %s1, 384
      %v2801 = vld [vmem:[%s2800] sm:$0xf]
      %v2802 = vld [vmem:[%s2800 + $0x4] sm:$0xf]
      %v2803 = vld [vmem:[%s2800 + $0x8] sm:$0xf]
      %v2804 = vld [vmem:[%s2800 + $0xc] sm:$0xf]
      %v2805 = vld [vmem:[%s2800 + $0x10] sm:$0xf]
      %v2806 = vld [vmem:[%s2800 + $0x14] sm:$0xf]
      %v2807 = vld [vmem:[%s2800 + $0x18] sm:$0xf]
      %v2808 = vld [vmem:[%s2800 + $0x1c] sm:$0xf]
      %v2809 = vld [vmem:[%s2800 + $0x20] sm:$0xf]
      %v2810 = vld [vmem:[%s2800 + $0x24] sm:$0xf]
      %v2811 = vld [vmem:[%s2800 + $0x28] sm:$0xf]
      %v2812 = vld [vmem:[%s2800 + $0x2c] sm:$0xf]
      %v2813 = vld [vmem:[%s2800 + $0x30] sm:$0xf]
      %v2814 = vld [vmem:[%s2800 + $0x34] sm:$0xf]
      %v2815 = vld [vmem:[%s2800 + $0x38] sm:$0xf]
      %v2816 = vld [vmem:[%s2800 + $0x3c] sm:$0xf]
      %v2817 = vld [vmem:[%s2800 + $0x40] sm:$0xf]
      %v2818 = vld [vmem:[%s2800 + $0x44] sm:$0xf]
      %v2819 = vld [vmem:[%s2800 + $0x48] sm:$0xf]
      %v2820 = vld [vmem:[%s2800 + $0x4c] sm:$0xf]
      %v2821 = vld [vmem:[%s2800 + $0x50] sm:$0xf]
      %v2822 = vld [vmem:[%s2800 + $0x54] sm:$0xf]
      %v2823 = vld [vmem:[%s2800 + $0x58] sm:$0xf]
      %v2824 = vld [vmem:[%s2800 + $0x5c] sm:$0xf]
      %v2825 = vld [vmem:[%s2800 + $0x60] sm:$0xf]
      %v2826 = vld [vmem:[%s2800 + $0x64] sm:$0xf]
      %v2827 = vld [vmem:[%s2800 + $0x68] sm:$0xf]
      %v2828 = vld [vmem:[%s2800 + $0x6c] sm:$0xf]
      %v2829 = vld [vmem:[%s2800 + $0x70] sm:$0xf]
      %v2830 = vld [vmem:[%s2800 + $0x74] sm:$0xf]
      %v2831 = vld [vmem:[%s2800 + $0x78] sm:$0xf]
      %v2832 = vld [vmem:[%s2800 + $0x7c] sm:$0xf]
      %v2833 = vld [vmem:[%s2800 + $0x80] sm:$0xf]
      %v2834 = vld [vmem:[%s2800 + $0x84] sm:$0xf]
      %v2835 = vld [vmem:[%s2800 + $0x88] sm:$0xf]
      %v2836 = vld [vmem:[%s2800 + $0x8c] sm:$0xf]
      %v2837 = vld [vmem:[%s2800 + $0x90] sm:$0xf]
      %v2838 = vld [vmem:[%s2800 + $0x94] sm:$0xf]
      %v2839 = vld [vmem:[%s2800 + $0x98] sm:$0xf]
      %v2840 = vld [vmem:[%s2800 + $0x9c] sm:$0xf]
      %v2841 = vld [vmem:[%s2800 + $0xa0] sm:$0xf]
      %v2842 = vld [vmem:[%s2800 + $0xa4] sm:$0xf]
      %v2843 = vld [vmem:[%s2800 + $0xa8] sm:$0xf]
      %v2844 = vld [vmem:[%s2800 + $0xac] sm:$0xf]
      %v2845 = vld [vmem:[%s2800 + $0xb0] sm:$0xf]
      %v2846 = vld [vmem:[%s2800 + $0xb4] sm:$0xf]
      %v2847 = vld [vmem:[%s2800 + $0xb8] sm:$0xf]
      %v2848 = vld [vmem:[%s2800 + $0xbc] sm:$0xf]
      %v2897 = vunpack.c.l.b16 %v2801
      %v2898 = vunpack.c.l.b16 %v2802
      %v2899 = vunpack.c.l.b16 %v2803
      %v2900 = vunpack.c.l.b16 %v2804
      %v2901 = vunpack.c.l.b16 %v2805
      %v2902 = vunpack.c.l.b16 %v2806
      %v2903 = vunpack.c.l.b16 %v2807
      %v2904 = vunpack.c.l.b16 %v2808
      %v2905 = vunpack.c.l.b16 %v2809
      %v2906 = vunpack.c.l.b16 %v2810
      %v2907 = vunpack.c.l.b16 %v2811
      %v2908 = vunpack.c.l.b16 %v2812
      %v2909 = vunpack.c.l.b16 %v2813
      %v2910 = vunpack.c.l.b16 %v2814
      %v2911 = vunpack.c.l.b16 %v2815
      %v2912 = vunpack.c.l.b16 %v2816
      %v2913 = vunpack.c.l.b16 %v2817
      %v2914 = vunpack.c.l.b16 %v2818
      %v2915 = vunpack.c.l.b16 %v2819
      %v2916 = vunpack.c.l.b16 %v2820
      %v2917 = vunpack.c.l.b16 %v2821
      %v2918 = vunpack.c.l.b16 %v2822
      %v2919 = vunpack.c.l.b16 %v2823
      %v2920 = vunpack.c.l.b16 %v2824
      %v2921 = vunpack.c.l.b16 %v2825
      %v2922 = vunpack.c.l.b16 %v2826
      %v2923 = vunpack.c.l.b16 %v2827
      %v2924 = vunpack.c.l.b16 %v2828
      %v2925 = vunpack.c.l.b16 %v2829
      %v2926 = vunpack.c.l.b16 %v2830
      %v2927 = vunpack.c.l.b16 %v2831
      %v2928 = vunpack.c.l.b16 %v2832
      %v2929 = vunpack.c.l.b16 %v2833
      %v2930 = vunpack.c.l.b16 %v2834
      %v2931 = vunpack.c.l.b16 %v2835
      %v2932 = vunpack.c.l.b16 %v2836
      %v2933 = vunpack.c.l.b16 %v2837
      %v2934 = vunpack.c.l.b16 %v2838
      %v2935 = vunpack.c.l.b16 %v2839
      %v2936 = vunpack.c.l.b16 %v2840
      %v2937 = vunpack.c.l.b16 %v2841
      %v2938 = vunpack.c.l.b16 %v2842
      %v2939 = vunpack.c.l.b16 %v2843
      %v2940 = vunpack.c.l.b16 %v2844
      %v2941 = vunpack.c.l.b16 %v2845
      %v2942 = vunpack.c.l.b16 %v2846
      %v2943 = vunpack.c.l.b16 %v2847
      %v2944 = vunpack.c.l.b16 %v2848
      %v2945 = vpack.c.b16 %v2898, %v2897
      %v2946 = vpack.c.b16 %v2900, %v2899
      %v2947 = vpack.c.b16 %v2902, %v2901
      %v2948 = vpack.c.b16 %v2904, %v2903
      %v2949 = vpack.c.b16 %v2906, %v2905
      %v2950 = vpack.c.b16 %v2908, %v2907
      %v2951 = vpack.c.b16 %v2910, %v2909
      %v2952 = vpack.c.b16 %v2912, %v2911
      %v2953 = vpack.c.b16 %v2914, %v2913
      %v2954 = vpack.c.b16 %v2916, %v2915
      %v2955 = vpack.c.b16 %v2918, %v2917
      %v2956 = vpack.c.b16 %v2920, %v2919
      %v2957 = vpack.c.b16 %v2922, %v2921
      %v2958 = vpack.c.b16 %v2924, %v2923
      %v2959 = vpack.c.b16 %v2926, %v2925
      %v2960 = vpack.c.b16 %v2928, %v2927
      %v2961 = vpack.c.b16 %v2930, %v2929
      %v2962 = vpack.c.b16 %v2932, %v2931
      %v2963 = vpack.c.b16 %v2934, %v2933
      %v2964 = vpack.c.b16 %v2936, %v2935
      %v2965 = vpack.c.b16 %v2938, %v2937
      %v2966 = vpack.c.b16 %v2940, %v2939
      %v2967 = vpack.c.b16 %v2942, %v2941
      %v2968 = vpack.c.b16 %v2944, %v2943
      %2993 = vmatprep.subr.bf16.mxu0 0
      %2994 = vmatpush1.bf16.msra.mxu0 %v2945
      %2995 = vmatprep.subr.bf16.mxu0 0
      %2996 = vmatpush1.bf16.msra.mxu0 %v2946
      %2997 = vmatprep.subr.bf16.mxu0 0
      %2998 = vmatpush1.bf16.msra.mxu0 %v2947
      %2999 = vmatprep.subr.bf16.mxu0 0
      %3000 = vmatpush1.bf16.msra.mxu0 %v2948
      %3001 = vmatprep.subr.bf16.mxu0 0
      %3002 = vmatpush1.bf16.msra.mxu0 %v2949
      %3003 = vmatprep.subr.bf16.mxu0 0
      %3004 = vmatpush1.bf16.msra.mxu0 %v2950
      %3005 = vmatprep.subr.bf16.mxu0 0
      %3006 = vmatpush1.bf16.msra.mxu0 %v2951
      %3007 = vmatprep.subr.bf16.mxu0 0
      %3008 = vmatpush1.bf16.msra.mxu0 %v2952
      %3009 = vmatprep.subr.bf16.mxu0 0
      %3010 = vmatpush1.bf16.msra.mxu0 %v2953
      %3011 = vmatprep.subr.bf16.mxu0 0
      %3012 = vmatpush1.bf16.msra.mxu0 %v2954
      %3013 = vmatprep.subr.bf16.mxu0 0
      %3014 = vmatpush1.bf16.msra.mxu0 %v2955
      %3015 = vmatprep.subr.bf16.mxu0 0
      %3016 = vmatpush1.bf16.msra.mxu0 %v2956
      %3017 = vmatprep.subr.bf16.mxu0 0
      %3018 = vmatpush1.bf16.msra.mxu0 %v2957
      %3019 = vmatprep.subr.bf16.mxu0 0
      %3020 = vmatpush1.bf16.msra.mxu0 %v2958
      %3021 = vmatprep.subr.bf16.mxu0 0
      %3022 = vmatpush1.bf16.msra.mxu0 %v2959
      %3023 = vmatprep.subr.bf16.mxu0 0
      %3024 = vmatpush1.bf16.msra.mxu0 %v2960
      %3025 = vmatprep.mubr.bf16.mxu0 %v2491
      %3026 = vmatmul.mubr.bf16.gmra.mrb[0].mxu0 %v2400
      %v3027 = vpop.f32.mrb[0].mxu0
      %v3028 = vadd.f32 0.0, %v3027
      %v3029 = vpop.f32.mrb[0].mxu0
      %v3030 = vpop.f32.mrb[0].mxu0
      %v3031 = vadd.f32 0.0, %v3030
      %v3032 = vpop.f32.mrb[0].mxu0
      %3033 = vmatprep.mubr.bf16.mxu0 %v2503
      %3034 = vmatmul.mubr.bf16.gmra.mrb[0].mxu0 %v2401
      %v3035 = vpop.f32.mrb[0].mxu0
      %v3036 = vadd.f32 0.0, %v3035
      %v3037 = vpop.f32.mrb[0].mxu0
      %v3038 = vpop.f32.mrb[0].mxu0
      %v3039 = vadd.f32 0.0, %v3038
      %v3040 = vpop.f32.mrb[0].mxu0
      %3041 = vmatprep.mubr.bf16.mxu0 %v2515
      %3042 = vmatmul.mubr.bf16.gmra.mrb[0].mxu0 %v2402
      %v3043 = vpop.f32.mrb[0].mxu0
      %v3044 = vadd.f32 0.0, %v3043
      %v3045 = vpop.f32.mrb[0].mxu0
      %v3046 = vpop.f32.mrb[0].mxu0
      %v3047 = vadd.f32 0.0, %v3046
      %v3048 = vpop.f32.mrb[0].mxu0
      %3049 = vmatprep.mubr.bf16.mxu0 %v2527
      %3050 = vmatmul.mubr.bf16.gmra.mrb[0].mxu0 %v2403
      %v3051 = vpop.f32.mrb[0].mxu0
      %v3052 = vadd.f32 0.0, %v3051
      %v3053 = vpop.f32.mrb[0].mxu0
      %v3054 = vpop.f32.mrb[0].mxu0
      %v3055 = vadd.f32 0.0, %v3054
      %v3056 = vpop.f32.mrb[0].mxu0
      %3057 = vmatprep.mubr.bf16.mxu0 %v2539
      %3058 = vmatmul.mubr.bf16.gmra.mrb[0].mxu0 %v2404
      %v3059 = vpop.f32.mrb[0].mxu0
      %v3060 = vadd.f32 0.0, %v3059
      %v3061 = vpop.f32.mrb[0].mxu0
      %v3062 = vpop.f32.mrb[0].mxu0
      %v3063 = vadd.f32 0.0, %v3062
      %v3064 = vpop.f32.mrb[0].mxu0
      %3065 = vmatprep.mubr.bf16.mxu0 %v2551
      %3066 = vmatmul.mubr.bf16.gmra.mrb[0].mxu0 %v2405
      %v3067 = vpop.f32.mrb[0].mxu0
      %v3068 = vadd.f32 0.0, %v3067
      %v3069 = vpop.f32.mrb[0].mxu0
      %v3070 = vpop.f32.mrb[0].mxu0
      %v3071 = vadd.f32 0.0, %v3070
      %v3072 = vpop.f32.mrb[0].mxu0
      %3073 = vmatprep.mubr.bf16.mxu0 %v2563
      %3074 = vmatmul.mubr.bf16.gmra.mrb[0].mxu0 %v2406
      %v3075 = vpop.f32.mrb[0].mxu0
      %v3076 = vadd.f32 0.0, %v3075
      %v3077 = vpop.f32.mrb[0].mxu0
      %v3078 = vpop.f32.mrb[0].mxu0
      %v3079 = vadd.f32 0.0, %v3078
      %v3080 = vpop.f32.mrb[0].mxu0
      %3081 = vmatprep.mubr.bf16.mxu0 %v2575
      %3082 = vmatmul.mubr.bf16.gmra.mrb[0].mxu0 %v2407
      %v3083 = vpop.f32.mrb[0].mxu0
      %v3084 = vadd.f32 0.0, %v3083
      %v3085 = vpop.f32.mrb[0].mxu0
      %v3086 = vpop.f32.mrb[0].mxu0
      %v3087 = vadd.f32 0.0, %v3086
      %v3088 = vpop.f32.mrb[0].mxu0
      %3089 = vmatprep.mubr.bf16.mxu0 %v2587
      %3090 = vmatmul.mubr.bf16.gmra.mrb[0].mxu0 %v2408
      %v3091 = vpop.f32.mrb[0].mxu0
      %v3092 = vadd.f32 0.0, %v3091
      %v3093 = vpop.f32.mrb[0].mxu0
      %v3094 = vpop.f32.mrb[0].mxu0
      %v3095 = vadd.f32 0.0, %v3094
      %v3096 = vpop.f32.mrb[0].mxu0
      %3097 = vmatprep.mubr.bf16.mxu0 %v2599
      %3098 = vmatmul.mubr.bf16.gmra.mrb[0].mxu0 %v2409
      %v3099 = vpop.f32.mrb[0].mxu0
      %v3100 = vadd.f32 0.0, %v3099
      %v3101 = vpop.f32.mrb[0].mxu0
      %v3102 = vpop.f32.mrb[0].mxu0
      %v3103 = vadd.f32 0.0, %v3102
      %v3104 = vpop.f32.mrb[0].mxu0
      %3105 = vmatprep.mubr.bf16.mxu0 %v2611
      %3106 = vmatmul.mubr.bf16.gmra.mrb[0].mxu0 %v2410
      %v3107 = vpop.f32.mrb[0].mxu0
      %v3108 = vadd.f32 0.0, %v3107
      %v3109 = vpop.f32.mrb[0].mxu0
      %v3110 = vpop.f32.mrb[0].mxu0
      %v3111 = vadd.f32 0.0, %v3110
      %v3112 = vpop.f32.mrb[0].mxu0
      %3113 = vmatprep.mubr.bf16.mxu0 %v2623
      %3114 = vmatmul.mubr.bf16.gmra.mrb[0].mxu0 %v2411
      %v3115 = vpop.f32.mrb[0].mxu0
      %v3116 = vadd.f32 0.0, %v3115
      %v3117 = vpop.f32.mrb[0].mxu0
      %v3118 = vpop.f32.mrb[0].mxu0
      %v3119 = vadd.f32 0.0, %v3118
      %v3120 = vpop.f32.mrb[0].mxu0
      %3121 = vmatprep.mubr.bf16.mxu0 %v2635
      %3122 = vmatmul.mubr.bf16.gmra.mrb[0].mxu0 %v2412
      %v3123 = vpop.f32.mrb[0].mxu0
      %v3124 = vadd.f32 0.0, %v3123
      %v3125 = vpop.f32.mrb[0].mxu0
      %v3126 = vpop.f32.mrb[0].mxu0
      %v3127 = vadd.f32 0.0, %v3126
      %v3128 = vpop.f32.mrb[0].mxu0
      %3129 = vmatprep.mubr.bf16.mxu0 %v2647
      %3130 = vmatmul.mubr.bf16.gmra.mrb[0].mxu0 %v2413
      %v3131 = vpop.f32.mrb[0].mxu0
      %v3132 = vadd.f32 0.0, %v3131
      %v3133 = vpop.f32.mrb[0].mxu0
      %v3134 = vpop.f32.mrb[0].mxu0
      %v3135 = vadd.f32 0.0, %v3134
      %v3136 = vpop.f32.mrb[0].mxu0
      %3137 = vmatprep.mubr.bf16.mxu0 %v2659
      %3138 = vmatmul.mubr.bf16.gmra.mrb[0].mxu0 %v2414
      %v3139 = vpop.f32.mrb[0].mxu0
      %v3140 = vadd.f32 0.0, %v3139
      %v3141 = vpop.f32.mrb[0].mxu0
      %v3142 = vpop.f32.mrb[0].mxu0
      %v3143 = vadd.f32 0.0, %v3142
      %v3144 = vpop.f32.mrb[0].mxu0
      %3145 = vmatprep.mubr.bf16.mxu0 %v2671
      %3146 = vmatmul.mubr.bf16.gmra.mrb[0].mxu0 %v2415
      %v3147 = vpop.f32.mrb[0].mxu0
      %v3148 = vadd.f32 0.0, %v3147
      %v3149 = vpop.f32.mrb[0].mxu0
      %v3150 = vpop.f32.mrb[0].mxu0
      %v3151 = vadd.f32 0.0, %v3150
      %v3152 = vpop.f32.mrb[0].mxu0
      %3153 = vdwg.mxu0
      %3154 = vmatprep.subr.bf16.mxu0 0
      %3155 = vmatpush1.bf16.msra.mxu0 %v2961
      %3156 = vmatprep.subr.bf16.mxu0 0
      %3157 = vmatpush1.bf16.msra.mxu0 %v2962
      %3158 = vmatprep.subr.bf16.mxu0 0
      %3159 = vmatpush1.bf16.msra.mxu0 %v2963
      %3160 = vmatprep.subr.bf16.mxu0 0
      %3161 = vmatpush1.bf16.msra.mxu0 %v2964
      %3162 = vmatprep.subr.bf16.mxu0 0
      %3163 = vmatpush1.bf16.msra.mxu0 %v2965
      %3164 = vmatprep.subr.bf16.mxu0 0
      %3165 = vmatpush1.bf16.msra.mxu0 %v2966
      %3166 = vmatprep.subr.bf16.mxu0 0
      %3167 = vmatpush1.bf16.msra.mxu0 %v2967
      %3168 = vmatprep.subr.bf16.mxu0 0
      %3169 = vmatpush1.bf16.msra.mxu0 %v2968
      %3170 = vmatprep.subr.bf16.mxu0 0
      %3171 = vmatpush1.bf16.msra.mxu0 0
      %3172 = vmatprep.subr.bf16.mxu0 0
      %3173 = vmatpush1.bf16.msra.mxu0 0
      %3174 = vmatprep.subr.bf16.mxu0 0
      %3175 = vmatpush1.bf16.msra.mxu0 0
      %3176 = vmatprep.subr.bf16.mxu0 0
      %3177 = vmatpush1.bf16.msra.mxu0 0
      %3178 = vmatprep.subr.bf16.mxu0 0
      %3179 = vmatpush1.bf16.msra.mxu0 0
      %3180 = vmatprep.subr.bf16.mxu0 0
      %3181 = vmatpush1.bf16.msra.mxu0 0
      %3182 = vmatprep.subr.bf16.mxu0 0
      %3183 = vmatpush1.bf16.msra.mxu0 0
      %3184 = vmatprep.subr.bf16.mxu0 0
      %3185 = vmatpush1.bf16.msra.mxu0 0
      %3186 = vmatprep.mubr.bf16.mxu0 0
      %3187 = vmatmul.mubr.bf16.gmra.mrb[0].mxu0 %v2738
      %v3188 = vpop.f32.mrb[0].mxu0
      %v3189 = vadd.f32 %v3028, %v3188
      %v3190 = vpop.f32.mrb[0].mxu0
      %v3191 = vpop.f32.mrb[0].mxu0
      %v3192 = vadd.f32 %v3031, %v3191
      %v3193 = vpop.f32.mrb[0].mxu0
      %3194 = vmatprep.mubr.bf16.mxu0 0
      %3195 = vmatmul.mubr.bf16.gmra.mrb[0].mxu0 %v2741
      %v3196 = vpop.f32.mrb[0].mxu0
      %v3197 = vadd.f32 %v3036, %v3196
      %v3198 = vpop.f32.mrb[0].mxu0
      %v3199 = vpop.f32.mrb[0].mxu0
      %v3200 = vadd.f32 %v3039, %v3199
      %v3201 = vpop.f32.mrb[0].mxu0
      %3202 = vmatprep.mubr.bf16.mxu0 0
      %3203 = vmatmul.mubr.bf16.gmra.mrb[0].mxu0 %v2744
      %v3204 = vpop.f32.mrb[0].mxu0
      %v3205 = vadd.f32 %v3044, %v3204
      %v3206 = vpop.f32.mrb[0].mxu0
      %v3207 = vpop.f32.mrb[0].mxu0
      %v3208 = vadd.f32 %v3047, %v3207
      %v3209 = vpop.f32.mrb[0].mxu0
      %3210 = vmatprep.mubr.bf16.mxu0 0
      %3211 = vmatmul.mubr.bf16.gmra.mrb[0].mxu0 %v2747
      %v3212 = vpop.f32.mrb[0].mxu0
      %v3213 = vadd.f32 %v3052, %v3212
      %v3214 = vpop.f32.mrb[0].mxu0
      %v3215 = vpop.f32.mrb[0].mxu0
      %v3216 = vadd.f32 %v3055, %v3215
      %v3217 = vpop.f32.mrb[0].mxu0
      %3218 = vmatprep.mubr.bf16.mxu0 0
      %3219 = vmatmul.mubr.bf16.gmra.mrb[0].mxu0 %v2750
      %v3220 = vpop.f32.mrb[0].mxu0
      %v3221 = vadd.f32 %v3060, %v3220
      %v3222 = vpop.f32.mrb[0].mxu0
      %v3223 = vpop.f32.mrb[0].mxu0
      %v3224 = vadd.f32 %v3063, %v3223
      %v3225 = vpop.f32.mrb[0].mxu0
      %3226 = vmatprep.mubr.bf16.mxu0 0
      %3227 = vmatmul.mubr.bf16.gmra.mrb[0].mxu0 %v2753
      %v3228 = vpop.f32.mrb[0].mxu0
      %v3229 = vadd.f32 %v3068, %v3228
      %v3230 = vpop.f32.mrb[0].mxu0
      %v3231 = vpop.f32.mrb[0].mxu0
      %v3232 = vadd.f32 %v3071, %v3231
      %v3233 = vpop.f32.mrb[0].mxu0
      %3234 = vmatprep.mubr.bf16.mxu0 0
      %3235 = vmatmul.mubr.bf16.gmra.mrb[0].mxu0 %v2756
      %v3236 = vpop.f32.mrb[0].mxu0
      %v3237 = vadd.f32 %v3076, %v3236
      %v3238 = vpop.f32.mrb[0].mxu0
      %v3239 = vpop.f32.mrb[0].mxu0
      %v3240 = vadd.f32 %v3079, %v3239
      %v3241 = vpop.f32.mrb[0].mxu0
      %3242 = vmatprep.mubr.bf16.mxu0 0
      %3243 = vmatmul.mubr.bf16.gmra.mrb[0].mxu0 %v2759
      %v3244 = vpop.f32.mrb[0].mxu0
      %v3245 = vadd.f32 %v3084, %v3244
      %v3246 = vpop.f32.mrb[0].mxu0
      %v3247 = vpop.f32.mrb[0].mxu0
      %v3248 = vadd.f32 %v3087, %v3247
      %v3249 = vpop.f32.mrb[0].mxu0
      %3250 = vmatprep.mubr.bf16.mxu0 0
      %3251 = vmatmul.mubr.bf16.gmra.mrb[0].mxu0 %v2762
      %v3252 = vpop.f32.mrb[0].mxu0
      %v3253 = vadd.f32 %v3092, %v3252
      %v3254 = vpop.f32.mrb[0].mxu0
      %v3255 = vpop.f32.mrb[0].mxu0
      %v3256 = vadd.f32 %v3095, %v3255
      %v3257 = vpop.f32.mrb[0].mxu0
      %3258 = vmatprep.mubr.bf16.mxu0 0
      %3259 = vmatmul.mubr.bf16.gmra.mrb[0].mxu0 %v2765
      %v3260 = vpop.f32.mrb[0].mxu0
      %v3261 = vadd.f32 %v3100, %v3260
      %v3262 = vpop.f32.mrb[0].mxu0
      %v3263 = vpop.f32.mrb[0].mxu0
      %v3264 = vadd.f32 %v3103, %v3263
      %v3265 = vpop.f32.mrb[0].mxu0
      %3266 = vmatprep.mubr.bf16.mxu0 0
      %3267 = vmatmul.mubr.bf16.gmra.mrb[0].mxu0 %v2768
      %v3268 = vpop.f32.mrb[0].mxu0
      %v3269 = vadd.f32 %v3108, %v3268
      %v3270 = vpop.f32.mrb[0].mxu0
      %v3271 = vpop.f32.mrb[0].mxu0
      %v3272 = vadd.f32 %v3111, %v3271
      %v3273 = vpop.f32.mrb[0].mxu0
      %3274 = vmatprep.mubr.bf16.mxu0 0
      %3275 = vmatmul.mubr.bf16.gmra.mrb[0].mxu0 %v2771
      %v3276 = vpop.f32.mrb[0].mxu0
      %v3277 = vadd.f32 %v3116, %v3276
      %v3278 = vpop.f32.mrb[0].mxu0
      %v3279 = vpop.f32.mrb[0].mxu0
      %v3280 = vadd.f32 %v3119, %v3279
      %v3281 = vpop.f32.mrb[0].mxu0
      %3282 = vmatprep.mubr.bf16.mxu0 0
      %3283 = vmatmul.mubr.bf16.gmra.mrb[0].mxu0 %v2774
      %v3284 = vpop.f32.mrb[0].mxu0
      %v3285 = vadd.f32 %v3124, %v3284
      %v3286 = vpop.f32.mrb[0].mxu0
      %v3287 = vpop.f32.mrb[0].mxu0
      %v3288 = vadd.f32 %v3127, %v3287
      %v3289 = vpop.f32.mrb[0].mxu0
      %3290 = vmatprep.mubr.bf16.mxu0 0
      %3291 = vmatmul.mubr.bf16.gmra.mrb[0].mxu0 %v2777
      %v3292 = vpop.f32.mrb[0].mxu0
      %v3293 = vadd.f32 %v3132, %v3292
      %v3294 = vpop.f32.mrb[0].mxu0
      %v3295 = vpop.f32.mrb[0].mxu0
      %v3296 = vadd.f32 %v3135, %v3295
      %v3297 = vpop.f32.mrb[0].mxu0
      %3298 = vmatprep.mubr.bf16.mxu0 0
      %3299 = vmatmul.mubr.bf16.gmra.mrb[0].mxu0 %v2780
      %v3300 = vpop.f32.mrb[0].mxu0
      %v3301 = vadd.f32 %v3140, %v3300
      %v3302 = vpop.f32.mrb[0].mxu0
      %v3303 = vpop.f32.mrb[0].mxu0
      %v3304 = vadd.f32 %v3143, %v3303
      %v3305 = vpop.f32.mrb[0].mxu0
      %3306 = vmatprep.mubr.bf16.mxu0 0
      %3307 = vmatmul.mubr.bf16.gmra.mrb[0].mxu0 %v2783
      %v3308 = vpop.f32.mrb[0].mxu0
      %v3309 = vadd.f32 %v3148, %v3308
      %v3310 = vpop.f32.mrb[0].mxu0
      %v3311 = vpop.f32.mrb[0].mxu0
      %v3312 = vadd.f32 %v3151, %v3311
      %v3313 = vpop.f32.mrb[0].mxu0
      %3314 = vdwg.mxu0
      %v3315 = vadd.f32 %v2145, %v3189
      %v3316 = vadd.f32 %v2148, %v3192
      %v3317 = vadd.f32 %v2153, %v3197
      %v3318 = vadd.f32 %v2156, %v3200
      %v3319 = vadd.f32 %v2161, %v3205
      %v3320 = vadd.f32 %v2164, %v3208
      %v3321 = vadd.f32 %v2169, %v3213
      %v3322 = vadd.f32 %v2172, %v3216
      %v3323 = vadd.f32 %v2177, %v3221
      %v3324 = vadd.f32 %v2180, %v3224
      %v3325 = vadd.f32 %v2185, %v3229
      %v3326 = vadd.f32 %v2188, %v3232
      %v3327 = vadd.f32 %v2193, %v3237
      %v3328 = vadd.f32 %v2196, %v3240
      %v3329 = vadd.f32 %v2201, %v3245
      %v3330 = vadd.f32 %v2204, %v3248
      %v3331 = vadd.f32 %v2209, %v3253
      %v3332 = vadd.f32 %v2212, %v3256
      %v3333 = vadd.f32 %v2217, %v3261
      %v3334 = vadd.f32 %v2220, %v3264
      %v3335 = vadd.f32 %v2225, %v3269
      %v3336 = vadd.f32 %v2228, %v3272
      %v3337 = vadd.f32 %v2233, %v3277
      %v3338 = vadd.f32 %v2236, %v3280
      %v3339 = vadd.f32 %v2241, %v3285
      %v3340 = vadd.f32 %v2244, %v3288
      %v3341 = vadd.f32 %v2249, %v3293
      %v3342 = vadd.f32 %v2252, %v3296
      %v3343 = vadd.f32 %v2257, %v3301
      %v3344 = vadd.f32 %v2260, %v3304
      %v3345 = vadd.f32 %v2265, %v3309
      %v3346 = vadd.f32 %v2268, %v3312
      %v3347 = vpack.c.bf16 %v3316, %v3315
      %v3348 = vpack.c.bf16 %v3318, %v3317
      %v3349 = vpack.c.bf16 %v3320, %v3319
      %v3350 = vpack.c.bf16 %v3322, %v3321
      %v3351 = vpack.c.bf16 %v3324, %v3323
      %v3352 = vpack.c.bf16 %v3326, %v3325
      %v3353 = vpack.c.bf16 %v3328, %v3327
      %v3354 = vpack.c.bf16 %v3330, %v3329
      %v3355 = vpack.c.bf16 %v3332, %v3331
      %v3356 = vpack.c.bf16 %v3334, %v3333
      %v3357 = vpack.c.bf16 %v3336, %v3335
      %v3358 = vpack.c.bf16 %v3338, %v3337
      %v3359 = vpack.c.bf16 %v3340, %v3339
      %v3360 = vpack.c.bf16 %v3342, %v3341
      %v3361 = vpack.c.bf16 %v3344, %v3343
      %v3362 = vpack.c.bf16 %v3346, %v3345
      %v3379 = vunpack.c.l.b16 %v3347
      %v3380 = vunpack.c.h.b16 %v3347
      %v3381 = vunpack.c.l.b16 %v3348
      %v3382 = vunpack.c.h.b16 %v3348
      %v3383 = vunpack.c.l.b16 %v3349
      %v3384 = vunpack.c.h.b16 %v3349
      %v3385 = vunpack.c.l.b16 %v3350
      %v3386 = vunpack.c.h.b16 %v3350
      %v3387 = vunpack.c.l.b16 %v3351
      %v3388 = vunpack.c.h.b16 %v3351
      %v3389 = vunpack.c.l.b16 %v3352
      %v3390 = vunpack.c.h.b16 %v3352
      %v3391 = vunpack.c.l.b16 %v3353
      %v3392 = vunpack.c.h.b16 %v3353
      %v3393 = vunpack.c.l.b16 %v3354
      %v3394 = vunpack.c.h.b16 %v3354
      %v3395 = vunpack.c.l.b16 %v3355
      %v3396 = vunpack.c.h.b16 %v3355
      %v3397 = vunpack.c.l.b16 %v3356
      %v3398 = vunpack.c.h.b16 %v3356
      %v3399 = vunpack.c.l.b16 %v3357
      %v3400 = vunpack.c.h.b16 %v3357
      %v3401 = vunpack.c.l.b16 %v3358
      %v3402 = vunpack.c.h.b16 %v3358
      %v3403 = vunpack.c.l.b16 %v3359
      %v3404 = vunpack.c.h.b16 %v3359
      %v3405 = vunpack.c.l.b16 %v3360
      %v3406 = vunpack.c.h.b16 %v3360
      %v3407 = vunpack.c.l.b16 %v3361
      %v3408 = vunpack.c.h.b16 %v3361
      %v3409 = vunpack.c.l.b16 %v3362
      %v3410 = vunpack.c.h.b16 %v3362
      %v3411 = vpack.c.b16 %v3379, %v3379
      %v3412 = vpack.c.b16 %v3380, %v3380
      %v3413 = vpack.c.b16 %v3381, %v3381
      %v3414 = vpack.c.b16 %v3382, %v3382
      %v3415 = vpack.c.b16 %v3383, %v3383
      %v3416 = vpack.c.b16 %v3384, %v3384
      %v3417 = vpack.c.b16 %v3385, %v3385
      %v3418 = vpack.c.b16 %v3386, %v3386
      %v3419 = vpack.c.b16 %v3387, %v3387
      %v3420 = vpack.c.b16 %v3388, %v3388
      %v3421 = vpack.c.b16 %v3389, %v3389
      %v3422 = vpack.c.b16 %v3390, %v3390
      %v3423 = vpack.c.b16 %v3391, %v3391
      %v3424 = vpack.c.b16 %v3392, %v3392
      %v3425 = vpack.c.b16 %v3393, %v3393
      %v3426 = vpack.c.b16 %v3394, %v3394
      %v3427 = vpack.c.b16 %v3395, %v3395
      %v3428 = vpack.c.b16 %v3396, %v3396
      %v3429 = vpack.c.b16 %v3397, %v3397
      %v3430 = vpack.c.b16 %v3398, %v3398
      %v3431 = vpack.c.b16 %v3399, %v3399
      %v3432 = vpack.c.b16 %v3400, %v3400
      %v3433 = vpack.c.b16 %v3401, %v3401
      %v3434 = vpack.c.b16 %v3402, %v3402
      %v3435 = vpack.c.b16 %v3403, %v3403
      %v3436 = vpack.c.b16 %v3404, %v3404
      %v3437 = vpack.c.b16 %v3405, %v3405
      %v3438 = vpack.c.b16 %v3406, %v3406
      %v3439 = vpack.c.b16 %v3407, %v3407
      %v3440 = vpack.c.b16 %v3408, %v3408
      %v3441 = vpack.c.b16 %v3409, %v3409
      %v3442 = vpack.c.b16 %v3410, %v3410
      %3475 = vst [vmem:[%s177] sm:$0xf] %v3411
      %3476 = vst [vmem:[%s177 + $0x4] sm:$0xf] %v3412
      %3477 = vst [vmem:[%s177 + $0x8] sm:$0xf] %v3413
      %3478 = vst [vmem:[%s177 + $0xc] sm:$0xf] %v3414
      %3479 = vst [vmem:[%s177 + $0x10] sm:$0xf] %v3415
      %3480 = vst [vmem:[%s177 + $0x14] sm:$0xf] %v3416
      %3481 = vst [vmem:[%s177 + $0x18] sm:$0xf] %v3417
      %3482 = vst [vmem:[%s177 + $0x1c] sm:$0xf] %v3418
      %3483 = vst [vmem:[%s177 + $0x20] sm:$0xf] %v3419
      %3484 = vst [vmem:[%s177 + $0x24] sm:$0xf] %v3420
      %3485 = vst [vmem:[%s177 + $0x28] sm:$0xf] %v3421
      %3486 = vst [vmem:[%s177 + $0x2c] sm:$0xf] %v3422
      %3487 = vst [vmem:[%s177 + $0x30] sm:$0xf] %v3423
      %3488 = vst [vmem:[%s177 + $0x34] sm:$0xf] %v3424
      %3489 = vst [vmem:[%s177 + $0x38] sm:$0xf] %v3425
      %3490 = vst [vmem:[%s177 + $0x3c] sm:$0xf] %v3426
      %3491 = vst [vmem:[%s177 + $0x40] sm:$0xf] %v3427
      %3492 = vst [vmem:[%s177 + $0x44] sm:$0xf] %v3428
      %3493 = vst [vmem:[%s177 + $0x48] sm:$0xf] %v3429
      %3494 = vst [vmem:[%s177 + $0x4c] sm:$0xf] %v3430
      %3495 = vst [vmem:[%s177 + $0x50] sm:$0xf] %v3431
      %3496 = vst [vmem:[%s177 + $0x54] sm:$0xf] %v3432
      %3497 = vst [vmem:[%s177 + $0x58] sm:$0xf] %v3433
      %3498 = vst [vmem:[%s177 + $0x5c] sm:$0xf] %v3434
      %3499 = vst [vmem:[%s177 + $0x60] sm:$0xf] %v3435
      %3500 = vst [vmem:[%s177 + $0x64] sm:$0xf] %v3436
      %3501 = vst [vmem:[%s177 + $0x68] sm:$0xf] %v3437
      %3502 = vst [vmem:[%s177 + $0x6c] sm:$0xf] %v3438
      %3503 = vst [vmem:[%s177 + $0x70] sm:$0xf] %v3439
      %3504 = vst [vmem:[%s177 + $0x74] sm:$0xf] %v3440
      %3505 = vst [vmem:[%s177 + $0x78] sm:$0xf] %v3441
      %3506 = vst [vmem:[%s177 + $0x7c] sm:$0xf] %v3442
      %v3507 = vadd.f32 %v3315, %v3316
      %v3508 = vadd.f32 %v3507, %v3317
      %v3509 = vadd.f32 %v3508, %v3318
      %v3510 = vadd.f32 %v3509, %v3319
      %v3511 = vadd.f32 %v3510, %v3320
      %v3512 = vadd.f32 %v3511, %v3321
      %v3513 = vadd.f32 %v3512, %v3322
      %v3514 = vadd.f32 %v3513, %v3323
      %v3515 = vadd.f32 %v3514, %v3324
      %v3516 = vadd.f32 %v3515, %v3325
      %v3517 = vadd.f32 %v3516, %v3326
      %v3518 = vadd.f32 %v3517, %v3327
      %v3519 = vadd.f32 %v3518, %v3328
      %v3520 = vadd.f32 %v3519, %v3329
      %v3521 = vadd.f32 %v3520, %v3330
      %v3522 = vadd.f32 %v3521, %v3331
      %v3523 = vadd.f32 %v3522, %v3332
      %v3524 = vadd.f32 %v3523, %v3333
      %v3525 = vadd.f32 %v3524, %v3334
      %v3526 = vadd.f32 %v3525, %v3335
      %v3527 = vadd.f32 %v3526, %v3336
      %v3528 = vadd.f32 %v3527, %v3337
      %v3529 = vadd.f32 %v3528, %v3338
      %v3530 = vadd.f32 %v3529, %v3339
      %v3531 = vadd.f32 %v3530, %v3340
      %v3532 = vadd.f32 %v3531, %v3341
      %v3533 = vadd.f32 %v3532, %v3342
      %v3534 = vadd.f32 %v3533, %v3343
      %v3535 = vadd.f32 %v3534, %v3344
      %v3536 = vadd.f32 %v3535, %v3345
      %v3537 = vadd.f32 %v3536, %v3346
      %v3538 = vrot.slane %v3537, 4
      %v3539 = vadd.f32 %v3537, %v3538
      %v3540 = vrot.slane %v3539, 2
      %v3541 = vadd.f32 %v3539, %v3540
      %v3542 = vrot.slane %v3541, 1
      %v3543 = vadd.f32 %v3541, %v3542
      %3544 = vst [vmem:[%s181] sm:$0x1] %v3543
      %v3545 = vmul.f32 %v3315, %v3315
      %v3546 = vmul.f32 %v3316, %v3316
      %v3547 = vmul.f32 %v3317, %v3317
      %v3548 = vmul.f32 %v3318, %v3318
      %v3549 = vmul.f32 %v3319, %v3319
      %v3550 = vmul.f32 %v3320, %v3320
      %v3551 = vmul.f32 %v3321, %v3321
      %v3552 = vmul.f32 %v3322, %v3322
      %v3553 = vmul.f32 %v3323, %v3323
      %v3554 = vmul.f32 %v3324, %v3324
      %v3555 = vmul.f32 %v3325, %v3325
      %v3556 = vmul.f32 %v3326, %v3326
      %v3557 = vmul.f32 %v3327, %v3327
      %v3558 = vmul.f32 %v3328, %v3328
      %v3559 = vmul.f32 %v3329, %v3329
      %v3560 = vmul.f32 %v3330, %v3330
      %v3561 = vmul.f32 %v3331, %v3331
      %v3562 = vmul.f32 %v3332, %v3332
      %v3563 = vmul.f32 %v3333, %v3333
      %v3564 = vmul.f32 %v3334, %v3334
      %v3565 = vmul.f32 %v3335, %v3335
      %v3566 = vmul.f32 %v3336, %v3336
      %v3567 = vmul.f32 %v3337, %v3337
      %v3568 = vmul.f32 %v3338, %v3338
      %v3569 = vmul.f32 %v3339, %v3339
      %v3570 = vmul.f32 %v3340, %v3340
      %v3571 = vmul.f32 %v3341, %v3341
      %v3572 = vmul.f32 %v3342, %v3342
      %v3573 = vmul.f32 %v3343, %v3343
      %v3574 = vmul.f32 %v3344, %v3344
      %v3575 = vmul.f32 %v3345, %v3345
      %v3576 = vmul.f32 %v3346, %v3346
      %v3577 = vadd.f32 %v3545, %v3546
      %v3578 = vadd.f32 %v3577, %v3547
      %v3579 = vadd.f32 %v3578, %v3548
      %v3580 = vadd.f32 %v3579, %v3549
      %v3581 = vadd.f32 %v3580, %v3550
      %v3582 = vadd.f32 %v3581, %v3551
      %v3583 = vadd.f32 %v3582, %v3552
      %v3584 = vadd.f32 %v3583, %v3553
      %v3585 = vadd.f32 %v3584, %v3554
      %v3586 = vadd.f32 %v3585, %v3555
      %v3587 = vadd.f32 %v3586, %v3556
      %v3588 = vadd.f32 %v3587, %v3557
      %v3589 = vadd.f32 %v3588, %v3558
      %v3590 = vadd.f32 %v3589, %v3559
      %v3591 = vadd.f32 %v3590, %v3560
      %v3592 = vadd.f32 %v3591, %v3561
      %v3593 = vadd.f32 %v3592, %v3562
      %v3594 = vadd.f32 %v3593, %v3563
      %v3595 = vadd.f32 %v3594, %v3564
      %v3596 = vadd.f32 %v3595, %v3565
      %v3597 = vadd.f32 %v3596, %v3566
      %v3598 = vadd.f32 %v3597, %v3567
      %v3599 = vadd.f32 %v3598, %v3568
      %v3600 = vadd.f32 %v3599, %v3569
      %v3601 = vadd.f32 %v3600, %v3570
      %v3602 = vadd.f32 %v3601, %v3571
      %v3603 = vadd.f32 %v3602, %v3572
      %v3604 = vadd.f32 %v3603, %v3573
      %v3605 = vadd.f32 %v3604, %v3574
      %v3606 = vadd.f32 %v3605, %v3575
      %v3607 = vadd.f32 %v3606, %v3576
      %v3608 = vrot.slane %v3607, 4
      %v3609 = vadd.f32 %v3607, %v3608
      %v3610 = vrot.slane %v3609, 2
      %v3611 = vadd.f32 %v3609, %v3610
      %v3612 = vrot.slane %v3611, 1
      %v3613 = vadd.f32 %v3611, %v3612
      %3614 = vst [vmem:[%s181 + $0x1] sm:$0x1] %v3613
      %p3615 = scmp.lt.s32.totalorder %s15, 1
      %s3616 = scalar_select %p3615, %s15, 1
      %s3617 = smul.addr %s3616, 32
      %s3618 = smul.addr %s3617, 4
      %s3619 = scalar_lea.vmem %s2, %s3618
      %p3620 = scmp.lt.s32.totalorder %s15, 1
      %s3621 = scalar_select %p3620, %s15, 1
      %s3622 = smul.addr %s3621, 2
      %s3623 = scalar_lea.vmem %s3, %s3622
      // Predicated region
      $region29: #{residual_block.3} parent=27 // pred_check
        %p3624 = pneg %p80
      $region30: #{residual_block.3} parent=27 // pred_check_branch
        %3626 = sbr.rel (%p3624) target = $region32
      $region31: #{residual_block.3} parent=27 // pred_region
        _
      $region32: #{residual_block.3} parent=27 // pred_fallthru
        _
      // Predicated region
      $region33: #{residual_block.3} parent=27 // pred_check
        %p3627 = pneg %p106
      $region34: #{residual_block.3} parent=27 // pred_check_branch
        %3629 = sbr.rel (%p3627) target = $region36
      $region35: #{residual_block.3} parent=27 // pred_region
        _
      $region36: #{residual_block.3} parent=27 // pred_fallthru
        _
    $region28: #{residual_block.3} parent=5 // pred_fallthru
      _
    %p3630 = scmp.le.s32.totalorder 2, %s10
    // Predicated region
    $region37: #{residual_block.3} parent=5 // pred_check
      %p3631 = pneg %p3630
    $region38: #{residual_block.3} parent=5 // pred_check_branch
      %3633 = sbr.rel (%p3631) target = $region40
    $region39: #{residual_block.3} parent=5 // pred_region
      %s3634 = ssub.s32 %s10, 2
      // Predicated region
      $region41: #{residual_block.3} parent=39 // pred_check
        %p3635 = pneg %p86
      $region42: #{residual_block.3} parent=39 // pred_check_branch
        %3637 = sbr.rel (%p3635) target = $region44
      $region43: #{residual_block.3} parent=39 // pred_region
        %p3638 = scmp.lt.s32.totalorder %s16, 1
        %s3639 = scalar_select %p3638, %s16, 1
        %s3640 = smul.addr %s3639, 32
        %s3641 = smul.addr %s3640, 4
        %s3642 = scalar_lea.vmem %s2, %s3641
      $region44: #{residual_block.3} parent=39 // pred_fallthru
        _
      // Predicated region
      $region45: #{residual_block.3} parent=39 // pred_check
        %p3643 = pneg %p112
      $region46: #{residual_block.3} parent=39 // pred_check_branch
        %3645 = sbr.rel (%p3643) target = $region48
      $region47: #{residual_block.3} parent=39 // pred_region
        %p3646 = scmp.lt.s32.totalorder %s16, 1
        %s3647 = scalar_select %p3646, %s16, 1
        %s3648 = smul.addr %s3647, 2
        %s3649 = scalar_lea.vmem %s3, %s3648
      $region48: #{residual_block.3} parent=39 // pred_fallthru
        _
    $region40: #{residual_block.3} parent=5 // pred_fallthru
      _
  $region6: #{residual_block.3} parent=0 // loop_footer
    %s14 = sadd.s32 1, %s10
  $region7: #{residual_block.3} parent=0 // loop_footer_branch
    %9 = sbr.rel target = $region3
  $region8: #{residual_block.3} parent=0 // loop_exit
    _

// kernel: residual_block.4
$region0: #{residual_block.4}
  #allocation0 [shape = 'u32[]', space=smem, size = 0x4, offset = 0x4, fixed_abs, tag = 'smem constant byte address 0x4 - core index']
  #allocation1 [shape = 'u32[144,128]{1,0:T(1,128)}', space=vmem, size = 0x12000, scoped, tag = 'internal scratch']
  #allocation2 [shape = 'bf16[18,18,128]{2,1,0:T(8,128)(2,1)}', space=vmem, size = 0x1b000, scoped, tag = 'scratch operand']
  %s0 = inlined_call_operand.vmem [shape: bf16[2,16,16,128], index: 0, kind: input, shape index: {}]
  %s1 = inlined_call_operand.vmem [shape: f32[2,128], index: 1, kind: input, shape index: {}]
  %s2 = inlined_call_operand.vmem [shape: bf16[3,384,128], index: 2, kind: input, shape index: {}]
  %s3 = inlined_call_operand.vmem [shape: bf16[2,16,16,128], index: 3, kind: output, shape index: {0}]
  %s4 = inlined_call_operand.vmem [shape: f32[2,2,128], index: 4, kind: output, shape index: {1}]
  %5 = xla_tuple %s3, %s4
  %s6 = sld [smem:[#allocation0]]
  $region53: #{residual_block.4} parent=0
    _
  %s8 = ssub.s32 1, %s6
  %s9 = scalar_select 0, %s8, %s6
  loop: start=0, step=1, limit=4
  $region2: #{residual_block.4} parent=0 // loop_pre_header
    _
  $region3: #{residual_block.4} parent=0 // loop_header
    %s11 = sphi 0, %s15
    %p12 = scmp.ge.s32.totalorder %s11, 4
    %s21 = sphi 0, %s23
    %s24 = sphi 0, %s21
    %s25 = sphi 0, %s24
    %s41 = sphi 0, %s25
    %s45 = sphi 0, %s45
    %s47 = sphi 0, %s45
    %s48 = sphi 0, %s47
    %s62 = sphi 0, %s48
    %s66 = sphi 0, %s66
    %s68 = sphi 0, %s66
    %s69 = sphi 0, %s68
    %s83 = sphi 0, %s69
    %s89 = sphi 0, %s91
    %s92 = sphi 0, %s89
    %s93 = sphi 0, %s92
    %s109 = sphi 0, %s93
    %s115 = sphi 0, %s117
    %s118 = sphi 0, %s115
    %s119 = sphi 0, %s118
    %s135 = sphi 0, %s119
  $region4: #{residual_block.4} parent=0 // loop_header_branch
    %14 = sbr.rel (%p12) target = $region8
  $region5: #{residual_block.4} parent=0 // loop_body
    %s16 = ssub.s32 %s11, 1
    %s17 = ssub.s32 %s11, 2
    %s18 = sadd.s32 %s11, 1
    %s19 = ssub.s32 %s11, %s18
    %p20 = scmp.eq.s32.totalorder %s19, 0
    %s22 = sadd.s32 %s21, 1
    %s23 = scalar_select %p20, %s21, %s22
    %p26 = pneg %p20
    %p27 = scmp.eq.s32.totalorder %s11, 1
    %p28 = por %p26, %p27
    %p29 = scmp.ne.s32.totalorder %s21, %s24
    %p30 = scmp.eq.s32.totalorder %s11, 0
    %p31 = por %p29, %p30
    %p32 = scmp.ne.s32.totalorder %s21, %s24
    %p33 = scmp.eq.s32.totalorder %s16, 1
    %p34 = por %p32, %p33
    %p35 = scmp.ne.s32.totalorder %s24, %s25
    %p36 = scmp.eq.s32.totalorder %s16, 0
    %p37 = por %p35, %p36
    %p38 = scmp.ne.s32.totalorder %s24, %s25
    %p39 = scmp.eq.s32.totalorder %s17, 1
    %p40 = por %p38, %p39
    %p42 = scmp.ne.s32.totalorder %s25, %s41
    %p43 = scmp.eq.s32.totalorder %s17, 0
    %p44 = por %p42, %p43
    %s46 = sadd.s32 %s45, 1
    %p49 = scmp.eq.s32.totalorder %s11, 1
    %p50 = scmp.ne.s32.totalorder %s45, %s47
    %p51 = scmp.eq.s32.totalorder %s11, 0
    %p52 = por %p50, %p51
    %p53 = scmp.ne.s32.totalorder %s45, %s47
    %p54 = scmp.eq.s32.totalorder %s16, 1
    %p55 = por %p53, %p54
    %p56 = scmp.ne.s32.totalorder %s47, %s48
    %p57 = scmp.eq.s32.totalorder %s16, 0
    %p58 = por %p56, %p57
    %p59 = scmp.ne.s32.totalorder %s47, %s48
    %p60 = scmp.eq.s32.totalorder %s17, 1
    %p61 = por %p59, %p60
    %p63 = scmp.ne.s32.totalorder %s48, %s62
    %p64 = scmp.eq.s32.totalorder %s17, 0
    %p65 = por %p63, %p64
    %s67 = sadd.s32 %s66, 1
    %p70 = scmp.eq.s32.totalorder %s11, 1
    %p71 = scmp.ne.s32.totalorder %s66, %s68
    %p72 = scmp.eq.s32.totalorder %s11, 0
    %p73 = por %p71, %p72
    %p74 = scmp.ne.s32.totalorder %s66, %s68
    %p75 = scmp.eq.s32.totalorder %s16, 1
    %p76 = por %p74, %p75
    %p77 = scmp.ne.s32.totalorder %s68, %s69
    %p78 = scmp.eq.s32.totalorder %s16, 0
    %p79 = por %p77, %p78
    %p80 = scmp.ne.s32.totalorder %s68, %s69
    %p81 = scmp.eq.s32.totalorder %s17, 1
    %p82 = por %p80, %p81
    %p84 = scmp.ne.s32.totalorder %s69, %s83
    %p85 = scmp.eq.s32.totalorder %s17, 0
    %p86 = por %p84, %p85
    %s87 = ssub.s32 %s11, %s18
    %p88 = scmp.eq.s32.totalorder %s87, 0
    %s90 = sadd.s32 %s89, 1
    %s91 = scalar_select %p88, %s89, %s90
    %p94 = pneg %p88
    %p95 = scmp.eq.s32.totalorder %s11, 1
    %p96 = por %p94, %p95
    %p97 = scmp.ne.s32.totalorder %s89, %s92
    %p98 = scmp.eq.s32.totalorder %s11, 0
    %p99 = por %p97, %p98
    %p100 = scmp.ne.s32.totalorder %s89, %s92
    %p101 = scmp.eq.s32.totalorder %s16, 1
    %p102 = por %p100, %p101
    %p103 = scmp.ne.s32.totalorder %s92, %s93
    %p104 = scmp.eq.s32.totalorder %s16, 0
    %p105 = por %p103, %p104
    %p106 = scmp.ne.s32.totalorder %s92, %s93
    %p107 = scmp.eq.s32.totalorder %s17, 1
    %p108 = por %p106, %p107
    %p110 = scmp.ne.s32.totalorder %s93, %s109
    %p111 = scmp.eq.s32.totalorder %s17, 0
    %p112 = por %p110, %p111
    %s113 = ssub.s32 %s11, %s18
    %p114 = scmp.eq.s32.totalorder %s113, 0
    %s116 = sadd.s32 %s115, 1
    %s117 = scalar_select %p114, %s115, %s116
    %p120 = pneg %p114
    %p121 = scmp.eq.s32.totalorder %s11, 1
    %p122 = por %p120, %p121
    %p123 = scmp.ne.s32.totalorder %s115, %s118
    %p124 = scmp.eq.s32.totalorder %s11, 0
    %p125 = por %p123, %p124
    %p126 = scmp.ne.s32.totalorder %s115, %s118
    %p127 = scmp.eq.s32.totalorder %s16, 1
    %p128 = por %p126, %p127
    %p129 = scmp.ne.s32.totalorder %s118, %s119
    %p130 = scmp.eq.s32.totalorder %s16, 0
    %p131 = por %p129, %p130
    %p132 = scmp.ne.s32.totalorder %s118, %s119
    %p133 = scmp.eq.s32.totalorder %s17, 1
    %p134 = por %p132, %p133
    %p136 = scmp.ne.s32.totalorder %s119, %s135
    %p137 = scmp.eq.s32.totalorder %s17, 0
    %p138 = por %p136, %p137
    %p139 = scmp.le.s32.totalorder 1, %s11
    %p140 = scmp.lt.s32.totalorder %s11, 3
    %p141 = pnand %p139, %p140
    %p142 = pneg %p141
    // Predicated region
    $region9: #{residual_block.4} parent=5 // pred_check
      _
    $region10: #{residual_block.4} parent=5 // pred_check_branch
      %144 = sbr.rel (%p141) target = $region12
    $region11: #{residual_block.4} parent=5 // pred_region
      %s145 = ssub.s32 %s11, 1
      // Predicated region
      $region13: #{residual_block.4} parent=11 // pred_check
        %p146 = pneg %p58
      $region14: #{residual_block.4} parent=11 // pred_check_branch
        %148 = sbr.rel (%p146) target = $region16
      $region15: #{residual_block.4} parent=11 // pred_region
        _
      $region16: #{residual_block.4} parent=11 // pred_fallthru
        _
      // Predicated region
      $region17: #{residual_block.4} parent=11 // pred_check
        %p149 = pneg %p79
      $region18: #{residual_block.4} parent=11 // pred_check_branch
        %151 = sbr.rel (%p149) target = $region20
      $region19: #{residual_block.4} parent=11 // pred_region
        _
      $region20: #{residual_block.4} parent=11 // pred_fallthru
        _
    $region12: #{residual_block.4} parent=5 // pred_fallthru
      _
    %p152 = scmp.lt.s32.totalorder %s11, 2
    // Predicated region
    $region21: #{residual_block.4} parent=5 // pred_check
      %p153 = pneg %p152
    $region22: #{residual_block.4} parent=5 // pred_check_branch
      %155 = sbr.rel (%p153) target = $region24
    $region23: #{residual_block.4} parent=5 // pred_region
      // Predicated region
      $region25: #{residual_block.4} parent=23 // pred_check
        %p156 = pneg %p31
      $region26: #{residual_block.4} parent=23 // pred_check_branch
        %158 = sbr.rel (%p156) target = $region28
      $region27: #{residual_block.4} parent=23 // pred_region
        %p159 = scmp.lt.s32.totalorder %s11, 1
        %s160 = scalar_select %p159, %s11, 1
        %s161 = smul.addr %s160, 32
        %s162 = smul.addr %s161, 4
        %s163 = scalar_lea.vmem %s0, %s162
      $region28: #{residual_block.4} parent=23 // pred_fallthru
        _
    $region24: #{residual_block.4} parent=5 // pred_fallthru
      _
    %p164 = scmp.le.s32.totalorder 1, %s11
    %p165 = scmp.lt.s32.totalorder %s11, 3
    %p166 = pnand %p164, %p165
    %p167 = pneg %p166
    // Predicated region
    $region29: #{residual_block.4} parent=5 // pred_check
      _
    $region30: #{residual_block.4} parent=5 // pred_check_branch
      %169 = sbr.rel (%p166) target = $region32
    $region31: #{residual_block.4} parent=5 // pred_region
      %s170 = ssub.s32 %s11, 1
      %p171 = scmp.lt.s32.totalorder %s16, 1
      %s172 = scalar_select %p171, %s16, 1
      %s173 = smul.addr %s172, 32
      %s174 = smul.addr %s173, 4
      %s175 = scalar_lea.vmem %s0, %s174
      %p176 = pneg %p37
      %p177 = pneg %p34
      %p178 = pneg %p58
      %p179 = pneg %p55
      %p180 = pneg %p79
      %p181 = pneg %p76
      %p182 = pneg %p105
      %p183 = pneg %p102
      %p184 = scmp.lt.s32.totalorder %s16, 1
      %s185 = scalar_select %p184, %s16, 1
      %s186 = smul.addr %s185, 32
      %s187 = smul.addr %s186, 4
      %s188 = scalar_lea.vmem %s3, %s187
      %p189 = pneg %p131
      %p190 = pneg %p128
      %p191 = scmp.lt.s32.totalorder %s16, 1
      %s192 = scalar_select %p191, %s16, 1
      %s193 = smul.addr %s192, 2
      %s194 = scalar_lea.vmem %s4, %s193
      %p195 = scmp.lt.s32.totalorder %s16, 1
      %s196 = scalar_select %p195, %s16, 1
      %s197 = smul.addr %s196, 32
      %s198 = smul.addr %s197, 4
      %s199 = scalar_lea.vmem %s0, %s198
      %p200 = scmp.lt.s32.totalorder %s16, 1
      %s201 = scalar_select %p200, %s16, 1
      %s202 = smul.addr %s201, 32
      %s203 = smul.addr %s202, 4
      %s204 = scalar_lea.vmem %s3, %s203
      %p205 = scmp.lt.s32.totalorder %s16, 1
      %s206 = scalar_select %p205, %s16, 1
      %s207 = smul.addr %s206, 2
      %s208 = scalar_lea.vmem %s4, %s207
      %v210 = vld [vmem:[%s1] sm:$0x1]
      %v211 = vld [vmem:[%s1 + $0x1] sm:$0x1]
      %v212 = vld [vmem:[%s199] sm:$0xf]
      %v213 = vld [vmem:[%s199 + $0x4] sm:$0xf]
      %v214 = vld [vmem:[%s199 + $0x8] sm:$0xf]
      %v215 = vld [vmem:[%s199 + $0xc] sm:$0xf]
      %v216 = vld [vmem:[%s199 + $0x10] sm:$0xf]
      %v217 = vld [vmem:[%s199 + $0x14] sm:$0xf]
      %v218 = vld [vmem:[%s199 + $0x18] sm:$0xf]
      %v219 = vld [vmem:[%s199 + $0x1c] sm:$0xf]
      %v220 = vld [vmem:[%s199 + $0x20] sm:$0xf]
      %v221 = vld [vmem:[%s199 + $0x24] sm:$0xf]
      %v222 = vld [vmem:[%s199 + $0x28] sm:$0xf]
      %v223 = vld [vmem:[%s199 + $0x2c] sm:$0xf]
      %v224 = vld [vmem:[%s199 + $0x30] sm:$0xf]
      %v225 = vld [vmem:[%s199 + $0x34] sm:$0xf]
      %v226 = vld [vmem:[%s199 + $0x38] sm:$0xf]
      %v227 = vld [vmem:[%s199 + $0x3c] sm:$0xf]
      %v228 = vld [vmem:[%s199 + $0x40] sm:$0xf]
      %v229 = vld [vmem:[%s199 + $0x44] sm:$0xf]
      %v230 = vld [vmem:[%s199 + $0x48] sm:$0xf]
      %v231 = vld [vmem:[%s199 + $0x4c] sm:$0xf]
      %v232 = vld [vmem:[%s199 + $0x50] sm:$0xf]
      %v233 = vld [vmem:[%s199 + $0x54] sm:$0xf]
      %v234 = vld [vmem:[%s199 + $0x58] sm:$0xf]
      %v235 = vld [vmem:[%s199 + $0x5c] sm:$0xf]
      %v236 = vld [vmem:[%s199 + $0x60] sm:$0xf]
      %v237 = vld [vmem:[%s199 + $0x64] sm:$0xf]
      %v238 = vld [vmem:[%s199 + $0x68] sm:$0xf]
      %v239 = vld [vmem:[%s199 + $0x6c] sm:$0xf]
      %v240 = vld [vmem:[%s199 + $0x70] sm:$0xf]
      %v241 = vld [vmem:[%s199 + $0x74] sm:$0xf]
      %v242 = vld [vmem:[%s199 + $0x78] sm:$0xf]
      %v243 = vld [vmem:[%s199 + $0x7c] sm:$0xf]
      %v244 = vunpack.c.l.bf16 %v212
      %v245 = vunpack.c.l.bf16 %v213
      %v246 = vunpack.c.l.bf16 %v214
      %v247 = vunpack.c.l.bf16 %v215
      %v248 = vunpack.c.l.bf16 %v216
      %v249 = vunpack.c.l.bf16 %v217
      %v250 = vunpack.c.l.bf16 %v218
      %v251 = vunpack.c.l.bf16 %v219
      %v252 = vunpack.c.l.bf16 %v220
      %v253 = vunpack.c.l.bf16 %v221
      %v254 = vunpack.c.l.bf16 %v222
      %v255 = vunpack.c.l.bf16 %v223
      %v256 = vunpack.c.l.bf16 %v224
      %v257 = vunpack.c.l.bf16 %v225
      %v258 = vunpack.c.l.bf16 %v226
      %v259 = vunpack.c.l.bf16 %v227
      %v260 = vunpack.c.l.bf16 %v228
      %v261 = vunpack.c.l.bf16 %v229
      %v262 = vunpack.c.l.bf16 %v230
      %v263 = vunpack.c.l.bf16 %v231
      %v264 = vunpack.c.l.bf16 %v232
      %v265 = vunpack.c.l.bf16 %v233
      %v266 = vunpack.c.l.bf16 %v234
      %v267 = vunpack.c.l.bf16 %v235
      %v268 = vunpack.c.l.bf16 %v236
      %v269 = vunpack.c.l.bf16 %v237
      %v270 = vunpack.c.l.bf16 %v238
      %v271 = vunpack.c.l.bf16 %v239
      %v272 = vunpack.c.l.bf16 %v240
      %v273 = vunpack.c.l.bf16 %v241
      %v274 = vunpack.c.l.bf16 %v242
      %v275 = vunpack.c.l.bf16 %v243
      %v276 = vlaneseq
      %v277 = vshrl.u32 %v276, 7
      %v278 = vsub.s32 0, %v277
      %v279 = vrot.slane %v210, %v278
      %v280 = vmul.f32 %v244, %v279
      %v281 = vmul.f32 %v245, %v279
      %v282 = vmul.f32 %v246, %v279
      %v283 = vmul.f32 %v247, %v279
      %v284 = vmul.f32 %v248, %v279
      %v285 = vmul.f32 %v249, %v279
      %v286 = vmul.f32 %v250, %v279
      %v287 = vmul.f32 %v251, %v279
      %v288 = vmul.f32 %v252, %v279
      %v289 = vmul.f32 %v253, %v279
      %v290 = vmul.f32 %v254, %v279
      %v291 = vmul.f32 %v255, %v279
      %v292 = vmul.f32 %v256, %v279
      %v293 = vmul.f32 %v257, %v279
      %v294 = vmul.f32 %v258, %v279
      %v295 = vmul.f32 %v259, %v279
      %v296 = vmul.f32 %v260, %v279
      %v297 = vmul.f32 %v261, %v279
      %v298 = vmul.f32 %v262, %v279
      %v299 = vmul.f32 %v263, %v279
      %v300 = vmul.f32 %v264, %v279
      %v301 = vmul.f32 %v265, %v279
      %v302 = vmul.f32 %v266, %v279
      %v303 = vmul.f32 %v267, %v279
      %v304 = vmul.f32 %v268, %v279
      %v305 = vmul.f32 %v269, %v279
      %v306 = vmul.f32 %v270, %v279
      %v307 = vmul.f32 %v271, %v279
      %v308 = vmul.f32 %v272, %v279
      %v309 = vmul.f32 %v273, %v279
      %v310 = vmul.f32 %v274, %v279
      %v311 = vmul.f32 %v275, %v279
      %v312 = vlaneseq
      %v313 = vshrl.u32 %v312, 7
      %v314 = vsub.s32 0, %v313
      %v315 = vrot.slane %v211, %v314
      %v316 = vadd.f32 %v280, %v315
      %v317 = vadd.f32 %v281, %v315
      %v318 = vadd.f32 %v282, %v315
      %v319 = vadd.f32 %v283, %v315
      %v320 = vadd.f32 %v284, %v315
      %v321 = vadd.f32 %v285, %v315
      %v322 = vadd.f32 %v286, %v315
      %v323 = vadd.f32 %v287, %v315
      %v324 = vadd.f32 %v288, %v315
      %v325 = vadd.f32 %v289, %v315
      %v326 = vadd.f32 %v290, %v315
      %v327 = vadd.f32 %v291, %v315
      %v328 = vadd.f32 %v292, %v315
      %v329 = vadd.f32 %v293, %v315
      %v330 = vadd.f32 %v294, %v315
      %v331 = vadd.f32 %v295, %v315
      %v332 = vadd.f32 %v296, %v315
      %v333 = vadd.f32 %v297, %v315
      %v334 = vadd.f32 %v298, %v315
      %v335 = vadd.f32 %v299, %v315
      %v336 = vadd.f32 %v300, %v315
      %v337 = vadd.f32 %v301, %v315
      %v338 = vadd.f32 %v302, %v315
      %v339 = vadd.f32 %v303, %v315
      %v340 = vadd.f32 %v304, %v315
      %v341 = vadd.f32 %v305, %v315
      %v342 = vadd.f32 %v306, %v315
      %v343 = vadd.f32 %v307, %v315
      %v344 = vadd.f32 %v308, %v315
      %v345 = vadd.f32 %v309, %v315
      %v346 = vadd.f32 %v310, %v315
      %v347 = vadd.f32 %v311, %v315
      %v348 = vmax.f32 %v316, 0.0
      %v349 = vmax.f32 %v317, 0.0
      %v350 = vmax.f32 %v318, 0.0
      %v351 = vmax.f32 %v319, 0.0
      %v352 = vmax.f32 %v320, 0.0
      %v353 = vmax.f32 %v321, 0.0
      %v354 = vmax.f32 %v322, 0.0
      %v355 = vmax.f32 %v323, 0.0
      %v356 = vmax.f32 %v324, 0.0
      %v357 = vmax.f32 %v325, 0.0
      %v358 = vmax.f32 %v326, 0.0
      %v359 = vmax.f32 %v327, 0.0
      %v360 = vmax.f32 %v328, 0.0
      %v361 = vmax.f32 %v329, 0.0
      %v362 = vmax.f32 %v330, 0.0
      %v363 = vmax.f32 %v331, 0.0
      %v364 = vmax.f32 %v332, 0.0
      %v365 = vmax.f32 %v333, 0.0
      %v366 = vmax.f32 %v334, 0.0
      %v367 = vmax.f32 %v335, 0.0
      %v368 = vmax.f32 %v336, 0.0
      %v369 = vmax.f32 %v337, 0.0
      %v370 = vmax.f32 %v338, 0.0
      %v371 = vmax.f32 %v339, 0.0
      %v372 = vmax.f32 %v340, 0.0
      %v373 = vmax.f32 %v341, 0.0
      %v374 = vmax.f32 %v342, 0.0
      %v375 = vmax.f32 %v343, 0.0
      %v376 = vmax.f32 %v344, 0.0
      %v377 = vmax.f32 %v345, 0.0
      %v378 = vmax.f32 %v346, 0.0
      %v379 = vmax.f32 %v347, 0.0
      %v380 = vpack.c.bf16 %v349, %v348
      %v381 = vpack.c.bf16 %v351, %v350
      %v382 = vpack.c.bf16 %v353, %v352
      %v383 = vpack.c.bf16 %v355, %v354
      %v384 = vpack.c.bf16 %v357, %v356
      %v385 = vpack.c.bf16 %v359, %v358
      %v386 = vpack.c.bf16 %v361, %v360
      %v387 = vpack.c.bf16 %v363, %v362
      %v388 = vpack.c.bf16 %v365, %v364
      %v389 = vpack.c.bf16 %v367, %v366
      %v390 = vpack.c.bf16 %v369, %v368
      %v391 = vpack.c.bf16 %v371, %v370
      %v392 = vpack.c.bf16 %v373, %v372
      %v393 = vpack.c.bf16 %v375, %v374
      %v394 = vpack.c.bf16 %v377, %v376
      %v395 = vpack.c.bf16 %v379, %v378
      %v412 = vunpack.c.l.b16 %v380
      %v413 = vunpack.c.h.b16 %v380
      %v414 = vunpack.c.l.b16 %v381
      %v415 = vunpack.c.h.b16 %v381
      %v416 = vunpack.c.l.b16 %v382
      %v417 = vunpack.c.h.b16 %v382
      %v418 = vunpack.c.l.b16 %v383
      %v419 = vunpack.c.h.b16 %v383
      %v420 = vunpack.c.l.b16 %v384
      %v421 = vunpack.c.h.b16 %v384
      %v422 = vunpack.c.l.b16 %v385
      %v423 = vunpack.c.h.b16 %v385
      %v424 = vunpack.c.l.b16 %v386
      %v425 = vunpack.c.h.b16 %v386
      %v426 = vunpack.c.l.b16 %v387
      %v427 = vunpack.c.h.b16 %v387
      %v428 = vunpack.c.l.b16 %v388
      %v429 = vunpack.c.h.b16 %v388
      %v430 = vunpack.c.l.b16 %v389
      %v431 = vunpack.c.h.b16 %v389
      %v432 = vunpack.c.l.b16 %v390
      %v433 = vunpack.c.h.b16 %v390
      %v434 = vunpack.c.l.b16 %v391
      %v435 = vunpack.c.h.b16 %v391
      %v436 = vunpack.c.l.b16 %v392
      %v437 = vunpack.c.h.b16 %v392
      %v438 = vunpack.c.l.b16 %v393
      %v439 = vunpack.c.h.b16 %v393
      %v440 = vunpack.c.l.b16 %v394
      %v441 = vunpack.c.h.b16 %v394
      %v442 = vunpack.c.l.b16 %v395
      %v443 = vunpack.c.h.b16 %v395
      %v444 = vpack.c.b16 %v412, %v412
      %v445 = vpack.c.b16 %v413, %v413
      %v446 = vpack.c.b16 %v414, %v414
      %v447 = vpack.c.b16 %v415, %v415
      %v448 = vpack.c.b16 %v416, %v416
      %v449 = vpack.c.b16 %v417, %v417
      %v450 = vpack.c.b16 %v418, %v418
      %v451 = vpack.c.b16 %v419, %v419
      %v452 = vpack.c.b16 %v420, %v420
      %v453 = vpack.c.b16 %v421, %v421
      %v454 = vpack.c.b16 %v422, %v422
      %v455 = vpack.c.b16 %v423, %v423
      %v456 = vpack.c.b16 %v424, %v424
      %v457 = vpack.c.b16 %v425, %v425
      %v458 = vpack.c.b16 %v426, %v426
      %v459 = vpack.c.b16 %v427, %v427
      %v460 = vpack.c.b16 %v428, %v428
      %v461 = vpack.c.b16 %v429, %v429
      %v462 = vpack.c.b16 %v430, %v430
      %v463 = vpack.c.b16 %v431, %v431
      %v464 = vpack.c.b16 %v432, %v432
      %v465 = vpack.c.b16 %v433, %v433
      %v466 = vpack.c.b16 %v434, %v434
      %v467 = vpack.c.b16 %v435, %v435
      %v468 = vpack.c.b16 %v436, %v436
      %v469 = vpack.c.b16 %v437, %v437
      %v470 = vpack.c.b16 %v438, %v438
      %v471 = vpack.c.b16 %v439, %v439
      %v472 = vpack.c.b16 %v440, %v440
      %v473 = vpack.c.b16 %v441, %v441
      %v474 = vpack.c.b16 %v442, %v442
      %v475 = vpack.c.b16 %v443, %v443
      %vm476 = vsmask.f32 256
      %vm477 = vsmask.f32 4368
      %vm478 = vmor %vm476, %vm477
      %v480 = vshrl.u32 %v444, 16
      %v482 = vrot.slane %v480, 7
      %v483 = vshll.u32 %v444, 16
      %v485 = vor.u32 %v482, %v483
      %v486 = vrot.slane %v482, 4
      %v488 = vshrl.u32 %v445, 16
      %v490 = vrot.slane %v488, 7
      %v491 = vshll.u32 %v445, 16
      %v493 = vor.u32 %v490, %v491
      %v494 = vsel %vm478, %v486, %v493
      %v495 = vrot.slane %v490, 4
      %v497 = vshrl.u32 %v446, 16
      %v499 = vrot.slane %v497, 7
      %v500 = vshll.u32 %v446, 16
      %v502 = vor.u32 %v499, %v500
      %v503 = vrot.slane %v499, 4
      %v505 = vshrl.u32 %v447, 16
      %v507 = vrot.slane %v505, 7
      %v508 = vshll.u32 %v447, 16
      %v510 = vor.u32 %v507, %v508
      %v511 = vsel %vm478, %v503, %v510
      %v512 = vrot.slane %v507, 4
      %v514 = vshrl.u32 %v448, 16
      %v516 = vrot.slane %v514, 7
      %v517 = vshll.u32 %v448, 16
      %v519 = vor.u32 %v516, %v517
      %v520 = vrot.slane %v516, 4
      %v522 = vshrl.u32 %v449, 16
      %v524 = vrot.slane %v522, 7
      %v525 = vshll.u32 %v449, 16
      %v527 = vor.u32 %v524, %v525
      %v528 = vsel %vm478, %v520, %v527
      %v529 = vrot.slane %v524, 4
      %v531 = vshrl.u32 %v450, 16
      %v533 = vrot.slane %v531, 7
      %v534 = vshll.u32 %v450, 16
      %v536 = vor.u32 %v533, %v534
      %v537 = vrot.slane %v533, 4
      %v539 = vshrl.u32 %v451, 16
      %v541 = vrot.slane %v539, 7
      %v542 = vshll.u32 %v451, 16
      %v544 = vor.u32 %v541, %v542
      %v545 = vsel %vm478, %v537, %v544
      %v546 = vrot.slane %v541, 4
      %v548 = vshrl.u32 %v452, 16
      %v550 = vrot.slane %v548, 7
      %v551 = vshll.u32 %v452, 16
      %v553 = vor.u32 %v550, %v551
      %v554 = vrot.slane %v550, 4
      %v556 = vshrl.u32 %v453, 16
      %v558 = vrot.slane %v556, 7
      %v559 = vshll.u32 %v453, 16
      %v561 = vor.u32 %v558, %v559
      %v562 = vsel %vm478, %v554, %v561
      %v563 = vrot.slane %v558, 4
      %v565 = vshrl.u32 %v454, 16
      %v567 = vrot.slane %v565, 7
      %v568 = vshll.u32 %v454, 16
      %v570 = vor.u32 %v567, %v568
      %v571 = vrot.slane %v567, 4
      %v573 = vshrl.u32 %v455, 16
      %v575 = vrot.slane %v573, 7
      %v576 = vshll.u32 %v455, 16
      %v578 = vor.u32 %v575, %v576
      %v579 = vsel %vm478, %v571, %v578
      %v580 = vrot.slane %v575, 4
      %v582 = vshrl.u32 %v456, 16
      %v584 = vrot.slane %v582, 7
      %v585 = vshll.u32 %v456, 16
      %v587 = vor.u32 %v584, %v585
      %v588 = vrot.slane %v584, 4
      %v590 = vshrl.u32 %v457, 16
      %v592 = vrot.slane %v590, 7
      %v593 = vshll.u32 %v457, 16
      %v595 = vor.u32 %v592, %v593
      %v596 = vsel %vm478, %v588, %v595
      %v597 = vrot.slane %v592, 4
      %v599 = vshrl.u32 %v458, 16
      %v601 = vrot.slane %v599, 7
      %v602 = vshll.u32 %v458, 16
      %v604 = vor.u32 %v601, %v602
      %v605 = vrot.slane %v601, 4
      %v607 = vshrl.u32 %v459, 16
      %v609 = vrot.slane %v607, 7
      %v610 = vshll.u32 %v459, 16
      %v612 = vor.u32 %v609, %v610
      %v613 = vsel %vm478, %v605, %v612
      %v614 = vrot.slane %v609, 4
      %v616 = vshrl.u32 %v460, 16
      %v618 = vrot.slane %v616, 7
      %v619 = vshll.u32 %v460, 16
      %v621 = vor.u32 %v618, %v619
      %v622 = vrot.slane %v618, 4
      %v624 = vshrl.u32 %v461, 16
      %v626 = vrot.slane %v624, 7
      %v627 = vshll.u32 %v461, 16
      %v629 = vor.u32 %v626, %v627
      %v630 = vsel %vm478, %v622, %v629
      %v631 = vrot.slane %v626, 4
      %v633 = vshrl.u32 %v462, 16
      %v635 = vrot.slane %v633, 7
      %v636 = vshll.u32 %v462, 16
      %v638 = vor.u32 %v635, %v636
      %v639 = vrot.slane %v635, 4
      %v641 = vshrl.u32 %v463, 16
      %v643 = vrot.slane %v641, 7
      %v644 = vshll.u32 %v463, 16
      %v646 = vor.u32 %v643, %v644
      %v647 = vsel %vm478, %v639, %v646
      %v648 = vrot.slane %v643, 4
      %v650 = vshrl.u32 %v464, 16
      %v652 = vrot.slane %v650, 7
      %v653 = vshll.u32 %v464, 16
      %v655 = vor.u32 %v652, %v653
      %v656 = vrot.slane %v652, 4
      %v658 = vshrl.u32 %v465, 16
      %v660 = vrot.slane %v658, 7
      %v661 = vshll.u32 %v465, 16
      %v663 = vor.u32 %v660, %v661
      %v664 = vsel %vm478, %v656, %v663
      %v665 = vrot.slane %v660, 4
      %v667 = vshrl.u32 %v466, 16
      %v669 = vrot.slane %v667, 7
      %v670 = vshll.u32 %v466, 16
      %v672 = vor.u32 %v669, %v670
      %v673 = vrot.slane %v669, 4
      %v675 = vshrl.u32 %v467, 16
      %v677 = vrot.slane %v675, 7
      %v678 = vshll.u32 %v467, 16
      %v680 = vor.u32 %v677, %v678
      %v681 = vsel %vm478, %v673, %v680
      %v682 = vrot.slane %v677, 4
      %v684 = vshrl.u32 %v468, 16
      %v686 = vrot.slane %v684, 7
      %v687 = vshll.u32 %v468, 16
      %v689 = vor.u32 %v686, %v687
      %v690 = vrot.slane %v686, 4
      %v692 = vshrl.u32 %v469, 16
      %v694 = vrot.slane %v692, 7
      %v695 = vshll.u32 %v469, 16
      %v697 = vor.u32 %v694, %v695
      %v698 = vsel %vm478, %v690, %v697
      %v699 = vrot.slane %v694, 4
      %v701 = vshrl.u32 %v470, 16
      %v703 = vrot.slane %v701, 7
      %v704 = vshll.u32 %v470, 16
      %v706 = vor.u32 %v703, %v704
      %v707 = vrot.slane %v703, 4
      %v709 = vshrl.u32 %v471, 16
      %v711 = vrot.slane %v709, 7
      %v712 = vshll.u32 %v471, 16
      %v714 = vor.u32 %v711, %v712
      %v715 = vsel %vm478, %v707, %v714
      %v716 = vrot.slane %v711, 4
      %v718 = vshrl.u32 %v472, 16
      %v720 = vrot.slane %v718, 7
      %v721 = vshll.u32 %v472, 16
      %v723 = vor.u32 %v720, %v721
      %v724 = vrot.slane %v720, 4
      %v726 = vshrl.u32 %v473, 16
      %v728 = vrot.slane %v726, 7
      %v729 = vshll.u32 %v473, 16
      %v731 = vor.u32 %v728, %v729
      %v732 = vsel %vm478, %v724, %v731
      %v733 = vrot.slane %v728, 4
      %v735 = vshrl.u32 %v474, 16
      %v737 = vrot.slane %v735, 7
      %v738 = vshll.u32 %v474, 16
      %v740 = vor.u32 %v737, %v738
      %v741 = vrot.slane %v737, 4
      %v743 = vshrl.u32 %v475, 16
      %v745 = vrot.slane %v743, 7
      %v746 = vshll.u32 %v475, 16
      %v748 = vor.u32 %v745, %v746
      %v749 = vsel %vm478, %v741, %v748
      %v750 = vrot.slane %v745, 4
      %s799 = scalar_lea.vmem [#allocation2], 12
      %vm800 = vcmask 1043456
      %vm801 = vsmask.f32 7938
      %vm802 = vmand %vm800, %vm801
      %v803 = vld [vmem:[%s799] sm:$0xf]
      %v804 = vsel %vm802, %v485, %v803
      %805 = vst [vmem:[%s799] sm:$0xf] %v804
      %806 = vst [vmem:[%s799 + $0x4] sm:$0xf] %v494
      %vm807 = vcmask 1040384
      %vm808 = vmand %vm807, %vm476
      %v809 = vld [vmem:[%s799 + $0x8] sm:$0x1]
      %v810 = vsel %vm808, %v495, %v809
      %811 = vst [vmem:[%s799 + $0x8] sm:$0x1] %v810
      %v812 = vld [vmem:[%s799 + $0xc] sm:$0xf]
      %v813 = vsel %vm802, %v502, %v812
      %814 = vst [vmem:[%s799 + $0xc] sm:$0xf] %v813
      %815 = vst [vmem:[%s799 + $0x10] sm:$0xf] %v511
      %v816 = vld [vmem:[%s799 + $0x14] sm:$0x1]
      %v817 = vsel %vm808, %v512, %v816
      %818 = vst [vmem:[%s799 + $0x14] sm:$0x1] %v817
      %v819 = vld [vmem:[%s799 + $0x18] sm:$0xf]
      %v820 = vsel %vm802, %v519, %v819
      %821 = vst [vmem:[%s799 + $0x18] sm:$0xf] %v820
      %822 = vst [vmem:[%s799 + $0x1c] sm:$0xf] %v528
      %v823 = vld [vmem:[%s799 + $0x20] sm:$0x1]
      %v824 = vsel %vm808, %v529, %v823
      %825 = vst [vmem:[%s799 + $0x20] sm:$0x1] %v824
      %v826 = vld [vmem:[%s799 + $0x24] sm:$0xf]
      %v827 = vsel %vm802, %v536, %v826
      %828 = vst [vmem:[%s799 + $0x24] sm:$0xf] %v827
      %829 = vst [vmem:[%s799 + $0x28] sm:$0xf] %v545
      %v830 = vld [vmem:[%s799 + $0x2c] sm:$0x1]
      %v831 = vsel %vm808, %v546, %v830
      %832 = vst [vmem:[%s799 + $0x2c] sm:$0x1] %v831
      %v833 = vld [vmem:[%s799 + $0x30] sm:$0xf]
      %v834 = vsel %vm802, %v553, %v833
      %835 = vst [vmem:[%s799 + $0x30] sm:$0xf] %v834
      %836 = vst [vmem:[%s799 + $0x34] sm:$0xf] %v562
      %v837 = vld [vmem:[%s799 + $0x38] sm:$0x1]
      %v838 = vsel %vm808, %v563, %v837
      %839 = vst [vmem:[%s799 + $0x38] sm:$0x1] %v838
      %v840 = vld [vmem:[%s799 + $0x3c] sm:$0xf]
      %v841 = vsel %vm802, %v570, %v840
      %842 = vst [vmem:[%s799 + $0x3c] sm:$0xf] %v841
      %843 = vst [vmem:[%s799 + $0x40] sm:$0xf] %v579
      %v844 = vld [vmem:[%s799 + $0x44] sm:$0x1]
      %v845 = vsel %vm808, %v580, %v844
      %846 = vst [vmem:[%s799 + $0x44] sm:$0x1] %v845
      %v847 = vld [vmem:[%s799 + $0x48] sm:$0xf]
      %v848 = vsel %vm802, %v587, %v847
      %849 = vst [vmem:[%s799 + $0x48] sm:$0xf] %v848
      %850 = vst [vmem:[%s799 + $0x4c] sm:$0xf] %v596
      %v851 = vld [vmem:[%s799 + $0x50] sm:$0x1]
      %v852 = vsel %vm808, %v597, %v851
      %853 = vst [vmem:[%s799 + $0x50] sm:$0x1] %v852
      %v854 = vld [vmem:[%s799 + $0x54] sm:$0xf]
      %v855 = vsel %vm802, %v604, %v854
      %856 = vst [vmem:[%s799 + $0x54] sm:$0xf] %v855
      %857 = vst [vmem:[%s799 + $0x58] sm:$0xf] %v613
      %v858 = vld [vmem:[%s799 + $0x5c] sm:$0x1]
      %v859 = vsel %vm808, %v614, %v858
      %860 = vst [vmem:[%s799 + $0x5c] sm:$0x1] %v859
      %v861 = vld [vmem:[%s799 + $0x60] sm:$0xf]
      %v862 = vsel %vm802, %v621, %v861
      %863 = vst [vmem:[%s799 + $0x60] sm:$0xf] %v862
      %864 = vst [vmem:[%s799 + $0x64] sm:$0xf] %v630
      %v865 = vld [vmem:[%s799 + $0x68] sm:$0x1]
      %v866 = vsel %vm808, %v631, %v865
      %867 = vst [vmem:[%s799 + $0x68] sm:$0x1] %v866
      %v868 = vld [vmem:[%s799 + $0x6c] sm:$0xf]
      %v869 = vsel %vm802, %v638, %v868
      %870 = vst [vmem:[%s799 + $0x6c] sm:$0xf] %v869
      %871 = vst [vmem:[%s799 + $0x70] sm:$0xf] %v647
      %v872 = vld [vmem:[%s799 + $0x74] sm:$0x1]
      %v873 = vsel %vm808, %v648, %v872
      %874 = vst [vmem:[%s799 + $0x74] sm:$0x1] %v873
      %v875 = vld [vmem:[%s799 + $0x78] sm:$0xf]
      %v876 = vsel %vm802, %v655, %v875
      %877 = vst [vmem:[%s799 + $0x78] sm:$0xf] %v876
      %878 = vst [vmem:[%s799 + $0x7c] sm:$0xf] %v664
      %v879 = vld [vmem:[%s799 + $0x80] sm:$0x1]
      %v880 = vsel %vm808, %v665, %v879
      %881 = vst [vmem:[%s799 + $0x80] sm:$0x1] %v880
      %v882 = vld [vmem:[%s799 + $0x84] sm:$0xf]
      %v883 = vsel %vm802, %v672, %v882
      %884 = vst [vmem:[%s799 + $0x84] sm:$0xf] %v883
      %885 = vst [vmem:[%s799 + $0x88] sm:$0xf] %v681
      %v886 = vld [vmem:[%s799 + $0x8c] sm:$0x1]
      %v887 = vsel %vm808, %v682, %v886
      %888 = vst [vmem:[%s799 + $0x8c] sm:$0x1] %v887
      %v889 = vld [vmem:[%s799 + $0x90] sm:$0xf]
      %v890 = vsel %vm802, %v689, %v889
      %891 = vst [vmem:[%s799 + $0x90] sm:$0xf] %v890
      %892 = vst [vmem:[%s799 + $0x94] sm:$0xf] %v698
      %v893 = vld [vmem:[%s799 + $0x98] sm:$0x1]
      %v894 = vsel %vm808, %v699, %v893
      %895 = vst [vmem:[%s799 + $0x98] sm:$0x1] %v894
      %v896 = vld [vmem:[%s799 + $0x9c] sm:$0xf]
      %v897 = vsel %vm802, %v706, %v896
      %898 = vst [vmem:[%s799 + $0x9c] sm:$0xf] %v897
      %899 = vst [vmem:[%s799 + $0xa0] sm:$0xf] %v715
      %v900 = vld [vmem:[%s799 + $0xa4] sm:$0x1]
      %v901 = vsel %vm808, %v716, %v900
      %902 = vst [vmem:[%s799 + $0xa4] sm:$0x1] %v901
      %v903 = vld [vmem:[%s799 + $0xa8] sm:$0xf]
      %v904 = vsel %vm802, %v723, %v903
      %905 = vst [vmem:[%s799 + $0xa8] sm:$0xf] %v904
      %906 = vst [vmem:[%s799 + $0xac] sm:$0xf] %v732
      %v907 = vld [vmem:[%s799 + $0xb0] sm:$0x1]
      %v908 = vsel %vm808, %v733, %v907
      %909 = vst [vmem:[%s799 + $0xb0] sm:$0x1] %v908
      %v910 = vld [vmem:[%s799 + $0xb4] sm:$0xf]
      %v911 = vsel %vm802, %v740, %v910
      %912 = vst [vmem:[%s799 + $0xb4] sm:$0xf] %v911
      %913 = vst [vmem:[%s799 + $0xb8] sm:$0xf] %v749
      %v914 = vld [vmem:[%s799 + $0xbc] sm:$0x1]
      %v915 = vsel %vm808, %v750, %v914
      %916 = vst [vmem:[%s799 + $0xbc] sm:$0x1] %v915
      %917 = vst [vmem:[#allocation2] sm:$0xf] 0
      %918 = vst [vmem:[#allocation2 + $0x4] sm:$0xf] 0
      %919 = vst [vmem:[#allocation2 + $0x8] sm:$0x1] 0
      %s920 = scalar_lea.vmem [#allocation2], 204
      %921 = vst [vmem:[%s920] sm:$0xf] 0
      %922 = vst [vmem:[%s920 + $0x4] sm:$0xf] 0
      %923 = vst [vmem:[%s920 + $0x8] sm:$0x1] 0
      %v924 = vld [vmem:[%s799] sm:$0x1]
      %v925 = vsel %vm808, 0, %v924
      %926 = vst [vmem:[%s799] sm:$0x1] %v925
      %v927 = vld [vmem:[%s799 + $0xc] sm:$0x1]
      %v928 = vsel %vm808, 0, %v927
      %929 = vst [vmem:[%s799 + $0xc] sm:$0x1] %v928
      %v930 = vld [vmem:[%s799 + $0x18] sm:$0x1]
      %v931 = vsel %vm808, 0, %v930
      %932 = vst [vmem:[%s799 + $0x18] sm:$0x1] %v931
      %v933 = vld [vmem:[%s799 + $0x24] sm:$0x1]
      %v934 = vsel %vm808, 0, %v933
      %935 = vst [vmem:[%s799 + $0x24] sm:$0x1] %v934
      %v936 = vld [vmem:[%s799 + $0x30] sm:$0x1]
      %v937 = vsel %vm808, 0, %v936
      %938 = vst [vmem:[%s799 + $0x30] sm:$0x1] %v937
      %v939 = vld [vmem:[%s799 + $0x3c] sm:$0x1]
      %v940 = vsel %vm808, 0, %v939
      %941 = vst [vmem:[%s799 + $0x3c] sm:$0x1] %v940
      %v942 = vld [vmem:[%s799 + $0x48] sm:$0x1]
      %v943 = vsel %vm808, 0, %v942
      %944 = vst [vmem:[%s799 + $0x48] sm:$0x1] %v943
      %v945 = vld [vmem:[%s799 + $0x54] sm:$0x1]
      %v946 = vsel %vm808, 0, %v945
      %947 = vst [vmem:[%s799 + $0x54] sm:$0x1] %v946
      %v948 = vld [vmem:[%s799 + $0x60] sm:$0x1]
      %v949 = vsel %vm808, 0, %v948
      %950 = vst [vmem:[%s799 + $0x60] sm:$0x1] %v949
      %v951 = vld [vmem:[%s799 + $0x6c] sm:$0x1]
      %v952 = vsel %vm808, 0, %v951
      %953 = vst [vmem:[%s799 + $0x6c] sm:$0x1] %v952
      %v954 = vld [vmem:[%s799 + $0x78] sm:$0x1]
      %v955 = vsel %vm808, 0, %v954
      %956 = vst [vmem:[%s799 + $0x78] sm:$0x1] %v955
      %v957 = vld [vmem:[%s799 + $0x84] sm:$0x1]
      %v958 = vsel %vm808, 0, %v957
      %959 = vst [vmem:[%s799 + $0x84] sm:$0x1] %v958
      %v960 = vld [vmem:[%s799 + $0x90] sm:$0x1]
      %v961 = vsel %vm808, 0, %v960
      %962 = vst [vmem:[%s799 + $0x90] sm:$0x1] %v961
      %v963 = vld [vmem:[%s799 + $0x9c] sm:$0x1]
      %v964 = vsel %vm808, 0, %v963
      %965 = vst [vmem:[%s799 + $0x9c] sm:$0x1] %v964
      %v966 = vld [vmem:[%s799 + $0xa8] sm:$0x1]
      %v967 = vsel %vm808, 0, %v966
      %968 = vst [vmem:[%s799 + $0xa8] sm:$0x1] %v967
      %v969 = vld [vmem:[%s799 + $0xb4] sm:$0x1]
      %v970 = vsel %vm808, 0, %v969
      %971 = vst [vmem:[%s799 + $0xb4] sm:$0x1] %v970
      %vm972 = vmand %vm807, %vm801
      %v973 = vld [vmem:[%s799 + $0x8] sm:$0x1]
      %v974 = vsel %vm972, 0, %v973
      %975 = vst [vmem:[%s799 + $0x8] sm:$0x1] %v974
      %v976 = vld [vmem:[%s799 + $0x14] sm:$0x1]
      %v977 = vsel %vm972, 0, %v976
      %978 = vst [vmem:[%s799 + $0x14] sm:$0x1] %v977
      %v979 = vld [vmem:[%s799 + $0x20] sm:$0x1]
      %v980 = vsel %vm972, 0, %v979
      %981 = vst [vmem:[%s799 + $0x20] sm:$0x1] %v980
      %v982 = vld [vmem:[%s799 + $0x2c] sm:$0x1]
      %v983 = vsel %vm972, 0, %v982
      %984 = vst [vmem:[%s799 + $0x2c] sm:$0x1] %v983
      %v985 = vld [vmem:[%s799 + $0x38] sm:$0x1]
      %v986 = vsel %vm972, 0, %v985
      %987 = vst [vmem:[%s799 + $0x38] sm:$0x1] %v986
      %v988 = vld [vmem:[%s799 + $0x44] sm:$0x1]
      %v989 = vsel %vm972, 0, %v988
      %990 = vst [vmem:[%s799 + $0x44] sm:$0x1] %v989
      %v991 = vld [vmem:[%s799 + $0x50] sm:$0x1]
      %v992 = vsel %vm972, 0, %v991
      %993 = vst [vmem:[%s799 + $0x50] sm:$0x1] %v992
      %v994 = vld [vmem:[%s799 + $0x5c] sm:$0x1]
      %v995 = vsel %vm972, 0, %v994
      %996 = vst [vmem:[%s799 + $0x5c] sm:$0x1] %v995
      %v997 = vld [vmem:[%s799 + $0x68] sm:$0x1]
      %v998 = vsel %vm972, 0, %v997
      %999 = vst [vmem:[%s799 + $0x68] sm:$0x1] %v998
      %v1000 = vld [vmem:[%s799 + $0x74] sm:$0x1]
      %v1001 = vsel %vm972, 0, %v1000
      %1002 = vst [vmem:[%s799 + $0x74] sm:$0x1] %v1001
      %v1003 = vld [vmem:[%s799 + $0x80] sm:$0x1]
      %v1004 = vsel %vm972, 0, %v1003
      %1005 = vst [vmem:[%s799 + $0x80] sm:$0x1] %v1004
      %v1006 = vld [vmem:[%s799 + $0x8c] sm:$0x1]
      %v1007 = vsel %vm972, 0, %v1006
      %1008 = vst [vmem:[%s799 + $0x8c] sm:$0x1] %v1007
      %v1009 = vld [vmem:[%s799 + $0x98] sm:$0x1]
      %v1010 = vsel %vm972, 0, %v1009
      %1011 = vst [vmem:[%s799 + $0x98] sm:$0x1] %v1010
      %v1012 = vld [vmem:[%s799 + $0xa4] sm:$0x1]
      %v1013 = vsel %vm972, 0, %v1012
      %1014 = vst [vmem:[%s799 + $0xa4] sm:$0x1] %v1013
      %v1015 = vld [vmem:[%s799 + $0xb0] sm:$0x1]
      %v1016 = vsel %vm972, 0, %v1015
      %1017 = vst [vmem:[%s799 + $0xb0] sm:$0x1] %v1016
      %v1018 = vld [vmem:[%s799 + $0xbc] sm:$0x1]
      %v1019 = vsel %vm972, 0, %v1018
      %1020 = vst [vmem:[%s799 + $0xbc] sm:$0x1] %v1019
      %v1021 = vld [vmem:[#allocation2] sm:$0xf]
      %v1022 = vld [vmem:[#allocation2 + $0x4] sm:$0xf]
      %v1023 = vld [vmem:[#allocation2 + $0xc] sm:$0xf]
      %v1024 = vld [vmem:[#allocation2 + $0x10] sm:$0xf]
      %v1025 = vld [vmem:[#allocation2 + $0x18] sm:$0xf]
      %v1026 = vld [vmem:[#allocation2 + $0x1c] sm:$0xf]
      %v1027 = vld [vmem:[#allocation2 + $0x24] sm:$0xf]
      %v1028 = vld [vmem:[#allocation2 + $0x28] sm:$0xf]
      %v1029 = vld [vmem:[#allocation2 + $0x30] sm:$0xf]
      %v1030 = vld [vmem:[#allocation2 + $0x34] sm:$0xf]
      %v1031 = vld [vmem:[#allocation2 + $0x3c] sm:$0xf]
      %v1032 = vld [vmem:[#allocation2 + $0x40] sm:$0xf]
      %v1033 = vld [vmem:[#allocation2 + $0x48] sm:$0xf]
      %v1034 = vld [vmem:[#allocation2 + $0x4c] sm:$0xf]
      %v1035 = vld [vmem:[#allocation2 + $0x54] sm:$0xf]
      %v1036 = vld [vmem:[#allocation2 + $0x58] sm:$0xf]
      %v1037 = vld [vmem:[#allocation2 + $0x60] sm:$0xf]
      %v1038 = vld [vmem:[#allocation2 + $0x64] sm:$0xf]
      %v1039 = vld [vmem:[#allocation2 + $0x6c] sm:$0xf]
      %v1040 = vld [vmem:[#allocation2 + $0x70] sm:$0xf]
      %v1041 = vld [vmem:[#allocation2 + $0x78] sm:$0xf]
      %v1042 = vld [vmem:[#allocation2 + $0x7c] sm:$0xf]
      %v1043 = vld [vmem:[#allocation2 + $0x84] sm:$0xf]
      %v1044 = vld [vmem:[#allocation2 + $0x88] sm:$0xf]
      %v1045 = vld [vmem:[#allocation2 + $0x90] sm:$0xf]
      %v1046 = vld [vmem:[#allocation2 + $0x94] sm:$0xf]
      %v1047 = vld [vmem:[#allocation2 + $0x9c] sm:$0xf]
      %v1048 = vld [vmem:[#allocation2 + $0xa0] sm:$0xf]
      %v1049 = vld [vmem:[#allocation2 + $0xa8] sm:$0xf]
      %v1050 = vld [vmem:[#allocation2 + $0xac] sm:$0xf]
      %v1051 = vld [vmem:[#allocation2 + $0xb4] sm:$0xf]
      %v1052 = vld [vmem:[#allocation2 + $0xb8] sm:$0xf]
      %v1053 = vld [vmem:[#allocation2 + $0x8] sm:$0x1]
      %v1054 = vld [vmem:[#allocation2 + $0x14] sm:$0x1]
      %v1055 = vld [vmem:[#allocation2 + $0x20] sm:$0x1]
      %v1056 = vld [vmem:[#allocation2 + $0x2c] sm:$0x1]
      %v1057 = vld [vmem:[#allocation2 + $0x38] sm:$0x1]
      %v1058 = vld [vmem:[#allocation2 + $0x44] sm:$0x1]
      %v1059 = vld [vmem:[#allocation2 + $0x50] sm:$0x1]
      %v1060 = vld [vmem:[#allocation2 + $0x5c] sm:$0x1]
      %v1061 = vld [vmem:[#allocation2 + $0x68] sm:$0x1]
      %v1062 = vld [vmem:[#allocation2 + $0x74] sm:$0x1]
      %v1063 = vld [vmem:[#allocation2 + $0x80] sm:$0x1]
      %v1064 = vld [vmem:[#allocation2 + $0x8c] sm:$0x1]
      %v1065 = vld [vmem:[#allocation2 + $0x98] sm:$0x1]
      %v1066 = vld [vmem:[#allocation2 + $0xa4] sm:$0x1]
      %v1067 = vld [vmem:[#allocation2 + $0xb0] sm:$0x1]
      %v1068 = vld [vmem:[#allocation2 + $0xbc] sm:$0x1]
      %v1069 = vld [vmem:[#allocation2] sm:$0xe]
      %v1070 = vld [vmem:[#allocation2 + $0xc] sm:$0xe]
      %v1071 = vld [vmem:[#allocation2 + $0x18] sm:$0xe]
      %v1072 = vld [vmem:[#allocation2 + $0x24] sm:$0xe]
      %v1073 = vld [vmem:[#allocation2 + $0x30] sm:$0xe]
      %v1074 = vld [vmem:[#allocation2 + $0x3c] sm:$0xe]
      %v1075 = vld [vmem:[#allocation2 + $0x48] sm:$0xe]
      %v1076 = vld [vmem:[#allocation2 + $0x54] sm:$0xe]
      %v1077 = vld [vmem:[#allocation2 + $0x60] sm:$0xe]
      %v1078 = vld [vmem:[#allocation2 + $0x6c] sm:$0xe]
      %v1079 = vld [vmem:[#allocation2 + $0x78] sm:$0xe]
      %v1080 = vld [vmem:[#allocation2 + $0x84] sm:$0xe]
      %v1081 = vld [vmem:[#allocation2 + $0x90] sm:$0xe]
      %v1082 = vld [vmem:[#allocation2 + $0x9c] sm:$0xe]
      %v1083 = vld [vmem:[#allocation2 + $0xa8] sm:$0xe]
      %v1084 = vld [vmem:[#allocation2 + $0xb4] sm:$0xe]
      %v1117 = vunpack.c.l.b16 %v1021
      %v1118 = vunpack.c.l.b16 %v1022
      %v1119 = vunpack.c.l.b16 %v1023
      %v1120 = vunpack.c.l.b16 %v1024
      %v1121 = vunpack.c.l.b16 %v1025
      %v1122 = vunpack.c.l.b16 %v1026
      %v1123 = vunpack.c.l.b16 %v1027
      %v1124 = vunpack.c.l.b16 %v1028
      %v1125 = vunpack.c.l.b16 %v1029
      %v1126 = vunpack.c.l.b16 %v1030
      %v1127 = vunpack.c.l.b16 %v1031
      %v1128 = vunpack.c.l.b16 %v1032
      %v1129 = vunpack.c.l.b16 %v1033
      %v1130 = vunpack.c.l.b16 %v1034
      %v1131 = vunpack.c.l.b16 %v1035
      %v1132 = vunpack.c.l.b16 %v1036
      %v1133 = vunpack.c.l.b16 %v1037
      %v1134 = vunpack.c.l.b16 %v1038
      %v1135 = vunpack.c.l.b16 %v1039
      %v1136 = vunpack.c.l.b16 %v1040
      %v1137 = vunpack.c.l.b16 %v1041
      %v1138 = vunpack.c.l.b16 %v1042
      %v1139 = vunpack.c.l.b16 %v1043
      %v1140 = vunpack.c.l.b16 %v1044
      %v1141 = vunpack.c.l.b16 %v1045
      %v1142 = vunpack.c.l.b16 %v1046
      %v1143 = vunpack.c.l.b16 %v1047
      %v1144 = vunpack.c.l.b16 %v1048
      %v1145 = vunpack.c.l.b16 %v1049
      %v1146 = vunpack.c.l.b16 %v1050
      %v1147 = vunpack.c.l.b16 %v1051
      %v1148 = vunpack.c.l.b16 %v1052
      %v1149 = vpack.c.b16 %v1118, %v1117
      %v1150 = vpack.c.b16 %v1120, %v1119
      %v1151 = vpack.c.b16 %v1122, %v1121
      %v1152 = vpack.c.b16 %v1124, %v1123
      %v1153 = vpack.c.b16 %v1126, %v1125
      %v1154 = vpack.c.b16 %v1128, %v1127
      %v1155 = vpack.c.b16 %v1130, %v1129
      %v1156 = vpack.c.b16 %v1132, %v1131
      %v1157 = vpack.c.b16 %v1134, %v1133
      %v1158 = vpack.c.b16 %v1136, %v1135
      %v1159 = vpack.c.b16 %v1138, %v1137
      %v1160 = vpack.c.b16 %v1140, %v1139
      %v1161 = vpack.c.b16 %v1142, %v1141
      %v1162 = vpack.c.b16 %v1144, %v1143
      %v1163 = vpack.c.b16 %v1146, %v1145
      %v1164 = vpack.c.b16 %v1148, %v1147
      %v1197 = vunpack.c.l.b16 %v1053
      %v1198 = vunpack.c.l.b16 %v1054
      %v1199 = vunpack.c.l.b16 %v1055
      %v1200 = vunpack.c.l.b16 %v1056
      %v1201 = vunpack.c.l.b16 %v1057
      %v1202 = vunpack.c.l.b16 %v1058
      %v1203 = vunpack.c.l.b16 %v1059
      %v1204 = vunpack.c.l.b16 %v1060
      %v1205 = vunpack.c.l.b16 %v1061
      %v1206 = vunpack.c.l.b16 %v1062
      %v1207 = vunpack.c.l.b16 %v1063
      %v1208 = vunpack.c.l.b16 %v1064
      %v1209 = vunpack.c.l.b16 %v1065
      %v1210 = vunpack.c.l.b16 %v1066
      %v1211 = vunpack.c.l.b16 %v1067
      %v1212 = vunpack.c.l.b16 %v1068
      %v1213 = vpack.c.b16 %v1197, %v1197
      %v1214 = vpack.c.b16 %v1198, %v1198
      %v1215 = vpack.c.b16 %v1199, %v1199
      %v1216 = vpack.c.b16 %v1200, %v1200
      %v1217 = vpack.c.b16 %v1201, %v1201
      %v1218 = vpack.c.b16 %v1202, %v1202
      %v1219 = vpack.c.b16 %v1203, %v1203
      %v1220 = vpack.c.b16 %v1204, %v1204
      %v1221 = vpack.c.b16 %v1205, %v1205
      %v1222 = vpack.c.b16 %v1206, %v1206
      %v1223 = vpack.c.b16 %v1207, %v1207
      %v1224 = vpack.c.b16 %v1208, %v1208
      %v1225 = vpack.c.b16 %v1209, %v1209
      %v1226 = vpack.c.b16 %v1210, %v1210
      %v1227 = vpack.c.b16 %v1211, %v1211
      %v1228 = vpack.c.b16 %v1212, %v1212
      %vm1229 = vsmask.f32 7424
      %v1231 = vshrl.u32 %v1149, 16
      %v1233 = vshll.u32 %v1149, 16
      %v1235 = vrot.slane %v1233, 1
      %v1236 = vor.u32 %v1231, %v1235
      %v1238 = vshll.u32 %v1213, 16
      %v1240 = vrot.slane %v1238, 1
      %v1241 = vsel %vm1229, %v1236, %v1240
      %v1243 = vshrl.u32 %v1150, 16
      %v1245 = vshll.u32 %v1150, 16
      %v1247 = vrot.slane %v1245, 1
      %v1248 = vor.u32 %v1243, %v1247
      %v1250 = vshll.u32 %v1214, 16
      %v1252 = vrot.slane %v1250, 1
      %v1253 = vsel %vm1229, %v1248, %v1252
      %v1255 = vshrl.u32 %v1151, 16
      %v1257 = vshll.u32 %v1151, 16
      %v1259 = vrot.slane %v1257, 1
      %v1260 = vor.u32 %v1255, %v1259
      %v1262 = vshll.u32 %v1215, 16
      %v1264 = vrot.slane %v1262, 1
      %v1265 = vsel %vm1229, %v1260, %v1264
      %v1267 = vshrl.u32 %v1152, 16
      %v1269 = vshll.u32 %v1152, 16
      %v1271 = vrot.slane %v1269, 1
      %v1272 = vor.u32 %v1267, %v1271
      %v1274 = vshll.u32 %v1216, 16
      %v1276 = vrot.slane %v1274, 1
      %v1277 = vsel %vm1229, %v1272, %v1276
      %v1279 = vshrl.u32 %v1153, 16
      %v1281 = vshll.u32 %v1153, 16
      %v1283 = vrot.slane %v1281, 1
      %v1284 = vor.u32 %v1279, %v1283
      %v1286 = vshll.u32 %v1217, 16
      %v1288 = vrot.slane %v1286, 1
      %v1289 = vsel %vm1229, %v1284, %v1288
      %v1291 = vshrl.u32 %v1154, 16
      %v1293 = vshll.u32 %v1154, 16
      %v1295 = vrot.slane %v1293, 1
      %v1296 = vor.u32 %v1291, %v1295
      %v1298 = vshll.u32 %v1218, 16
      %v1300 = vrot.slane %v1298, 1
      %v1301 = vsel %vm1229, %v1296, %v1300
      %v1303 = vshrl.u32 %v1155, 16
      %v1305 = vshll.u32 %v1155, 16
      %v1307 = vrot.slane %v1305, 1
      %v1308 = vor.u32 %v1303, %v1307
      %v1310 = vshll.u32 %v1219, 16
      %v1312 = vrot.slane %v1310, 1
      %v1313 = vsel %vm1229, %v1308, %v1312
      %v1315 = vshrl.u32 %v1156, 16
      %v1317 = vshll.u32 %v1156, 16
      %v1319 = vrot.slane %v1317, 1
      %v1320 = vor.u32 %v1315, %v1319
      %v1322 = vshll.u32 %v1220, 16
      %v1324 = vrot.slane %v1322, 1
      %v1325 = vsel %vm1229, %v1320, %v1324
      %v1327 = vshrl.u32 %v1157, 16
      %v1329 = vshll.u32 %v1157, 16
      %v1331 = vrot.slane %v1329, 1
      %v1332 = vor.u32 %v1327, %v1331
      %v1334 = vshll.u32 %v1221, 16
      %v1336 = vrot.slane %v1334, 1
      %v1337 = vsel %vm1229, %v1332, %v1336
      %v1339 = vshrl.u32 %v1158, 16
      %v1341 = vshll.u32 %v1158, 16
      %v1343 = vrot.slane %v1341, 1
      %v1344 = vor.u32 %v1339, %v1343
      %v1346 = vshll.u32 %v1222, 16
      %v1348 = vrot.slane %v1346, 1
      %v1349 = vsel %vm1229, %v1344, %v1348
      %v1351 = vshrl.u32 %v1159, 16
      %v1353 = vshll.u32 %v1159, 16
      %v1355 = vrot.slane %v1353, 1
      %v1356 = vor.u32 %v1351, %v1355
      %v1358 = vshll.u32 %v1223, 16
      %v1360 = vrot.slane %v1358, 1
      %v1361 = vsel %vm1229, %v1356, %v1360
      %v1363 = vshrl.u32 %v1160, 16
      %v1365 = vshll.u32 %v1160, 16
      %v1367 = vrot.slane %v1365, 1
      %v1368 = vor.u32 %v1363, %v1367
      %v1370 = vshll.u32 %v1224, 16
      %v1372 = vrot.slane %v1370, 1
      %v1373 = vsel %vm1229, %v1368, %v1372
      %v1375 = vshrl.u32 %v1161, 16
      %v1377 = vshll.u32 %v1161, 16
      %v1379 = vrot.slane %v1377, 1
      %v1380 = vor.u32 %v1375, %v1379
      %v1382 = vshll.u32 %v1225, 16
      %v1384 = vrot.slane %v1382, 1
      %v1385 = vsel %vm1229, %v1380, %v1384
      %v1387 = vshrl.u32 %v1162, 16
      %v1389 = vshll.u32 %v1162, 16
      %v1391 = vrot.slane %v1389, 1
      %v1392 = vor.u32 %v1387, %v1391
      %v1394 = vshll.u32 %v1226, 16
      %v1396 = vrot.slane %v1394, 1
      %v1397 = vsel %vm1229, %v1392, %v1396
      %v1399 = vshrl.u32 %v1163, 16
      %v1401 = vshll.u32 %v1163, 16
      %v1403 = vrot.slane %v1401, 1
      %v1404 = vor.u32 %v1399, %v1403
      %v1406 = vshll.u32 %v1227, 16
      %v1408 = vrot.slane %v1406, 1
      %v1409 = vsel %vm1229, %v1404, %v1408
      %v1411 = vshrl.u32 %v1164, 16
      %v1413 = vshll.u32 %v1164, 16
      %v1415 = vrot.slane %v1413, 1
      %v1416 = vor.u32 %v1411, %v1415
      %v1418 = vshll.u32 %v1228, 16
      %v1420 = vrot.slane %v1418, 1
      %v1421 = vsel %vm1229, %v1416, %v1420
      %v1454 = vunpack.c.l.b16 %v1069
      %v1455 = vunpack.c.l.b16 %v1070
      %v1456 = vunpack.c.l.b16 %v1071
      %v1457 = vunpack.c.l.b16 %v1072
      %v1458 = vunpack.c.l.b16 %v1073
      %v1459 = vunpack.c.l.b16 %v1074
      %v1460 = vunpack.c.l.b16 %v1075
      %v1461 = vunpack.c.l.b16 %v1076
      %v1462 = vunpack.c.l.b16 %v1077
      %v1463 = vunpack.c.l.b16 %v1078
      %v1464 = vunpack.c.l.b16 %v1079
      %v1465 = vunpack.c.l.b16 %v1080
      %v1466 = vunpack.c.l.b16 %v1081
      %v1467 = vunpack.c.l.b16 %v1082
      %v1468 = vunpack.c.l.b16 %v1083
      %v1469 = vunpack.c.l.b16 %v1084
      %v1470 = vpack.c.b16 %v1118, %v1454
      %v1471 = vpack.c.b16 %v1120, %v1455
      %v1472 = vpack.c.b16 %v1122, %v1456
      %v1473 = vpack.c.b16 %v1124, %v1457
      %v1474 = vpack.c.b16 %v1126, %v1458
      %v1475 = vpack.c.b16 %v1128, %v1459
      %v1476 = vpack.c.b16 %v1130, %v1460
      %v1477 = vpack.c.b16 %v1132, %v1461
      %v1478 = vpack.c.b16 %v1134, %v1462
      %v1479 = vpack.c.b16 %v1136, %v1463
      %v1480 = vpack.c.b16 %v1138, %v1464
      %v1481 = vpack.c.b16 %v1140, %v1465
      %v1482 = vpack.c.b16 %v1142, %v1466
      %v1483 = vpack.c.b16 %v1144, %v1467
      %v1484 = vpack.c.b16 %v1146, %v1468
      %v1485 = vpack.c.b16 %v1148, %v1469
      %vm1486 = vcmask 1046528
      %v1487 = vrot.slane %v1470, 1
      %v1488 = vrot.slane %v1213, 1
      %v1489 = vsel %vm1486, %v1487, %v1488
      %v1490 = vrot.slane %v1471, 1
      %v1491 = vrot.slane %v1214, 1
      %v1492 = vsel %vm1486, %v1490, %v1491
      %v1493 = vrot.slane %v1472, 1
      %v1494 = vrot.slane %v1215, 1
      %v1495 = vsel %vm1486, %v1493, %v1494
      %v1496 = vrot.slane %v1473, 1
      %v1497 = vrot.slane %v1216, 1
      %v1498 = vsel %vm1486, %v1496, %v1497
      %v1499 = vrot.slane %v1474, 1
      %v1500 = vrot.slane %v1217, 1
      %v1501 = vsel %vm1486, %v1499, %v1500
      %v1502 = vrot.slane %v1475, 1
      %v1503 = vrot.slane %v1218, 1
      %v1504 = vsel %vm1486, %v1502, %v1503
      %v1505 = vrot.slane %v1476, 1
      %v1506 = vrot.slane %v1219, 1
      %v1507 = vsel %vm1486, %v1505, %v1506
      %v1508 = vrot.slane %v1477, 1
      %v1509 = vrot.slane %v1220, 1
      %v1510 = vsel %vm1486, %v1508, %v1509
      %v1511 = vrot.slane %v1478, 1
      %v1512 = vrot.slane %v1221, 1
      %v1513 = vsel %vm1486, %v1511, %v1512
      %v1514 = vrot.slane %v1479, 1
      %v1515 = vrot.slane %v1222, 1
      %v1516 = vsel %vm1486, %v1514, %v1515
      %v1517 = vrot.slane %v1480, 1
      %v1518 = vrot.slane %v1223, 1
      %v1519 = vsel %vm1486, %v1517, %v1518
      %v1520 = vrot.slane %v1481, 1
      %v1521 = vrot.slane %v1224, 1
      %v1522 = vsel %vm1486, %v1520, %v1521
      %v1523 = vrot.slane %v1482, 1
      %v1524 = vrot.slane %v1225, 1
      %v1525 = vsel %vm1486, %v1523, %v1524
      %v1526 = vrot.slane %v1483, 1
      %v1527 = vrot.slane %v1226, 1
      %v1528 = vsel %vm1486, %v1526, %v1527
      %v1529 = vrot.slane %v1484, 1
      %v1530 = vrot.slane %v1227, 1
      %v1531 = vsel %vm1486, %v1529, %v1530
      %v1532 = vrot.slane %v1485, 1
      %v1533 = vrot.slane %v1228, 1
      %v1534 = vsel %vm1486, %v1532, %v1533
      %v1551 = vld [vmem:[%s2] sm:$0xf]
      %v1552 = vld [vmem:[%s2 + $0x4] sm:$0xf]
      %v1553 = vld [vmem:[%s2 + $0x8] sm:$0xf]
      %v1554 = vld [vmem:[%s2 + $0xc] sm:$0xf]
      %v1555 = vld [vmem:[%s2 + $0x10] sm:$0xf]
      %v1556 = vld [vmem:[%s2 + $0x14] sm:$0xf]
      %v1557 = vld [vmem:[%s2 + $0x18] sm:$0xf]
      %v1558 = vld [vmem:[%s2 + $0x1c] sm:$0xf]
      %v1559 = vld [vmem:[%s2 + $0x20] sm:$0xf]
      %v1560 = vld [vmem:[%s2 + $0x24] sm:$0xf]
      %v1561 = vld [vmem:[%s2 + $0x28] sm:$0xf]
      %v1562 = vld [vmem:[%s2 + $0x2c] sm:$0xf]
      %v1563 = vld [vmem:[%s2 + $0x30] sm:$0xf]
      %v1564 = vld [vmem:[%s2 + $0x34] sm:$0xf]
      %v1565 = vld [vmem:[%s2 + $0x38] sm:$0xf]
      %v1566 = vld [vmem:[%s2 + $0x3c] sm:$0xf]
      %v1567 = vld [vmem:[%s2 + $0x40] sm:$0xf]
      %v1568 = vld [vmem:[%s2 + $0x44] sm:$0xf]
      %v1569 = vld [vmem:[%s2 + $0x48] sm:$0xf]
      %v1570 = vld [vmem:[%s2 + $0x4c] sm:$0xf]
      %v1571 = vld [vmem:[%s2 + $0x50] sm:$0xf]
      %v1572 = vld [vmem:[%s2 + $0x54] sm:$0xf]
      %v1573 = vld [vmem:[%s2 + $0x58] sm:$0xf]
      %v1574 = vld [vmem:[%s2 + $0x5c] sm:$0xf]
      %v1575 = vld [vmem:[%s2 + $0x60] sm:$0xf]
      %v1576 = vld [vmem:[%s2 + $0x64] sm:$0xf]
      %v1577 = vld [vmem:[%s2 + $0x68] sm:$0xf]
      %v1578 = vld [vmem:[%s2 + $0x6c] sm:$0xf]
      %v1579 = vld [vmem:[%s2 + $0x70] sm:$0xf]
      %v1580 = vld [vmem:[%s2 + $0x74] sm:$0xf]
      %v1581 = vld [vmem:[%s2 + $0x78] sm:$0xf]
      %v1582 = vld [vmem:[%s2 + $0x7c] sm:$0xf]
      %v1583 = vld [vmem:[%s2 + $0x80] sm:$0xf]
      %v1584 = vld [vmem:[%s2 + $0x84] sm:$0xf]
      %v1585 = vld [vmem:[%s2 + $0x88] sm:$0xf]
      %v1586 = vld [vmem:[%s2 + $0x8c] sm:$0xf]
      %v1587 = vld [vmem:[%s2 + $0x90] sm:$0xf]
      %v1588 = vld [vmem:[%s2 + $0x94] sm:$0xf]
      %v1589 = vld [vmem:[%s2 + $0x98] sm:$0xf]
      %v1590 = vld [vmem:[%s2 + $0x9c] sm:$0xf]
      %v1591 = vld [vmem:[%s2 + $0xa0] sm:$0xf]
      %v1592 = vld [vmem:[%s2 + $0xa4] sm:$0xf]
      %v1593 = vld [vmem:[%s2 + $0xa8] sm:$0xf]
      %v1594 = vld [vmem:[%s2 + $0xac] sm:$0xf]
      %v1595 = vld [vmem:[%s2 + $0xb0] sm:$0xf]
      %v1596 = vld [vmem:[%s2 + $0xb4] sm:$0xf]
      %v1597 = vld [vmem:[%s2 + $0xb8] sm:$0xf]
      %v1598 = vld [vmem:[%s2 + $0xbc] sm:$0xf]
      %v1599 = vld [vmem:[%s799] sm:$0xf]
      %v1600 = vld [vmem:[%s799 + $0x4] sm:$0xf]
      %v1601 = vld [vmem:[%s799 + $0xc] sm:$0xf]
      %v1602 = vld [vmem:[%s799 + $0x10] sm:$0xf]
      %v1603 = vld [vmem:[%s799 + $0x18] sm:$0xf]
      %v1604 = vld [vmem:[%s799 + $0x1c] sm:$0xf]
      %v1605 = vld [vmem:[%s799 + $0x24] sm:$0xf]
      %v1606 = vld [vmem:[%s799 + $0x28] sm:$0xf]
      %v1607 = vld [vmem:[%s799 + $0x30] sm:$0xf]
      %v1608 = vld [vmem:[%s799 + $0x34] sm:$0xf]
      %v1609 = vld [vmem:[%s799 + $0x3c] sm:$0xf]
      %v1610 = vld [vmem:[%s799 + $0x40] sm:$0xf]
      %v1611 = vld [vmem:[%s799 + $0x48] sm:$0xf]
      %v1612 = vld [vmem:[%s799 + $0x4c] sm:$0xf]
      %v1613 = vld [vmem:[%s799 + $0x54] sm:$0xf]
      %v1614 = vld [vmem:[%s799 + $0x58] sm:$0xf]
      %v1615 = vld [vmem:[%s799 + $0x60] sm:$0xf]
      %v1616 = vld [vmem:[%s799 + $0x64] sm:$0xf]
      %v1617 = vld [vmem:[%s799 + $0x6c] sm:$0xf]
      %v1618 = vld [vmem:[%s799 + $0x70] sm:$0xf]
      %v1619 = vld [vmem:[%s799 + $0x78] sm:$0xf]
      %v1620 = vld [vmem:[%s799 + $0x7c] sm:$0xf]
      %v1621 = vld [vmem:[%s799 + $0x84] sm:$0xf]
      %v1622 = vld [vmem:[%s799 + $0x88] sm:$0xf]
      %v1623 = vld [vmem:[%s799 + $0x90] sm:$0xf]
      %v1624 = vld [vmem:[%s799 + $0x94] sm:$0xf]
      %v1625 = vld [vmem:[%s799 + $0x9c] sm:$0xf]
      %v1626 = vld [vmem:[%s799 + $0xa0] sm:$0xf]
      %v1627 = vld [vmem:[%s799 + $0xa8] sm:$0xf]
      %v1628 = vld [vmem:[%s799 + $0xac] sm:$0xf]
      %v1629 = vld [vmem:[%s799 + $0xb4] sm:$0xf]
      %v1630 = vld [vmem:[%s799 + $0xb8] sm:$0xf]
      %v1631 = vld [vmem:[%s799 + $0x8] sm:$0x1]
      %v1632 = vld [vmem:[%s799 + $0x14] sm:$0x1]
      %v1633 = vld [vmem:[%s799 + $0x20] sm:$0x1]
      %v1634 = vld [vmem:[%s799 + $0x2c] sm:$0x1]
      %v1635 = vld [vmem:[%s799 + $0x38] sm:$0x1]
      %v1636 = vld [vmem:[%s799 + $0x44] sm:$0x1]
      %v1637 = vld [vmem:[%s799 + $0x50] sm:$0x1]
      %v1638 = vld [vmem:[%s799 + $0x5c] sm:$0x1]
      %v1639 = vld [vmem:[%s799 + $0x68] sm:$0x1]
      %v1640 = vld [vmem:[%s799 + $0x74] sm:$0x1]
      %v1641 = vld [vmem:[%s799 + $0x80] sm:$0x1]
      %v1642 = vld [vmem:[%s799 + $0x8c] sm:$0x1]
      %v1643 = vld [vmem:[%s799 + $0x98] sm:$0x1]
      %v1644 = vld [vmem:[%s799 + $0xa4] sm:$0x1]
      %v1645 = vld [vmem:[%s799 + $0xb0] sm:$0x1]
      %v1646 = vld [vmem:[%s799 + $0xbc] sm:$0x1]
      %v1647 = vld [vmem:[%s799] sm:$0xe]
      %v1648 = vld [vmem:[%s799 + $0xc] sm:$0xe]
      %v1649 = vld [vmem:[%s799 + $0x18] sm:$0xe]
      %v1650 = vld [vmem:[%s799 + $0x24] sm:$0xe]
      %v1651 = vld [vmem:[%s799 + $0x30] sm:$0xe]
      %v1652 = vld [vmem:[%s799 + $0x3c] sm:$0xe]
      %v1653 = vld [vmem:[%s799 + $0x48] sm:$0xe]
      %v1654 = vld [vmem:[%s799 + $0x54] sm:$0xe]
      %v1655 = vld [vmem:[%s799 + $0x60] sm:$0xe]
      %v1656 = vld [vmem:[%s799 + $0x6c] sm:$0xe]
      %v1657 = vld [vmem:[%s799 + $0x78] sm:$0xe]
      %v1658 = vld [vmem:[%s799 + $0x84] sm:$0xe]
      %v1659 = vld [vmem:[%s799 + $0x90] sm:$0xe]
      %v1660 = vld [vmem:[%s799 + $0x9c] sm:$0xe]
      %v1661 = vld [vmem:[%s799 + $0xa8] sm:$0xe]
      %v1662 = vld [vmem:[%s799 + $0xb4] sm:$0xe]
      %v1695 = vunpack.c.l.b16 %v1599
      %v1696 = vunpack.c.l.b16 %v1600
      %v1697 = vunpack.c.l.b16 %v1601
      %v1698 = vunpack.c.l.b16 %v1602
      %v1699 = vunpack.c.l.b16 %v1603
      %v1700 = vunpack.c.l.b16 %v1604
      %v1701 = vunpack.c.l.b16 %v1605
      %v1702 = vunpack.c.l.b16 %v1606
      %v1703 = vunpack.c.l.b16 %v1607
      %v1704 = vunpack.c.l.b16 %v1608
      %v1705 = vunpack.c.l.b16 %v1609
      %v1706 = vunpack.c.l.b16 %v1610
      %v1707 = vunpack.c.l.b16 %v1611
      %v1708 = vunpack.c.l.b16 %v1612
      %v1709 = vunpack.c.l.b16 %v1613
      %v1710 = vunpack.c.l.b16 %v1614
      %v1711 = vunpack.c.l.b16 %v1615
      %v1712 = vunpack.c.l.b16 %v1616
      %v1713 = vunpack.c.l.b16 %v1617
      %v1714 = vunpack.c.l.b16 %v1618
      %v1715 = vunpack.c.l.b16 %v1619
      %v1716 = vunpack.c.l.b16 %v1620
      %v1717 = vunpack.c.l.b16 %v1621
      %v1718 = vunpack.c.l.b16 %v1622
      %v1719 = vunpack.c.l.b16 %v1623
      %v1720 = vunpack.c.l.b16 %v1624
      %v1721 = vunpack.c.l.b16 %v1625
      %v1722 = vunpack.c.l.b16 %v1626
      %v1723 = vunpack.c.l.b16 %v1627
      %v1724 = vunpack.c.l.b16 %v1628
      %v1725 = vunpack.c.l.b16 %v1629
      %v1726 = vunpack.c.l.b16 %v1630
      %v1727 = vpack.c.b16 %v1696, %v1695
      %v1728 = vpack.c.b16 %v1698, %v1697
      %v1729 = vpack.c.b16 %v1700, %v1699
      %v1730 = vpack.c.b16 %v1702, %v1701
      %v1731 = vpack.c.b16 %v1704, %v1703
      %v1732 = vpack.c.b16 %v1706, %v1705
      %v1733 = vpack.c.b16 %v1708, %v1707
      %v1734 = vpack.c.b16 %v1710, %v1709
      %v1735 = vpack.c.b16 %v1712, %v1711
      %v1736 = vpack.c.b16 %v1714, %v1713
      %v1737 = vpack.c.b16 %v1716, %v1715
      %v1738 = vpack.c.b16 %v1718, %v1717
      %v1739 = vpack.c.b16 %v1720, %v1719
      %v1740 = vpack.c.b16 %v1722, %v1721
      %v1741 = vpack.c.b16 %v1724, %v1723
      %v1742 = vpack.c.b16 %v1726, %v1725
      %v1775 = vunpack.c.l.b16 %v1631
      %v1776 = vunpack.c.l.b16 %v1632
      %v1777 = vunpack.c.l.b16 %v1633
      %v1778 = vunpack.c.l.b16 %v1634
      %v1779 = vunpack.c.l.b16 %v1635
      %v1780 = vunpack.c.l.b16 %v1636
      %v1781 = vunpack.c.l.b16 %v1637
      %v1782 = vunpack.c.l.b16 %v1638
      %v1783 = vunpack.c.l.b16 %v1639
      %v1784 = vunpack.c.l.b16 %v1640
      %v1785 = vunpack.c.l.b16 %v1641
      %v1786 = vunpack.c.l.b16 %v1642
      %v1787 = vunpack.c.l.b16 %v1643
      %v1788 = vunpack.c.l.b16 %v1644
      %v1789 = vunpack.c.l.b16 %v1645
      %v1790 = vunpack.c.l.b16 %v1646
      %v1791 = vpack.c.b16 %v1775, %v1775
      %v1792 = vpack.c.b16 %v1776, %v1776
      %v1793 = vpack.c.b16 %v1777, %v1777
      %v1794 = vpack.c.b16 %v1778, %v1778
      %v1795 = vpack.c.b16 %v1779, %v1779
      %v1796 = vpack.c.b16 %v1780, %v1780
      %v1797 = vpack.c.b16 %v1781, %v1781
      %v1798 = vpack.c.b16 %v1782, %v1782
      %v1799 = vpack.c.b16 %v1783, %v1783
      %v1800 = vpack.c.b16 %v1784, %v1784
      %v1801 = vpack.c.b16 %v1785, %v1785
      %v1802 = vpack.c.b16 %v1786, %v1786
      %v1803 = vpack.c.b16 %v1787, %v1787
      %v1804 = vpack.c.b16 %v1788, %v1788
      %v1805 = vpack.c.b16 %v1789, %v1789
      %v1806 = vpack.c.b16 %v1790, %v1790
      %v1808 = vshrl.u32 %v1727, 16
      %v1810 = vshll.u32 %v1727, 16
      %v1812 = vrot.slane %v1810, 1
      %v1813 = vor.u32 %v1808, %v1812
      %v1815 = vshll.u32 %v1791, 16
      %v1817 = vrot.slane %v1815, 1
      %v1818 = vsel %vm1229, %v1813, %v1817
      %v1820 = vshrl.u32 %v1728, 16
      %v1822 = vshll.u32 %v1728, 16
      %v1824 = vrot.slane %v1822, 1
      %v1825 = vor.u32 %v1820, %v1824
      %v1827 = vshll.u32 %v1792, 16
      %v1829 = vrot.slane %v1827, 1
      %v1830 = vsel %vm1229, %v1825, %v1829
      %v1832 = vshrl.u32 %v1729, 16
      %v1834 = vshll.u32 %v1729, 16
      %v1836 = vrot.slane %v1834, 1
      %v1837 = vor.u32 %v1832, %v1836
      %v1839 = vshll.u32 %v1793, 16
      %v1841 = vrot.slane %v1839, 1
      %v1842 = vsel %vm1229, %v1837, %v1841
      %v1844 = vshrl.u32 %v1730, 16
      %v1846 = vshll.u32 %v1730, 16
      %v1848 = vrot.slane %v1846, 1
      %v1849 = vor.u32 %v1844, %v1848
      %v1851 = vshll.u32 %v1794, 16
      %v1853 = vrot.slane %v1851, 1
      %v1854 = vsel %vm1229, %v1849, %v1853
      %v1856 = vshrl.u32 %v1731, 16
      %v1858 = vshll.u32 %v1731, 16
      %v1860 = vrot.slane %v1858, 1
      %v1861 = vor.u32 %v1856, %v1860
      %v1863 = vshll.u32 %v1795, 16
      %v1865 = vrot.slane %v1863, 1
      %v1866 = vsel %vm1229, %v1861, %v1865
      %v1868 = vshrl.u32 %v1732, 16
      %v1870 = vshll.u32 %v1732, 16
      %v1872 = vrot.slane %v1870, 1
      %v1873 = vor.u32 %v1868, %v1872
      %v1875 = vshll.u32 %v1796, 16
      %v1877 = vrot.slane %v1875, 1
      %v1878 = vsel %vm1229, %v1873, %v1877
      %v1880 = vshrl.u32 %v1733, 16
      %v1882 = vshll.u32 %v1733, 16
      %v1884 = vrot.slane %v1882, 1
      %v1885 = vor.u32 %v1880, %v1884
      %v1887 = vshll.u32 %v1797, 16
      %v1889 = vrot.slane %v1887, 1
      %v1890 = vsel %vm1229, %v1885, %v1889
      %v1892 = vshrl.u32 %v1734, 16
      %v1894 = vshll.u32 %v1734, 16
      %v1896 = vrot.slane %v1894, 1
      %v1897 = vor.u32 %v1892, %v1896
      %v1899 = vshll.u32 %v1798, 16
      %v1901 = vrot.slane %v1899, 1
      %v1902 = vsel %vm1229, %v1897, %v1901
      %v1904 = vshrl.u32 %v1735, 16
      %v1906 = vshll.u32 %v1735, 16
      %v1908 = vrot.slane %v1906, 1
      %v1909 = vor.u32 %v1904, %v1908
      %v1911 = vshll.u32 %v1799, 16
      %v1913 = vrot.slane %v1911, 1
      %v1914 = vsel %vm1229, %v1909, %v1913
      %v1916 = vshrl.u32 %v1736, 16
      %v1918 = vshll.u32 %v1736, 16
      %v1920 = vrot.slane %v1918, 1
      %v1921 = vor.u32 %v1916, %v1920
      %v1923 = vshll.u32 %v1800, 16
      %v1925 = vrot.slane %v1923, 1
      %v1926 = vsel %vm1229, %v1921, %v1925
      %v1928 = vshrl.u32 %v1737, 16
      %v1930 = vshll.u32 %v1737, 16
      %v1932 = vrot.slane %v1930, 1
      %v1933 = vor.u32 %v1928, %v1932
      %v1935 = vshll.u32 %v1801, 16
      %v1937 = vrot.slane %v1935, 1
      %v1938 = vsel %vm1229, %v1933, %v1937
      %v1940 = vshrl.u32 %v1738, 16
      %v1942 = vshll.u32 %v1738, 16
      %v1944 = vrot.slane %v1942, 1
      %v1945 = vor.u32 %v1940, %v1944
      %v1947 = vshll.u32 %v1802, 16
      %v1949 = vrot.slane %v1947, 1
      %v1950 = vsel %vm1229, %v1945, %v1949
      %v1952 = vshrl.u32 %v1739, 16
      %v1954 = vshll.u32 %v1739, 16
      %v1956 = vrot.slane %v1954, 1
      %v1957 = vor.u32 %v1952, %v1956
      %v1959 = vshll.u32 %v1803, 16
      %v1961 = vrot.slane %v1959, 1
      %v1962 = vsel %vm1229, %v1957, %v1961
      %v1964 = vshrl.u32 %v1740, 16
      %v1966 = vshll.u32 %v1740, 16
      %v1968 = vrot.slane %v1966, 1
      %v1969 = vor.u32 %v1964, %v1968
      %v1971 = vshll.u32 %v1804, 16
      %v1973 = vrot.slane %v1971, 1
      %v1974 = vsel %vm1229, %v1969, %v1973
      %v1976 = vshrl.u32 %v1741, 16
      %v1978 = vshll.u32 %v1741, 16
      %v1980 = vrot.slane %v1978, 1
      %v1981 = vor.u32 %v1976, %v1980
      %v1983 = vshll.u32 %v1805, 16
      %v1985 = vrot.slane %v1983, 1
      %v1986 = vsel %vm1229, %v1981, %v1985
      %v1988 = vshrl.u32 %v1742, 16
      %v1990 = vshll.u32 %v1742, 16
      %v1992 = vrot.slane %v1990, 1
      %v1993 = vor.u32 %v1988, %v1992
      %v1995 = vshll.u32 %v1806, 16
      %v1997 = vrot.slane %v1995, 1
      %v1998 = vsel %vm1229, %v1993, %v1997
      %v2031 = vunpack.c.l.b16 %v1647
      %v2032 = vunpack.c.l.b16 %v1648
      %v2033 = vunpack.c.l.b16 %v1649
      %v2034 = vunpack.c.l.b16 %v1650
      %v2035 = vunpack.c.l.b16 %v1651
      %v2036 = vunpack.c.l.b16 %v1652
      %v2037 = vunpack.c.l.b16 %v1653
      %v2038 = vunpack.c.l.b16 %v1654
      %v2039 = vunpack.c.l.b16 %v1655
      %v2040 = vunpack.c.l.b16 %v1656
      %v2041 = vunpack.c.l.b16 %v1657
      %v2042 = vunpack.c.l.b16 %v1658
      %v2043 = vunpack.c.l.b16 %v1659
      %v2044 = vunpack.c.l.b16 %v1660
      %v2045 = vunpack.c.l.b16 %v1661
      %v2046 = vunpack.c.l.b16 %v1662
      %v2047 = vpack.c.b16 %v1696, %v2031
      %v2048 = vpack.c.b16 %v1698, %v2032
      %v2049 = vpack.c.b16 %v1700, %v2033
      %v2050 = vpack.c.b16 %v1702, %v2034
      %v2051 = vpack.c.b16 %v1704, %v2035
      %v2052 = vpack.c.b16 %v1706, %v2036
      %v2053 = vpack.c.b16 %v1708, %v2037
      %v2054 = vpack.c.b16 %v1710, %v2038
      %v2055 = vpack.c.b16 %v1712, %v2039
      %v2056 = vpack.c.b16 %v1714, %v2040
      %v2057 = vpack.c.b16 %v1716, %v2041
      %v2058 = vpack.c.b16 %v1718, %v2042
      %v2059 = vpack.c.b16 %v1720, %v2043
      %v2060 = vpack.c.b16 %v1722, %v2044
      %v2061 = vpack.c.b16 %v1724, %v2045
      %v2062 = vpack.c.b16 %v1726, %v2046
      %v2063 = vrot.slane %v2047, 1
      %v2064 = vrot.slane %v1791, 1
      %v2065 = vsel %vm1486, %v2063, %v2064
      %v2066 = vrot.slane %v2048, 1
      %v2067 = vrot.slane %v1792, 1
      %v2068 = vsel %vm1486, %v2066, %v2067
      %v2069 = vrot.slane %v2049, 1
      %v2070 = vrot.slane %v1793, 1
      %v2071 = vsel %vm1486, %v2069, %v2070
      %v2072 = vrot.slane %v2050, 1
      %v2073 = vrot.slane %v1794, 1
      %v2074 = vsel %vm1486, %v2072, %v2073
      %v2075 = vrot.slane %v2051, 1
      %v2076 = vrot.slane %v1795, 1
      %v2077 = vsel %vm1486, %v2075, %v2076
      %v2078 = vrot.slane %v2052, 1
      %v2079 = vrot.slane %v1796, 1
      %v2080 = vsel %vm1486, %v2078, %v2079
      %v2081 = vrot.slane %v2053, 1
      %v2082 = vrot.slane %v1797, 1
      %v2083 = vsel %vm1486, %v2081, %v2082
      %v2084 = vrot.slane %v2054, 1
      %v2085 = vrot.slane %v1798, 1
      %v2086 = vsel %vm1486, %v2084, %v2085
      %v2087 = vrot.slane %v2055, 1
      %v2088 = vrot.slane %v1799, 1
      %v2089 = vsel %vm1486, %v2087, %v2088
      %v2090 = vrot.slane %v2056, 1
      %v2091 = vrot.slane %v1800, 1
      %v2092 = vsel %vm1486, %v2090, %v2091
      %v2093 = vrot.slane %v2057, 1
      %v2094 = vrot.slane %v1801, 1
      %v2095 = vsel %vm1486, %v2093, %v2094
      %v2096 = vrot.slane %v2058, 1
      %v2097 = vrot.slane %v1802, 1
      %v2098 = vsel %vm1486, %v2096, %v2097
      %v2099 = vrot.slane %v2059, 1
      %v2100 = vrot.slane %v1803, 1
      %v2101 = vsel %vm1486, %v2099, %v2100
      %v2102 = vrot.slane %v2060, 1
      %v2103 = vrot.slane %v1804, 1
      %v2104 = vsel %vm1486, %v2102, %v2103
      %v2105 = vrot.slane %v2061, 1
      %v2106 = vrot.slane %v1805, 1
      %v2107 = vsel %vm1486, %v2105, %v2106
      %v2108 = vrot.slane %v2062, 1
      %v2109 = vrot.slane %v1806, 1
      %v2110 = vsel %vm1486, %v2108, %v2109
      %s2127 = scalar_lea.vmem %s2, 192
      %v2128 = vld [vmem:[%s2127] sm:$0xf]
      %v2129 = vld [vmem:[%s2127 + $0x4] sm:$0xf]
      %v2130 = vld [vmem:[%s2127 + $0x8] sm:$0xf]
      %v2131 = vld [vmem:[%s2127 + $0xc] sm:$0xf]
      %v2132 = vld [vmem:[%s2127 + $0x10] sm:$0xf]
      %v2133 = vld [vmem:[%s2127 + $0x14] sm:$0xf]
      %v2134 = vld [vmem:[%s2127 + $0x18] sm:$0xf]
      %v2135 = vld [vmem:[%s2127 + $0x1c] sm:$0xf]
      %v2136 = vld [vmem:[%s2127 + $0x20] sm:$0xf]
      %v2137 = vld [vmem:[%s2127 + $0x24] sm:$0xf]
      %v2138 = vld [vmem:[%s2127 + $0x28] sm:$0xf]
      %v2139 = vld [vmem:[%s2127 + $0x2c] sm:$0xf]
      %v2140 = vld [vmem:[%s2127 + $0x30] sm:$0xf]
      %v2141 = vld [vmem:[%s2127 + $0x34] sm:$0xf]
      %v2142 = vld [vmem:[%s2127 + $0x38] sm:$0xf]
      %v2143 = vld [vmem:[%s2127 + $0x3c] sm:$0xf]
      %v2144 = vld [vmem:[%s2127 + $0x40] sm:$0xf]
      %v2145 = vld [vmem:[%s2127 + $0x44] sm:$0xf]
      %v2146 = vld [vmem:[%s2127 + $0x48] sm:$0xf]
      %v2147 = vld [vmem:[%s2127 + $0x4c] sm:$0xf]
      %v2148 = vld [vmem:[%s2127 + $0x50] sm:$0xf]
      %v2149 = vld [vmem:[%s2127 + $0x54] sm:$0xf]
      %v2150 = vld [vmem:[%s2127 + $0x58] sm:$0xf]
      %v2151 = vld [vmem:[%s2127 + $0x5c] sm:$0xf]
      %v2152 = vld [vmem:[%s2127 + $0x60] sm:$0xf]
      %v2153 = vld [vmem:[%s2127 + $0x64] sm:$0xf]
      %v2154 = vld [vmem:[%s2127 + $0x68] sm:$0xf]
      %v2155 = vld [vmem:[%s2127 + $0x6c] sm:$0xf]
      %v2156 = vld [vmem:[%s2127 + $0x70] sm:$0xf]
      %v2157 = vld [vmem:[%s2127 + $0x74] sm:$0xf]
      %v2158 = vld [vmem:[%s2127 + $0x78] sm:$0xf]
      %v2159 = vld [vmem:[%s2127 + $0x7c] sm:$0xf]
      %v2160 = vld [vmem:[%s2127 + $0x80] sm:$0xf]
      %v2161 = vld [vmem:[%s2127 + $0x84] sm:$0xf]
      %v2162 = vld [vmem:[%s2127 + $0x88] sm:$0xf]
      %v2163 = vld [vmem:[%s2127 + $0x8c] sm:$0xf]
      %v2164 = vld [vmem:[%s2127 + $0x90] sm:$0xf]
      %v2165 = vld [vmem:[%s2127 + $0x94] sm:$0xf]
      %v2166 = vld [vmem:[%s2127 + $0x98] sm:$0xf]
      %v2167 = vld [vmem:[%s2127 + $0x9c] sm:$0xf]
      %v2168 = vld [vmem:[%s2127 + $0xa0] sm:$0xf]
      %v2169 = vld [vmem:[%s2127 + $0xa4] sm:$0xf]
      %v2170 = vld [vmem:[%s2127 + $0xa8] sm:$0xf]
      %v2171 = vld [vmem:[%s2127 + $0xac] sm:$0xf]
      %v2172 = vld [vmem:[%s2127 + $0xb0] sm:$0xf]
      %v2173 = vld [vmem:[%s2127 + $0xb4] sm:$0xf]
      %v2174 = vld [vmem:[%s2127 + $0xb8] sm:$0xf]
      %v2175 = vld [vmem:[%s2127 + $0xbc] sm:$0xf]
      %v2224 = vunpack.c.l.b16 %v2128
      %v2225 = vunpack.c.l.b16 %v2129
      %v2226 = vunpack.c.l.b16 %v2130
      %v2227 = vunpack.c.l.b16 %v2131
      %v2228 = vunpack.c.l.b16 %v2132
      %v2229 = vunpack.c.l.b16 %v2133
      %v2230 = vunpack.c.l.b16 %v2134
      %v2231 = vunpack.c.l.b16 %v2135
      %v2232 = vunpack.c.l.b16 %v2136
      %v2233 = vunpack.c.l.b16 %v2137
      %v2234 = vunpack.c.l.b16 %v2138
      %v2235 = vunpack.c.l.b16 %v2139
      %v2236 = vunpack.c.l.b16 %v2140
      %v2237 = vunpack.c.l.b16 %v2141
      %v2238 = vunpack.c.l.b16 %v2142
      %v2239 = vunpack.c.l.b16 %v2143
      %v2240 = vunpack.c.l.b16 %v2144
      %v2241 = vunpack.c.l.b16 %v2145
      %v2242 = vunpack.c.l.b16 %v2146
      %v2243 = vunpack.c.l.b16 %v2147
      %v2244 = vunpack.c.l.b16 %v2148
      %v2245 = vunpack.c.l.b16 %v2149
      %v2246 = vunpack.c.l.b16 %v2150
      %v2247 = vunpack.c.l.b16 %v2151
      %v2248 = vunpack.c.l.b16 %v2152
      %v2249 = vunpack.c.l.b16 %v2153
      %v2250 = vunpack.c.l.b16 %v2154
      %v2251 = vunpack.c.l.b16 %v2155
      %v2252 = vunpack.c.l.b16 %v2156
      %v2253 = vunpack.c.l.b16 %v2157
      %v2254 = vunpack.c.l.b16 %v2158
      %v2255 = vunpack.c.l.b16 %v2159
      %v2256 = vunpack.c.l.b16 %v2160
      %v2257 = vunpack.c.l.b16 %v2161
      %v2258 = vunpack.c.l.b16 %v2162
      %v2259 = vunpack.c.l.b16 %v2163
      %v2260 = vunpack.c.l.b16 %v2164
      %v2261 = vunpack.c.l.b16 %v2165
      %v2262 = vunpack.c.l.b16 %v2166
      %v2263 = vunpack.c.l.b16 %v2167
      %v2264 = vunpack.c.l.b16 %v2168
      %v2265 = vunpack.c.l.b16 %v2169
      %v2266 = vunpack.c.l.b16 %v2170
      %v2267 = vunpack.c.l.b16 %v2171
      %v2268 = vunpack.c.l.b16 %v2172
      %v2269 = vunpack.c.l.b16 %v2173
      %v2270 = vunpack.c.l.b16 %v2174
      %v2271 = vunpack.c.l.b16 %v2175
      %v2272 = vpack.c.b16 %v2225, %v2224
      %v2273 = vpack.c.b16 %v2227, %v2226
      %v2274 = vpack.c.b16 %v2229, %v2228
      %v2275 = vpack.c.b16 %v2231, %v2230
      %v2276 = vpack.c.b16 %v2233, %v2232
      %v2277 = vpack.c.b16 %v2235, %v2234
      %v2278 = vpack.c.b16 %v2237, %v2236
      %v2279 = vpack.c.b16 %v2239, %v2238
      %v2280 = vpack.c.b16 %v2241, %v2240
      %v2281 = vpack.c.b16 %v2243, %v2242
      %v2282 = vpack.c.b16 %v2245, %v2244
      %v2283 = vpack.c.b16 %v2247, %v2246
      %v2284 = vpack.c.b16 %v2249, %v2248
      %v2285 = vpack.c.b16 %v2251, %v2250
      %v2286 = vpack.c.b16 %v2253, %v2252
      %v2287 = vpack.c.b16 %v2255, %v2254
      %v2288 = vpack.c.b16 %v2257, %v2256
      %v2289 = vpack.c.b16 %v2259, %v2258
      %v2290 = vpack.c.b16 %v2261, %v2260
      %v2291 = vpack.c.b16 %v2263, %v2262
      %v2292 = vpack.c.b16 %v2265, %v2264
      %v2293 = vpack.c.b16 %v2267, %v2266
      %v2294 = vpack.c.b16 %v2269, %v2268
      %v2295 = vpack.c.b16 %v2271, %v2270
      %2320 = vmatprep.subr.bf16.mxu0 0
      %2321 = vmatpush1.bf16.msra.mxu0 %v2272
      %2322 = vmatprep.subr.bf16.mxu0 0
      %2323 = vmatpush1.bf16.msra.mxu0 %v2273
      %2324 = vmatprep.subr.bf16.mxu0 0
      %2325 = vmatpush1.bf16.msra.mxu0 %v2274
      %2326 = vmatprep.subr.bf16.mxu0 0
      %2327 = vmatpush1.bf16.msra.mxu0 %v2275
      %2328 = vmatprep.subr.bf16.mxu0 0
      %2329 = vmatpush1.bf16.msra.mxu0 %v2276
      %2330 = vmatprep.subr.bf16.mxu0 0
      %2331 = vmatpush1.bf16.msra.mxu0 %v2277
      %2332 = vmatprep.subr.bf16.mxu0 0
      %2333 = vmatpush1.bf16.msra.mxu0 %v2278
      %2334 = vmatprep.subr.bf16.mxu0 0
      %2335 = vmatpush1.bf16.msra.mxu0 %v2279
      %2336 = vmatprep.subr.bf16.mxu0 0
      %2337 = vmatpush1.bf16.msra.mxu0 %v2280
      %2338 = vmatprep.subr.bf16.mxu0 0
      %2339 = vmatpush1.bf16.msra.mxu0 %v2281
      %2340 = vmatprep.subr.bf16.mxu0 0
      %2341 = vmatpush1.bf16.msra.mxu0 %v2282
      %2342 = vmatprep.subr.bf16.mxu0 0
      %2343 = vmatpush1.bf16.msra.mxu0 %v2283
      %2344 = vmatprep.subr.bf16.mxu0 0
      %2345 = vmatpush1.bf16.msra.mxu0 %v2284
      %2346 = vmatprep.subr.bf16.mxu0 0
      %2347 = vmatpush1.bf16.msra.mxu0 %v2285
      %2348 = vmatprep.subr.bf16.mxu0 0
      %2349 = vmatpush1.bf16.msra.mxu0 %v2286
      %2350 = vmatprep.subr.bf16.mxu0 0
      %2351 = vmatpush1.bf16.msra.mxu0 %v2287
      %2352 = vmatprep.mubr.bf16.mxu0 %v1818
      %2353 = vmatmul.mubr.bf16.gmra.mrb[0].mxu0 %v1727
      %v2354 = vpop.f32.mrb[0].mxu0
      %v2355 = vadd.f32 0.0, %v2354
      %v2356 = vpop.f32.mrb[0].mxu0
      %v2357 = vpop.f32.mrb[0].mxu0
      %v2358 = vadd.f32 0.0, %v2357
      %v2359 = vpop.f32.mrb[0].mxu0
      %2360 = vmatprep.mubr.bf16.mxu0 %v1830
      %2361 = vmatmul.mubr.bf16.gmra.mrb[0].mxu0 %v1728
      %v2362 = vpop.f32.mrb[0].mxu0
      %v2363 = vadd.f32 0.0, %v2362
      %v2364 = vpop.f32.mrb[0].mxu0
      %v2365 = vpop.f32.mrb[0].mxu0
      %v2366 = vadd.f32 0.0, %v2365
      %v2367 = vpop.f32.mrb[0].mxu0
      %2368 = vmatprep.mubr.bf16.mxu0 %v1842
      %2369 = vmatmul.mubr.bf16.gmra.mrb[0].mxu0 %v1729
      %v2370 = vpop.f32.mrb[0].mxu0
      %v2371 = vadd.f32 0.0, %v2370
      %v2372 = vpop.f32.mrb[0].mxu0
      %v2373 = vpop.f32.mrb[0].mxu0
      %v2374 = vadd.f32 0.0, %v2373
      %v2375 = vpop.f32.mrb[0].mxu0
      %2376 = vmatprep.mubr.bf16.mxu0 %v1854
      %2377 = vmatmul.mubr.bf16.gmra.mrb[0].mxu0 %v1730
      %v2378 = vpop.f32.mrb[0].mxu0
      %v2379 = vadd.f32 0.0, %v2378
      %v2380 = vpop.f32.mrb[0].mxu0
      %v2381 = vpop.f32.mrb[0].mxu0
      %v2382 = vadd.f32 0.0, %v2381
      %v2383 = vpop.f32.mrb[0].mxu0
      %2384 = vmatprep.mubr.bf16.mxu0 %v1866
      %2385 = vmatmul.mubr.bf16.gmra.mrb[0].mxu0 %v1731
      %v2386 = vpop.f32.mrb[0].mxu0
      %v2387 = vadd.f32 0.0, %v2386
      %v2388 = vpop.f32.mrb[0].mxu0
      %v2389 = vpop.f32.mrb[0].mxu0
      %v2390 = vadd.f32 0.0, %v2389
      %v2391 = vpop.f32.mrb[0].mxu0
      %2392 = vmatprep.mubr.bf16.mxu0 %v1878
      %2393 = vmatmul.mubr.bf16.gmra.mrb[0].mxu0 %v1732
      %v2394 = vpop.f32.mrb[0].mxu0
      %v2395 = vadd.f32 0.0, %v2394
      %v2396 = vpop.f32.mrb[0].mxu0
      %v2397 = vpop.f32.mrb[0].mxu0
      %v2398 = vadd.f32 0.0, %v2397
      %v2399 = vpop.f32.mrb[0].mxu0
      %2400 = vmatprep.mubr.bf16.mxu0 %v1890
      %2401 = vmatmul.mubr.bf16.gmra.mrb[0].mxu0 %v1733
      %v2402 = vpop.f32.mrb[0].mxu0
      %v2403 = vadd.f32 0.0, %v2402
      %v2404 = vpop.f32.mrb[0].mxu0
      %v2405 = vpop.f32.mrb[0].mxu0
      %v2406 = vadd.f32 0.0, %v2405
      %v2407 = vpop.f32.mrb[0].mxu0
      %2408 = vmatprep.mubr.bf16.mxu0 %v1902
      %2409 = vmatmul.mubr.bf16.gmra.mrb[0].mxu0 %v1734
      %v2410 = vpop.f32.mrb[0].mxu0
      %v2411 = vadd.f32 0.0, %v2410
      %v2412 = vpop.f32.mrb[0].mxu0
      %v2413 = vpop.f32.mrb[0].mxu0
      %v2414 = vadd.f32 0.0, %v2413
      %v2415 = vpop.f32.mrb[0].mxu0
      %2416 = vmatprep.mubr.bf16.mxu0 %v1914
      %2417 = vmatmul.mubr.bf16.gmra.mrb[0].mxu0 %v1735
      %v2418 = vpop.f32.mrb[0].mxu0
      %v2419 = vadd.f32 0.0, %v2418
      %v2420 = vpop.f32.mrb[0].mxu0
      %v2421 = vpop.f32.mrb[0].mxu0
      %v2422 = vadd.f32 0.0, %v2421
      %v2423 = vpop.f32.mrb[0].mxu0
      %2424 = vmatprep.mubr.bf16.mxu0 %v1926
      %2425 = vmatmul.mubr.bf16.gmra.mrb[0].mxu0 %v1736
      %v2426 = vpop.f32.mrb[0].mxu0
      %v2427 = vadd.f32 0.0, %v2426
      %v2428 = vpop.f32.mrb[0].mxu0
      %v2429 = vpop.f32.mrb[0].mxu0
      %v2430 = vadd.f32 0.0, %v2429
      %v2431 = vpop.f32.mrb[0].mxu0
      %2432 = vmatprep.mubr.bf16.mxu0 %v1938
      %2433 = vmatmul.mubr.bf16.gmra.mrb[0].mxu0 %v1737
      %v2434 = vpop.f32.mrb[0].mxu0
      %v2435 = vadd.f32 0.0, %v2434
      %v2436 = vpop.f32.mrb[0].mxu0
      %v2437 = vpop.f32.mrb[0].mxu0
      %v2438 = vadd.f32 0.0, %v2437
      %v2439 = vpop.f32.mrb[0].mxu0
      %2440 = vmatprep.mubr.bf16.mxu0 %v1950
      %2441 = vmatmul.mubr.bf16.gmra.mrb[0].mxu0 %v1738
      %v2442 = vpop.f32.mrb[0].mxu0
      %v2443 = vadd.f32 0.0, %v2442
      %v2444 = vpop.f32.mrb[0].mxu0
      %v2445 = vpop.f32.mrb[0].mxu0
      %v2446 = vadd.f32 0.0, %v2445
      %v2447 = vpop.f32.mrb[0].mxu0
      %2448 = vmatprep.mubr.bf16.mxu0 %v1962
      %2449 = vmatmul.mubr.bf16.gmra.mrb[0].mxu0 %v1739
      %v2450 = vpop.f32.mrb[0].mxu0
      %v2451 = vadd.f32 0.0, %v2450
      %v2452 = vpop.f32.mrb[0].mxu0
      %v2453 = vpop.f32.mrb[0].mxu0
      %v2454 = vadd.f32 0.0, %v2453
      %v2455 = vpop.f32.mrb[0].mxu0
      %2456 = vmatprep.mubr.bf16.mxu0 %v1974
      %2457 = vmatmul.mubr.bf16.gmra.mrb[0].mxu0 %v1740
      %v2458 = vpop.f32.mrb[0].mxu0
      %v2459 = vadd.f32 0.0, %v2458
      %v2460 = vpop.f32.mrb[0].mxu0
      %v2461 = vpop.f32.mrb[0].mxu0
      %v2462 = vadd.f32 0.0, %v2461
      %v2463 = vpop.f32.mrb[0].mxu0
      %2464 = vmatprep.mubr.bf16.mxu0 %v1986
      %2465 = vmatmul.mubr.bf16.gmra.mrb[0].mxu0 %v1741
      %v2466 = vpop.f32.mrb[0].mxu0
      %v2467 = vadd.f32 0.0, %v2466
      %v2468 = vpop.f32.mrb[0].mxu0
      %v2469 = vpop.f32.mrb[0].mxu0
      %v2470 = vadd.f32 0.0, %v2469
      %v2471 = vpop.f32.mrb[0].mxu0
      %2472 = vmatprep.mubr.bf16.mxu0 %v1998
      %2473 = vmatmul.mubr.bf16.gmra.mrb[0].mxu0 %v1742
      %v2474 = vpop.f32.mrb[0].mxu0
      %v2475 = vadd.f32 0.0, %v2474
      %v2476 = vpop.f32.mrb[0].mxu0
      %v2477 = vpop.f32.mrb[0].mxu0
      %v2478 = vadd.f32 0.0, %v2477
      %v2479 = vpop.f32.mrb[0].mxu0
      %2480 = vdwg.mxu0
      %2481 = vmatprep.subr.bf16.mxu0 0
      %2482 = vmatpush1.bf16.msra.mxu0 %v2288
      %2483 = vmatprep.subr.bf16.mxu0 0
      %2484 = vmatpush1.bf16.msra.mxu0 %v2289
      %2485 = vmatprep.subr.bf16.mxu0 0
      %2486 = vmatpush1.bf16.msra.mxu0 %v2290
      %2487 = vmatprep.subr.bf16.mxu0 0
      %2488 = vmatpush1.bf16.msra.mxu0 %v2291
      %2489 = vmatprep.subr.bf16.mxu0 0
      %2490 = vmatpush1.bf16.msra.mxu0 %v2292
      %2491 = vmatprep.subr.bf16.mxu0 0
      %2492 = vmatpush1.bf16.msra.mxu0 %v2293
      %2493 = vmatprep.subr.bf16.mxu0 0
      %2494 = vmatpush1.bf16.msra.mxu0 %v2294
      %2495 = vmatprep.subr.bf16.mxu0 0
      %2496 = vmatpush1.bf16.msra.mxu0 %v2295
      %2497 = vmatprep.subr.bf16.mxu0 0
      %2498 = vmatpush1.bf16.msra.mxu0 0
      %2499 = vmatprep.subr.bf16.mxu0 0
      %2500 = vmatpush1.bf16.msra.mxu0 0
      %2501 = vmatprep.subr.bf16.mxu0 0
      %2502 = vmatpush1.bf16.msra.mxu0 0
      %2503 = vmatprep.subr.bf16.mxu0 0
      %2504 = vmatpush1.bf16.msra.mxu0 0
      %2505 = vmatprep.subr.bf16.mxu0 0
      %2506 = vmatpush1.bf16.msra.mxu0 0
      %2507 = vmatprep.subr.bf16.mxu0 0
      %2508 = vmatpush1.bf16.msra.mxu0 0
      %2509 = vmatprep.subr.bf16.mxu0 0
      %2510 = vmatpush1.bf16.msra.mxu0 0
      %2511 = vmatprep.subr.bf16.mxu0 0
      %2512 = vmatpush1.bf16.msra.mxu0 0
      %2513 = vmatprep.mubr.bf16.mxu0 0
      %2514 = vmatmul.mubr.bf16.gmra.mrb[0].mxu0 %v2065
      %v2515 = vpop.f32.mrb[0].mxu0
      %v2516 = vadd.f32 %v2355, %v2515
      %v2517 = vpop.f32.mrb[0].mxu0
      %v2518 = vpop.f32.mrb[0].mxu0
      %v2519 = vadd.f32 %v2358, %v2518
      %v2520 = vpop.f32.mrb[0].mxu0
      %2521 = vmatprep.mubr.bf16.mxu0 0
      %2522 = vmatmul.mubr.bf16.gmra.mrb[0].mxu0 %v2068
      %v2523 = vpop.f32.mrb[0].mxu0
      %v2524 = vadd.f32 %v2363, %v2523
      %v2525 = vpop.f32.mrb[0].mxu0
      %v2526 = vpop.f32.mrb[0].mxu0
      %v2527 = vadd.f32 %v2366, %v2526
      %v2528 = vpop.f32.mrb[0].mxu0
      %2529 = vmatprep.mubr.bf16.mxu0 0
      %2530 = vmatmul.mubr.bf16.gmra.mrb[0].mxu0 %v2071
      %v2531 = vpop.f32.mrb[0].mxu0
      %v2532 = vadd.f32 %v2371, %v2531
      %v2533 = vpop.f32.mrb[0].mxu0
      %v2534 = vpop.f32.mrb[0].mxu0
      %v2535 = vadd.f32 %v2374, %v2534
      %v2536 = vpop.f32.mrb[0].mxu0
      %2537 = vmatprep.mubr.bf16.mxu0 0
      %2538 = vmatmul.mubr.bf16.gmra.mrb[0].mxu0 %v2074
      %v2539 = vpop.f32.mrb[0].mxu0
      %v2540 = vadd.f32 %v2379, %v2539
      %v2541 = vpop.f32.mrb[0].mxu0
      %v2542 = vpop.f32.mrb[0].mxu0
      %v2543 = vadd.f32 %v2382, %v2542
      %v2544 = vpop.f32.mrb[0].mxu0
      %2545 = vmatprep.mubr.bf16.mxu0 0
      %2546 = vmatmul.mubr.bf16.gmra.mrb[0].mxu0 %v2077
      %v2547 = vpop.f32.mrb[0].mxu0
      %v2548 = vadd.f32 %v2387, %v2547
      %v2549 = vpop.f32.mrb[0].mxu0
      %v2550 = vpop.f32.mrb[0].mxu0
      %v2551 = vadd.f32 %v2390, %v2550
      %v2552 = vpop.f32.mrb[0].mxu0
      %2553 = vmatprep.mubr.bf16.mxu0 0
      %2554 = vmatmul.mubr.bf16.gmra.mrb[0].mxu0 %v2080
      %v2555 = vpop.f32.mrb[0].mxu0
      %v2556 = vadd.f32 %v2395, %v2555
      %v2557 = vpop.f32.mrb[0].mxu0
      %v2558 = vpop.f32.mrb[0].mxu0
      %v2559 = vadd.f32 %v2398, %v2558
      %v2560 = vpop.f32.mrb[0].mxu0
      %2561 = vmatprep.mubr.bf16.mxu0 0
      %2562 = vmatmul.mubr.bf16.gmra.mrb[0].mxu0 %v2083
      %v2563 = vpop.f32.mrb[0].mxu0
      %v2564 = vadd.f32 %v2403, %v2563
      %v2565 = vpop.f32.mrb[0].mxu0
      %v2566 = vpop.f32.mrb[0].mxu0
      %v2567 = vadd.f32 %v2406, %v2566
      %v2568 = vpop.f32.mrb[0].mxu0
      %2569 = vmatprep.mubr.bf16.mxu0 0
      %2570 = vmatmul.mubr.bf16.gmra.mrb[0].mxu0 %v2086
      %v2571 = vpop.f32.mrb[0].mxu0
      %v2572 = vadd.f32 %v2411, %v2571
      %v2573 = vpop.f32.mrb[0].mxu0
      %v2574 = vpop.f32.mrb[0].mxu0
      %v2575 = vadd.f32 %v2414, %v2574
      %v2576 = vpop.f32.mrb[0].mxu0
      %2577 = vmatprep.mubr.bf16.mxu0 0
      %2578 = vmatmul.mubr.bf16.gmra.mrb[0].mxu0 %v2089
      %v2579 = vpop.f32.mrb[0].mxu0
      %v2580 = vadd.f32 %v2419, %v2579
      %v2581 = vpop.f32.mrb[0].mxu0
      %v2582 = vpop.f32.mrb[0].mxu0
      %v2583 = vadd.f32 %v2422, %v2582
      %v2584 = vpop.f32.mrb[0].mxu0
      %2585 = vmatprep.mubr.bf16.mxu0 0
      %2586 = vmatmul.mubr.bf16.gmra.mrb[0].mxu0 %v2092
      %v2587 = vpop.f32.mrb[0].mxu0
      %v2588 = vadd.f32 %v2427, %v2587
      %v2589 = vpop.f32.mrb[0].mxu0
      %v2590 = vpop.f32.mrb[0].mxu0
      %v2591 = vadd.f32 %v2430, %v2590
      %v2592 = vpop.f32.mrb[0].mxu0
      %2593 = vmatprep.mubr.bf16.mxu0 0
      %2594 = vmatmul.mubr.bf16.gmra.mrb[0].mxu0 %v2095
      %v2595 = vpop.f32.mrb[0].mxu0
      %v2596 = vadd.f32 %v2435, %v2595
      %v2597 = vpop.f32.mrb[0].mxu0
      %v2598 = vpop.f32.mrb[0].mxu0
      %v2599 = vadd.f32 %v2438, %v2598
      %v2600 = vpop.f32.mrb[0].mxu0
      %2601 = vmatprep.mubr.bf16.mxu0 0
      %2602 = vmatmul.mubr.bf16.gmra.mrb[0].mxu0 %v2098
      %v2603 = vpop.f32.mrb[0].mxu0
      %v2604 = vadd.f32 %v2443, %v2603
      %v2605 = vpop.f32.mrb[0].mxu0
      %v2606 = vpop.f32.mrb[0].mxu0
      %v2607 = vadd.f32 %v2446, %v2606
      %v2608 = vpop.f32.mrb[0].mxu0
      %2609 = vmatprep.mubr.bf16.mxu0 0
      %2610 = vmatmul.mubr.bf16.gmra.mrb[0].mxu0 %v2101
      %v2611 = vpop.f32.mrb[0].mxu0
      %v2612 = vadd.f32 %v2451, %v2611
      %v2613 = vpop.f32.mrb[0].mxu0
      %v2614 = vpop.f32.mrb[0].mxu0
      %v2615 = vadd.f32 %v2454, %v2614
      %v2616 = vpop.f32.mrb[0].mxu0
      %2617 = vmatprep.mubr.bf16.mxu0 0
      %2618 = vmatmul.mubr.bf16.gmra.mrb[0].mxu0 %v2104
      %v2619 = vpop.f32.mrb[0].mxu0
      %v2620 = vadd.f32 %v2459, %v2619
      %v2621 = vpop.f32.mrb[0].mxu0
      %v2622 = vpop.f32.mrb[0].mxu0
      %v2623 = vadd.f32 %v2462, %v2622
      %v2624 = vpop.f32.mrb[0].mxu0
      %2625 = vmatprep.mubr.bf16.mxu0 0
      %2626 = vmatmul.mubr.bf16.gmra.mrb[0].mxu0 %v2107
      %v2627 = vpop.f32.mrb[0].mxu0
      %v2628 = vadd.f32 %v2467, %v2627
      %v2629 = vpop.f32.mrb[0].mxu0
      %v2630 = vpop.f32.mrb[0].mxu0
      %v2631 = vadd.f32 %v2470, %v2630
      %v2632 = vpop.f32.mrb[0].mxu0
      %2633 = vmatprep.mubr.bf16.mxu0 0
      %2634 = vmatmul.mubr.bf16.gmra.mrb[0].mxu0 %v2110
      %v2635 = vpop.f32.mrb[0].mxu0
      %v2636 = vadd.f32 %v2475, %v2635
      %v2637 = vpop.f32.mrb[0].mxu0
      %v2638 = vpop.f32.mrb[0].mxu0
      %v2639 = vadd.f32 %v2478, %v2638
      %v2640 = vpop.f32.mrb[0].mxu0
      %2641 = vdwg.mxu0
      %v2690 = vunpack.c.l.b16 %v1551
      %v2691 = vunpack.c.l.b16 %v1552
      %v2692 = vunpack.c.l.b16 %v1553
      %v2693 = vunpack.c.l.b16 %v1554
      %v2694 = vunpack.c.l.b16 %v1555
      %v2695 = vunpack.c.l.b16 %v1556
      %v2696 = vunpack.c.l.b16 %v1557
      %v2697 = vunpack.c.l.b16 %v1558
      %v2698 = vunpack.c.l.b16 %v1559
      %v2699 = vunpack.c.l.b16 %v1560
      %v2700 = vunpack.c.l.b16 %v1561
      %v2701 = vunpack.c.l.b16 %v1562
      %v2702 = vunpack.c.l.b16 %v1563
      %v2703 = vunpack.c.l.b16 %v1564
      %v2704 = vunpack.c.l.b16 %v1565
      %v2705 = vunpack.c.l.b16 %v1566
      %v2706 = vunpack.c.l.b16 %v1567
      %v2707 = vunpack.c.l.b16 %v1568
      %v2708 = vunpack.c.l.b16 %v1569
      %v2709 = vunpack.c.l.b16 %v1570
      %v2710 = vunpack.c.l.b16 %v1571
      %v2711 = vunpack.c.l.b16 %v1572
      %v2712 = vunpack.c.l.b16 %v1573
      %v2713 = vunpack.c.l.b16 %v1574
      %v2714 = vunpack.c.l.b16 %v1575
      %v2715 = vunpack.c.l.b16 %v1576
      %v2716 = vunpack.c.l.b16 %v1577
      %v2717 = vunpack.c.l.b16 %v1578
      %v2718 = vunpack.c.l.b16 %v1579
      %v2719 = vunpack.c.l.b16 %v1580
      %v2720 = vunpack.c.l.b16 %v1581
      %v2721 = vunpack.c.l.b16 %v1582
      %v2722 = vunpack.c.l.b16 %v1583
      %v2723 = vunpack.c.l.b16 %v1584
      %v2724 = vunpack.c.l.b16 %v1585
      %v2725 = vunpack.c.l.b16 %v1586
      %v2726 = vunpack.c.l.b16 %v1587
      %v2727 = vunpack.c.l.b16 %v1588
      %v2728 = vunpack.c.l.b16 %v1589
      %v2729 = vunpack.c.l.b16 %v1590
      %v2730 = vunpack.c.l.b16 %v1591
      %v2731 = vunpack.c.l.b16 %v1592
      %v2732 = vunpack.c.l.b16 %v1593
      %v2733 = vunpack.c.l.b16 %v1594
      %v2734 = vunpack.c.l.b16 %v1595
      %v2735 = vunpack.c.l.b16 %v1596
      %v2736 = vunpack.c.l.b16 %v1597
      %v2737 = vunpack.c.l.b16 %v1598
      %v2738 = vpack.c.b16 %v2691, %v2690
      %v2739 = vpack.c.b16 %v2693, %v2692
      %v2740 = vpack.c.b16 %v2695, %v2694
      %v2741 = vpack.c.b16 %v2697, %v2696
      %v2742 = vpack.c.b16 %v2699, %v2698
      %v2743 = vpack.c.b16 %v2701, %v2700
      %v2744 = vpack.c.b16 %v2703, %v2702
      %v2745 = vpack.c.b16 %v2705, %v2704
      %v2746 = vpack.c.b16 %v2707, %v2706
      %v2747 = vpack.c.b16 %v2709, %v2708
      %v2748 = vpack.c.b16 %v2711, %v2710
      %v2749 = vpack.c.b16 %v2713, %v2712
      %v2750 = vpack.c.b16 %v2715, %v2714
      %v2751 = vpack.c.b16 %v2717, %v2716
      %v2752 = vpack.c.b16 %v2719, %v2718
      %v2753 = vpack.c.b16 %v2721, %v2720
      %v2754 = vpack.c.b16 %v2723, %v2722
      %v2755 = vpack.c.b16 %v2725, %v2724
      %v2756 = vpack.c.b16 %v2727, %v2726
      %v2757 = vpack.c.b16 %v2729, %v2728
      %v2758 = vpack.c.b16 %v2731, %v2730
      %v2759 = vpack.c.b16 %v2733, %v2732
      %v2760 = vpack.c.b16 %v2735, %v2734
      %v2761 = vpack.c.b16 %v2737, %v2736
      %2786 = vmatprep.subr.bf16.mxu0 0
      %2787 = vmatpush1.bf16.msra.mxu0 %v2738
      %2788 = vmatprep.subr.bf16.mxu0 0
      %2789 = vmatpush1.bf16.msra.mxu0 %v2739
      %2790 = vmatprep.subr.bf16.mxu0 0
      %2791 = vmatpush1.bf16.msra.mxu0 %v2740
      %2792 = vmatprep.subr.bf16.mxu0 0
      %2793 = vmatpush1.bf16.msra.mxu0 %v2741
      %2794 = vmatprep.subr.bf16.mxu0 0
      %2795 = vmatpush1.bf16.msra.mxu0 %v2742
      %2796 = vmatprep.subr.bf16.mxu0 0
      %2797 = vmatpush1.bf16.msra.mxu0 %v2743
      %2798 = vmatprep.subr.bf16.mxu0 0
      %2799 = vmatpush1.bf16.msra.mxu0 %v2744
      %2800 = vmatprep.subr.bf16.mxu0 0
      %2801 = vmatpush1.bf16.msra.mxu0 %v2745
      %2802 = vmatprep.subr.bf16.mxu0 0
      %2803 = vmatpush1.bf16.msra.mxu0 %v2746
      %2804 = vmatprep.subr.bf16.mxu0 0
      %2805 = vmatpush1.bf16.msra.mxu0 %v2747
      %2806 = vmatprep.subr.bf16.mxu0 0
      %2807 = vmatpush1.bf16.msra.mxu0 %v2748
      %2808 = vmatprep.subr.bf16.mxu0 0
      %2809 = vmatpush1.bf16.msra.mxu0 %v2749
      %2810 = vmatprep.subr.bf16.mxu0 0
      %2811 = vmatpush1.bf16.msra.mxu0 %v2750
      %2812 = vmatprep.subr.bf16.mxu0 0
      %2813 = vmatpush1.bf16.msra.mxu0 %v2751
      %2814 = vmatprep.subr.bf16.mxu0 0
      %2815 = vmatpush1.bf16.msra.mxu0 %v2752
      %2816 = vmatprep.subr.bf16.mxu0 0
      %2817 = vmatpush1.bf16.msra.mxu0 %v2753
      %2818 = vmatprep.mubr.bf16.mxu0 %v1241
      %2819 = vmatmul.mubr.bf16.gmra.mrb[0].mxu0 %v1149
      %v2820 = vpop.f32.mrb[0].mxu0
      %v2821 = vadd.f32 %v2516, %v2820
      %v2822 = vpop.f32.mrb[0].mxu0
      %v2823 = vpop.f32.mrb[0].mxu0
      %v2824 = vadd.f32 %v2519, %v2823
      %v2825 = vpop.f32.mrb[0].mxu0
      %2826 = vmatprep.mubr.bf16.mxu0 %v1253
      %2827 = vmatmul.mubr.bf16.gmra.mrb[0].mxu0 %v1150
      %v2828 = vpop.f32.mrb[0].mxu0
      %v2829 = vadd.f32 %v2524, %v2828
      %v2830 = vpop.f32.mrb[0].mxu0
      %v2831 = vpop.f32.mrb[0].mxu0
      %v2832 = vadd.f32 %v2527, %v2831
      %v2833 = vpop.f32.mrb[0].mxu0
      %2834 = vmatprep.mubr.bf16.mxu0 %v1265
      %2835 = vmatmul.mubr.bf16.gmra.mrb[0].mxu0 %v1151
      %v2836 = vpop.f32.mrb[0].mxu0
      %v2837 = vadd.f32 %v2532, %v2836
      %v2838 = vpop.f32.mrb[0].mxu0
      %v2839 = vpop.f32.mrb[0].mxu0
      %v2840 = vadd.f32 %v2535, %v2839
      %v2841 = vpop.f32.mrb[0].mxu0
      %2842 = vmatprep.mubr.bf16.mxu0 %v1277
      %2843 = vmatmul.mubr.bf16.gmra.mrb[0].mxu0 %v1152
      %v2844 = vpop.f32.mrb[0].mxu0
      %v2845 = vadd.f32 %v2540, %v2844
      %v2846 = vpop.f32.mrb[0].mxu0
      %v2847 = vpop.f32.mrb[0].mxu0
      %v2848 = vadd.f32 %v2543, %v2847
      %v2849 = vpop.f32.mrb[0].mxu0
      %2850 = vmatprep.mubr.bf16.mxu0 %v1289
      %2851 = vmatmul.mubr.bf16.gmra.mrb[0].mxu0 %v1153
      %v2852 = vpop.f32.mrb[0].mxu0
      %v2853 = vadd.f32 %v2548, %v2852
      %v2854 = vpop.f32.mrb[0].mxu0
      %v2855 = vpop.f32.mrb[0].mxu0
      %v2856 = vadd.f32 %v2551, %v2855
      %v2857 = vpop.f32.mrb[0].mxu0
      %2858 = vmatprep.mubr.bf16.mxu0 %v1301
      %2859 = vmatmul.mubr.bf16.gmra.mrb[0].mxu0 %v1154
      %v2860 = vpop.f32.mrb[0].mxu0
      %v2861 = vadd.f32 %v2556, %v2860
      %v2862 = vpop.f32.mrb[0].mxu0
      %v2863 = vpop.f32.mrb[0].mxu0
      %v2864 = vadd.f32 %v2559, %v2863
      %v2865 = vpop.f32.mrb[0].mxu0
      %2866 = vmatprep.mubr.bf16.mxu0 %v1313
      %2867 = vmatmul.mubr.bf16.gmra.mrb[0].mxu0 %v1155
      %v2868 = vpop.f32.mrb[0].mxu0
      %v2869 = vadd.f32 %v2564, %v2868
      %v2870 = vpop.f32.mrb[0].mxu0
      %v2871 = vpop.f32.mrb[0].mxu0
      %v2872 = vadd.f32 %v2567, %v2871
      %v2873 = vpop.f32.mrb[0].mxu0
      %2874 = vmatprep.mubr.bf16.mxu0 %v1325
      %2875 = vmatmul.mubr.bf16.gmra.mrb[0].mxu0 %v1156
      %v2876 = vpop.f32.mrb[0].mxu0
      %v2877 = vadd.f32 %v2572, %v2876
      %v2878 = vpop.f32.mrb[0].mxu0
      %v2879 = vpop.f32.mrb[0].mxu0
      %v2880 = vadd.f32 %v2575, %v2879
      %v2881 = vpop.f32.mrb[0].mxu0
      %2882 = vmatprep.mubr.bf16.mxu0 %v1337
      %2883 = vmatmul.mubr.bf16.gmra.mrb[0].mxu0 %v1157
      %v2884 = vpop.f32.mrb[0].mxu0
      %v2885 = vadd.f32 %v2580, %v2884
      %v2886 = vpop.f32.mrb[0].mxu0
      %v2887 = vpop.f32.mrb[0].mxu0
      %v2888 = vadd.f32 %v2583, %v2887
      %v2889 = vpop.f32.mrb[0].mxu0
      %2890 = vmatprep.mubr.bf16.mxu0 %v1349
      %2891 = vmatmul.mubr.bf16.gmra.mrb[0].mxu0 %v1158
      %v2892 = vpop.f32.mrb[0].mxu0
      %v2893 = vadd.f32 %v2588, %v2892
      %v2894 = vpop.f32.mrb[0].mxu0
      %v2895 = vpop.f32.mrb[0].mxu0
      %v2896 = vadd.f32 %v2591, %v2895
      %v2897 = vpop.f32.mrb[0].mxu0
      %2898 = vmatprep.mubr.bf16.mxu0 %v1361
      %2899 = vmatmul.mubr.bf16.gmra.mrb[0].mxu0 %v1159
      %v2900 = vpop.f32.mrb[0].mxu0
      %v2901 = vadd.f32 %v2596, %v2900
      %v2902 = vpop.f32.mrb[0].mxu0
      %v2903 = vpop.f32.mrb[0].mxu0
      %v2904 = vadd.f32 %v2599, %v2903
      %v2905 = vpop.f32.mrb[0].mxu0
      %2906 = vmatprep.mubr.bf16.mxu0 %v1373
      %2907 = vmatmul.mubr.bf16.gmra.mrb[0].mxu0 %v1160
      %v2908 = vpop.f32.mrb[0].mxu0
      %v2909 = vadd.f32 %v2604, %v2908
      %v2910 = vpop.f32.mrb[0].mxu0
      %v2911 = vpop.f32.mrb[0].mxu0
      %v2912 = vadd.f32 %v2607, %v2911
      %v2913 = vpop.f32.mrb[0].mxu0
      %2914 = vmatprep.mubr.bf16.mxu0 %v1385
      %2915 = vmatmul.mubr.bf16.gmra.mrb[0].mxu0 %v1161
      %v2916 = vpop.f32.mrb[0].mxu0
      %v2917 = vadd.f32 %v2612, %v2916
      %v2918 = vpop.f32.mrb[0].mxu0
      %v2919 = vpop.f32.mrb[0].mxu0
      %v2920 = vadd.f32 %v2615, %v2919
      %v2921 = vpop.f32.mrb[0].mxu0
      %2922 = vmatprep.mubr.bf16.mxu0 %v1397
      %2923 = vmatmul.mubr.bf16.gmra.mrb[0].mxu0 %v1162
      %v2924 = vpop.f32.mrb[0].mxu0
      %v2925 = vadd.f32 %v2620, %v2924
      %v2926 = vpop.f32.mrb[0].mxu0
      %v2927 = vpop.f32.mrb[0].mxu0
      %v2928 = vadd.f32 %v2623, %v2927
      %v2929 = vpop.f32.mrb[0].mxu0
      %2930 = vmatprep.mubr.bf16.mxu0 %v1409
      %2931 = vmatmul.mubr.bf16.gmra.mrb[0].mxu0 %v1163
      %v2932 = vpop.f32.mrb[0].mxu0
      %v2933 = vadd.f32 %v2628, %v2932
      %v2934 = vpop.f32.mrb[0].mxu0
      %v2935 = vpop.f32.mrb[0].mxu0
      %v2936 = vadd.f32 %v2631, %v2935
      %v2937 = vpop.f32.mrb[0].mxu0
      %2938 = vmatprep.mubr.bf16.mxu0 %v1421
      %2939 = vmatmul.mubr.bf16.gmra.mrb[0].mxu0 %v1164
      %v2940 = vpop.f32.mrb[0].mxu0
      %v2941 = vadd.f32 %v2636, %v2940
      %v2942 = vpop.f32.mrb[0].mxu0
      %v2943 = vpop.f32.mrb[0].mxu0
      %v2944 = vadd.f32 %v2639, %v2943
      %v2945 = vpop.f32.mrb[0].mxu0
      %2946 = vdwg.mxu0
      %2947 = vmatprep.subr.bf16.mxu0 0
      %2948 = vmatpush1.bf16.msra.mxu0 %v2754
      %2949 = vmatprep.subr.bf16.mxu0 0
      %2950 = vmatpush1.bf16.msra.mxu0 %v2755
      %2951 = vmatprep.subr.bf16.mxu0 0
      %2952 = vmatpush1.bf16.msra.mxu0 %v2756
      %2953 = vmatprep.subr.bf16.mxu0 0
      %2954 = vmatpush1.bf16.msra.mxu0 %v2757
      %2955 = vmatprep.subr.bf16.mxu0 0
      %2956 = vmatpush1.bf16.msra.mxu0 %v2758
      %2957 = vmatprep.subr.bf16.mxu0 0
      %2958 = vmatpush1.bf16.msra.mxu0 %v2759
      %2959 = vmatprep.subr.bf16.mxu0 0
      %2960 = vmatpush1.bf16.msra.mxu0 %v2760
      %2961 = vmatprep.subr.bf16.mxu0 0
      %2962 = vmatpush1.bf16.msra.mxu0 %v2761
      %2963 = vmatprep.subr.bf16.mxu0 0
      %2964 = vmatpush1.bf16.msra.mxu0 0
      %2965 = vmatprep.subr.bf16.mxu0 0
      %2966 = vmatpush1.bf16.msra.mxu0 0
      %2967 = vmatprep.subr.bf16.mxu0 0
      %2968 = vmatpush1.bf16.msra.mxu0 0
      %2969 = vmatprep.subr.bf16.mxu0 0
      %2970 = vmatpush1.bf16.msra.mxu0 0
      %2971 = vmatprep.subr.bf16.mxu0 0
      %2972 = vmatpush1.bf16.msra.mxu0 0
      %2973 = vmatprep.subr.bf16.mxu0 0
      %2974 = vmatpush1.bf16.msra.mxu0 0
      %2975 = vmatprep.subr.bf16.mxu0 0
      %2976 = vmatpush1.bf16.msra.mxu0 0
      %2977 = vmatprep.subr.bf16.mxu0 0
      %2978 = vmatpush1.bf16.msra.mxu0 0
      %2979 = vmatprep.mubr.bf16.mxu0 0
      %2980 = vmatmul.mubr.bf16.gmra.mrb[0].mxu0 %v1489
      %v2981 = vpop.f32.mrb[0].mxu0
      %v2982 = vadd.f32 %v2821, %v2981
      %v2983 = vpop.f32.mrb[0].mxu0
      %v2984 = vpop.f32.mrb[0].mxu0
      %v2985 = vadd.f32 %v2824, %v2984
      %v2986 = vpop.f32.mrb[0].mxu0
      %2987 = vmatprep.mubr.bf16.mxu0 0
      %2988 = vmatmul.mubr.bf16.gmra.mrb[0].mxu0 %v1492
      %v2989 = vpop.f32.mrb[0].mxu0
      %v2990 = vadd.f32 %v2829, %v2989
      %v2991 = vpop.f32.mrb[0].mxu0
      %v2992 = vpop.f32.mrb[0].mxu0
      %v2993 = vadd.f32 %v2832, %v2992
      %v2994 = vpop.f32.mrb[0].mxu0
      %2995 = vmatprep.mubr.bf16.mxu0 0
      %2996 = vmatmul.mubr.bf16.gmra.mrb[0].mxu0 %v1495
      %v2997 = vpop.f32.mrb[0].mxu0
      %v2998 = vadd.f32 %v2837, %v2997
      %v2999 = vpop.f32.mrb[0].mxu0
      %v3000 = vpop.f32.mrb[0].mxu0
      %v3001 = vadd.f32 %v2840, %v3000
      %v3002 = vpop.f32.mrb[0].mxu0
      %3003 = vmatprep.mubr.bf16.mxu0 0
      %3004 = vmatmul.mubr.bf16.gmra.mrb[0].mxu0 %v1498
      %v3005 = vpop.f32.mrb[0].mxu0
      %v3006 = vadd.f32 %v2845, %v3005
      %v3007 = vpop.f32.mrb[0].mxu0
      %v3008 = vpop.f32.mrb[0].mxu0
      %v3009 = vadd.f32 %v2848, %v3008
      %v3010 = vpop.f32.mrb[0].mxu0
      %3011 = vmatprep.mubr.bf16.mxu0 0
      %3012 = vmatmul.mubr.bf16.gmra.mrb[0].mxu0 %v1501
      %v3013 = vpop.f32.mrb[0].mxu0
      %v3014 = vadd.f32 %v2853, %v3013
      %v3015 = vpop.f32.mrb[0].mxu0
      %v3016 = vpop.f32.mrb[0].mxu0
      %v3017 = vadd.f32 %v2856, %v3016
      %v3018 = vpop.f32.mrb[0].mxu0
      %3019 = vmatprep.mubr.bf16.mxu0 0
      %3020 = vmatmul.mubr.bf16.gmra.mrb[0].mxu0 %v1504
      %v3021 = vpop.f32.mrb[0].mxu0
      %v3022 = vadd.f32 %v2861, %v3021
      %v3023 = vpop.f32.mrb[0].mxu0
      %v3024 = vpop.f32.mrb[0].mxu0
      %v3025 = vadd.f32 %v2864, %v3024
      %v3026 = vpop.f32.mrb[0].mxu0
      %3027 = vmatprep.mubr.bf16.mxu0 0
      %3028 = vmatmul.mubr.bf16.gmra.mrb[0].mxu0 %v1507
      %v3029 = vpop.f32.mrb[0].mxu0
      %v3030 = vadd.f32 %v2869, %v3029
      %v3031 = vpop.f32.mrb[0].mxu0
      %v3032 = vpop.f32.mrb[0].mxu0
      %v3033 = vadd.f32 %v2872, %v3032
      %v3034 = vpop.f32.mrb[0].mxu0
      %3035 = vmatprep.mubr.bf16.mxu0 0
      %3036 = vmatmul.mubr.bf16.gmra.mrb[0].mxu0 %v1510
      %v3037 = vpop.f32.mrb[0].mxu0
      %v3038 = vadd.f32 %v2877, %v3037
      %v3039 = vpop.f32.mrb[0].mxu0
      %v3040 = vpop.f32.mrb[0].mxu0
      %v3041 = vadd.f32 %v2880, %v3040
      %v3042 = vpop.f32.mrb[0].mxu0
      %3043 = vmatprep.mubr.bf16.mxu0 0
      %3044 = vmatmul.mubr.bf16.gmra.mrb[0].mxu0 %v1513
      %v3045 = vpop.f32.mrb[0].mxu0
      %v3046 = vadd.f32 %v2885, %v3045
      %v3047 = vpop.f32.mrb[0].mxu0
      %v3048 = vpop.f32.mrb[0].mxu0
      %v3049 = vadd.f32 %v2888, %v3048
      %v3050 = vpop.f32.mrb[0].mxu0
      %3051 = vmatprep.mubr.bf16.mxu0 0
      %3052 = vmatmul.mubr.bf16.gmra.mrb[0].mxu0 %v1516
      %v3053 = vpop.f32.mrb[0].mxu0
      %v3054 = vadd.f32 %v2893, %v3053
      %v3055 = vpop.f32.mrb[0].mxu0
      %v3056 = vpop.f32.mrb[0].mxu0
      %v3057 = vadd.f32 %v2896, %v3056
      %v3058 = vpop.f32.mrb[0].mxu0
      %3059 = vmatprep.mubr.bf16.mxu0 0
      %3060 = vmatmul.mubr.bf16.gmra.mrb[0].mxu0 %v1519
      %v3061 = vpop.f32.mrb[0].mxu0
      %v3062 = vadd.f32 %v2901, %v3061
      %v3063 = vpop.f32.mrb[0].mxu0
      %v3064 = vpop.f32.mrb[0].mxu0
      %v3065 = vadd.f32 %v2904, %v3064
      %v3066 = vpop.f32.mrb[0].mxu0
      %3067 = vmatprep.mubr.bf16.mxu0 0
      %3068 = vmatmul.mubr.bf16.gmra.mrb[0].mxu0 %v1522
      %v3069 = vpop.f32.mrb[0].mxu0
      %v3070 = vadd.f32 %v2909, %v3069
      %v3071 = vpop.f32.mrb[0].mxu0
      %v3072 = vpop.f32.mrb[0].mxu0
      %v3073 = vadd.f32 %v2912, %v3072
      %v3074 = vpop.f32.mrb[0].mxu0
      %3075 = vmatprep.mubr.bf16.mxu0 0
      %3076 = vmatmul.mubr.bf16.gmra.mrb[0].mxu0 %v1525
      %v3077 = vpop.f32.mrb[0].mxu0
      %v3078 = vadd.f32 %v2917, %v3077
      %v3079 = vpop.f32.mrb[0].mxu0
      %v3080 = vpop.f32.mrb[0].mxu0
      %v3081 = vadd.f32 %v2920, %v3080
      %v3082 = vpop.f32.mrb[0].mxu0
      %3083 = vmatprep.mubr.bf16.mxu0 0
      %3084 = vmatmul.mubr.bf16.gmra.mrb[0].mxu0 %v1528
      %v3085 = vpop.f32.mrb[0].mxu0
      %v3086 = vadd.f32 %v2925, %v3085
      %v3087 = vpop.f32.mrb[0].mxu0
      %v3088 = vpop.f32.mrb[0].mxu0
      %v3089 = vadd.f32 %v2928, %v3088
      %v3090 = vpop.f32.mrb[0].mxu0
      %3091 = vmatprep.mubr.bf16.mxu0 0
      %3092 = vmatmul.mubr.bf16.gmra.mrb[0].mxu0 %v1531
      %v3093 = vpop.f32.mrb[0].mxu0
      %v3094 = vadd.f32 %v2933, %v3093
      %v3095 = vpop.f32.mrb[0].mxu0
      %v3096 = vpop.f32.mrb[0].mxu0
      %v3097 = vadd.f32 %v2936, %v3096
      %v3098 = vpop.f32.mrb[0].mxu0
      %3099 = vmatprep.mubr.bf16.mxu0 0
      %3100 = vmatmul.mubr.bf16.gmra.mrb[0].mxu0 %v1534
      %v3101 = vpop.f32.mrb[0].mxu0
      %v3102 = vadd.f32 %v2941, %v3101
      %v3103 = vpop.f32.mrb[0].mxu0
      %v3104 = vpop.f32.mrb[0].mxu0
      %v3105 = vadd.f32 %v2944, %v3104
      %v3106 = vpop.f32.mrb[0].mxu0
      %3107 = vdwg.mxu0
      %s3108 = scalar_lea.vmem [#allocation2], 24
      %v3109 = vld [vmem:[%s3108] sm:$0xf]
      %v3110 = vld [vmem:[%s3108 + $0x4] sm:$0xf]
      %v3111 = vld [vmem:[%s3108 + $0xc] sm:$0xf]
      %v3112 = vld [vmem:[%s3108 + $0x10] sm:$0xf]
      %v3113 = vld [vmem:[%s3108 + $0x18] sm:$0xf]
      %v3114 = vld [vmem:[%s3108 + $0x1c] sm:$0xf]
      %v3115 = vld [vmem:[%s3108 + $0x24] sm:$0xf]
      %v3116 = vld [vmem:[%s3108 + $0x28] sm:$0xf]
      %v3117 = vld [vmem:[%s3108 + $0x30] sm:$0xf]
      %v3118 = vld [vmem:[%s3108 + $0x34] sm:$0xf]
      %v3119 = vld [vmem:[%s3108 + $0x3c] sm:$0xf]
      %v3120 = vld [vmem:[%s3108 + $0x40] sm:$0xf]
      %v3121 = vld [vmem:[%s3108 + $0x48] sm:$0xf]
      %v3122 = vld [vmem:[%s3108 + $0x4c] sm:$0xf]
      %v3123 = vld [vmem:[%s3108 + $0x54] sm:$0xf]
      %v3124 = vld [vmem:[%s3108 + $0x58] sm:$0xf]
      %v3125 = vld [vmem:[%s3108 + $0x60] sm:$0xf]
      %v3126 = vld [vmem:[%s3108 + $0x64] sm:$0xf]
      %v3127 = vld [vmem:[%s3108 + $0x6c] sm:$0xf]
      %v3128 = vld [vmem:[%s3108 + $0x70] sm:$0xf]
      %v3129 = vld [vmem:[%s3108 + $0x78] sm:$0xf]
      %v3130 = vld [vmem:[%s3108 + $0x7c] sm:$0xf]
      %v3131 = vld [vmem:[%s3108 + $0x84] sm:$0xf]
      %v3132 = vld [vmem:[%s3108 + $0x88] sm:$0xf]
      %v3133 = vld [vmem:[%s3108 + $0x90] sm:$0xf]
      %v3134 = vld [vmem:[%s3108 + $0x94] sm:$0xf]
      %v3135 = vld [vmem:[%s3108 + $0x9c] sm:$0xf]
      %v3136 = vld [vmem:[%s3108 + $0xa0] sm:$0xf]
      %v3137 = vld [vmem:[%s3108 + $0xa8] sm:$0xf]
      %v3138 = vld [vmem:[%s3108 + $0xac] sm:$0xf]
      %v3139 = vld [vmem:[%s3108 + $0xb4] sm:$0xf]
      %v3140 = vld [vmem:[%s3108 + $0xb8] sm:$0xf]
      %v3141 = vld [vmem:[%s3108 + $0x8] sm:$0x1]
      %v3142 = vld [vmem:[%s3108 + $0x14] sm:$0x1]
      %v3143 = vld [vmem:[%s3108 + $0x20] sm:$0x1]
      %v3144 = vld [vmem:[%s3108 + $0x2c] sm:$0x1]
      %v3145 = vld [vmem:[%s3108 + $0x38] sm:$0x1]
      %v3146 = vld [vmem:[%s3108 + $0x44] sm:$0x1]
      %v3147 = vld [vmem:[%s3108 + $0x50] sm:$0x1]
      %v3148 = vld [vmem:[%s3108 + $0x5c] sm:$0x1]
      %v3149 = vld [vmem:[%s3108 + $0x68] sm:$0x1]
      %v3150 = vld [vmem:[%s3108 + $0x74] sm:$0x1]
      %v3151 = vld [vmem:[%s3108 + $0x80] sm:$0x1]
      %v3152 = vld [vmem:[%s3108 + $0x8c] sm:$0x1]
      %v3153 = vld [vmem:[%s3108 + $0x98] sm:$0x1]
      %v3154 = vld [vmem:[%s3108 + $0xa4] sm:$0x1]
      %v3155 = vld [vmem:[%s3108 + $0xb0] sm:$0x1]
      %v3156 = vld [vmem:[%s3108 + $0xbc] sm:$0x1]
      %v3157 = vld [vmem:[%s3108] sm:$0xe]
      %v3158 = vld [vmem:[%s3108 + $0xc] sm:$0xe]
      %v3159 = vld [vmem:[%s3108 + $0x18] sm:$0xe]
      %v3160 = vld [vmem:[%s3108 + $0x24] sm:$0xe]
      %v3161 = vld [vmem:[%s3108 + $0x30] sm:$0xe]
      %v3162 = vld [vmem:[%s3108 + $0x3c] sm:$0xe]
      %v3163 = vld [vmem:[%s3108 + $0x48] sm:$0xe]
      %v3164 = vld [vmem:[%s3108 + $0x54] sm:$0xe]
      %v3165 = vld [vmem:[%s3108 + $0x60] sm:$0xe]
      %v3166 = vld [vmem:[%s3108 + $0x6c] sm:$0xe]
      %v3167 = vld [vmem:[%s3108 + $0x78] sm:$0xe]
      %v3168 = vld [vmem:[%s3108 + $0x84] sm:$0xe]
      %v3169 = vld [vmem:[%s3108 + $0x90] sm:$0xe]
      %v3170 = vld [vmem:[%s3108 + $0x9c] sm:$0xe]
      %v3171 = vld [vmem:[%s3108 + $0xa8] sm:$0xe]
      %v3172 = vld [vmem:[%s3108 + $0xb4] sm:$0xe]
      %v3205 = vunpack.c.l.b16 %v3109
      %v3206 = vunpack.c.l.b16 %v3110
      %v3207 = vunpack.c.l.b16 %v3111
      %v3208 = vunpack.c.l.b16 %v3112
      %v3209 = vunpack.c.l.b16 %v3113
      %v3210 = vunpack.c.l.b16 %v3114
      %v3211 = vunpack.c.l.b16 %v3115
      %v3212 = vunpack.c.l.b16 %v3116
      %v3213 = vunpack.c.l.b16 %v3117
      %v3214 = vunpack.c.l.b16 %v3118
      %v3215 = vunpack.c.l.b16 %v3119
      %v3216 = vunpack.c.l.b16 %v3120
      %v3217 = vunpack.c.l.b16 %v3121
      %v3218 = vunpack.c.l.b16 %v3122
      %v3219 = vunpack.c.l.b16 %v3123
      %v3220 = vunpack.c.l.b16 %v3124
      %v3221 = vunpack.c.l.b16 %v3125
      %v3222 = vunpack.c.l.b16 %v3126
      %v3223 = vunpack.c.l.b16 %v3127
      %v3224 = vunpack.c.l.b16 %v3128
      %v3225 = vunpack.c.l.b16 %v3129
      %v3226 = vunpack.c.l.b16 %v3130
      %v3227 = vunpack.c.l.b16 %v3131
      %v3228 = vunpack.c.l.b16 %v3132
      %v3229 = vunpack.c.l.b16 %v3133
      %v3230 = vunpack.c.l.b16 %v3134
      %v3231 = vunpack.c.l.b16 %v3135
      %v3232 = vunpack.c.l.b16 %v3136
      %v3233 = vunpack.c.l.b16 %v3137
      %v3234 = vunpack.c.l.b16 %v3138
      %v3235 = vunpack.c.l.b16 %v3139
      %v3236 = vunpack.c.l.b16 %v3140
      %v3237 = vpack.c.b16 %v3206, %v3205
      %v3238 = vpack.c.b16 %v3208, %v3207
      %v3239 = vpack.c.b16 %v3210, %v3209
      %v3240 = vpack.c.b16 %v3212, %v3211
      %v3241 = vpack.c.b16 %v3214, %v3213
      %v3242 = vpack.c.b16 %v3216, %v3215
      %v3243 = vpack.c.b16 %v3218, %v3217
      %v3244 = vpack.c.b16 %v3220, %v3219
      %v3245 = vpack.c.b16 %v3222, %v3221
      %v3246 = vpack.c.b16 %v3224, %v3223
      %v3247 = vpack.c.b16 %v3226, %v3225
      %v3248 = vpack.c.b16 %v3228, %v3227
      %v3249 = vpack.c.b16 %v3230, %v3229
      %v3250 = vpack.c.b16 %v3232, %v3231
      %v3251 = vpack.c.b16 %v3234, %v3233
      %v3252 = vpack.c.b16 %v3236, %v3235
      %v3285 = vunpack.c.l.b16 %v3141
      %v3286 = vunpack.c.l.b16 %v3142
      %v3287 = vunpack.c.l.b16 %v3143
      %v3288 = vunpack.c.l.b16 %v3144
      %v3289 = vunpack.c.l.b16 %v3145
      %v3290 = vunpack.c.l.b16 %v3146
      %v3291 = vunpack.c.l.b16 %v3147
      %v3292 = vunpack.c.l.b16 %v3148
      %v3293 = vunpack.c.l.b16 %v3149
      %v3294 = vunpack.c.l.b16 %v3150
      %v3295 = vunpack.c.l.b16 %v3151
      %v3296 = vunpack.c.l.b16 %v3152
      %v3297 = vunpack.c.l.b16 %v3153
      %v3298 = vunpack.c.l.b16 %v3154
      %v3299 = vunpack.c.l.b16 %v3155
      %v3300 = vunpack.c.l.b16 %v3156
      %v3301 = vpack.c.b16 %v3285, %v3285
      %v3302 = vpack.c.b16 %v3286, %v3286
      %v3303 = vpack.c.b16 %v3287, %v3287
      %v3304 = vpack.c.b16 %v3288, %v3288
      %v3305 = vpack.c.b16 %v3289, %v3289
      %v3306 = vpack.c.b16 %v3290, %v3290
      %v3307 = vpack.c.b16 %v3291, %v3291
      %v3308 = vpack.c.b16 %v3292, %v3292
      %v3309 = vpack.c.b16 %v3293, %v3293
      %v3310 = vpack.c.b16 %v3294, %v3294
      %v3311 = vpack.c.b16 %v3295, %v3295
      %v3312 = vpack.c.b16 %v3296, %v3296
      %v3313 = vpack.c.b16 %v3297, %v3297
      %v3314 = vpack.c.b16 %v3298, %v3298
      %v3315 = vpack.c.b16 %v3299, %v3299
      %v3316 = vpack.c.b16 %v3300, %v3300
      %v3318 = vshrl.u32 %v3237, 16
      %v3320 = vshll.u32 %v3237, 16
      %v3322 = vrot.slane %v3320, 1
      %v3323 = vor.u32 %v3318, %v3322
      %v3325 = vshll.u32 %v3301, 16
      %v3327 = vrot.slane %v3325, 1
      %v3328 = vsel %vm1229, %v3323, %v3327
      %v3330 = vshrl.u32 %v3238, 16
      %v3332 = vshll.u32 %v3238, 16
      %v3334 = vrot.slane %v3332, 1
      %v3335 = vor.u32 %v3330, %v3334
      %v3337 = vshll.u32 %v3302, 16
      %v3339 = vrot.slane %v3337, 1
      %v3340 = vsel %vm1229, %v3335, %v3339
      %v3342 = vshrl.u32 %v3239, 16
      %v3344 = vshll.u32 %v3239, 16
      %v3346 = vrot.slane %v3344, 1
      %v3347 = vor.u32 %v3342, %v3346
      %v3349 = vshll.u32 %v3303, 16
      %v3351 = vrot.slane %v3349, 1
      %v3352 = vsel %vm1229, %v3347, %v3351
      %v3354 = vshrl.u32 %v3240, 16
      %v3356 = vshll.u32 %v3240, 16
      %v3358 = vrot.slane %v3356, 1
      %v3359 = vor.u32 %v3354, %v3358
      %v3361 = vshll.u32 %v3304, 16
      %v3363 = vrot.slane %v3361, 1
      %v3364 = vsel %vm1229, %v3359, %v3363
      %v3366 = vshrl.u32 %v3241, 16
      %v3368 = vshll.u32 %v3241, 16
      %v3370 = vrot.slane %v3368, 1
      %v3371 = vor.u32 %v3366, %v3370
      %v3373 = vshll.u32 %v3305, 16
      %v3375 = vrot.slane %v3373, 1
      %v3376 = vsel %vm1229, %v3371, %v3375
      %v3378 = vshrl.u32 %v3242, 16
      %v3380 = vshll.u32 %v3242, 16
      %v3382 = vrot.slane %v3380, 1
      %v3383 = vor.u32 %v3378, %v3382
      %v3385 = vshll.u32 %v3306, 16
      %v3387 = vrot.slane %v3385, 1
      %v3388 = vsel %vm1229, %v3383, %v3387
      %v3390 = vshrl.u32 %v3243, 16
      %v3392 = vshll.u32 %v3243, 16
      %v3394 = vrot.slane %v3392, 1
      %v3395 = vor.u32 %v3390, %v3394
      %v3397 = vshll.u32 %v3307, 16
      %v3399 = vrot.slane %v3397, 1
      %v3400 = vsel %vm1229, %v3395, %v3399
      %v3402 = vshrl.u32 %v3244, 16
      %v3404 = vshll.u32 %v3244, 16
      %v3406 = vrot.slane %v3404, 1
      %v3407 = vor.u32 %v3402, %v3406
      %v3409 = vshll.u32 %v3308, 16
      %v3411 = vrot.slane %v3409, 1
      %v3412 = vsel %vm1229, %v3407, %v3411
      %v3414 = vshrl.u32 %v3245, 16
      %v3416 = vshll.u32 %v3245, 16
      %v3418 = vrot.slane %v3416, 1
      %v3419 = vor.u32 %v3414, %v3418
      %v3421 = vshll.u32 %v3309, 16
      %v3423 = vrot.slane %v3421, 1
      %v3424 = vsel %vm1229, %v3419, %v3423
      %v3426 = vshrl.u32 %v3246, 16
      %v3428 = vshll.u32 %v3246, 16
      %v3430 = vrot.slane %v3428, 1
      %v3431 = vor.u32 %v3426, %v3430
      %v3433 = vshll.u32 %v3310, 16
      %v3435 = vrot.slane %v3433, 1
      %v3436 = vsel %vm1229, %v3431, %v3435
      %v3438 = vshrl.u32 %v3247, 16
      %v3440 = vshll.u32 %v3247, 16
      %v3442 = vrot.slane %v3440, 1
      %v3443 = vor.u32 %v3438, %v3442
      %v3445 = vshll.u32 %v3311, 16
      %v3447 = vrot.slane %v3445, 1
      %v3448 = vsel %vm1229, %v3443, %v3447
      %v3450 = vshrl.u32 %v3248, 16
      %v3452 = vshll.u32 %v3248, 16
      %v3454 = vrot.slane %v3452, 1
      %v3455 = vor.u32 %v3450, %v3454
      %v3457 = vshll.u32 %v3312, 16
      %v3459 = vrot.slane %v3457, 1
      %v3460 = vsel %vm1229, %v3455, %v3459
      %v3462 = vshrl.u32 %v3249, 16
      %v3464 = vshll.u32 %v3249, 16
      %v3466 = vrot.slane %v3464, 1
      %v3467 = vor.u32 %v3462, %v3466
      %v3469 = vshll.u32 %v3313, 16
      %v3471 = vrot.slane %v3469, 1
      %v3472 = vsel %vm1229, %v3467, %v3471
      %v3474 = vshrl.u32 %v3250, 16
      %v3476 = vshll.u32 %v3250, 16
      %v3478 = vrot.slane %v3476, 1
      %v3479 = vor.u32 %v3474, %v3478
      %v3481 = vshll.u32 %v3314, 16
      %v3483 = vrot.slane %v3481, 1
      %v3484 = vsel %vm1229, %v3479, %v3483
      %v3486 = vshrl.u32 %v3251, 16
      %v3488 = vshll.u32 %v3251, 16
      %v3490 = vrot.slane %v3488, 1
      %v3491 = vor.u32 %v3486, %v3490
      %v3493 = vshll.u32 %v3315, 16
      %v3495 = vrot.slane %v3493, 1
      %v3496 = vsel %vm1229, %v3491, %v3495
      %v3498 = vshrl.u32 %v3252, 16
      %v3500 = vshll.u32 %v3252, 16
      %v3502 = vrot.slane %v3500, 1
      %v3503 = vor.u32 %v3498, %v3502
      %v3505 = vshll.u32 %v3316, 16
      %v3507 = vrot.slane %v3505, 1
      %v3508 = vsel %vm1229, %v3503, %v3507
      %v3541 = vunpack.c.l.b16 %v3157
      %v3542 = vunpack.c.l.b16 %v3158
      %v3543 = vunpack.c.l.b16 %v3159
      %v3544 = vunpack.c.l.b16 %v3160
      %v3545 = vunpack.c.l.b16 %v3161
      %v3546 = vunpack.c.l.b16 %v3162
      %v3547 = vunpack.c.l.b16 %v3163
      %v3548 = vunpack.c.l.b16 %v3164
      %v3549 = vunpack.c.l.b16 %v3165
      %v3550 = vunpack.c.l.b16 %v3166
      %v3551 = vunpack.c.l.b16 %v3167
      %v3552 = vunpack.c.l.b16 %v3168
      %v3553 = vunpack.c.l.b16 %v3169
      %v3554 = vunpack.c.l.b16 %v3170
      %v3555 = vunpack.c.l.b16 %v3171
      %v3556 = vunpack.c.l.b16 %v3172
      %v3557 = vpack.c.b16 %v3206, %v3541
      %v3558 = vpack.c.b16 %v3208, %v3542
      %v3559 = vpack.c.b16 %v3210, %v3543
      %v3560 = vpack.c.b16 %v3212, %v3544
      %v3561 = vpack.c.b16 %v3214, %v3545
      %v3562 = vpack.c.b16 %v3216, %v3546
      %v3563 = vpack.c.b16 %v3218, %v3547
      %v3564 = vpack.c.b16 %v3220, %v3548
      %v3565 = vpack.c.b16 %v3222, %v3549
      %v3566 = vpack.c.b16 %v3224, %v3550
      %v3567 = vpack.c.b16 %v3226, %v3551
      %v3568 = vpack.c.b16 %v3228, %v3552
      %v3569 = vpack.c.b16 %v3230, %v3553
      %v3570 = vpack.c.b16 %v3232, %v3554
      %v3571 = vpack.c.b16 %v3234, %v3555
      %v3572 = vpack.c.b16 %v3236, %v3556
      %v3573 = vrot.slane %v3557, 1
      %v3574 = vrot.slane %v3301, 1
      %v3575 = vsel %vm1486, %v3573, %v3574
      %v3576 = vrot.slane %v3558, 1
      %v3577 = vrot.slane %v3302, 1
      %v3578 = vsel %vm1486, %v3576, %v3577
      %v3579 = vrot.slane %v3559, 1
      %v3580 = vrot.slane %v3303, 1
      %v3581 = vsel %vm1486, %v3579, %v3580
      %v3582 = vrot.slane %v3560, 1
      %v3583 = vrot.slane %v3304, 1
      %v3584 = vsel %vm1486, %v3582, %v3583
      %v3585 = vrot.slane %v3561, 1
      %v3586 = vrot.slane %v3305, 1
      %v3587 = vsel %vm1486, %v3585, %v3586
      %v3588 = vrot.slane %v3562, 1
      %v3589 = vrot.slane %v3306, 1
      %v3590 = vsel %vm1486, %v3588, %v3589
      %v3591 = vrot.slane %v3563, 1
      %v3592 = vrot.slane %v3307, 1
      %v3593 = vsel %vm1486, %v3591, %v3592
      %v3594 = vrot.slane %v3564, 1
      %v3595 = vrot.slane %v3308, 1
      %v3596 = vsel %vm1486, %v3594, %v3595
      %v3597 = vrot.slane %v3565, 1
      %v3598 = vrot.slane %v3309, 1
      %v3599 = vsel %vm1486, %v3597, %v3598
      %v3600 = vrot.slane %v3566, 1
      %v3601 = vrot.slane %v3310, 1
      %v3602 = vsel %vm1486, %v3600, %v3601
      %v3603 = vrot.slane %v3567, 1
      %v3604 = vrot.slane %v3311, 1
      %v3605 = vsel %vm1486, %v3603, %v3604
      %v3606 = vrot.slane %v3568, 1
      %v3607 = vrot.slane %v3312, 1
      %v3608 = vsel %vm1486, %v3606, %v3607
      %v3609 = vrot.slane %v3569, 1
      %v3610 = vrot.slane %v3313, 1
      %v3611 = vsel %vm1486, %v3609, %v3610
      %v3612 = vrot.slane %v3570, 1
      %v3613 = vrot.slane %v3314, 1
      %v3614 = vsel %vm1486, %v3612, %v3613
      %v3615 = vrot.slane %v3571, 1
      %v3616 = vrot.slane %v3315, 1
      %v3617 = vsel %vm1486, %v3615, %v3616
      %v3618 = vrot.slane %v3572, 1
      %v3619 = vrot.slane %v3316, 1
      %v3620 = vsel %vm1486, %v3618, %v3619
      %s3637 = scalar_lea.vmem %s2, 384
      %v3638 = vld [vmem:[%s3637] sm:$0xf]
      %v3639 = vld [vmem:[%s3637 + $0x4] sm:$0xf]
      %v3640 = vld [vmem:[%s3637 + $0x8] sm:$0xf]
      %v3641 = vld [vmem:[%s3637 + $0xc] sm:$0xf]
      %v3642 = vld [vmem:[%s3637 + $0x10] sm:$0xf]
      %v3643 = vld [vmem:[%s3637 + $0x14] sm:$0xf]
      %v3644 = vld [vmem:[%s3637 + $0x18] sm:$0xf]
      %v3645 = vld [vmem:[%s3637 + $0x1c] sm:$0xf]
      %v3646 = vld [vmem:[%s3637 + $0x20] sm:$0xf]
      %v3647 = vld [vmem:[%s3637 + $0x24] sm:$0xf]
      %v3648 = vld [vmem:[%s3637 + $0x28] sm:$0xf]
      %v3649 = vld [vmem:[%s3637 + $0x2c] sm:$0xf]
      %v3650 = vld [vmem:[%s3637 + $0x30] sm:$0xf]
      %v3651 = vld [vmem:[%s3637 + $0x34] sm:$0xf]
      %v3652 = vld [vmem:[%s3637 + $0x38] sm:$0xf]
      %v3653 = vld [vmem:[%s3637 + $0x3c] sm:$0xf]
      %v3654 = vld [vmem:[%s3637 + $0x40] sm:$0xf]
      %v3655 = vld [vmem:[%s3637 + $0x44] sm:$0xf]
      %v3656 = vld [vmem:[%s3637 + $0x48] sm:$0xf]
      %v3657 = vld [vmem:[%s3637 + $0x4c] sm:$0xf]
      %v3658 = vld [vmem:[%s3637 + $0x50] sm:$0xf]
      %v3659 = vld [vmem:[%s3637 + $0x54] sm:$0xf]
      %v3660 = vld [vmem:[%s3637 + $0x58] sm:$0xf]
      %v3661 = vld [vmem:[%s3637 + $0x5c] sm:$0xf]
      %v3662 = vld [vmem:[%s3637 + $0x60] sm:$0xf]
      %v3663 = vld [vmem:[%s3637 + $0x64] sm:$0xf]
      %v3664 = vld [vmem:[%s3637 + $0x68] sm:$0xf]
      %v3665 = vld [vmem:[%s3637 + $0x6c] sm:$0xf]
      %v3666 = vld [vmem:[%s3637 + $0x70] sm:$0xf]
      %v3667 = vld [vmem:[%s3637 + $0x74] sm:$0xf]
      %v3668 = vld [vmem:[%s3637 + $0x78] sm:$0xf]
      %v3669 = vld [vmem:[%s3637 + $0x7c] sm:$0xf]
      %v3670 = vld [vmem:[%s3637 + $0x80] sm:$0xf]
      %v3671 = vld [vmem:[%s3637 + $0x84] sm:$0xf]
      %v3672 = vld [vmem:[%s3637 + $0x88] sm:$0xf]
      %v3673 = vld [vmem:[%s3637 + $0x8c] sm:$0xf]
      %v3674 = vld [vmem:[%s3637 + $0x90] sm:$0xf]
      %v3675 = vld [vmem:[%s3637 + $0x94] sm:$0xf]
      %v3676 = vld [vmem:[%s3637 + $0x98] sm:$0xf]
      %v3677 = vld [vmem:[%s3637 + $0x9c] sm:$0xf]
      %v3678 = vld [vmem:[%s3637 + $0xa0] sm:$0xf]
      %v3679 = vld [vmem:[%s3637 + $0xa4] sm:$0xf]
      %v3680 = vld [vmem:[%s3637 + $0xa8] sm:$0xf]
      %v3681 = vld [vmem:[%s3637 + $0xac] sm:$0xf]
      %v3682 = vld [vmem:[%s3637 + $0xb0] sm:$0xf]
      %v3683 = vld [vmem:[%s3637 + $0xb4] sm:$0xf]
      %v3684 = vld [vmem:[%s3637 + $0xb8] sm:$0xf]
      %v3685 = vld [vmem:[%s3637 + $0xbc] sm:$0xf]
      %v3734 = vunpack.c.l.b16 %v3638
      %v3735 = vunpack.c.l.b16 %v3639
      %v3736 = vunpack.c.l.b16 %v3640
      %v3737 = vunpack.c.l.b16 %v3641
      %v3738 = vunpack.c.l.b16 %v3642
      %v3739 = vunpack.c.l.b16 %v3643
      %v3740 = vunpack.c.l.b16 %v3644
      %v3741 = vunpack.c.l.b16 %v3645
      %v3742 = vunpack.c.l.b16 %v3646
      %v3743 = vunpack.c.l.b16 %v3647
      %v3744 = vunpack.c.l.b16 %v3648
      %v3745 = vunpack.c.l.b16 %v3649
      %v3746 = vunpack.c.l.b16 %v3650
      %v3747 = vunpack.c.l.b16 %v3651
      %v3748 = vunpack.c.l.b16 %v3652
      %v3749 = vunpack.c.l.b16 %v3653
      %v3750 = vunpack.c.l.b16 %v3654
      %v3751 = vunpack.c.l.b16 %v3655
      %v3752 = vunpack.c.l.b16 %v3656
      %v3753 = vunpack.c.l.b16 %v3657
      %v3754 = vunpack.c.l.b16 %v3658
      %v3755 = vunpack.c.l.b16 %v3659
      %v3756 = vunpack.c.l.b16 %v3660
      %v3757 = vunpack.c.l.b16 %v3661
      %v3758 = vunpack.c.l.b16 %v3662
      %v3759 = vunpack.c.l.b16 %v3663
      %v3760 = vunpack.c.l.b16 %v3664
      %v3761 = vunpack.c.l.b16 %v3665
      %v3762 = vunpack.c.l.b16 %v3666
      %v3763 = vunpack.c.l.b16 %v3667
      %v3764 = vunpack.c.l.b16 %v3668
      %v3765 = vunpack.c.l.b16 %v3669
      %v3766 = vunpack.c.l.b16 %v3670
      %v3767 = vunpack.c.l.b16 %v3671
      %v3768 = vunpack.c.l.b16 %v3672
      %v3769 = vunpack.c.l.b16 %v3673
      %v3770 = vunpack.c.l.b16 %v3674
      %v3771 = vunpack.c.l.b16 %v3675
      %v3772 = vunpack.c.l.b16 %v3676
      %v3773 = vunpack.c.l.b16 %v3677
      %v3774 = vunpack.c.l.b16 %v3678
      %v3775 = vunpack.c.l.b16 %v3679
      %v3776 = vunpack.c.l.b16 %v3680
      %v3777 = vunpack.c.l.b16 %v3681
      %v3778 = vunpack.c.l.b16 %v3682
      %v3779 = vunpack.c.l.b16 %v3683
      %v3780 = vunpack.c.l.b16 %v3684
      %v3781 = vunpack.c.l.b16 %v3685
      %v3782 = vpack.c.b16 %v3735, %v3734
      %v3783 = vpack.c.b16 %v3737, %v3736
      %v3784 = vpack.c.b16 %v3739, %v3738
      %v3785 = vpack.c.b16 %v3741, %v3740
      %v3786 = vpack.c.b16 %v3743, %v3742
      %v3787 = vpack.c.b16 %v3745, %v3744
      %v3788 = vpack.c.b16 %v3747, %v3746
      %v3789 = vpack.c.b16 %v3749, %v3748
      %v3790 = vpack.c.b16 %v3751, %v3750
      %v3791 = vpack.c.b16 %v3753, %v3752
      %v3792 = vpack.c.b16 %v3755, %v3754
      %v3793 = vpack.c.b16 %v3757, %v3756
      %v3794 = vpack.c.b16 %v3759, %v3758
      %v3795 = vpack.c.b16 %v3761, %v3760
      %v3796 = vpack.c.b16 %v3763, %v3762
      %v3797 = vpack.c.b16 %v3765, %v3764
      %v3798 = vpack.c.b16 %v3767, %v3766
      %v3799 = vpack.c.b16 %v3769, %v3768
      %v3800 = vpack.c.b16 %v3771, %v3770
      %v3801 = vpack.c.b16 %v3773, %v3772
      %v3802 = vpack.c.b16 %v3775, %v3774
      %v3803 = vpack.c.b16 %v3777, %v3776
      %v3804 = vpack.c.b16 %v3779, %v3778
      %v3805 = vpack.c.b16 %v3781, %v3780
      %3830 = vmatprep.subr.bf16.mxu0 0
      %3831 = vmatpush1.bf16.msra.mxu0 %v3782
      %3832 = vmatprep.subr.bf16.mxu0 0
      %3833 = vmatpush1.bf16.msra.mxu0 %v3783
      %3834 = vmatprep.subr.bf16.mxu0 0
      %3835 = vmatpush1.bf16.msra.mxu0 %v3784
      %3836 = vmatprep.subr.bf16.mxu0 0
      %3837 = vmatpush1.bf16.msra.mxu0 %v3785
      %3838 = vmatprep.subr.bf16.mxu0 0
      %3839 = vmatpush1.bf16.msra.mxu0 %v3786
      %3840 = vmatprep.subr.bf16.mxu0 0
      %3841 = vmatpush1.bf16.msra.mxu0 %v3787
      %3842 = vmatprep.subr.bf16.mxu0 0
      %3843 = vmatpush1.bf16.msra.mxu0 %v3788
      %3844 = vmatprep.subr.bf16.mxu0 0
      %3845 = vmatpush1.bf16.msra.mxu0 %v3789
      %3846 = vmatprep.subr.bf16.mxu0 0
      %3847 = vmatpush1.bf16.msra.mxu0 %v3790
      %3848 = vmatprep.subr.bf16.mxu0 0
      %3849 = vmatpush1.bf16.msra.mxu0 %v3791
      %3850 = vmatprep.subr.bf16.mxu0 0
      %3851 = vmatpush1.bf16.msra.mxu0 %v3792
      %3852 = vmatprep.subr.bf16.mxu0 0
      %3853 = vmatpush1.bf16.msra.mxu0 %v3793
      %3854 = vmatprep.subr.bf16.mxu0 0
      %3855 = vmatpush1.bf16.msra.mxu0 %v3794
      %3856 = vmatprep.subr.bf16.mxu0 0
      %3857 = vmatpush1.bf16.msra.mxu0 %v3795
      %3858 = vmatprep.subr.bf16.mxu0 0
      %3859 = vmatpush1.bf16.msra.mxu0 %v3796
      %3860 = vmatprep.subr.bf16.mxu0 0
      %3861 = vmatpush1.bf16.msra.mxu0 %v3797
      %3862 = vmatprep.mubr.bf16.mxu0 %v3328
      %3863 = vmatmul.mubr.bf16.gmra.mrb[0].mxu0 %v3237
      %v3864 = vpop.f32.mrb[0].mxu0
      %v3865 = vadd.f32 0.0, %v3864
      %v3866 = vpop.f32.mrb[0].mxu0
      %v3867 = vpop.f32.mrb[0].mxu0
      %v3868 = vadd.f32 0.0, %v3867
      %v3869 = vpop.f32.mrb[0].mxu0
      %3870 = vmatprep.mubr.bf16.mxu0 %v3340
      %3871 = vmatmul.mubr.bf16.gmra.mrb[0].mxu0 %v3238
      %v3872 = vpop.f32.mrb[0].mxu0
      %v3873 = vadd.f32 0.0, %v3872
      %v3874 = vpop.f32.mrb[0].mxu0
      %v3875 = vpop.f32.mrb[0].mxu0
      %v3876 = vadd.f32 0.0, %v3875
      %v3877 = vpop.f32.mrb[0].mxu0
      %3878 = vmatprep.mubr.bf16.mxu0 %v3352
      %3879 = vmatmul.mubr.bf16.gmra.mrb[0].mxu0 %v3239
      %v3880 = vpop.f32.mrb[0].mxu0
      %v3881 = vadd.f32 0.0, %v3880
      %v3882 = vpop.f32.mrb[0].mxu0
      %v3883 = vpop.f32.mrb[0].mxu0
      %v3884 = vadd.f32 0.0, %v3883
      %v3885 = vpop.f32.mrb[0].mxu0
      %3886 = vmatprep.mubr.bf16.mxu0 %v3364
      %3887 = vmatmul.mubr.bf16.gmra.mrb[0].mxu0 %v3240
      %v3888 = vpop.f32.mrb[0].mxu0
      %v3889 = vadd.f32 0.0, %v3888
      %v3890 = vpop.f32.mrb[0].mxu0
      %v3891 = vpop.f32.mrb[0].mxu0
      %v3892 = vadd.f32 0.0, %v3891
      %v3893 = vpop.f32.mrb[0].mxu0
      %3894 = vmatprep.mubr.bf16.mxu0 %v3376
      %3895 = vmatmul.mubr.bf16.gmra.mrb[0].mxu0 %v3241
      %v3896 = vpop.f32.mrb[0].mxu0
      %v3897 = vadd.f32 0.0, %v3896
      %v3898 = vpop.f32.mrb[0].mxu0
      %v3899 = vpop.f32.mrb[0].mxu0
      %v3900 = vadd.f32 0.0, %v3899
      %v3901 = vpop.f32.mrb[0].mxu0
      %3902 = vmatprep.mubr.bf16.mxu0 %v3388
      %3903 = vmatmul.mubr.bf16.gmra.mrb[0].mxu0 %v3242
      %v3904 = vpop.f32.mrb[0].mxu0
      %v3905 = vadd.f32 0.0, %v3904
      %v3906 = vpop.f32.mrb[0].mxu0
      %v3907 = vpop.f32.mrb[0].mxu0
      %v3908 = vadd.f32 0.0, %v3907
      %v3909 = vpop.f32.mrb[0].mxu0
      %3910 = vmatprep.mubr.bf16.mxu0 %v3400
      %3911 = vmatmul.mubr.bf16.gmra.mrb[0].mxu0 %v3243
      %v3912 = vpop.f32.mrb[0].mxu0
      %v3913 = vadd.f32 0.0, %v3912
      %v3914 = vpop.f32.mrb[0].mxu0
      %v3915 = vpop.f32.mrb[0].mxu0
      %v3916 = vadd.f32 0.0, %v3915
      %v3917 = vpop.f32.mrb[0].mxu0
      %3918 = vmatprep.mubr.bf16.mxu0 %v3412
      %3919 = vmatmul.mubr.bf16.gmra.mrb[0].mxu0 %v3244
      %v3920 = vpop.f32.mrb[0].mxu0
      %v3921 = vadd.f32 0.0, %v3920
      %v3922 = vpop.f32.mrb[0].mxu0
      %v3923 = vpop.f32.mrb[0].mxu0
      %v3924 = vadd.f32 0.0, %v3923
      %v3925 = vpop.f32.mrb[0].mxu0
      %3926 = vmatprep.mubr.bf16.mxu0 %v3424
      %3927 = vmatmul.mubr.bf16.gmra.mrb[0].mxu0 %v3245
      %v3928 = vpop.f32.mrb[0].mxu0
      %v3929 = vadd.f32 0.0, %v3928
      %v3930 = vpop.f32.mrb[0].mxu0
      %v3931 = vpop.f32.mrb[0].mxu0
      %v3932 = vadd.f32 0.0, %v3931
      %v3933 = vpop.f32.mrb[0].mxu0
      %3934 = vmatprep.mubr.bf16.mxu0 %v3436
      %3935 = vmatmul.mubr.bf16.gmra.mrb[0].mxu0 %v3246
      %v3936 = vpop.f32.mrb[0].mxu0
      %v3937 = vadd.f32 0.0, %v3936
      %v3938 = vpop.f32.mrb[0].mxu0
      %v3939 = vpop.f32.mrb[0].mxu0
      %v3940 = vadd.f32 0.0, %v3939
      %v3941 = vpop.f32.mrb[0].mxu0
      %3942 = vmatprep.mubr.bf16.mxu0 %v3448
      %3943 = vmatmul.mubr.bf16.gmra.mrb[0].mxu0 %v3247
      %v3944 = vpop.f32.mrb[0].mxu0
      %v3945 = vadd.f32 0.0, %v3944
      %v3946 = vpop.f32.mrb[0].mxu0
      %v3947 = vpop.f32.mrb[0].mxu0
      %v3948 = vadd.f32 0.0, %v3947
      %v3949 = vpop.f32.mrb[0].mxu0
      %3950 = vmatprep.mubr.bf16.mxu0 %v3460
      %3951 = vmatmul.mubr.bf16.gmra.mrb[0].mxu0 %v3248
      %v3952 = vpop.f32.mrb[0].mxu0
      %v3953 = vadd.f32 0.0, %v3952
      %v3954 = vpop.f32.mrb[0].mxu0
      %v3955 = vpop.f32.mrb[0].mxu0
      %v3956 = vadd.f32 0.0, %v3955
      %v3957 = vpop.f32.mrb[0].mxu0
      %3958 = vmatprep.mubr.bf16.mxu0 %v3472
      %3959 = vmatmul.mubr.bf16.gmra.mrb[0].mxu0 %v3249
      %v3960 = vpop.f32.mrb[0].mxu0
      %v3961 = vadd.f32 0.0, %v3960
      %v3962 = vpop.f32.mrb[0].mxu0
      %v3963 = vpop.f32.mrb[0].mxu0
      %v3964 = vadd.f32 0.0, %v3963
      %v3965 = vpop.f32.mrb[0].mxu0
      %3966 = vmatprep.mubr.bf16.mxu0 %v3484
      %3967 = vmatmul.mubr.bf16.gmra.mrb[0].mxu0 %v3250
      %v3968 = vpop.f32.mrb[0].mxu0
      %v3969 = vadd.f32 0.0, %v3968
      %v3970 = vpop.f32.mrb[0].mxu0
      %v3971 = vpop.f32.mrb[0].mxu0
      %v3972 = vadd.f32 0.0, %v3971
      %v3973 = vpop.f32.mrb[0].mxu0
      %3974 = vmatprep.mubr.bf16.mxu0 %v3496
      %3975 = vmatmul.mubr.bf16.gmra.mrb[0].mxu0 %v3251
      %v3976 = vpop.f32.mrb[0].mxu0
      %v3977 = vadd.f32 0.0, %v3976
      %v3978 = vpop.f32.mrb[0].mxu0
      %v3979 = vpop.f32.mrb[0].mxu0
      %v3980 = vadd.f32 0.0, %v3979
      %v3981 = vpop.f32.mrb[0].mxu0
      %3982 = vmatprep.mubr.bf16.mxu0 %v3508
      %3983 = vmatmul.mubr.bf16.gmra.mrb[0].mxu0 %v3252
      %v3984 = vpop.f32.mrb[0].mxu0
      %v3985 = vadd.f32 0.0, %v3984
      %v3986 = vpop.f32.mrb[0].mxu0
      %v3987 = vpop.f32.mrb[0].mxu0
      %v3988 = vadd.f32 0.0, %v3987
      %v3989 = vpop.f32.mrb[0].mxu0
      %3990 = vdwg.mxu0
      %3991 = vmatprep.subr.bf16.mxu0 0
      %3992 = vmatpush1.bf16.msra.mxu0 %v3798
      %3993 = vmatprep.subr.bf16.mxu0 0
      %3994 = vmatpush1.bf16.msra.mxu0 %v3799
      %3995 = vmatprep.subr.bf16.mxu0 0
      %3996 = vmatpush1.bf16.msra.mxu0 %v3800
      %3997 = vmatprep.subr.bf16.mxu0 0
      %3998 = vmatpush1.bf16.msra.mxu0 %v3801
      %3999 = vmatprep.subr.bf16.mxu0 0
      %4000 = vmatpush1.bf16.msra.mxu0 %v3802
      %4001 = vmatprep.subr.bf16.mxu0 0
      %4002 = vmatpush1.bf16.msra.mxu0 %v3803
      %4003 = vmatprep.subr.bf16.mxu0 0
      %4004 = vmatpush1.bf16.msra.mxu0 %v3804
      %4005 = vmatprep.subr.bf16.mxu0 0
      %4006 = vmatpush1.bf16.msra.mxu0 %v3805
      %4007 = vmatprep.subr.bf16.mxu0 0
      %4008 = vmatpush1.bf16.msra.mxu0 0
      %4009 = vmatprep.subr.bf16.mxu0 0
      %4010 = vmatpush1.bf16.msra.mxu0 0
      %4011 = vmatprep.subr.bf16.mxu0 0
      %4012 = vmatpush1.bf16.msra.mxu0 0
      %4013 = vmatprep.subr.bf16.mxu0 0
      %4014 = vmatpush1.bf16.msra.mxu0 0
      %4015 = vmatprep.subr.bf16.mxu0 0
      %4016 = vmatpush1.bf16.msra.mxu0 0
      %4017 = vmatprep.subr.bf16.mxu0 0
      %4018 = vmatpush1.bf16.msra.mxu0 0
      %4019 = vmatprep.subr.bf16.mxu0 0
      %4020 = vmatpush1.bf16.msra.mxu0 0
      %4021 = vmatprep.subr.bf16.mxu0 0
      %4022 = vmatpush1.bf16.msra.mxu0 0
      %4023 = vmatprep.mubr.bf16.mxu0 0
      %4024 = vmatmul.mubr.bf16.gmra.mrb[0].mxu0 %v3575
      %v4025 = vpop.f32.mrb[0].mxu0
      %v4026 = vadd.f32 %v3865, %v4025
      %v4027 = vpop.f32.mrb[0].mxu0
      %v4028 = vpop.f32.mrb[0].mxu0
      %v4029 = vadd.f32 %v3868, %v4028
      %v4030 = vpop.f32.mrb[0].mxu0
      %4031 = vmatprep.mubr.bf16.mxu0 0
      %4032 = vmatmul.mubr.bf16.gmra.mrb[0].mxu0 %v3578
      %v4033 = vpop.f32.mrb[0].mxu0
      %v4034 = vadd.f32 %v3873, %v4033
      %v4035 = vpop.f32.mrb[0].mxu0
      %v4036 = vpop.f32.mrb[0].mxu0
      %v4037 = vadd.f32 %v3876, %v4036
      %v4038 = vpop.f32.mrb[0].mxu0
      %4039 = vmatprep.mubr.bf16.mxu0 0
      %4040 = vmatmul.mubr.bf16.gmra.mrb[0].mxu0 %v3581
      %v4041 = vpop.f32.mrb[0].mxu0
      %v4042 = vadd.f32 %v3881, %v4041
      %v4043 = vpop.f32.mrb[0].mxu0
      %v4044 = vpop.f32.mrb[0].mxu0
      %v4045 = vadd.f32 %v3884, %v4044
      %v4046 = vpop.f32.mrb[0].mxu0
      %4047 = vmatprep.mubr.bf16.mxu0 0
      %4048 = vmatmul.mubr.bf16.gmra.mrb[0].mxu0 %v3584
      %v4049 = vpop.f32.mrb[0].mxu0
      %v4050 = vadd.f32 %v3889, %v4049
      %v4051 = vpop.f32.mrb[0].mxu0
      %v4052 = vpop.f32.mrb[0].mxu0
      %v4053 = vadd.f32 %v3892, %v4052
      %v4054 = vpop.f32.mrb[0].mxu0
      %4055 = vmatprep.mubr.bf16.mxu0 0
      %4056 = vmatmul.mubr.bf16.gmra.mrb[0].mxu0 %v3587
      %v4057 = vpop.f32.mrb[0].mxu0
      %v4058 = vadd.f32 %v3897, %v4057
      %v4059 = vpop.f32.mrb[0].mxu0
      %v4060 = vpop.f32.mrb[0].mxu0
      %v4061 = vadd.f32 %v3900, %v4060
      %v4062 = vpop.f32.mrb[0].mxu0
      %4063 = vmatprep.mubr.bf16.mxu0 0
      %4064 = vmatmul.mubr.bf16.gmra.mrb[0].mxu0 %v3590
      %v4065 = vpop.f32.mrb[0].mxu0
      %v4066 = vadd.f32 %v3905, %v4065
      %v4067 = vpop.f32.mrb[0].mxu0
      %v4068 = vpop.f32.mrb[0].mxu0
      %v4069 = vadd.f32 %v3908, %v4068
      %v4070 = vpop.f32.mrb[0].mxu0
      %4071 = vmatprep.mubr.bf16.mxu0 0
      %4072 = vmatmul.mubr.bf16.gmra.mrb[0].mxu0 %v3593
      %v4073 = vpop.f32.mrb[0].mxu0
      %v4074 = vadd.f32 %v3913, %v4073
      %v4075 = vpop.f32.mrb[0].mxu0
      %v4076 = vpop.f32.mrb[0].mxu0
      %v4077 = vadd.f32 %v3916, %v4076
      %v4078 = vpop.f32.mrb[0].mxu0
      %4079 = vmatprep.mubr.bf16.mxu0 0
      %4080 = vmatmul.mubr.bf16.gmra.mrb[0].mxu0 %v3596
      %v4081 = vpop.f32.mrb[0].mxu0
      %v4082 = vadd.f32 %v3921, %v4081
      %v4083 = vpop.f32.mrb[0].mxu0
      %v4084 = vpop.f32.mrb[0].mxu0
      %v4085 = vadd.f32 %v3924, %v4084
      %v4086 = vpop.f32.mrb[0].mxu0
      %4087 = vmatprep.mubr.bf16.mxu0 0
      %4088 = vmatmul.mubr.bf16.gmra.mrb[0].mxu0 %v3599
      %v4089 = vpop.f32.mrb[0].mxu0
      %v4090 = vadd.f32 %v3929, %v4089
      %v4091 = vpop.f32.mrb[0].mxu0
      %v4092 = vpop.f32.mrb[0].mxu0
      %v4093 = vadd.f32 %v3932, %v4092
      %v4094 = vpop.f32.mrb[0].mxu0
      %4095 = vmatprep.mubr.bf16.mxu0 0
      %4096 = vmatmul.mubr.bf16.gmra.mrb[0].mxu0 %v3602
      %v4097 = vpop.f32.mrb[0].mxu0
      %v4098 = vadd.f32 %v3937, %v4097
      %v4099 = vpop.f32.mrb[0].mxu0
      %v4100 = vpop.f32.mrb[0].mxu0
      %v4101 = vadd.f32 %v3940, %v4100
      %v4102 = vpop.f32.mrb[0].mxu0
      %4103 = vmatprep.mubr.bf16.mxu0 0
      %4104 = vmatmul.mubr.bf16.gmra.mrb[0].mxu0 %v3605
      %v4105 = vpop.f32.mrb[0].mxu0
      %v4106 = vadd.f32 %v3945, %v4105
      %v4107 = vpop.f32.mrb[0].mxu0
      %v4108 = vpop.f32.mrb[0].mxu0
      %v4109 = vadd.f32 %v3948, %v4108
      %v4110 = vpop.f32.mrb[0].mxu0
      %4111 = vmatprep.mubr.bf16.mxu0 0
      %4112 = vmatmul.mubr.bf16.gmra.mrb[0].mxu0 %v3608
      %v4113 = vpop.f32.mrb[0].mxu0
      %v4114 = vadd.f32 %v3953, %v4113
      %v4115 = vpop.f32.mrb[0].mxu0
      %v4116 = vpop.f32.mrb[0].mxu0
      %v4117 = vadd.f32 %v3956, %v4116
      %v4118 = vpop.f32.mrb[0].mxu0
      %4119 = vmatprep.mubr.bf16.mxu0 0
      %4120 = vmatmul.mubr.bf16.gmra.mrb[0].mxu0 %v3611
      %v4121 = vpop.f32.mrb[0].mxu0
      %v4122 = vadd.f32 %v3961, %v4121
      %v4123 = vpop.f32.mrb[0].mxu0
      %v4124 = vpop.f32.mrb[0].mxu0
      %v4125 = vadd.f32 %v3964, %v4124
      %v4126 = vpop.f32.mrb[0].mxu0
      %4127 = vmatprep.mubr.bf16.mxu0 0
      %4128 = vmatmul.mubr.bf16.gmra.mrb[0].mxu0 %v3614
      %v4129 = vpop.f32.mrb[0].mxu0
      %v4130 = vadd.f32 %v3969, %v4129
      %v4131 = vpop.f32.mrb[0].mxu0
      %v4132 = vpop.f32.mrb[0].mxu0
      %v4133 = vadd.f32 %v3972, %v4132
      %v4134 = vpop.f32.mrb[0].mxu0
      %4135 = vmatprep.mubr.bf16.mxu0 0
      %4136 = vmatmul.mubr.bf16.gmra.mrb[0].mxu0 %v3617
      %v4137 = vpop.f32.mrb[0].mxu0
      %v4138 = vadd.f32 %v3977, %v4137
      %v4139 = vpop.f32.mrb[0].mxu0
      %v4140 = vpop.f32.mrb[0].mxu0
      %v4141 = vadd.f32 %v3980, %v4140
      %v4142 = vpop.f32.mrb[0].mxu0
      %4143 = vmatprep.mubr.bf16.mxu0 0
      %4144 = vmatmul.mubr.bf16.gmra.mrb[0].mxu0 %v3620
      %v4145 = vpop.f32.mrb[0].mxu0
      %v4146 = vadd.f32 %v3985, %v4145
      %v4147 = vpop.f32.mrb[0].mxu0
      %v4148 = vpop.f32.mrb[0].mxu0
      %v4149 = vadd.f32 %v3988, %v4148
      %v4150 = vpop.f32.mrb[0].mxu0
      %4151 = vdwg.mxu0
      %v4152 = vadd.f32 %v2982, %v4026
      %v4153 = vadd.f32 %v2985, %v4029
      %v4154 = vadd.f32 %v2990, %v4034
      %v4155 = vadd.f32 %v2993, %v4037
      %v4156 = vadd.f32 %v2998, %v4042
      %v4157 = vadd.f32 %v3001, %v4045
      %v4158 = vadd.f32 %v3006, %v4050
      %v4159 = vadd.f32 %v3009, %v4053
      %v4160 = vadd.f32 %v3014, %v4058
      %v4161 = vadd.f32 %v3017, %v4061
      %v4162 = vadd.f32 %v3022, %v4066
      %v4163 = vadd.f32 %v3025, %v4069
      %v4164 = vadd.f32 %v3030, %v4074
      %v4165 = vadd.f32 %v3033, %v4077
      %v4166 = vadd.f32 %v3038, %v4082
      %v4167 = vadd.f32 %v3041, %v4085
      %v4168 = vadd.f32 %v3046, %v4090
      %v4169 = vadd.f32 %v3049, %v4093
      %v4170 = vadd.f32 %v3054, %v4098
      %v4171 = vadd.f32 %v3057, %v4101
      %v4172 = vadd.f32 %v3062, %v4106
      %v4173 = vadd.f32 %v3065, %v4109
      %v4174 = vadd.f32 %v3070, %v4114
      %v4175 = vadd.f32 %v3073, %v4117
      %v4176 = vadd.f32 %v3078, %v4122
      %v4177 = vadd.f32 %v3081, %v4125
      %v4178 = vadd.f32 %v3086, %v4130
      %v4179 = vadd.f32 %v3089, %v4133
      %v4180 = vadd.f32 %v3094, %v4138
      %v4181 = vadd.f32 %v3097, %v4141
      %v4182 = vadd.f32 %v3102, %v4146
      %v4183 = vadd.f32 %v3105, %v4149
      %v4184 = vpack.c.bf16 %v4153, %v4152
      %v4185 = vpack.c.bf16 %v4155, %v4154
      %v4186 = vpack.c.bf16 %v4157, %v4156
      %v4187 = vpack.c.bf16 %v4159, %v4158
      %v4188 = vpack.c.bf16 %v4161, %v4160
      %v4189 = vpack.c.bf16 %v4163, %v4162
      %v4190 = vpack.c.bf16 %v4165, %v4164
      %v4191 = vpack.c.bf16 %v4167, %v4166
      %v4192 = vpack.c.bf16 %v4169, %v4168
      %v4193 = vpack.c.bf16 %v4171, %v4170
      %v4194 = vpack.c.bf16 %v4173, %v4172
      %v4195 = vpack.c.bf16 %v4175, %v4174
      %v4196 = vpack.c.bf16 %v4177, %v4176
      %v4197 = vpack.c.bf16 %v4179, %v4178
      %v4198 = vpack.c.bf16 %v4181, %v4180
      %v4199 = vpack.c.bf16 %v4183, %v4182
      %v4216 = vunpack.c.l.b16 %v4184
      %v4217 = vunpack.c.h.b16 %v4184
      %v4218 = vunpack.c.l.b16 %v4185
      %v4219 = vunpack.c.h.b16 %v4185
      %v4220 = vunpack.c.l.b16 %v4186
      %v4221 = vunpack.c.h.b16 %v4186
      %v4222 = vunpack.c.l.b16 %v4187
      %v4223 = vunpack.c.h.b16 %v4187
      %v4224 = vunpack.c.l.b16 %v4188
      %v4225 = vunpack.c.h.b16 %v4188
      %v4226 = vunpack.c.l.b16 %v4189
      %v4227 = vunpack.c.h.b16 %v4189
      %v4228 = vunpack.c.l.b16 %v4190
      %v4229 = vunpack.c.h.b16 %v4190
      %v4230 = vunpack.c.l.b16 %v4191
      %v4231 = vunpack.c.h.b16 %v4191
      %v4232 = vunpack.c.l.b16 %v4192
      %v4233 = vunpack.c.h.b16 %v4192
      %v4234 = vunpack.c.l.b16 %v4193
      %v4235 = vunpack.c.h.b16 %v4193
      %v4236 = vunpack.c.l.b16 %v4194
      %v4237 = vunpack.c.h.b16 %v4194
      %v4238 = vunpack.c.l.b16 %v4195
      %v4239 = vunpack.c.h.b16 %v4195
      %v4240 = vunpack.c.l.b16 %v4196
      %v4241 = vunpack.c.h.b16 %v4196
      %v4242 = vunpack.c.l.b16 %v4197
      %v4243 = vunpack.c.h.b16 %v4197
      %v4244 = vunpack.c.l.b16 %v4198
      %v4245 = vunpack.c.h.b16 %v4198
      %v4246 = vunpack.c.l.b16 %v4199
      %v4247 = vunpack.c.h.b16 %v4199
      %v4248 = vpack.c.b16 %v4216, %v4216
      %v4249 = vpack.c.b16 %v4217, %v4217
      %v4250 = vpack.c.b16 %v4218, %v4218
      %v4251 = vpack.c.b16 %v4219, %v4219
      %v4252 = vpack.c.b16 %v4220, %v4220
      %v4253 = vpack.c.b16 %v4221, %v4221
      %v4254 = vpack.c.b16 %v4222, %v4222
      %v4255 = vpack.c.b16 %v4223, %v4223
      %v4256 = vpack.c.b16 %v4224, %v4224
      %v4257 = vpack.c.b16 %v4225, %v4225
      %v4258 = vpack.c.b16 %v4226, %v4226
      %v4259 = vpack.c.b16 %v4227, %v4227
      %v4260 = vpack.c.b16 %v4228, %v4228
      %v4261 = vpack.c.b16 %v4229, %v4229
      %v4262 = vpack.c.b16 %v4230, %v4230
      %v4263 = vpack.c.b16 %v4231, %v4231
      %v4264 = vpack.c.b16 %v4232, %v4232
      %v4265 = vpack.c.b16 %v4233, %v4233
      %v4266 = vpack.c.b16 %v4234, %v4234
      %v4267 = vpack.c.b16 %v4235, %v4235
      %v4268 = vpack.c.b16 %v4236, %v4236
      %v4269 = vpack.c.b16 %v4237, %v4237
      %v4270 = vpack.c.b16 %v4238, %v4238
      %v4271 = vpack.c.b16 %v4239, %v4239
      %v4272 = vpack.c.b16 %v4240, %v4240
      %v4273 = vpack.c.b16 %v4241, %v4241
      %v4274 = vpack.c.b16 %v4242, %v4242
      %v4275 = vpack.c.b16 %v4243, %v4243
      %v4276 = vpack.c.b16 %v4244, %v4244
      %v4277 = vpack.c.b16 %v4245, %v4245
      %v4278 = vpack.c.b16 %v4246, %v4246
      %v4279 = vpack.c.b16 %v4247, %v4247
      %4312 = vst [vmem:[%s204] sm:$0xf] %v4248
      %4313 = vst [vmem:[%s204 + $0x4] sm:$0xf] %v4249
      %4314 = vst [vmem:[%s204 + $0x8] sm:$0xf] %v4250
      %4315 = vst [vmem:[%s204 + $0xc] sm:$0xf] %v4251
      %4316 = vst [vmem:[%s204 + $0x10] sm:$0xf] %v4252
      %4317 = vst [vmem:[%s204 + $0x14] sm:$0xf] %v4253
      %4318 = vst [vmem:[%s204 + $0x18] sm:$0xf] %v4254
      %4319 = vst [vmem:[%s204 + $0x1c] sm:$0xf] %v4255
      %4320 = vst [vmem:[%s204 + $0x20] sm:$0xf] %v4256
      %4321 = vst [vmem:[%s204 + $0x24] sm:$0xf] %v4257
      %4322 = vst [vmem:[%s204 + $0x28] sm:$0xf] %v4258
      %4323 = vst [vmem:[%s204 + $0x2c] sm:$0xf] %v4259
      %4324 = vst [vmem:[%s204 + $0x30] sm:$0xf] %v4260
      %4325 = vst [vmem:[%s204 + $0x34] sm:$0xf] %v4261
      %4326 = vst [vmem:[%s204 + $0x38] sm:$0xf] %v4262
      %4327 = vst [vmem:[%s204 + $0x3c] sm:$0xf] %v4263
      %4328 = vst [vmem:[%s204 + $0x40] sm:$0xf] %v4264
      %4329 = vst [vmem:[%s204 + $0x44] sm:$0xf] %v4265
      %4330 = vst [vmem:[%s204 + $0x48] sm:$0xf] %v4266
      %4331 = vst [vmem:[%s204 + $0x4c] sm:$0xf] %v4267
      %4332 = vst [vmem:[%s204 + $0x50] sm:$0xf] %v4268
      %4333 = vst [vmem:[%s204 + $0x54] sm:$0xf] %v4269
      %4334 = vst [vmem:[%s204 + $0x58] sm:$0xf] %v4270
      %4335 = vst [vmem:[%s204 + $0x5c] sm:$0xf] %v4271
      %4336 = vst [vmem:[%s204 + $0x60] sm:$0xf] %v4272
      %4337 = vst [vmem:[%s204 + $0x64] sm:$0xf] %v4273
      %4338 = vst [vmem:[%s204 + $0x68] sm:$0xf] %v4274
      %4339 = vst [vmem:[%s204 + $0x6c] sm:$0xf] %v4275
      %4340 = vst [vmem:[%s204 + $0x70] sm:$0xf] %v4276
      %4341 = vst [vmem:[%s204 + $0x74] sm:$0xf] %v4277
      %4342 = vst [vmem:[%s204 + $0x78] sm:$0xf] %v4278
      %4343 = vst [vmem:[%s204 + $0x7c] sm:$0xf] %v4279
      %v4344 = vadd.f32 %v4152, %v4153
      %v4345 = vadd.f32 %v4344, %v4154
      %v4346 = vadd.f32 %v4345, %v4155
      %v4347 = vadd.f32 %v4346, %v4156
      %v4348 = vadd.f32 %v4347, %v4157
      %v4349 = vadd.f32 %v4348, %v4158
      %v4350 = vadd.f32 %v4349, %v4159
      %v4351 = vadd.f32 %v4350, %v4160
      %v4352 = vadd.f32 %v4351, %v4161
      %v4353 = vadd.f32 %v4352, %v4162
      %v4354 = vadd.f32 %v4353, %v4163
      %v4355 = vadd.f32 %v4354, %v4164
      %v4356 = vadd.f32 %v4355, %v4165
      %v4357 = vadd.f32 %v4356, %v4166
      %v4358 = vadd.f32 %v4357, %v4167
      %v4359 = vadd.f32 %v4358, %v4168
      %v4360 = vadd.f32 %v4359, %v4169
      %v4361 = vadd.f32 %v4360, %v4170
      %v4362 = vadd.f32 %v4361, %v4171
      %v4363 = vadd.f32 %v4362, %v4172
      %v4364 = vadd.f32 %v4363, %v4173
      %v4365 = vadd.f32 %v4364, %v4174
      %v4366 = vadd.f32 %v4365, %v4175
      %v4367 = vadd.f32 %v4366, %v4176
      %v4368 = vadd.f32 %v4367, %v4177
      %v4369 = vadd.f32 %v4368, %v4178
      %v4370 = vadd.f32 %v4369, %v4179
      %v4371 = vadd.f32 %v4370, %v4180
      %v4372 = vadd.f32 %v4371, %v4181
      %v4373 = vadd.f32 %v4372, %v4182
      %v4374 = vadd.f32 %v4373, %v4183
      %v4375 = vrot.slane %v4374, 4
      %v4376 = vadd.f32 %v4374, %v4375
      %v4377 = vrot.slane %v4376, 2
      %v4378 = vadd.f32 %v4376, %v4377
      %v4379 = vrot.slane %v4378, 1
      %v4380 = vadd.f32 %v4378, %v4379
      %4381 = vst [vmem:[%s208] sm:$0x1] %v4380
      %v4382 = vmul.f32 %v4152, %v4152
      %v4383 = vmul.f32 %v4153, %v4153
      %v4384 = vmul.f32 %v4154, %v4154
      %v4385 = vmul.f32 %v4155, %v4155
      %v4386 = vmul.f32 %v4156, %v4156
      %v4387 = vmul.f32 %v4157, %v4157
      %v4388 = vmul.f32 %v4158, %v4158
      %v4389 = vmul.f32 %v4159, %v4159
      %v4390 = vmul.f32 %v4160, %v4160
      %v4391 = vmul.f32 %v4161, %v4161
      %v4392 = vmul.f32 %v4162, %v4162
      %v4393 = vmul.f32 %v4163, %v4163
      %v4394 = vmul.f32 %v4164, %v4164
      %v4395 = vmul.f32 %v4165, %v4165
      %v4396 = vmul.f32 %v4166, %v4166
      %v4397 = vmul.f32 %v4167, %v4167
      %v4398 = vmul.f32 %v4168, %v4168
      %v4399 = vmul.f32 %v4169, %v4169
      %v4400 = vmul.f32 %v4170, %v4170
      %v4401 = vmul.f32 %v4171, %v4171
      %v4402 = vmul.f32 %v4172, %v4172
      %v4403 = vmul.f32 %v4173, %v4173
      %v4404 = vmul.f32 %v4174, %v4174
      %v4405 = vmul.f32 %v4175, %v4175
      %v4406 = vmul.f32 %v4176, %v4176
      %v4407 = vmul.f32 %v4177, %v4177
      %v4408 = vmul.f32 %v4178, %v4178
      %v4409 = vmul.f32 %v4179, %v4179
      %v4410 = vmul.f32 %v4180, %v4180
      %v4411 = vmul.f32 %v4181, %v4181
      %v4412 = vmul.f32 %v4182, %v4182
      %v4413 = vmul.f32 %v4183, %v4183
      %v4414 = vadd.f32 %v4382, %v4383
      %v4415 = vadd.f32 %v4414, %v4384
      %v4416 = vadd.f32 %v4415, %v4385
      %v4417 = vadd.f32 %v4416, %v4386
      %v4418 = vadd.f32 %v4417, %v4387
      %v4419 = vadd.f32 %v4418, %v4388
      %v4420 = vadd.f32 %v4419, %v4389
      %v4421 = vadd.f32 %v4420, %v4390
      %v4422 = vadd.f32 %v4421, %v4391
      %v4423 = vadd.f32 %v4422, %v4392
      %v4424 = vadd.f32 %v4423, %v4393
      %v4425 = vadd.f32 %v4424, %v4394
      %v4426 = vadd.f32 %v4425, %v4395
      %v4427 = vadd.f32 %v4426, %v4396
      %v4428 = vadd.f32 %v4427, %v4397
      %v4429 = vadd.f32 %v4428, %v4398
      %v4430 = vadd.f32 %v4429, %v4399
      %v4431 = vadd.f32 %v4430, %v4400
      %v4432 = vadd.f32 %v4431, %v4401
      %v4433 = vadd.f32 %v4432, %v4402
      %v4434 = vadd.f32 %v4433, %v4403
      %v4435 = vadd.f32 %v4434, %v4404
      %v4436 = vadd.f32 %v4435, %v4405
      %v4437 = vadd.f32 %v4436, %v4406
      %v4438 = vadd.f32 %v4437, %v4407
      %v4439 = vadd.f32 %v4438, %v4408
      %v4440 = vadd.f32 %v4439, %v4409
      %v4441 = vadd.f32 %v4440, %v4410
      %v4442 = vadd.f32 %v4441, %v4411
      %v4443 = vadd.f32 %v4442, %v4412
      %v4444 = vadd.f32 %v4443, %v4413
      %v4445 = vrot.slane %v4444, 4
      %v4446 = vadd.f32 %v4444, %v4445
      %v4447 = vrot.slane %v4446, 2
      %v4448 = vadd.f32 %v4446, %v4447
      %v4449 = vrot.slane %v4448, 1
      %v4450 = vadd.f32 %v4448, %v4449
      %4451 = vst [vmem:[%s208 + $0x1] sm:$0x1] %v4450
      %p4452 = scmp.lt.s32.totalorder %s16, 1
      %s4453 = scalar_select %p4452, %s16, 1
      %s4454 = smul.addr %s4453, 32
      %s4455 = smul.addr %s4454, 4
      %s4456 = scalar_lea.vmem %s3, %s4455
      %p4457 = scmp.lt.s32.totalorder %s16, 1
      %s4458 = scalar_select %p4457, %s16, 1
      %s4459 = smul.addr %s4458, 2
      %s4460 = scalar_lea.vmem %s4, %s4459
      // Predicated region
      $region33: #{residual_block.4} parent=31 // pred_check
        %p4461 = pneg %p102
      $region34: #{residual_block.4} parent=31 // pred_check_branch
        %4463 = sbr.rel (%p4461) target = $region36
      $region35: #{residual_block.4} parent=31 // pred_region
        _
      $region36: #{residual_block.4} parent=31 // pred_fallthru
        _
      // Predicated region
      $region37: #{residual_block.4} parent=31 // pred_check
        %p4464 = pneg %p128
      $region38: #{residual_block.4} parent=31 // pred_check_branch
        %4466 = sbr.rel (%p4464) target = $region40
      $region39: #{residual_block.4} parent=31 // pred_region
        _
      $region40: #{residual_block.4} parent=31 // pred_fallthru
        _
    $region32: #{residual_block.4} parent=5 // pred_fallthru
      _
    %p4467 = scmp.le.s32.totalorder 2, %s11
    // Predicated region
    $region41: #{residual_block.4} parent=5 // pred_check
      %p4468 = pneg %p4467
    $region42: #{residual_block.4} parent=5 // pred_check_branch
      %4470 = sbr.rel (%p4468) target = $region44
    $region43: #{residual_block.4} parent=5 // pred_region
      %s4471 = ssub.s32 %s11, 2
      // Predicated region
      $region45: #{residual_block.4} parent=43 // pred_check
        %p4472 = pneg %p108
      $region46: #{residual_block.4} parent=43 // pred_check_branch
        %4474 = sbr.rel (%p4472) target = $region48
      $region47: #{residual_block.4} parent=43 // pred_region
        %p4475 = scmp.lt.s32.totalorder %s17, 1
        %s4476 = scalar_select %p4475, %s17, 1
        %s4477 = smul.addr %s4476, 32
        %s4478 = smul.addr %s4477, 4
        %s4479 = scalar_lea.vmem %s3, %s4478
      $region48: #{residual_block.4} parent=43 // pred_fallthru
        _
      // Predicated region
      $region49: #{residual_block.4} parent=43 // pred_check
        %p4480 = pneg %p134
      $region50: #{residual_block.4} parent=43 // pred_check_branch
        %4482 = sbr.rel (%p4480) target = $region52
      $region51: #{residual_block.4} parent=43 // pred_region
        %p4483 = scmp.lt.s32.totalorder %s17, 1
        %s4484 = scalar_select %p4483, %s17, 1
        %s4485 = smul.addr %s4484, 2
        %s4486 = scalar_lea.vmem %s4, %s4485
      $region52: #{residual_block.4} parent=43 // pred_fallthru
        _
    $region44: #{residual_block.4} parent=5 // pred_fallthru
      _
  $region6: #{residual_block.4} parent=0 // loop_footer
    %s15 = sadd.s32 1, %s11
  $region7: #{residual_block.4} parent=0 // loop_footer_branch
    %10 = sbr.rel target = $region3
  $region8: #{residual_block.4} parent=0 // loop_exit
    _

</llo_original>
